<compile_context>
chip_gen: v6e
topology: v6e:2x2x1
jax: 0.10.0
libtpu: 0.0.40
codegen_flags: <defaults>
</compile_context>

<pallas_src>
import functools

import jax
import jax.numpy as jnp
import numpy as np
from jax.experimental import pallas as pl
from jax.experimental.pallas import tpu as pltpu

EPS = 1e-5          # nn.GroupNorm default
NUM_GROUPS = 32     # norm_fn uses num_groups=32

# Review: set the scoped-VMEM limit explicitly; budget for v7x's 64 MiB
# (leave headroom).  Raise toward ~100 MiB on v5e/v6e when sizing tiles up.
VMEM_LIMIT_BYTES = 48 * 1024 * 1024


def _pick_tile_h(h, target=32):
    """Largest divisor of h that is <= target (spatial H tile height)."""
    for th in range(min(h, target), 0, -1):
        if h % th == 0:
            return th
    return h


# ----------------------------------------------------------------------------
# GroupNorm statistics pre-pass: per-frame per-channel sum / sum-of-squares,
# accumulated over H tiles, finalized to per-channel scale/shift in the
# wrapper (tiny (B,T,C) arrays, negligible XLA work).
# ----------------------------------------------------------------------------
def _frame_sums_kernel(x_ref, s1_ref, s2_ref):
    ht = pl.program_id(2)

    @pl.when(ht == 0)
    def _():
        s1_ref[...] = jnp.zeros(s1_ref.shape, s1_ref.dtype)
        s2_ref[...] = jnp.zeros(s2_ref.shape, s2_ref.dtype)

    x = x_ref[...].astype(jnp.float32)
    x2d = x.reshape(-1, x.shape[-1])
    s1_ref[...] += jnp.sum(x2d, axis=0, keepdims=True)
    s2_ref[...] += jnp.sum(x2d * x2d, axis=0, keepdims=True)


def groupnorm_scale_shift(x, gamma, beta, *, tile_h, num_groups=NUM_GROUPS):
    """Fold per-frame GroupNorm into per-channel scale/shift: y = x*scale+shift."""
    B, T, H, W, C = x.shape
    n_ht = H // tile_h
    s1, s2 = pl.pallas_call(
        _frame_sums_kernel,
        out_shape=(jax.ShapeDtypeStruct((B, T, 1, C), jnp.float32),
                   jax.ShapeDtypeStruct((B, T, 1, C), jnp.float32)),
        grid=(B, T, n_ht),
        in_specs=[pl.BlockSpec((pl.Squeezed(), pl.Squeezed(), tile_h, W, C),
                               lambda b, t, ht: (b, t, ht, 0, 0))],
        out_specs=(pl.BlockSpec((pl.Squeezed(), pl.Squeezed(), 1, C),
                                lambda b, t, ht: (b, t, 0, 0)),
                   pl.BlockSpec((pl.Squeezed(), pl.Squeezed(), 1, C),
                                lambda b, t, ht: (b, t, 0, 0))),
        compiler_params=pltpu.CompilerParams(
            dimension_semantics=("parallel", "parallel", "arbitrary"),
            vmem_limit_bytes=VMEM_LIMIT_BYTES),
    )(x)
    cpg = C // num_groups
    n = float(H * W * cpg)
    s1g = s1.reshape(B, T, num_groups, cpg).sum(axis=-1, keepdims=True)
    s2g = s2.reshape(B, T, num_groups, cpg).sum(axis=-1, keepdims=True)
    mean = s1g / n
    var = s2g / n - mean * mean
    rstd = jax.lax.rsqrt(var + EPS)
    bshape = (B, T, num_groups, cpg)
    rstd_c = jnp.broadcast_to(rstd, bshape).reshape(B, T, 1, C)
    mean_c = jnp.broadcast_to(mean, bshape).reshape(B, T, 1, C)
    scale = rstd_c * gamma.reshape(1, 1, 1, C)
    shift = beta.reshape(1, 1, 1, C) - mean_c * scale
    return scale, shift


# ----------------------------------------------------------------------------
# Fused kernel: normalize (precomputed scale/shift) + SiLU + causal 3x3x3 conv
# (+ optional residual).  grid = (B, H_tiles, T); T is the innermost,
# sequential axis and a persistent 3-slot bf16 ring of normalized, halo-padded
# row slabs supplies the causal time window and the spatial halo.
# ----------------------------------------------------------------------------
def _norm_silu_causal_conv_kernel(x_ref, xt_ref, xb_ref, sc_ref, sh_ref,
                                  w_ref, b_ref, *rest):
    if len(rest) == 3:
        r_ref, o_ref, ring_ref = rest
    else:
        r_ref = None
        o_ref, ring_ref = rest

    ht = pl.program_id(1)
    n_ht = pl.num_programs(1)
    t = pl.program_id(2)

    TH, W, Cin = x_ref.shape
    Cout = b_ref.shape[-1]

    # New clip (t == 0): clear this (b, h_tile)'s ring.  Slots 1 and 2 then
    # stand in for the zero frames at t = -2 / -1 (causal front pad), and the
    # never-written W columns / edge halo rows stay zero (spatial zero pad of
    # the post-activation tensor).
    @pl.when(t == 0)
    def _():
        ring_ref[...] = jnp.zeros(ring_ref.shape, ring_ref.dtype)

    scale = sc_ref[...].reshape(1, 1, Cin)      # f32 per-channel GN scale
    shift = sh_ref[...].reshape(1, 1, Cin)      # f32 per-channel GN shift

    def norm_act(v):
        y = v.astype(jnp.float32) * scale + shift
        return (y * jax.nn.sigmoid(y)).astype(ring_ref.dtype)     # SiLU -> bf16

    # Write frame t into ring slot t % 3.  W interior lives at sublane-aligned
    # offset 8 (cols [8, 8+W)); cols 7 and 8+W stay zero = W halo; ring rows
    # 0 / TH+1 hold the H halo (zeroed at frame edges).
    slot = t % 3
    ring_ref[slot, 1:TH + 1, 8:8 + W, :] = norm_act(x_ref[...])
    top = norm_act(xt_ref[...])
    top = jnp.where(ht > 0, top, jnp.zeros_like(top))
    bot = norm_act(xb_ref[...])
    bot = jnp.where(ht < n_ht - 1, bot, jnp.zeros_like(bot))
    ring_ref[slot, 0:1, 8:8 + W, :] = top
    ring_ref[slot, TH + 1:TH + 2, 8:8 + W, :] = bot

    # Causal 3x3x3 conv: 3 (time taps) x 3 (W taps) bf16 MXU matmuls with
    # K = 3*Cin.  Per (kt, kw) only one (possibly sublane-shifted) ref slab
    # load; the 3 kh taps are cheap major-axis slices folded into K.
    acc = jnp.zeros((TH * W, Cout), jnp.float32)
    for kt in range(3):                       # uses input frame t - 2 + kt
        slot_k = (t + kt + 1) % 3             # == (t - 2 + kt) mod 3
        for kw in range(3):
            slab = ring_ref[slot_k, :, 7 + kw:7 + kw + W, :]      # (TH+2, W, Cin)
            patch = jnp.concatenate([slab[kh:kh + TH] for kh in range(3)],
                                    axis=-1)                      # (TH, W, 3*Cin)
            acc += jnp.dot(patch.reshape(TH * W, 3 * Cin), w_ref[kt, kw],
                           preferred_element_type=jnp.float32)

    out = acc + b_ref[...]
    if r_ref is not None:
        out = out + r_ref[...].astype(jnp.float32)
    o_ref[...] = out.astype(o_ref.dtype)


def fused_gn_silu_causal_conv3d(x, gamma, beta, w, b, *, residual=None,
                                out_dtype=jnp.float32, tile_h=None,
                                num_groups=NUM_GROUPS):
    """causal_conv3d(SiLU(GroupNormSpatial(x))) [+ residual].

    x: (B, T, H, W, Cin)    w: (3, 3, 3, Cin, Cout) in (kt, kh, kw, I, O)
    b: (Cout,).  Returns (B, T, H, W, Cout) in out_dtype.
    """
    B, T, H, W, Cin = x.shape
    Cout = w.shape[-1]
    assert Cin % num_groups == 0
    tile_h = _pick_tile_h(H) if tile_h is None else tile_h
    assert H % tile_h == 0
    n_ht = H // tile_h
    TH = tile_h

    # GroupNorm stats pre-pass -> tiny per-frame per-channel scale/shift.
    scale, shift = groupnorm_scale_shift(x, gamma, beta, tile_h=tile_h,
                                         num_groups=num_groups)

    # Fold the 3 kh taps into the contraction axis (K = 3*Cin); bf16 for MXU.
    w_r = jnp.transpose(w, (0, 2, 1, 3, 4)).reshape(3, 3, 3 * Cin, Cout)
    w_r = w_r.astype(jnp.bfloat16)
    bias = b.reshape(1, Cout).astype(jnp.float32)

    sq = pl.Squeezed()
    frame_spec = pl.BlockSpec((sq, sq, TH, W, Cin),
                              lambda bb, ht, tt: (bb, tt, ht, 0, 0))
    # 1-row halo blocks of the same input array (clamped row index; the frame
    # edge rows are zeroed in-kernel -> zero spatial pad).
    halo_top_spec = pl.BlockSpec(
        (sq, sq, 1, W, Cin),
        lambda bb, ht, tt: (bb, tt, jnp.maximum(ht * TH - 1, 0), 0, 0))
    halo_bot_spec = pl.BlockSpec(
        (sq, sq, 1, W, Cin),
        lambda bb, ht, tt: (bb, tt, jnp.minimum((ht + 1) * TH, H - 1), 0, 0))
    vec_spec = pl.BlockSpec((sq, sq, 1, Cin), lambda bb, ht, tt: (bb, tt, 0, 0))
    # Constant-index operands: single-buffered (never re-DMA'd, half the VMEM).
    w_spec = pl.BlockSpec((3, 3, 3 * Cin, Cout),
                          lambda bb, ht, tt: (0, 0, 0, 0),
                          pipeline_mode=pl.Buffered(1))
    b_spec = pl.BlockSpec((1, Cout), lambda bb, ht, tt: (0, 0),
                          pipeline_mode=pl.Buffered(1))
    # Output / residual with H,W flattened -> full-sublane stores (fully
    # lane-dense once Cout >= 128, i.e. all production Mochi stages).
    flat_spec = pl.BlockSpec((sq, sq, TH * W, Cout),
                             lambda bb, ht, tt: (bb, tt, ht, 0))

    in_specs = [frame_spec, halo_top_spec, halo_bot_spec, vec_spec, vec_spec,
                w_spec, b_spec]
    args = [x, x, x, scale, shift, w_r, bias]
    if residual is not None:
        in_specs.append(flat_spec)
        args.append(residual.reshape(B, T, H * W, Cout))

    out = pl.pallas_call(
        _norm_silu_causal_conv_kernel,
        out_shape=jax.ShapeDtypeStruct((B, T, H * W, Cout), out_dtype),
        grid=(B, n_ht, T),                      # T innermost & sequential!
        in_specs=in_specs,
        out_specs=flat_spec,
        scratch_shapes=[pltpu.VMEM((3, TH + 2, W + 16, Cin), jnp.bfloat16)],
        compiler_params=pltpu.CompilerParams(
            dimension_semantics=("parallel", "parallel", "arbitrary"),
            vmem_limit_bytes=VMEM_LIMIT_BYTES),
    )(*args)
    return out.reshape(B, T, H, W, Cout)


# ----------------------------------------------------------------------------
# ResBlock forward (attn_block = Identity, padding_mode='zeros').
# ----------------------------------------------------------------------------
def res_block_forward(x, params, *, tile_h=None):
    # Stage-1 intermediate kept in bf16 (halves HBM read+write of h).
    h = fused_gn_silu_causal_conv3d(
        x, params["gn1_gamma"], params["gn1_beta"],
        params["conv1_w"], params["conv1_b"],
        out_dtype=jnp.bfloat16, tile_h=tile_h)
    out = fused_gn_silu_causal_conv3d(
        h, params["gn2_gamma"], params["gn2_beta"],
        params["conv2_w"], params["conv2_b"],
        residual=x, out_dtype=jnp.float32, tile_h=tile_h)
    return out


# ----------------------------------------------------------------------------
# Pure-JAX f32 reference for verification (returns stage-1 output too).
# ----------------------------------------------------------------------------
def ref_forward(x, params):
    def gn(v, g, b):
        B, T, H, W, C = v.shape
        cpg = C // NUM_GROUPS
        vg = v.reshape(B, T, H, W, NUM_GROUPS, cpg)
        mean = vg.mean(axis=(2, 3, 5), keepdims=True)
        var = ((vg - mean) ** 2).mean(axis=(2, 3, 5), keepdims=True)
        vn = ((vg - mean) / jnp.sqrt(var + EPS)).reshape(B, T, H, W, C)
        return vn * g + b

    def silu(v):
        return v * jax.nn.sigmoid(v)

    def conv(v, w, b):
        vp = jnp.pad(v, ((0, 0), (2, 0), (0, 0), (0, 0), (0, 0)))
        y = jax.lax.conv_general_dilated(
            vp, w, window_strides=(1, 1, 1),
            padding=((0, 0), (1, 1), (1, 1)),
            dimension_numbers=("NDHWC", "DHWIO", "NDHWC"),
            precision=jax.lax.Precision.HIGHEST)
        return y + b

    h = conv(silu(gn(x, params["gn1_gamma"], params["gn1_beta"])),
             params["conv1_w"], params["conv1_b"])
    y = conv(silu(gn(h, params["gn2_gamma"], params["gn2_beta"])),
             params["conv2_w"], params["conv2_b"]) + x
    return h, y


if __name__ == "__main__":
    # Channels must be divisible by 32 (GroupNorm num_groups=32).  Kernel
    # layout (B, T, H, W, C); equivalent PyTorch NCTHW input is (2, 32, 4, 16, 16).
    B, C, T, H, W = 2, 32, 4, 16, 16
    TILE_H = 8          # 2 H tiles -> exercises the spatial-tiling/halo path
    key = jax.random.PRNGKey(0)
    ks = jax.random.split(key, 9)
    x = jax.random.normal(ks[0], (B, T, H, W, C), jnp.float32)
    fan = float(C * 27)
    params = dict(
        gn1_gamma=1.0 + 0.1 * jax.random.normal(ks[1], (C,), jnp.float32),
        gn1_beta=0.1 * jax.random.normal(ks[2], (C,), jnp.float32),
        conv1_w=jax.random.normal(ks[3], (3, 3, 3, C, C), jnp.float32) / np.sqrt(fan),
        conv1_b=0.1 * jax.random.normal(ks[4], (C,), jnp.float32),
        gn2_gamma=1.0 + 0.1 * jax.random.normal(ks[5], (C,), jnp.float32),
        gn2_beta=0.1 * jax.random.normal(ks[6], (C,), jnp.float32),
        conv2_w=jax.random.normal(ks[7], (3, 3, 3, C, C), jnp.float32) / np.sqrt(fan),
        conv2_b=0.1 * jax.random.normal(ks[8], (C,), jnp.float32),
    )

    fwd = jax.jit(functools.partial(res_block_forward, tile_h=TILE_H))
    out = jax.block_until_ready(fwd(x, params))

    # Per-stage check (review request): stage-1 output alone.
    stage1 = jax.jit(functools.partial(
        fused_gn_silu_causal_conv3d, out_dtype=jnp.bfloat16, tile_h=TILE_H))
    h = jax.block_until_ready(
        stage1(x, params["gn1_gamma"], params["gn1_beta"],
               params["conv1_w"], params["conv1_b"]))

    ref_h, ref_out = ref_forward(x, params)
    ref_h = jax.block_until_ready(ref_h)
    ref_out = jax.block_until_ready(ref_out)

    # Stage 1: bf16 ring + bf16 MXU matmuls + bf16 output vs f32 HIGHEST ref.
    np.testing.assert_allclose(np.asarray(h.astype(jnp.float32)),
                               np.asarray(ref_h), rtol=2e-2, atol=2e-2)
    # End to end: stage-2 GN stats are computed from the bf16 intermediate.
    np.testing.assert_allclose(np.asarray(out), np.asarray(ref_out),
                               rtol=3e-2, atol=3e-2)
    print("KERNEL_OK")
</pallas_src>

<mosaic_0001>
module attributes {stable_mosaic.version = 11 : i64} {
  func.func @_frame_sums_kernel(%arg0: i32, %arg1: i32, %arg2: i32, %arg3: memref<1x1x8x16x32xf32, #tpu.memory_space<vmem>>, %arg4: memref<1x1x1x32xf32, #tpu.memory_space<vmem>>, %arg5: memref<1x1x1x32xf32, #tpu.memory_space<vmem>>) attributes {dimension_semantics = [#tpu.dimension_semantics<parallel>, #tpu.dimension_semantics<parallel>, #tpu.dimension_semantics<arbitrary>], iteration_bounds = array<i64: 2, 4, 2>, scalar_prefetch = 0 : i64, scratch_operands = 0 : i64, tpu.core_type = #tpu.core_type<tc>, window_params = [{transform_indices = @transform_0, window_bounds = array<i64: 1, 1, 8, 16, 32>}, {transform_indices = @transform_1, window_bounds = array<i64: 1, 1, 1, 32>}, {transform_indices = @transform_2, window_bounds = array<i64: 1, 1, 1, 32>}]} {
    %c0_i32 = arith.constant 0 : i32
    %0 = arith.cmpi eq, %arg2, %c0_i32 : i32
    %1 = arith.extui %0 : i1 to i32
    %c0_i32_0 = arith.constant 0 : i32
    %2 = arith.cmpi ne, %1, %c0_i32_0 : i32
    scf.if %2 {
      %cst_22 = arith.constant 0.000000e+00 : f32
      %23 = vector.broadcast %cst_22 : f32 to vector<1x32xf32>
      %c0_23 = arith.constant 0 : index
      %c0_24 = arith.constant 0 : index
      %c0_25 = arith.constant 0 : index
      %c0_26 = arith.constant 0 : index
      %24 = vector.load %arg4[%c0_23, %c0_24, %c0_25, %c0_26] : memref<1x1x1x32xf32, #tpu.memory_space<vmem>>, vector<1x1x1x32xf32>
      %25 = vector.shape_cast %24 : vector<1x1x1x32xf32> to vector<1x32xf32>
      %26 = vector.shape_cast %23 : vector<1x32xf32> to vector<1x1x1x32xf32>
      tpu.vector_store %arg4[%c0_23, %c0_24, %c0_25, %c0_26], %26 {strides = array<i32>} : memref<1x1x1x32xf32, #tpu.memory_space<vmem>>, vector<1x1x1x32xf32>,
      %cst_27 = arith.constant 0.000000e+00 : f32
      %27 = vector.broadcast %cst_27 : f32 to vector<1x32xf32>
      %c0_28 = arith.constant 0 : index
      %c0_29 = arith.constant 0 : index
      %c0_30 = arith.constant 0 : index
      %c0_31 = arith.constant 0 : index
      %28 = vector.load %arg5[%c0_28, %c0_29, %c0_30, %c0_31] : memref<1x1x1x32xf32, #tpu.memory_space<vmem>>, vector<1x1x1x32xf32>
      %29 = vector.shape_cast %28 : vector<1x1x1x32xf32> to vector<1x32xf32>
      %30 = vector.shape_cast %27 : vector<1x32xf32> to vector<1x1x1x32xf32>
      tpu.vector_store %arg5[%c0_28, %c0_29, %c0_30, %c0_31], %30 {strides = array<i32>} : memref<1x1x1x32xf32, #tpu.memory_space<vmem>>, vector<1x1x1x32xf32>,
    } else {
    }
    %c0 = arith.constant 0 : index
    %c0_1 = arith.constant 0 : index
    %c0_2 = arith.constant 0 : index
    %c0_3 = arith.constant 0 : index
    %c0_4 = arith.constant 0 : index
    %3 = vector.load %arg3[%c0, %c0_1, %c0_2, %c0_3, %c0_4] : memref<1x1x8x16x32xf32, #tpu.memory_space<vmem>>, vector<1x1x8x16x32xf32>
    %4 = vector.shape_cast %3 : vector<1x1x8x16x32xf32> to vector<8x16x32xf32>
    %5 = vector.shape_cast %4 : vector<8x16x32xf32> to vector<128x32xf32>
    %c0_5 = arith.constant 0 : index
    %c0_6 = arith.constant 0 : index
    %c0_7 = arith.constant 0 : index
    %c0_8 = arith.constant 0 : index
    %6 = vector.load %arg4[%c0_5, %c0_6, %c0_7, %c0_8] : memref<1x1x1x32xf32, #tpu.memory_space<vmem>>, vector<1x1x1x32xf32>
    %7 = vector.shape_cast %6 : vector<1x1x1x32xf32> to vector<1x32xf32>
    %cst = arith.constant dense<0.000000e+00> : vector<32xf32>
    %8 = vector.multi_reduction <add>, %5, %cst [0] : vector<128x32xf32> to vector<32xf32>
    %9 = vector.shape_cast %8 : vector<32xf32> to vector<1x32xf32>
    %10 = arith.addf %7, %9 : vector<1x32xf32>
    %c0_9 = arith.constant 0 : index
    %c0_10 = arith.constant 0 : index
    %c0_11 = arith.constant 0 : index
    %c0_12 = arith.constant 0 : index
    %11 = vector.load %arg4[%c0_9, %c0_10, %c0_11, %c0_12] : memref<1x1x1x32xf32, #tpu.memory_space<vmem>>, vector<1x1x1x32xf32>
    %12 = vector.shape_cast %11 : vector<1x1x1x32xf32> to vector<1x32xf32>
    %13 = vector.shape_cast %10 : vector<1x32xf32> to vector<1x1x1x32xf32>
    tpu.vector_store %arg4[%c0_9, %c0_10, %c0_11, %c0_12], %13 {strides = array<i32>} : memref<1x1x1x32xf32, #tpu.memory_space<vmem>>, vector<1x1x1x32xf32>,
    %c0_13 = arith.constant 0 : index
    %c0_14 = arith.constant 0 : index
    %c0_15 = arith.constant 0 : index
    %c0_16 = arith.constant 0 : index
    %14 = vector.load %arg5[%c0_13, %c0_14, %c0_15, %c0_16] : memref<1x1x1x32xf32, #tpu.memory_space<vmem>>, vector<1x1x1x32xf32>
    %15 = vector.shape_cast %14 : vector<1x1x1x32xf32> to vector<1x32xf32>
    %16 = arith.mulf %5, %5 : vector<128x32xf32>
    %cst_17 = arith.constant dense<0.000000e+00> : vector<32xf32>
    %17 = vector.multi_reduction <add>, %16, %cst_17 [0] : vector<128x32xf32> to vector<32xf32>
    %18 = vector.shape_cast %17 : vector<32xf32> to vector<1x32xf32>
    %19 = arith.addf %15, %18 : vector<1x32xf32>
    %c0_18 = arith.constant 0 : index
    %c0_19 = arith.constant 0 : index
    %c0_20 = arith.constant 0 : index
    %c0_21 = arith.constant 0 : index
    %20 = vector.load %arg5[%c0_18, %c0_19, %c0_20, %c0_21] : memref<1x1x1x32xf32, #tpu.memory_space<vmem>>, vector<1x1x1x32xf32>
    %21 = vector.shape_cast %20 : vector<1x1x1x32xf32> to vector<1x32xf32>
    %22 = vector.shape_cast %19 : vector<1x32xf32> to vector<1x1x1x32xf32>
    tpu.vector_store %arg5[%c0_18, %c0_19, %c0_20, %c0_21], %22 {strides = array<i32>} : memref<1x1x1x32xf32, #tpu.memory_space<vmem>>, vector<1x1x1x32xf32>,
    return
  }
  func.func @transform_0(%arg0: i32, %arg1: i32, %arg2: i32) -> (i32, i32, i32, i32, i32) {
    %c0_i32 = arith.constant 0 : i32
    %c0_i32_0 = arith.constant 0 : i32
    %c0_i32_1 = arith.constant 0 : i32
    return %arg0, %arg1, %arg2, %c0_i32, %c0_i32_0 : i32, i32, i32, i32, i32
  }
  func.func @transform_1(%arg0: i32, %arg1: i32, %arg2: i32) -> (i32, i32, i32, i32) {
    %c0_i32 = arith.constant 0 : i32
    %c0_i32_0 = arith.constant 0 : i32
    %c0_i32_1 = arith.constant 0 : i32
    return %arg0, %arg1, %c0_i32, %c0_i32_0 : i32, i32, i32, i32
  }
  func.func @transform_2(%arg0: i32, %arg1: i32, %arg2: i32) -> (i32, i32, i32, i32) {
    %c0_i32 = arith.constant 0 : i32
    %c0_i32_0 = arith.constant 0 : i32
    %c0_i32_1 = arith.constant 0 : i32
    return %arg0, %arg1, %c0_i32, %c0_i32_0 : i32, i32, i32, i32
  }
}

module attributes {stable_mosaic.version = 11 : i64} {
  func.func @_frame_sums_kernel(%arg0: i32, %arg1: i32, %arg2: i32, %arg3: memref<1x1x8x16x32xbf16, #tpu.memory_space<vmem>>, %arg4: memref<1x1x1x32xf32, #tpu.memory_space<vmem>>, %arg5: memref<1x1x1x32xf32, #tpu.memory_space<vmem>>) attributes {dimension_semantics = [#tpu.dimension_semantics<parallel>, #tpu.dimension_semantics<parallel>, #tpu.dimension_semantics<arbitrary>], iteration_bounds = array<i64: 2, 4, 2>, scalar_prefetch = 0 : i64, scratch_operands = 0 : i64, tpu.core_type = #tpu.core_type<tc>, window_params = [{transform_indices = @transform_0, window_bounds = array<i64: 1, 1, 8, 16, 32>}, {transform_indices = @transform_1, window_bounds = array<i64: 1, 1, 1, 32>}, {transform_indices = @transform_2, window_bounds = array<i64: 1, 1, 1, 32>}]} {
    %c0_i32 = arith.constant 0 : i32
    %0 = arith.cmpi eq, %arg2, %c0_i32 : i32
    %1 = arith.extui %0 : i1 to i32
    %c0_i32_0 = arith.constant 0 : i32
    %2 = arith.cmpi ne, %1, %c0_i32_0 : i32
    scf.if %2 {
      %cst_22 = arith.constant 0.000000e+00 : f32
      %24 = vector.broadcast %cst_22 : f32 to vector<1x32xf32>
      %c0_23 = arith.constant 0 : index
      %c0_24 = arith.constant 0 : index
      %c0_25 = arith.constant 0 : index
      %c0_26 = arith.constant 0 : index
      %25 = vector.load %arg4[%c0_23, %c0_24, %c0_25, %c0_26] : memref<1x1x1x32xf32, #tpu.memory_space<vmem>>, vector<1x1x1x32xf32>
      %26 = vector.shape_cast %25 : vector<1x1x1x32xf32> to vector<1x32xf32>
      %27 = vector.shape_cast %24 : vector<1x32xf32> to vector<1x1x1x32xf32>
      tpu.vector_store %arg4[%c0_23, %c0_24, %c0_25, %c0_26], %27 {strides = array<i32>} : memref<1x1x1x32xf32, #tpu.memory_space<vmem>>, vector<1x1x1x32xf32>,
      %cst_27 = arith.constant 0.000000e+00 : f32
      %28 = vector.broadcast %cst_27 : f32 to vector<1x32xf32>
      %c0_28 = arith.constant 0 : index
      %c0_29 = arith.constant 0 : index
      %c0_30 = arith.constant 0 : index
      %c0_31 = arith.constant 0 : index
      %29 = vector.load %arg5[%c0_28, %c0_29, %c0_30, %c0_31] : memref<1x1x1x32xf32, #tpu.memory_space<vmem>>, vector<1x1x1x32xf32>
      %30 = vector.shape_cast %29 : vector<1x1x1x32xf32> to vector<1x32xf32>
      %31 = vector.shape_cast %28 : vector<1x32xf32> to vector<1x1x1x32xf32>
      tpu.vector_store %arg5[%c0_28, %c0_29, %c0_30, %c0_31], %31 {strides = array<i32>} : memref<1x1x1x32xf32, #tpu.memory_space<vmem>>, vector<1x1x1x32xf32>,
    } else {
    }
    %c0 = arith.constant 0 : index
    %c0_1 = arith.constant 0 : index
    %c0_2 = arith.constant 0 : index
    %c0_3 = arith.constant 0 : index
    %c0_4 = arith.constant 0 : index
    %3 = vector.load %arg3[%c0, %c0_1, %c0_2, %c0_3, %c0_4] : memref<1x1x8x16x32xbf16, #tpu.memory_space<vmem>>, vector<1x1x8x16x32xbf16>
    %4 = vector.shape_cast %3 : vector<1x1x8x16x32xbf16> to vector<8x16x32xbf16>
    %5 = arith.extf %4 : vector<8x16x32xbf16> to vector<8x16x32xf32>
    %6 = vector.shape_cast %5 : vector<8x16x32xf32> to vector<128x32xf32>
    %c0_5 = arith.constant 0 : index
    %c0_6 = arith.constant 0 : index
    %c0_7 = arith.constant 0 : index
    %c0_8 = arith.constant 0 : index
    %7 = vector.load %arg4[%c0_5, %c0_6, %c0_7, %c0_8] : memref<1x1x1x32xf32, #tpu.memory_space<vmem>>, vector<1x1x1x32xf32>
    %8 = vector.shape_cast %7 : vector<1x1x1x32xf32> to vector<1x32xf32>
    %cst = arith.constant dense<0.000000e+00> : vector<32xf32>
    %9 = vector.multi_reduction <add>, %6, %cst [0] : vector<128x32xf32> to vector<32xf32>
    %10 = vector.shape_cast %9 : vector<32xf32> to vector<1x32xf32>
    %11 = arith.addf %8, %10 : vector<1x32xf32>
    %c0_9 = arith.constant 0 : index
    %c0_10 = arith.constant 0 : index
    %c0_11 = arith.constant 0 : index
    %c0_12 = arith.constant 0 : index
    %12 = vector.load %arg4[%c0_9, %c0_10, %c0_11, %c0_12] : memref<1x1x1x32xf32, #tpu.memory_space<vmem>>, vector<1x1x1x32xf32>
    %13 = vector.shape_cast %12 : vector<1x1x1x32xf32> to vector<1x32xf32>
    %14 = vector.shape_cast %11 : vector<1x32xf32> to vector<1x1x1x32xf32>
    tpu.vector_store %arg4[%c0_9, %c0_10, %c0_11, %c0_12], %14 {strides = array<i32>} : memref<1x1x1x32xf32, #tpu.memory_space<vmem>>, vector<1x1x1x32xf32>,
    %c0_13 = arith.constant 0 : index
    %c0_14 = arith.constant 0 : index
    %c0_15 = arith.constant 0 : index
    %c0_16 = arith.constant 0 : index
    %15 = vector.load %arg5[%c0_13, %c0_14, %c0_15, %c0_16] : memref<1x1x1x32xf32, #tpu.memory_space<vmem>>, vector<1x1x1x32xf32>
    %16 = vector.shape_cast %15 : vector<1x1x1x32xf32> to vector<1x32xf32>
    %17 = arith.mulf %6, %6 : vector<128x32xf32>
    %cst_17 = arith.constant dense<0.000000e+00> : vector<32xf32>
    %18 = vector.multi_reduction <add>, %17, %cst_17 [0] : vector<128x32xf32> to vector<32xf32>
    %19 = vector.shape_cast %18 : vector<32xf32> to vector<1x32xf32>
    %20 = arith.addf %16, %19 : vector<1x32xf32>
    %c0_18 = arith.constant 0 : index
    %c0_19 = arith.constant 0 : index
    %c0_20 = arith.constant 0 : index
    %c0_21 = arith.constant 0 : index
    %21 = vector.load %arg5[%c0_18, %c0_19, %c0_20, %c0_21] : memref<1x1x1x32xf32, #tpu.memory_space<vmem>>, vector<1x1x1x32xf32>
    %22 = vector.shape_cast %21 : vector<1x1x1x32xf32> to vector<1x32xf32>
    %23 = vector.shape_cast %20 : vector<1x32xf32> to vector<1x1x1x32xf32>
    tpu.vector_store %arg5[%c0_18, %c0_19, %c0_20, %c0_21], %23 {strides = array<i32>} : memref<1x1x1x32xf32, #tpu.memory_space<vmem>>, vector<1x1x1x32xf32>,
    return
  }
  func.func @transform_0(%arg0: i32, %arg1: i32, %arg2: i32) -> (i32, i32, i32, i32, i32) {
    %c0_i32 = arith.constant 0 : i32
    %c0_i32_0 = arith.constant 0 : i32
    %c0_i32_1 = arith.constant 0 : i32
    return %arg0, %arg1, %arg2, %c0_i32, %c0_i32_0 : i32, i32, i32, i32, i32
  }
  func.func @transform_1(%arg0: i32, %arg1: i32, %arg2: i32) -> (i32, i32, i32, i32) {
    %c0_i32 = arith.constant 0 : i32
    %c0_i32_0 = arith.constant 0 : i32
    %c0_i32_1 = arith.constant 0 : i32
    return %arg0, %arg1, %c0_i32, %c0_i32_0 : i32, i32, i32, i32
  }
  func.func @transform_2(%arg0: i32, %arg1: i32, %arg2: i32) -> (i32, i32, i32, i32) {
    %c0_i32 = arith.constant 0 : i32
    %c0_i32_0 = arith.constant 0 : i32
    %c0_i32_1 = arith.constant 0 : i32
    return %arg0, %arg1, %c0_i32, %c0_i32_0 : i32, i32, i32, i32
  }
}

module attributes {stable_mosaic.version = 11 : i64} {
  func.func @_norm_silu_causal_conv_kernel(%arg0: i32, %arg1: i32, %arg2: i32, %arg3: memref<1x1x8x16x32xf32, #tpu.memory_space<vmem>>, %arg4: memref<1x1x1x16x32xf32, #tpu.memory_space<vmem>>, %arg5: memref<1x1x1x16x32xf32, #tpu.memory_space<vmem>>, %arg6: memref<1x1x1x32xf32, #tpu.memory_space<vmem>>, %arg7: memref<1x1x1x32xf32, #tpu.memory_space<vmem>>, %arg8: memref<3x3x96x32xbf16, #tpu.memory_space<vmem>>, %arg9: memref<1x32xf32, #tpu.memory_space<vmem>>, %arg10: memref<1x1x128x32xbf16, #tpu.memory_space<vmem>>, %arg11: memref<3x10x32x32xbf16, #tpu.memory_space<vmem>>) attributes {dimension_semantics = [#tpu.dimension_semantics<parallel>, #tpu.dimension_semantics<parallel>, #tpu.dimension_semantics<arbitrary>], iteration_bounds = array<i64: 2, 2, 4>, scalar_prefetch = 0 : i64, scratch_operands = 1 : i64, tpu.core_type = #tpu.core_type<tc>, window_params = [{transform_indices = @transform_0, window_bounds = array<i64: 1, 1, 8, 16, 32>}, {transform_indices = @transform_1, window_bounds = array<i64: 1, 1, 1, 16, 32>}, {transform_indices = @transform_2, window_bounds = array<i64: 1, 1, 1, 16, 32>}, {transform_indices = @transform_3, window_bounds = array<i64: 1, 1, 1, 32>}, {transform_indices = @transform_4, window_bounds = array<i64: 1, 1, 1, 32>}, {pipeline_mode = #tpu.pipeline_mode<synchronous>, transform_indices = @transform_5, window_bounds = array<i64: 3, 3, 96, 32>}, {pipeline_mode = #tpu.pipeline_mode<synchronous>, transform_indices = @transform_6, window_bounds = array<i64: 1, 32>}, {transform_indices = @transform_7, window_bounds = array<i64: 1, 1, 128, 32>}]} {
    %c0_i32 = arith.constant 0 : i32
    %0 = arith.cmpi eq, %arg2, %c0_i32 : i32
    %1 = arith.extui %0 : i1 to i32
    %c0_i32_0 = arith.constant 0 : i32
    %2 = arith.cmpi ne, %1, %c0_i32_0 : i32
    scf.if %2 {
      %cst_139 = arith.constant 0.000000e+00 : bf16
      %228 = vector.broadcast %cst_139 : bf16 to vector<3x10x32x32xbf16>
      %c0_140 = arith.constant 0 : index
      %c0_141 = arith.constant 0 : index
      %c0_142 = arith.constant 0 : index
      %c0_143 = arith.constant 0 : index
      %229 = vector.load %arg11[%c0_140, %c0_141, %c0_142, %c0_143] : memref<3x10x32x32xbf16, #tpu.memory_space<vmem>>, vector<3x10x32x32xbf16>
      tpu.vector_store %arg11[%c0_140, %c0_141, %c0_142, %c0_143], %228 {strides = array<i32>} : memref<3x10x32x32xbf16, #tpu.memory_space<vmem>>, vector<3x10x32x32xbf16>,
    } else {
    }
    %c0 = arith.constant 0 : index
    %c0_1 = arith.constant 0 : index
    %c0_2 = arith.constant 0 : index
    %c0_3 = arith.constant 0 : index
    %3 = vector.load %arg6[%c0, %c0_1, %c0_2, %c0_3] : memref<1x1x1x32xf32, #tpu.memory_space<vmem>>, vector<1x1x1x32xf32>
    %4 = vector.shape_cast %3 : vector<1x1x1x32xf32> to vector<1x32xf32>
    %5 = vector.shape_cast %4 : vector<1x32xf32> to vector<1x1x32xf32>
    %c0_4 = arith.constant 0 : index
    %c0_5 = arith.constant 0 : index
    %c0_6 = arith.constant 0 : index
    %c0_7 = arith.constant 0 : index
    %6 = vector.load %arg7[%c0_4, %c0_5, %c0_6, %c0_7] : memref<1x1x1x32xf32, #tpu.memory_space<vmem>>, vector<1x1x1x32xf32>
    %7 = vector.shape_cast %6 : vector<1x1x1x32xf32> to vector<1x32xf32>
    %8 = vector.shape_cast %7 : vector<1x32xf32> to vector<1x1x32xf32>
    %c3_i32 = arith.constant 3 : i32
    %c0_i32_8 = arith.constant 0 : i32
    %9 = arith.cmpi eq, %c3_i32, %c0_i32_8 : i32
    %c1_i32 = arith.constant 1 : i32
    %10 = arith.select %9, %c1_i32, %c3_i32 : i32
    %11 = arith.remsi %arg2, %10 : i32
    %c0_i32_9 = arith.constant 0 : i32
    %12 = arith.cmpi ne, %11, %c0_i32_9 : i32
    %c0_i32_10 = arith.constant 0 : i32
    %13 = arith.cmpi slt, %11, %c0_i32_10 : i32
    %c0_i32_11 = arith.constant 0 : i32
    %14 = arith.cmpi slt, %10, %c0_i32_11 : i32
    %15 = arith.xori %13, %14 : i1
    %16 = arith.andi %15, %12 : i1
    %17 = arith.addi %11, %10 : i32
    %18 = arith.select %16, %17, %11 : i32
    %c0_12 = arith.constant 0 : index
    %c0_13 = arith.constant 0 : index
    %c0_14 = arith.constant 0 : index
    %c0_15 = arith.constant 0 : index
    %c0_16 = arith.constant 0 : index
    %19 = vector.load %arg3[%c0_12, %c0_13, %c0_14, %c0_15, %c0_16] : memref<1x1x8x16x32xf32, #tpu.memory_space<vmem>>, vector<1x1x8x16x32xf32>
    %20 = vector.shape_cast %19 : vector<1x1x8x16x32xf32> to vector<8x16x32xf32>
    %21 = vector.broadcast %5 : vector<1x1x32xf32> to vector<8x16x32xf32>
    %22 = arith.mulf %20, %21 : vector<8x16x32xf32>
    %23 = vector.broadcast %8 : vector<1x1x32xf32> to vector<8x16x32xf32>
    %24 = arith.addf %22, %23 : vector<8x16x32xf32>
    %25 = arith.negf %24 : vector<8x16x32xf32>
    %26 = math.exp %25 : vector<8x16x32xf32>
    %cst = arith.constant 1.000000e+00 : f32
    %27 = vector.broadcast %cst : f32 to vector<8x16x32xf32>
    %28 = arith.addf %27, %26 : vector<8x16x32xf32>
    %29 = arith.divf %27, %28 : vector<8x16x32xf32>
    %30 = arith.mulf %24, %29 : vector<8x16x32xf32>
    %31 = arith.truncf %30 : vector<8x16x32xf32> to vector<8x16x32xbf16>
    %32 = arith.index_cast %18 : i32 to index
    %c1 = arith.constant 1 : index
    %c8 = arith.constant 8 : index
    %c0_17 = arith.constant 0 : index
    %33 = vector.load %arg11[%32, %c1, %c8, %c0_17] : memref<3x10x32x32xbf16, #tpu.memory_space<vmem>>, vector<1x8x16x32xbf16>
    %34 = vector.shape_cast %33 : vector<1x8x16x32xbf16> to vector<8x16x32xbf16>
    %35 = vector.shape_cast %31 : vector<8x16x32xbf16> to vector<1x8x16x32xbf16>
    tpu.vector_store %arg11[%32, %c1, %c8, %c0_17], %35 {strides = array<i32>} : memref<3x10x32x32xbf16, #tpu.memory_space<vmem>>, vector<1x8x16x32xbf16>,
    %c0_18 = arith.constant 0 : index
    %c0_19 = arith.constant 0 : index
    %c0_20 = arith.constant 0 : index
    %c0_21 = arith.constant 0 : index
    %c0_22 = arith.constant 0 : index
    %36 = vector.load %arg4[%c0_18, %c0_19, %c0_20, %c0_21, %c0_22] : memref<1x1x1x16x32xf32, #tpu.memory_space<vmem>>, vector<1x1x1x16x32xf32>
    %37 = vector.shape_cast %36 : vector<1x1x1x16x32xf32> to vector<1x16x32xf32>
    %38 = vector.broadcast %5 : vector<1x1x32xf32> to vector<1x16x32xf32>
    %39 = arith.mulf %37, %38 : vector<1x16x32xf32>
    %40 = vector.broadcast %8 : vector<1x1x32xf32> to vector<1x16x32xf32>
    %41 = arith.addf %39, %40 : vector<1x16x32xf32>
    %42 = arith.negf %41 : vector<1x16x32xf32>
    %43 = math.exp %42 : vector<1x16x32xf32>
    %cst_23 = arith.constant 1.000000e+00 : f32
    %44 = vector.broadcast %cst_23 : f32 to vector<1x16x32xf32>
    %45 = arith.addf %44, %43 : vector<1x16x32xf32>
    %46 = arith.divf %44, %45 : vector<1x16x32xf32>
    %47 = arith.mulf %41, %46 : vector<1x16x32xf32>
    %48 = arith.truncf %47 : vector<1x16x32xf32> to vector<1x16x32xbf16>
    %c0_i32_24 = arith.constant 0 : i32
    %49 = arith.cmpi sgt, %arg1, %c0_i32_24 : i32
    %cst_25 = arith.constant 0.000000e+00 : bf16
    %50 = vector.broadcast %cst_25 : bf16 to vector<1x16x32xbf16>
    %51 = arith.select %49, %48, %50 : vector<1x16x32xbf16>
    %c0_26 = arith.constant 0 : index
    %c0_27 = arith.constant 0 : index
    %c0_28 = arith.constant 0 : index
    %c0_29 = arith.constant 0 : index
    %c0_30 = arith.constant 0 : index
    %52 = vector.load %arg5[%c0_26, %c0_27, %c0_28, %c0_29, %c0_30] : memref<1x1x1x16x32xf32, #tpu.memory_space<vmem>>, vector<1x1x1x16x32xf32>
    %53 = vector.shape_cast %52 : vector<1x1x1x16x32xf32> to vector<1x16x32xf32>
    %54 = vector.broadcast %5 : vector<1x1x32xf32> to vector<1x16x32xf32>
    %55 = arith.mulf %53, %54 : vector<1x16x32xf32>
    %56 = vector.broadcast %8 : vector<1x1x32xf32> to vector<1x16x32xf32>
    %57 = arith.addf %55, %56 : vector<1x16x32xf32>
    %58 = arith.negf %57 : vector<1x16x32xf32>
    %59 = math.exp %58 : vector<1x16x32xf32>
    %cst_31 = arith.constant 1.000000e+00 : f32
    %60 = vector.broadcast %cst_31 : f32 to vector<1x16x32xf32>
    %61 = arith.addf %60, %59 : vector<1x16x32xf32>
    %62 = arith.divf %60, %61 : vector<1x16x32xf32>
    %63 = arith.mulf %57, %62 : vector<1x16x32xf32>
    %64 = arith.truncf %63 : vector<1x16x32xf32> to vector<1x16x32xbf16>
    %c1_i32_32 = arith.constant 1 : i32
    %65 = arith.cmpi slt, %arg1, %c1_i32_32 : i32
    %cst_33 = arith.constant 0.000000e+00 : bf16
    %66 = vector.broadcast %cst_33 : bf16 to vector<1x16x32xbf16>
    %67 = arith.select %65, %64, %66 : vector<1x16x32xbf16>
    %68 = arith.index_cast %18 : i32 to index
    %c0_34 = arith.constant 0 : index
    %c8_35 = arith.constant 8 : index
    %c0_36 = arith.constant 0 : index
    %69 = vector.load %arg11[%68, %c0_34, %c8_35, %c0_36] : memref<3x10x32x32xbf16, #tpu.memory_space<vmem>>, vector<1x1x16x32xbf16>
    %70 = vector.shape_cast %69 : vector<1x1x16x32xbf16> to vector<1x16x32xbf16>
    %71 = vector.shape_cast %51 : vector<1x16x32xbf16> to vector<1x1x16x32xbf16>
    tpu.vector_store %arg11[%68, %c0_34, %c8_35, %c0_36], %71 {strides = array<i32>} : memref<3x10x32x32xbf16, #tpu.memory_space<vmem>>, vector<1x1x16x32xbf16>,
    %72 = arith.index_cast %18 : i32 to index
    %c9 = arith.constant 9 : index
    %c8_37 = arith.constant 8 : index
    %c0_38 = arith.constant 0 : index
    %73 = vector.load %arg11[%72, %c9, %c8_37, %c0_38] : memref<3x10x32x32xbf16, #tpu.memory_space<vmem>>, vector<1x1x16x32xbf16>
    %74 = vector.shape_cast %73 : vector<1x1x16x32xbf16> to vector<1x16x32xbf16>
    %75 = vector.shape_cast %67 : vector<1x16x32xbf16> to vector<1x1x16x32xbf16>
    tpu.vector_store %arg11[%72, %c9, %c8_37, %c0_38], %75 {strides = array<i32>} : memref<3x10x32x32xbf16, #tpu.memory_space<vmem>>, vector<1x1x16x32xbf16>,
    %cst_39 = arith.constant 0.000000e+00 : f32
    %76 = vector.broadcast %cst_39 : f32 to vector<128x32xf32>
    %c0_i32_40 = arith.constant 0 : i32
    %77 = arith.addi %arg2, %c0_i32_40 : i32
    %c1_i32_41 = arith.constant 1 : i32
    %78 = arith.addi %77, %c1_i32_41 : i32
    %c3_i32_42 = arith.constant 3 : i32
    %c0_i32_43 = arith.constant 0 : i32
    %79 = arith.cmpi eq, %c3_i32_42, %c0_i32_43 : i32
    %c1_i32_44 = arith.constant 1 : i32
    %80 = arith.select %79, %c1_i32_44, %c3_i32_42 : i32
    %81 = arith.remsi %78, %80 : i32
    %c0_i32_45 = arith.constant 0 : i32
    %82 = arith.cmpi ne, %81, %c0_i32_45 : i32
    %c0_i32_46 = arith.constant 0 : i32
    %83 = arith.cmpi slt, %81, %c0_i32_46 : i32
    %c0_i32_47 = arith.constant 0 : i32
    %84 = arith.cmpi slt, %80, %c0_i32_47 : i32
    %85 = arith.xori %83, %84 : i1
    %86 = arith.andi %85, %82 : i1
    %87 = arith.addi %81, %80 : i32
    %88 = arith.select %86, %87, %81 : i32
    %89 = arith.index_cast %88 : i32 to index
    %c0_48 = arith.constant 0 : index
    %c7 = arith.constant 7 : index
    %c0_49 = arith.constant 0 : index
    %90 = vector.load %arg11[%89, %c0_48, %c7, %c0_49] : memref<3x10x32x32xbf16, #tpu.memory_space<vmem>>, vector<1x10x16x32xbf16>
    %91 = vector.shape_cast %90 : vector<1x10x16x32xbf16> to vector<10x16x32xbf16>
    %92 = vector.extract_strided_slice %91 {offsets = [0, 0, 0], sizes = [8, 16, 32], strides = [1, 1, 1]} : vector<10x16x32xbf16> to vector<8x16x32xbf16>
    %93 = vector.extract_strided_slice %91 {offsets = [1, 0, 0], sizes = [8, 16, 32], strides = [1, 1, 1]} : vector<10x16x32xbf16> to vector<8x16x32xbf16>
    %94 = vector.extract_strided_slice %91 {offsets = [2, 0, 0], sizes = [8, 16, 32], strides = [1, 1, 1]} : vector<10x16x32xbf16> to vector<8x16x32xbf16>
    %95 = tpu.concatenate %92, %93, %94 in 2 : vector<8x16x32xbf16>, vector<8x16x32xbf16>, vector<8x16x32xbf16> -> vector<8x16x96xbf16>
    %96 = vector.shape_cast %95 : vector<8x16x96xbf16> to vector<128x96xbf16>
    %c0_50 = arith.constant 0 : index
    %c0_51 = arith.constant 0 : index
    %c0_52 = arith.constant 0 : index
    %c0_53 = arith.constant 0 : index
    %97 = vector.load %arg8[%c0_50, %c0_51, %c0_52, %c0_53] : memref<3x3x96x32xbf16, #tpu.memory_space<vmem>>, vector<1x1x96x32xbf16>
    %98 = vector.shape_cast %97 : vector<1x1x96x32xbf16> to vector<96x32xbf16>
    %cst_54 = arith.constant dense<0.000000e+00> : vector<128x32xf32>
    %99 = tpu.matmul %96, %98, %cst_54 {dimension_numbers = #tpu.dot_dimension_numbers<[1], [0], [0], [1], [0, 0, 1, 1], [], []>} : vector<128x96xbf16>, vector<96x32xbf16>, vector<128x32xf32> -> vector<128x32xf32>
    %100 = arith.addf %76, %99 : vector<128x32xf32>
    %101 = arith.index_cast %88 : i32 to index
    %c0_55 = arith.constant 0 : index
    %c8_56 = arith.constant 8 : index
    %c0_57 = arith.constant 0 : index
    %102 = vector.load %arg11[%101, %c0_55, %c8_56, %c0_57] : memref<3x10x32x32xbf16, #tpu.memory_space<vmem>>, vector<1x10x16x32xbf16>
    %103 = vector.shape_cast %102 : vector<1x10x16x32xbf16> to vector<10x16x32xbf16>
    %104 = vector.extract_strided_slice %103 {offsets = [0, 0, 0], sizes = [8, 16, 32], strides = [1, 1, 1]} : vector<10x16x32xbf16> to vector<8x16x32xbf16>
    %105 = vector.extract_strided_slice %103 {offsets = [1, 0, 0], sizes = [8, 16, 32], strides = [1, 1, 1]} : vector<10x16x32xbf16> to vector<8x16x32xbf16>
    %106 = vector.extract_strided_slice %103 {offsets = [2, 0, 0], sizes = [8, 16, 32], strides = [1, 1, 1]} : vector<10x16x32xbf16> to vector<8x16x32xbf16>
    %107 = tpu.concatenate %104, %105, %106 in 2 : vector<8x16x32xbf16>, vector<8x16x32xbf16>, vector<8x16x32xbf16> -> vector<8x16x96xbf16>
    %108 = vector.shape_cast %107 : vector<8x16x96xbf16> to vector<128x96xbf16>
    %c0_58 = arith.constant 0 : index
    %c1_59 = arith.constant 1 : index
    %c0_60 = arith.constant 0 : index
    %c0_61 = arith.constant 0 : index
    %109 = vector.load %arg8[%c0_58, %c1_59, %c0_60, %c0_61] : memref<3x3x96x32xbf16, #tpu.memory_space<vmem>>, vector<1x1x96x32xbf16>
    %110 = vector.shape_cast %109 : vector<1x1x96x32xbf16> to vector<96x32xbf16>
    %cst_62 = arith.constant dense<0.000000e+00> : vector<128x32xf32>
    %111 = tpu.matmul %108, %110, %cst_62 {dimension_numbers = #tpu.dot_dimension_numbers<[1], [0], [0], [1], [0, 0, 1, 1], [], []>} : vector<128x96xbf16>, vector<96x32xbf16>, vector<128x32xf32> -> vector<128x32xf32>
    %112 = arith.addf %100, %111 : vector<128x32xf32>
    %113 = arith.index_cast %88 : i32 to index
    %c0_63 = arith.constant 0 : index
    %c9_64 = arith.constant 9 : index
    %c0_65 = arith.constant 0 : index
    %114 = vector.load %arg11[%113, %c0_63, %c9_64, %c0_65] : memref<3x10x32x32xbf16, #tpu.memory_space<vmem>>, vector<1x10x16x32xbf16>
    %115 = vector.shape_cast %114 : vector<1x10x16x32xbf16> to vector<10x16x32xbf16>
    %116 = vector.extract_strided_slice %115 {offsets = [0, 0, 0], sizes = [8, 16, 32], strides = [1, 1, 1]} : vector<10x16x32xbf16> to vector<8x16x32xbf16>
    %117 = vector.extract_strided_slice %115 {offsets = [1, 0, 0], sizes = [8, 16, 32], strides = [1, 1, 1]} : vector<10x16x32xbf16> to vector<8x16x32xbf16>
    %118 = vector.extract_strided_slice %115 {offsets = [2, 0, 0], sizes = [8, 16, 32], strides = [1, 1, 1]} : vector<10x16x32xbf16> to vector<8x16x32xbf16>
    %119 = tpu.concatenate %116, %117, %118 in 2 : vector<8x16x32xbf16>, vector<8x16x32xbf16>, vector<8x16x32xbf16> -> vector<8x16x96xbf16>
    %120 = vector.shape_cast %119 : vector<8x16x96xbf16> to vector<128x96xbf16>
    %c0_66 = arith.constant 0 : index
    %c2 = arith.constant 2 : index
    %c0_67 = arith.constant 0 : index
    %c0_68 = arith.constant 0 : index
    %121 = vector.load %arg8[%c0_66, %c2, %c0_67, %c0_68] : memref<3x3x96x32xbf16, #tpu.memory_space<vmem>>, vector<1x1x96x32xbf16>
    %122 = vector.shape_cast %121 : vector<1x1x96x32xbf16> to vector<96x32xbf16>
    %cst_69 = arith.constant dense<0.000000e+00> : vector<128x32xf32>
    %123 = tpu.matmul %120, %122, %cst_69 {dimension_numbers = #tpu.dot_dimension_numbers<[1], [0], [0], [1], [0, 0, 1, 1], [], []>} : vector<128x96xbf16>, vector<96x32xbf16>, vector<128x32xf32> -> vector<128x32xf32>
    %124 = arith.addf %112, %123 : vector<128x32xf32>
    %c1_i32_70 = arith.constant 1 : i32
    %125 = arith.addi %arg2, %c1_i32_70 : i32
    %c1_i32_71 = arith.constant 1 : i32
    %126 = arith.addi %125, %c1_i32_71 : i32
    %c3_i32_72 = arith.constant 3 : i32
    %c0_i32_73 = arith.constant 0 : i32
    %127 = arith.cmpi eq, %c3_i32_72, %c0_i32_73 : i32
    %c1_i32_74 = arith.constant 1 : i32
    %128 = arith.select %127, %c1_i32_74, %c3_i32_72 : i32
    %129 = arith.remsi %126, %128 : i32
    %c0_i32_75 = arith.constant 0 : i32
    %130 = arith.cmpi ne, %129, %c0_i32_75 : i32
    %c0_i32_76 = arith.constant 0 : i32
    %131 = arith.cmpi slt, %129, %c0_i32_76 : i32
    %c0_i32_77 = arith.constant 0 : i32
    %132 = arith.cmpi slt, %128, %c0_i32_77 : i32
    %133 = arith.xori %131, %132 : i1
    %134 = arith.andi %133, %130 : i1
    %135 = arith.addi %129, %128 : i32
    %136 = arith.select %134, %135, %129 : i32
    %137 = arith.index_cast %136 : i32 to index
    %c0_78 = arith.constant 0 : index
    %c7_79 = arith.constant 7 : index
    %c0_80 = arith.constant 0 : index
    %138 = vector.load %arg11[%137, %c0_78, %c7_79, %c0_80] : memref<3x10x32x32xbf16, #tpu.memory_space<vmem>>, vector<1x10x16x32xbf16>
    %139 = vector.shape_cast %138 : vector<1x10x16x32xbf16> to vector<10x16x32xbf16>
    %140 = vector.extract_strided_slice %139 {offsets = [0, 0, 0], sizes = [8, 16, 32], strides = [1, 1, 1]} : vector<10x16x32xbf16> to vector<8x16x32xbf16>
    %141 = vector.extract_strided_slice %139 {offsets = [1, 0, 0], sizes = [8, 16, 32], strides = [1, 1, 1]} : vector<10x16x32xbf16> to vector<8x16x32xbf16>
    %142 = vector.extract_strided_slice %139 {offsets = [2, 0, 0], sizes = [8, 16, 32], strides = [1, 1, 1]} : vector<10x16x32xbf16> to vector<8x16x32xbf16>
    %143 = tpu.concatenate %140, %141, %142 in 2 : vector<8x16x32xbf16>, vector<8x16x32xbf16>, vector<8x16x32xbf16> -> vector<8x16x96xbf16>
    %144 = vector.shape_cast %143 : vector<8x16x96xbf16> to vector<128x96xbf16>
    %c1_81 = arith.constant 1 : index
    %c0_82 = arith.constant 0 : index
    %c0_83 = arith.constant 0 : index
    %c0_84 = arith.constant 0 : index
    %145 = vector.load %arg8[%c1_81, %c0_82, %c0_83, %c0_84] : memref<3x3x96x32xbf16, #tpu.memory_space<vmem>>, vector<1x1x96x32xbf16>
    %146 = vector.shape_cast %145 : vector<1x1x96x32xbf16> to vector<96x32xbf16>
    %cst_85 = arith.constant dense<0.000000e+00> : vector<128x32xf32>
    %147 = tpu.matmul %144, %146, %cst_85 {dimension_numbers = #tpu.dot_dimension_numbers<[1], [0], [0], [1], [0, 0, 1, 1], [], []>} : vector<128x96xbf16>, vector<96x32xbf16>, vector<128x32xf32> -> vector<128x32xf32>
    %148 = arith.addf %124, %147 : vector<128x32xf32>
    %149 = arith.index_cast %136 : i32 to index
    %c0_86 = arith.constant 0 : index
    %c8_87 = arith.constant 8 : index
    %c0_88 = arith.constant 0 : index
    %150 = vector.load %arg11[%149, %c0_86, %c8_87, %c0_88] : memref<3x10x32x32xbf16, #tpu.memory_space<vmem>>, vector<1x10x16x32xbf16>
    %151 = vector.shape_cast %150 : vector<1x10x16x32xbf16> to vector<10x16x32xbf16>
    %152 = vector.extract_strided_slice %151 {offsets = [0, 0, 0], sizes = [8, 16, 32], strides = [1, 1, 1]} : vector<10x16x32xbf16> to vector<8x16x32xbf16>
    %153 = vector.extract_strided_slice %151 {offsets = [1, 0, 0], sizes = [8, 16, 32], strides = [1, 1, 1]} : vector<10x16x32xbf16> to vector<8x16x32xbf16>
    %154 = vector.extract_strided_slice %151 {offsets = [2, 0, 0], sizes = [8, 16, 32], strides = [1, 1, 1]} : vector<10x16x32xbf16> to vector<8x16x32xbf16>
    %155 = tpu.concatenate %152, %153, %154 in 2 : vector<8x16x32xbf16>, vector<8x16x32xbf16>, vector<8x16x32xbf16> -> vector<8x16x96xbf16>
    %156 = vector.shape_cast %155 : vector<8x16x96xbf16> to vector<128x96xbf16>
    %c1_89 = arith.constant 1 : index
    %c1_90 = arith.constant 1 : index
    %c0_91 = arith.constant 0 : index
    %c0_92 = arith.constant 0 : index
    %157 = vector.load %arg8[%c1_89, %c1_90, %c0_91, %c0_92] : memref<3x3x96x32xbf16, #tpu.memory_space<vmem>>, vector<1x1x96x32xbf16>
    %158 = vector.shape_cast %157 : vector<1x1x96x32xbf16> to vector<96x32xbf16>
    %cst_93 = arith.constant dense<0.000000e+00> : vector<128x32xf32>
    %159 = tpu.matmul %156, %158, %cst_93 {dimension_numbers = #tpu.dot_dimension_numbers<[1], [0], [0], [1], [0, 0, 1, 1], [], []>} : vector<128x96xbf16>, vector<96x32xbf16>, vector<128x32xf32> -> vector<128x32xf32>
    %160 = arith.addf %148, %159 : vector<128x32xf32>
    %161 = arith.index_cast %136 : i32 to index
    %c0_94 = arith.constant 0 : index
    %c9_95 = arith.constant 9 : index
    %c0_96 = arith.constant 0 : index
    %162 = vector.load %arg11[%161, %c0_94, %c9_95, %c0_96] : memref<3x10x32x32xbf16, #tpu.memory_space<vmem>>, vector<1x10x16x32xbf16>
    %163 = vector.shape_cast %162 : vector<1x10x16x32xbf16> to vector<10x16x32xbf16>
    %164 = vector.extract_strided_slice %163 {offsets = [0, 0, 0], sizes = [8, 16, 32], strides = [1, 1, 1]} : vector<10x16x32xbf16> to vector<8x16x32xbf16>
    %165 = vector.extract_strided_slice %163 {offsets = [1, 0, 0], sizes = [8, 16, 32], strides = [1, 1, 1]} : vector<10x16x32xbf16> to vector<8x16x32xbf16>
    %166 = vector.extract_strided_slice %163 {offsets = [2, 0, 0], sizes = [8, 16, 32], strides = [1, 1, 1]} : vector<10x16x32xbf16> to vector<8x16x32xbf16>
    %167 = tpu.concatenate %164, %165, %166 in 2 : vector<8x16x32xbf16>, vector<8x16x32xbf16>, vector<8x16x32xbf16> -> vector<8x16x96xbf16>
    %168 = vector.shape_cast %167 : vector<8x16x96xbf16> to vector<128x96xbf16>
    %c1_97 = arith.constant 1 : index
    %c2_98 = arith.constant 2 : index
    %c0_99 = arith.constant 0 : index
    %c0_100 = arith.constant 0 : index
    %169 = vector.load %arg8[%c1_97, %c2_98, %c0_99, %c0_100] : memref<3x3x96x32xbf16, #tpu.memory_space<vmem>>, vector<1x1x96x32xbf16>
    %170 = vector.shape_cast %169 : vector<1x1x96x32xbf16> to vector<96x32xbf16>
    %cst_101 = arith.constant dense<0.000000e+00> : vector<128x32xf32>
    %171 = tpu.matmul %168, %170, %cst_101 {dimension_numbers = #tpu.dot_dimension_numbers<[1], [0], [0], [1], [0, 0, 1, 1], [], []>} : vector<128x96xbf16>, vector<96x32xbf16>, vector<128x32xf32> -> vector<128x32xf32>
    %172 = arith.addf %160, %171 : vector<128x32xf32>
    %c2_i32 = arith.constant 2 : i32
    %173 = arith.addi %arg2, %c2_i32 : i32
    %c1_i32_102 = arith.constant 1 : i32
    %174 = arith.addi %173, %c1_i32_102 : i32
    %c3_i32_103 = arith.constant 3 : i32
    %c0_i32_104 = arith.constant 0 : i32
    %175 = arith.cmpi eq, %c3_i32_103, %c0_i32_104 : i32
    %c1_i32_105 = arith.constant 1 : i32
    %176 = arith.select %175, %c1_i32_105, %c3_i32_103 : i32
    %177 = arith.remsi %174, %176 : i32
    %c0_i32_106 = arith.constant 0 : i32
    %178 = arith.cmpi ne, %177, %c0_i32_106 : i32
    %c0_i32_107 = arith.constant 0 : i32
    %179 = arith.cmpi slt, %177, %c0_i32_107 : i32
    %c0_i32_108 = arith.constant 0 : i32
    %180 = arith.cmpi slt, %176, %c0_i32_108 : i32
    %181 = arith.xori %179, %180 : i1
    %182 = arith.andi %181, %178 : i1
    %183 = arith.addi %177, %176 : i32
    %184 = arith.select %182, %183, %177 : i32
    %185 = arith.index_cast %184 : i32 to index
    %c0_109 = arith.constant 0 : index
    %c7_110 = arith.constant 7 : index
    %c0_111 = arith.constant 0 : index
    %186 = vector.load %arg11[%185, %c0_109, %c7_110, %c0_111] : memref<3x10x32x32xbf16, #tpu.memory_space<vmem>>, vector<1x10x16x32xbf16>
    %187 = vector.shape_cast %186 : vector<1x10x16x32xbf16> to vector<10x16x32xbf16>
    %188 = vector.extract_strided_slice %187 {offsets = [0, 0, 0], sizes = [8, 16, 32], strides = [1, 1, 1]} : vector<10x16x32xbf16> to vector<8x16x32xbf16>
    %189 = vector.extract_strided_slice %187 {offsets = [1, 0, 0], sizes = [8, 16, 32], strides = [1, 1, 1]} : vector<10x16x32xbf16> to vector<8x16x32xbf16>
    %190 = vector.extract_strided_slice %187 {offsets = [2, 0, 0], sizes = [8, 16, 32], strides = [1, 1, 1]} : vector<10x16x32xbf16> to vector<8x16x32xbf16>
    %191 = tpu.concatenate %188, %189, %190 in 2 : vector<8x16x32xbf16>, vector<8x16x32xbf16>, vector<8x16x32xbf16> -> vector<8x16x96xbf16>
    %192 = vector.shape_cast %191 : vector<8x16x96xbf16> to vector<128x96xbf16>
    %c2_112 = arith.constant 2 : index
    %c0_113 = arith.constant 0 : index
    %c0_114 = arith.constant 0 : index
    %c0_115 = arith.constant 0 : index
    %193 = vector.load %arg8[%c2_112, %c0_113, %c0_114, %c0_115] : memref<3x3x96x32xbf16, #tpu.memory_space<vmem>>, vector<1x1x96x32xbf16>
    %194 = vector.shape_cast %193 : vector<1x1x96x32xbf16> to vector<96x32xbf16>
    %cst_116 = arith.constant dense<0.000000e+00> : vector<128x32xf32>
    %195 = tpu.matmul %192, %194, %cst_116 {dimension_numbers = #tpu.dot_dimension_numbers<[1], [0], [0], [1], [0, 0, 1, 1], [], []>} : vector<128x96xbf16>, vector<96x32xbf16>, vector<128x32xf32> -> vector<128x32xf32>
    %196 = arith.addf %172, %195 : vector<128x32xf32>
    %197 = arith.index_cast %184 : i32 to index
    %c0_117 = arith.constant 0 : index
    %c8_118 = arith.constant 8 : index
    %c0_119 = arith.constant 0 : index
    %198 = vector.load %arg11[%197, %c0_117, %c8_118, %c0_119] : memref<3x10x32x32xbf16, #tpu.memory_space<vmem>>, vector<1x10x16x32xbf16>
    %199 = vector.shape_cast %198 : vector<1x10x16x32xbf16> to vector<10x16x32xbf16>
    %200 = vector.extract_strided_slice %199 {offsets = [0, 0, 0], sizes = [8, 16, 32], strides = [1, 1, 1]} : vector<10x16x32xbf16> to vector<8x16x32xbf16>
    %201 = vector.extract_strided_slice %199 {offsets = [1, 0, 0], sizes = [8, 16, 32], strides = [1, 1, 1]} : vector<10x16x32xbf16> to vector<8x16x32xbf16>
    %202 = vector.extract_strided_slice %199 {offsets = [2, 0, 0], sizes = [8, 16, 32], strides = [1, 1, 1]} : vector<10x16x32xbf16> to vector<8x16x32xbf16>
    %203 = tpu.concatenate %200, %201, %202 in 2 : vector<8x16x32xbf16>, vector<8x16x32xbf16>, vector<8x16x32xbf16> -> vector<8x16x96xbf16>
    %204 = vector.shape_cast %203 : vector<8x16x96xbf16> to vector<128x96xbf16>
    %c2_120 = arith.constant 2 : index
    %c1_121 = arith.constant 1 : index
    %c0_122 = arith.constant 0 : index
    %c0_123 = arith.constant 0 : index
    %205 = vector.load %arg8[%c2_120, %c1_121, %c0_122, %c0_123] : memref<3x3x96x32xbf16, #tpu.memory_space<vmem>>, vector<1x1x96x32xbf16>
    %206 = vector.shape_cast %205 : vector<1x1x96x32xbf16> to vector<96x32xbf16>
    %cst_124 = arith.constant dense<0.000000e+00> : vector<128x32xf32>
    %207 = tpu.matmul %204, %206, %cst_124 {dimension_numbers = #tpu.dot_dimension_numbers<[1], [0], [0], [1], [0, 0, 1, 1], [], []>} : vector<128x96xbf16>, vector<96x32xbf16>, vector<128x32xf32> -> vector<128x32xf32>
    %208 = arith.addf %196, %207 : vector<128x32xf32>
    %209 = arith.index_cast %184 : i32 to index
    %c0_125 = arith.constant 0 : index
    %c9_126 = arith.constant 9 : index
    %c0_127 = arith.constant 0 : index
    %210 = vector.load %arg11[%209, %c0_125, %c9_126, %c0_127] : memref<3x10x32x32xbf16, #tpu.memory_space<vmem>>, vector<1x10x16x32xbf16>
    %211 = vector.shape_cast %210 : vector<1x10x16x32xbf16> to vector<10x16x32xbf16>
    %212 = vector.extract_strided_slice %211 {offsets = [0, 0, 0], sizes = [8, 16, 32], strides = [1, 1, 1]} : vector<10x16x32xbf16> to vector<8x16x32xbf16>
    %213 = vector.extract_strided_slice %211 {offsets = [1, 0, 0], sizes = [8, 16, 32], strides = [1, 1, 1]} : vector<10x16x32xbf16> to vector<8x16x32xbf16>
    %214 = vector.extract_strided_slice %211 {offsets = [2, 0, 0], sizes = [8, 16, 32], strides = [1, 1, 1]} : vector<10x16x32xbf16> to vector<8x16x32xbf16>
    %215 = tpu.concatenate %212, %213, %214 in 2 : vector<8x16x32xbf16>, vector<8x16x32xbf16>, vector<8x16x32xbf16> -> vector<8x16x96xbf16>
    %216 = vector.shape_cast %215 : vector<8x16x96xbf16> to vector<128x96xbf16>
    %c2_128 = arith.constant 2 : index
    %c2_129 = arith.constant 2 : index
    %c0_130 = arith.constant 0 : index
    %c0_131 = arith.constant 0 : index
    %217 = vector.load %arg8[%c2_128, %c2_129, %c0_130, %c0_131] : memref<3x3x96x32xbf16, #tpu.memory_space<vmem>>, vector<1x1x96x32xbf16>
    %218 = vector.shape_cast %217 : vector<1x1x96x32xbf16> to vector<96x32xbf16>
    %cst_132 = arith.constant dense<0.000000e+00> : vector<128x32xf32>
    %219 = tpu.matmul %216, %218, %cst_132 {dimension_numbers = #tpu.dot_dimension_numbers<[1], [0], [0], [1], [0, 0, 1, 1], [], []>} : vector<128x96xbf16>, vector<96x32xbf16>, vector<128x32xf32> -> vector<128x32xf32>
    %220 = arith.addf %208, %219 : vector<128x32xf32>
    %c0_133 = arith.constant 0 : index
    %c0_134 = arith.constant 0 : index
    %221 = vector.load %arg9[%c0_133, %c0_134] : memref<1x32xf32, #tpu.memory_space<vmem>>, vector<1x32xf32>
    %222 = vector.broadcast %221 : vector<1x32xf32> to vector<128x32xf32>
    %223 = arith.addf %220, %222 : vector<128x32xf32>
    %224 = arith.truncf %223 : vector<128x32xf32> to vector<128x32xbf16>
    %c0_135 = arith.constant 0 : index
    %c0_136 = arith.constant 0 : index
    %c0_137 = arith.constant 0 : index
    %c0_138 = arith.constant 0 : index
    %225 = vector.load %arg10[%c0_135, %c0_136, %c0_137, %c0_138] : memref<1x1x128x32xbf16, #tpu.memory_space<vmem>>, vector<1x1x128x32xbf16>
    %226 = vector.shape_cast %225 : vector<1x1x128x32xbf16> to vector<128x32xbf16>
    %227 = vector.shape_cast %224 : vector<128x32xbf16> to vector<1x1x128x32xbf16>
    tpu.vector_store %arg10[%c0_135, %c0_136, %c0_137, %c0_138], %227 {strides = array<i32>} : memref<1x1x128x32xbf16, #tpu.memory_space<vmem>>, vector<1x1x128x32xbf16>,
    return
  }
  func.func @transform_0(%arg0: i32, %arg1: i32, %arg2: i32) -> (i32, i32, i32, i32, i32) {
    %c0_i32 = arith.constant 0 : i32
    %c0_i32_0 = arith.constant 0 : i32
    %c0_i32_1 = arith.constant 0 : i32
    return %arg0, %arg2, %arg1, %c0_i32, %c0_i32_0 : i32, i32, i32, i32, i32
  }
  func.func @transform_1(%arg0: i32, %arg1: i32, %arg2: i32) -> (i32, i32, i32, i32, i32) {
    %c8_i32 = arith.constant 8 : i32
    %0 = arith.muli %arg1, %c8_i32 : i32
    %c1_i32 = arith.constant 1 : i32
    %1 = arith.subi %0, %c1_i32 : i32
    %c0_i32 = arith.constant 0 : i32
    %2 = arith.maxsi %1, %c0_i32 : i32
    %c0_i32_0 = arith.constant 0 : i32
    %c0_i32_1 = arith.constant 0 : i32
    %c0_i32_2 = arith.constant 0 : i32
    return %arg0, %arg2, %2, %c0_i32_0, %c0_i32_1 : i32, i32, i32, i32, i32
  }
  func.func @transform_2(%arg0: i32, %arg1: i32, %arg2: i32) -> (i32, i32, i32, i32, i32) {
    %c1_i32 = arith.constant 1 : i32
    %0 = arith.addi %arg1, %c1_i32 : i32
    %c8_i32 = arith.constant 8 : i32
    %1 = arith.muli %0, %c8_i32 : i32
    %c15_i32 = arith.constant 15 : i32
    %2 = arith.minsi %1, %c15_i32 : i32
    %c0_i32 = arith.constant 0 : i32
    %c0_i32_0 = arith.constant 0 : i32
    %c0_i32_1 = arith.constant 0 : i32
    return %arg0, %arg2, %2, %c0_i32, %c0_i32_0 : i32, i32, i32, i32, i32
  }
  func.func @transform_3(%arg0: i32, %arg1: i32, %arg2: i32) -> (i32, i32, i32, i32) {
    %c0_i32 = arith.constant 0 : i32
    %c0_i32_0 = arith.constant 0 : i32
    %c0_i32_1 = arith.constant 0 : i32
    return %arg0, %arg2, %c0_i32, %c0_i32_0 : i32, i32, i32, i32
  }
  func.func @transform_4(%arg0: i32, %arg1: i32, %arg2: i32) -> (i32, i32, i32, i32) {
    %c0_i32 = arith.constant 0 : i32
    %c0_i32_0 = arith.constant 0 : i32
    %c0_i32_1 = arith.constant 0 : i32
    return %arg0, %arg2, %c0_i32, %c0_i32_0 : i32, i32, i32, i32
  }
  func.func @transform_5(%arg0: i32, %arg1: i32, %arg2: i32) -> (i32, i32, i32, i32) {
    %c0_i32 = arith.constant 0 : i32
    %c0_i32_0 = arith.constant 0 : i32
    %c0_i32_1 = arith.constant 0 : i32
    %c0_i32_2 = arith.constant 0 : i32
    %c0_i32_3 = arith.constant 0 : i32
    return %c0_i32, %c0_i32_0, %c0_i32_1, %c0_i32_2 : i32, i32, i32, i32
  }
  func.func @transform_6(%arg0: i32, %arg1: i32, %arg2: i32) -> (i32, i32) {
    %c0_i32 = arith.constant 0 : i32
    %c0_i32_0 = arith.constant 0 : i32
    %c0_i32_1 = arith.constant 0 : i32
    return %c0_i32, %c0_i32_0 : i32, i32
  }
  func.func @transform_7(%arg0: i32, %arg1: i32, %arg2: i32) -> (i32, i32, i32, i32) {
    %c0_i32 = arith.constant 0 : i32
    %c0_i32_0 = arith.constant 0 : i32
    return %arg0, %arg2, %arg1, %c0_i32 : i32, i32, i32, i32
  }
}

module attributes {stable_mosaic.version = 11 : i64} {
  func.func @_norm_silu_causal_conv_kernel(%arg0: i32, %arg1: i32, %arg2: i32, %arg3: memref<1x1x8x16x32xbf16, #tpu.memory_space<vmem>>, %arg4: memref<1x1x1x16x32xbf16, #tpu.memory_space<vmem>>, %arg5: memref<1x1x1x16x32xbf16, #tpu.memory_space<vmem>>, %arg6: memref<1x1x1x32xf32, #tpu.memory_space<vmem>>, %arg7: memref<1x1x1x32xf32, #tpu.memory_space<vmem>>, %arg8: memref<3x3x96x32xbf16, #tpu.memory_space<vmem>>, %arg9: memref<1x32xf32, #tpu.memory_space<vmem>>, %arg10: memref<1x1x128x32xf32, #tpu.memory_space<vmem>>, %arg11: memref<1x1x128x32xf32, #tpu.memory_space<vmem>>, %arg12: memref<3x10x32x32xbf16, #tpu.memory_space<vmem>>) attributes {dimension_semantics = [#tpu.dimension_semantics<parallel>, #tpu.dimension_semantics<parallel>, #tpu.dimension_semantics<arbitrary>], iteration_bounds = array<i64: 2, 2, 4>, scalar_prefetch = 0 : i64, scratch_operands = 1 : i64, tpu.core_type = #tpu.core_type<tc>, window_params = [{transform_indices = @transform_0, window_bounds = array<i64: 1, 1, 8, 16, 32>}, {transform_indices = @transform_1, window_bounds = array<i64: 1, 1, 1, 16, 32>}, {transform_indices = @transform_2, window_bounds = array<i64: 1, 1, 1, 16, 32>}, {transform_indices = @transform_3, window_bounds = array<i64: 1, 1, 1, 32>}, {transform_indices = @transform_4, window_bounds = array<i64: 1, 1, 1, 32>}, {pipeline_mode = #tpu.pipeline_mode<synchronous>, transform_indices = @transform_5, window_bounds = array<i64: 3, 3, 96, 32>}, {pipeline_mode = #tpu.pipeline_mode<synchronous>, transform_indices = @transform_6, window_bounds = array<i64: 1, 32>}, {transform_indices = @transform_7, window_bounds = array<i64: 1, 1, 128, 32>}, {transform_indices = @transform_8, window_bounds = array<i64: 1, 1, 128, 32>}]} {
    %c0_i32 = arith.constant 0 : i32
    %0 = arith.cmpi eq, %arg2, %c0_i32 : i32
    %1 = arith.extui %0 : i1 to i32
    %c0_i32_0 = arith.constant 0 : i32
    %2 = arith.cmpi ne, %1, %c0_i32_0 : i32
    scf.if %2 {
      %cst_143 = arith.constant 0.000000e+00 : bf16
      %233 = vector.broadcast %cst_143 : bf16 to vector<3x10x32x32xbf16>
      %c0_144 = arith.constant 0 : index
      %c0_145 = arith.constant 0 : index
      %c0_146 = arith.constant 0 : index
      %c0_147 = arith.constant 0 : index
      %234 = vector.load %arg12[%c0_144, %c0_145, %c0_146, %c0_147] : memref<3x10x32x32xbf16, #tpu.memory_space<vmem>>, vector<3x10x32x32xbf16>
      tpu.vector_store %arg12[%c0_144, %c0_145, %c0_146, %c0_147], %233 {strides = array<i32>} : memref<3x10x32x32xbf16, #tpu.memory_space<vmem>>, vector<3x10x32x32xbf16>,
    } else {
    }
    %c0 = arith.constant 0 : index
    %c0_1 = arith.constant 0 : index
    %c0_2 = arith.constant 0 : index
    %c0_3 = arith.constant 0 : index
    %3 = vector.load %arg6[%c0, %c0_1, %c0_2, %c0_3] : memref<1x1x1x32xf32, #tpu.memory_space<vmem>>, vector<1x1x1x32xf32>
    %4 = vector.shape_cast %3 : vector<1x1x1x32xf32> to vector<1x32xf32>
    %5 = vector.shape_cast %4 : vector<1x32xf32> to vector<1x1x32xf32>
    %c0_4 = arith.constant 0 : index
    %c0_5 = arith.constant 0 : index
    %c0_6 = arith.constant 0 : index
    %c0_7 = arith.constant 0 : index
    %6 = vector.load %arg7[%c0_4, %c0_5, %c0_6, %c0_7] : memref<1x1x1x32xf32, #tpu.memory_space<vmem>>, vector<1x1x1x32xf32>
    %7 = vector.shape_cast %6 : vector<1x1x1x32xf32> to vector<1x32xf32>
    %8 = vector.shape_cast %7 : vector<1x32xf32> to vector<1x1x32xf32>
    %c3_i32 = arith.constant 3 : i32
    %c0_i32_8 = arith.constant 0 : i32
    %9 = arith.cmpi eq, %c3_i32, %c0_i32_8 : i32
    %c1_i32 = arith.constant 1 : i32
    %10 = arith.select %9, %c1_i32, %c3_i32 : i32
    %11 = arith.remsi %arg2, %10 : i32
    %c0_i32_9 = arith.constant 0 : i32
    %12 = arith.cmpi ne, %11, %c0_i32_9 : i32
    %c0_i32_10 = arith.constant 0 : i32
    %13 = arith.cmpi slt, %11, %c0_i32_10 : i32
    %c0_i32_11 = arith.constant 0 : i32
    %14 = arith.cmpi slt, %10, %c0_i32_11 : i32
    %15 = arith.xori %13, %14 : i1
    %16 = arith.andi %15, %12 : i1
    %17 = arith.addi %11, %10 : i32
    %18 = arith.select %16, %17, %11 : i32
    %c0_12 = arith.constant 0 : index
    %c0_13 = arith.constant 0 : index
    %c0_14 = arith.constant 0 : index
    %c0_15 = arith.constant 0 : index
    %c0_16 = arith.constant 0 : index
    %19 = vector.load %arg3[%c0_12, %c0_13, %c0_14, %c0_15, %c0_16] : memref<1x1x8x16x32xbf16, #tpu.memory_space<vmem>>, vector<1x1x8x16x32xbf16>
    %20 = vector.shape_cast %19 : vector<1x1x8x16x32xbf16> to vector<8x16x32xbf16>
    %21 = arith.extf %20 : vector<8x16x32xbf16> to vector<8x16x32xf32>
    %22 = vector.broadcast %5 : vector<1x1x32xf32> to vector<8x16x32xf32>
    %23 = arith.mulf %21, %22 : vector<8x16x32xf32>
    %24 = vector.broadcast %8 : vector<1x1x32xf32> to vector<8x16x32xf32>
    %25 = arith.addf %23, %24 : vector<8x16x32xf32>
    %26 = arith.negf %25 : vector<8x16x32xf32>
    %27 = math.exp %26 : vector<8x16x32xf32>
    %cst = arith.constant 1.000000e+00 : f32
    %28 = vector.broadcast %cst : f32 to vector<8x16x32xf32>
    %29 = arith.addf %28, %27 : vector<8x16x32xf32>
    %30 = arith.divf %28, %29 : vector<8x16x32xf32>
    %31 = arith.mulf %25, %30 : vector<8x16x32xf32>
    %32 = arith.truncf %31 : vector<8x16x32xf32> to vector<8x16x32xbf16>
    %33 = arith.index_cast %18 : i32 to index
    %c1 = arith.constant 1 : index
    %c8 = arith.constant 8 : index
    %c0_17 = arith.constant 0 : index
    %34 = vector.load %arg12[%33, %c1, %c8, %c0_17] : memref<3x10x32x32xbf16, #tpu.memory_space<vmem>>, vector<1x8x16x32xbf16>
    %35 = vector.shape_cast %34 : vector<1x8x16x32xbf16> to vector<8x16x32xbf16>
    %36 = vector.shape_cast %32 : vector<8x16x32xbf16> to vector<1x8x16x32xbf16>
    tpu.vector_store %arg12[%33, %c1, %c8, %c0_17], %36 {strides = array<i32>} : memref<3x10x32x32xbf16, #tpu.memory_space<vmem>>, vector<1x8x16x32xbf16>,
    %c0_18 = arith.constant 0 : index
    %c0_19 = arith.constant 0 : index
    %c0_20 = arith.constant 0 : index
    %c0_21 = arith.constant 0 : index
    %c0_22 = arith.constant 0 : index
    %37 = vector.load %arg4[%c0_18, %c0_19, %c0_20, %c0_21, %c0_22] : memref<1x1x1x16x32xbf16, #tpu.memory_space<vmem>>, vector<1x1x1x16x32xbf16>
    %38 = vector.shape_cast %37 : vector<1x1x1x16x32xbf16> to vector<1x16x32xbf16>
    %39 = arith.extf %38 : vector<1x16x32xbf16> to vector<1x16x32xf32>
    %40 = vector.broadcast %5 : vector<1x1x32xf32> to vector<1x16x32xf32>
    %41 = arith.mulf %39, %40 : vector<1x16x32xf32>
    %42 = vector.broadcast %8 : vector<1x1x32xf32> to vector<1x16x32xf32>
    %43 = arith.addf %41, %42 : vector<1x16x32xf32>
    %44 = arith.negf %43 : vector<1x16x32xf32>
    %45 = math.exp %44 : vector<1x16x32xf32>
    %cst_23 = arith.constant 1.000000e+00 : f32
    %46 = vector.broadcast %cst_23 : f32 to vector<1x16x32xf32>
    %47 = arith.addf %46, %45 : vector<1x16x32xf32>
    %48 = arith.divf %46, %47 : vector<1x16x32xf32>
    %49 = arith.mulf %43, %48 : vector<1x16x32xf32>
    %50 = arith.truncf %49 : vector<1x16x32xf32> to vector<1x16x32xbf16>
    %c0_i32_24 = arith.constant 0 : i32
    %51 = arith.cmpi sgt, %arg1, %c0_i32_24 : i32
    %cst_25 = arith.constant 0.000000e+00 : bf16
    %52 = vector.broadcast %cst_25 : bf16 to vector<1x16x32xbf16>
    %53 = arith.select %51, %50, %52 : vector<1x16x32xbf16>
    %c0_26 = arith.constant 0 : index
    %c0_27 = arith.constant 0 : index
    %c0_28 = arith.constant 0 : index
    %c0_29 = arith.constant 0 : index
    %c0_30 = arith.constant 0 : index
    %54 = vector.load %arg5[%c0_26, %c0_27, %c0_28, %c0_29, %c0_30] : memref<1x1x1x16x32xbf16, #tpu.memory_space<vmem>>, vector<1x1x1x16x32xbf16>
    %55 = vector.shape_cast %54 : vector<1x1x1x16x32xbf16> to vector<1x16x32xbf16>
    %56 = arith.extf %55 : vector<1x16x32xbf16> to vector<1x16x32xf32>
    %57 = vector.broadcast %5 : vector<1x1x32xf32> to vector<1x16x32xf32>
    %58 = arith.mulf %56, %57 : vector<1x16x32xf32>
    %59 = vector.broadcast %8 : vector<1x1x32xf32> to vector<1x16x32xf32>
    %60 = arith.addf %58, %59 : vector<1x16x32xf32>
    %61 = arith.negf %60 : vector<1x16x32xf32>
    %62 = math.exp %61 : vector<1x16x32xf32>
    %cst_31 = arith.constant 1.000000e+00 : f32
    %63 = vector.broadcast %cst_31 : f32 to vector<1x16x32xf32>
    %64 = arith.addf %63, %62 : vector<1x16x32xf32>
    %65 = arith.divf %63, %64 : vector<1x16x32xf32>
    %66 = arith.mulf %60, %65 : vector<1x16x32xf32>
    %67 = arith.truncf %66 : vector<1x16x32xf32> to vector<1x16x32xbf16>
    %c1_i32_32 = arith.constant 1 : i32
    %68 = arith.cmpi slt, %arg1, %c1_i32_32 : i32
    %cst_33 = arith.constant 0.000000e+00 : bf16
    %69 = vector.broadcast %cst_33 : bf16 to vector<1x16x32xbf16>
    %70 = arith.select %68, %67, %69 : vector<1x16x32xbf16>
    %71 = arith.index_cast %18 : i32 to index
    %c0_34 = arith.constant 0 : index
    %c8_35 = arith.constant 8 : index
    %c0_36 = arith.constant 0 : index
    %72 = vector.load %arg12[%71, %c0_34, %c8_35, %c0_36] : memref<3x10x32x32xbf16, #tpu.memory_space<vmem>>, vector<1x1x16x32xbf16>
    %73 = vector.shape_cast %72 : vector<1x1x16x32xbf16> to vector<1x16x32xbf16>
    %74 = vector.shape_cast %53 : vector<1x16x32xbf16> to vector<1x1x16x32xbf16>
    tpu.vector_store %arg12[%71, %c0_34, %c8_35, %c0_36], %74 {strides = array<i32>} : memref<3x10x32x32xbf16, #tpu.memory_space<vmem>>, vector<1x1x16x32xbf16>,
    %75 = arith.index_cast %18 : i32 to index
    %c9 = arith.constant 9 : index
    %c8_37 = arith.constant 8 : index
    %c0_38 = arith.constant 0 : index
    %76 = vector.load %arg12[%75, %c9, %c8_37, %c0_38] : memref<3x10x32x32xbf16, #tpu.memory_space<vmem>>, vector<1x1x16x32xbf16>
    %77 = vector.shape_cast %76 : vector<1x1x16x32xbf16> to vector<1x16x32xbf16>
    %78 = vector.shape_cast %70 : vector<1x16x32xbf16> to vector<1x1x16x32xbf16>
    tpu.vector_store %arg12[%75, %c9, %c8_37, %c0_38], %78 {strides = array<i32>} : memref<3x10x32x32xbf16, #tpu.memory_space<vmem>>, vector<1x1x16x32xbf16>,
    %cst_39 = arith.constant 0.000000e+00 : f32
    %79 = vector.broadcast %cst_39 : f32 to vector<128x32xf32>
    %c0_i32_40 = arith.constant 0 : i32
    %80 = arith.addi %arg2, %c0_i32_40 : i32
    %c1_i32_41 = arith.constant 1 : i32
    %81 = arith.addi %80, %c1_i32_41 : i32
    %c3_i32_42 = arith.constant 3 : i32
    %c0_i32_43 = arith.constant 0 : i32
    %82 = arith.cmpi eq, %c3_i32_42, %c0_i32_43 : i32
    %c1_i32_44 = arith.constant 1 : i32
    %83 = arith.select %82, %c1_i32_44, %c3_i32_42 : i32
    %84 = arith.remsi %81, %83 : i32
    %c0_i32_45 = arith.constant 0 : i32
    %85 = arith.cmpi ne, %84, %c0_i32_45 : i32
    %c0_i32_46 = arith.constant 0 : i32
    %86 = arith.cmpi slt, %84, %c0_i32_46 : i32
    %c0_i32_47 = arith.constant 0 : i32
    %87 = arith.cmpi slt, %83, %c0_i32_47 : i32
    %88 = arith.xori %86, %87 : i1
    %89 = arith.andi %88, %85 : i1
    %90 = arith.addi %84, %83 : i32
    %91 = arith.select %89, %90, %84 : i32
    %92 = arith.index_cast %91 : i32 to index
    %c0_48 = arith.constant 0 : index
    %c7 = arith.constant 7 : index
    %c0_49 = arith.constant 0 : index
    %93 = vector.load %arg12[%92, %c0_48, %c7, %c0_49] : memref<3x10x32x32xbf16, #tpu.memory_space<vmem>>, vector<1x10x16x32xbf16>
    %94 = vector.shape_cast %93 : vector<1x10x16x32xbf16> to vector<10x16x32xbf16>
    %95 = vector.extract_strided_slice %94 {offsets = [0, 0, 0], sizes = [8, 16, 32], strides = [1, 1, 1]} : vector<10x16x32xbf16> to vector<8x16x32xbf16>
    %96 = vector.extract_strided_slice %94 {offsets = [1, 0, 0], sizes = [8, 16, 32], strides = [1, 1, 1]} : vector<10x16x32xbf16> to vector<8x16x32xbf16>
    %97 = vector.extract_strided_slice %94 {offsets = [2, 0, 0], sizes = [8, 16, 32], strides = [1, 1, 1]} : vector<10x16x32xbf16> to vector<8x16x32xbf16>
    %98 = tpu.concatenate %95, %96, %97 in 2 : vector<8x16x32xbf16>, vector<8x16x32xbf16>, vector<8x16x32xbf16> -> vector<8x16x96xbf16>
    %99 = vector.shape_cast %98 : vector<8x16x96xbf16> to vector<128x96xbf16>
    %c0_50 = arith.constant 0 : index
    %c0_51 = arith.constant 0 : index
    %c0_52 = arith.constant 0 : index
    %c0_53 = arith.constant 0 : index
    %100 = vector.load %arg8[%c0_50, %c0_51, %c0_52, %c0_53] : memref<3x3x96x32xbf16, #tpu.memory_space<vmem>>, vector<1x1x96x32xbf16>
    %101 = vector.shape_cast %100 : vector<1x1x96x32xbf16> to vector<96x32xbf16>
    %cst_54 = arith.constant dense<0.000000e+00> : vector<128x32xf32>
    %102 = tpu.matmul %99, %101, %cst_54 {dimension_numbers = #tpu.dot_dimension_numbers<[1], [0], [0], [1], [0, 0, 1, 1], [], []>} : vector<128x96xbf16>, vector<96x32xbf16>, vector<128x32xf32> -> vector<128x32xf32>
    %103 = arith.addf %79, %102 : vector<128x32xf32>
    %104 = arith.index_cast %91 : i32 to index
    %c0_55 = arith.constant 0 : index
    %c8_56 = arith.constant 8 : index
    %c0_57 = arith.constant 0 : index
    %105 = vector.load %arg12[%104, %c0_55, %c8_56, %c0_57] : memref<3x10x32x32xbf16, #tpu.memory_space<vmem>>, vector<1x10x16x32xbf16>
    %106 = vector.shape_cast %105 : vector<1x10x16x32xbf16> to vector<10x16x32xbf16>
    %107 = vector.extract_strided_slice %106 {offsets = [0, 0, 0], sizes = [8, 16, 32], strides = [1, 1, 1]} : vector<10x16x32xbf16> to vector<8x16x32xbf16>
    %108 = vector.extract_strided_slice %106 {offsets = [1, 0, 0], sizes = [8, 16, 32], strides = [1, 1, 1]} : vector<10x16x32xbf16> to vector<8x16x32xbf16>
    %109 = vector.extract_strided_slice %106 {offsets = [2, 0, 0], sizes = [8, 16, 32], strides = [1, 1, 1]} : vector<10x16x32xbf16> to vector<8x16x32xbf16>
    %110 = tpu.concatenate %107, %108, %109 in 2 : vector<8x16x32xbf16>, vector<8x16x32xbf16>, vector<8x16x32xbf16> -> vector<8x16x96xbf16>
    %111 = vector.shape_cast %110 : vector<8x16x96xbf16> to vector<128x96xbf16>
    %c0_58 = arith.constant 0 : index
    %c1_59 = arith.constant 1 : index
    %c0_60 = arith.constant 0 : index
    %c0_61 = arith.constant 0 : index
    %112 = vector.load %arg8[%c0_58, %c1_59, %c0_60, %c0_61] : memref<3x3x96x32xbf16, #tpu.memory_space<vmem>>, vector<1x1x96x32xbf16>
    %113 = vector.shape_cast %112 : vector<1x1x96x32xbf16> to vector<96x32xbf16>
    %cst_62 = arith.constant dense<0.000000e+00> : vector<128x32xf32>
    %114 = tpu.matmul %111, %113, %cst_62 {dimension_numbers = #tpu.dot_dimension_numbers<[1], [0], [0], [1], [0, 0, 1, 1], [], []>} : vector<128x96xbf16>, vector<96x32xbf16>, vector<128x32xf32> -> vector<128x32xf32>
    %115 = arith.addf %103, %114 : vector<128x32xf32>
    %116 = arith.index_cast %91 : i32 to index
    %c0_63 = arith.constant 0 : index
    %c9_64 = arith.constant 9 : index
    %c0_65 = arith.constant 0 : index
    %117 = vector.load %arg12[%116, %c0_63, %c9_64, %c0_65] : memref<3x10x32x32xbf16, #tpu.memory_space<vmem>>, vector<1x10x16x32xbf16>
    %118 = vector.shape_cast %117 : vector<1x10x16x32xbf16> to vector<10x16x32xbf16>
    %119 = vector.extract_strided_slice %118 {offsets = [0, 0, 0], sizes = [8, 16, 32], strides = [1, 1, 1]} : vector<10x16x32xbf16> to vector<8x16x32xbf16>
    %120 = vector.extract_strided_slice %118 {offsets = [1, 0, 0], sizes = [8, 16, 32], strides = [1, 1, 1]} : vector<10x16x32xbf16> to vector<8x16x32xbf16>
    %121 = vector.extract_strided_slice %118 {offsets = [2, 0, 0], sizes = [8, 16, 32], strides = [1, 1, 1]} : vector<10x16x32xbf16> to vector<8x16x32xbf16>
    %122 = tpu.concatenate %119, %120, %121 in 2 : vector<8x16x32xbf16>, vector<8x16x32xbf16>, vector<8x16x32xbf16> -> vector<8x16x96xbf16>
    %123 = vector.shape_cast %122 : vector<8x16x96xbf16> to vector<128x96xbf16>
    %c0_66 = arith.constant 0 : index
    %c2 = arith.constant 2 : index
    %c0_67 = arith.constant 0 : index
    %c0_68 = arith.constant 0 : index
    %124 = vector.load %arg8[%c0_66, %c2, %c0_67, %c0_68] : memref<3x3x96x32xbf16, #tpu.memory_space<vmem>>, vector<1x1x96x32xbf16>
    %125 = vector.shape_cast %124 : vector<1x1x96x32xbf16> to vector<96x32xbf16>
    %cst_69 = arith.constant dense<0.000000e+00> : vector<128x32xf32>
    %126 = tpu.matmul %123, %125, %cst_69 {dimension_numbers = #tpu.dot_dimension_numbers<[1], [0], [0], [1], [0, 0, 1, 1], [], []>} : vector<128x96xbf16>, vector<96x32xbf16>, vector<128x32xf32> -> vector<128x32xf32>
    %127 = arith.addf %115, %126 : vector<128x32xf32>
    %c1_i32_70 = arith.constant 1 : i32
    %128 = arith.addi %arg2, %c1_i32_70 : i32
    %c1_i32_71 = arith.constant 1 : i32
    %129 = arith.addi %128, %c1_i32_71 : i32
    %c3_i32_72 = arith.constant 3 : i32
    %c0_i32_73 = arith.constant 0 : i32
    %130 = arith.cmpi eq, %c3_i32_72, %c0_i32_73 : i32
    %c1_i32_74 = arith.constant 1 : i32
    %131 = arith.select %130, %c1_i32_74, %c3_i32_72 : i32
    %132 = arith.remsi %129, %131 : i32
    %c0_i32_75 = arith.constant 0 : i32
    %133 = arith.cmpi ne, %132, %c0_i32_75 : i32
    %c0_i32_76 = arith.constant 0 : i32
    %134 = arith.cmpi slt, %132, %c0_i32_76 : i32
    %c0_i32_77 = arith.constant 0 : i32
    %135 = arith.cmpi slt, %131, %c0_i32_77 : i32
    %136 = arith.xori %134, %135 : i1
    %137 = arith.andi %136, %133 : i1
    %138 = arith.addi %132, %131 : i32
    %139 = arith.select %137, %138, %132 : i32
    %140 = arith.index_cast %139 : i32 to index
    %c0_78 = arith.constant 0 : index
    %c7_79 = arith.constant 7 : index
    %c0_80 = arith.constant 0 : index
    %141 = vector.load %arg12[%140, %c0_78, %c7_79, %c0_80] : memref<3x10x32x32xbf16, #tpu.memory_space<vmem>>, vector<1x10x16x32xbf16>
    %142 = vector.shape_cast %141 : vector<1x10x16x32xbf16> to vector<10x16x32xbf16>
    %143 = vector.extract_strided_slice %142 {offsets = [0, 0, 0], sizes = [8, 16, 32], strides = [1, 1, 1]} : vector<10x16x32xbf16> to vector<8x16x32xbf16>
    %144 = vector.extract_strided_slice %142 {offsets = [1, 0, 0], sizes = [8, 16, 32], strides = [1, 1, 1]} : vector<10x16x32xbf16> to vector<8x16x32xbf16>
    %145 = vector.extract_strided_slice %142 {offsets = [2, 0, 0], sizes = [8, 16, 32], strides = [1, 1, 1]} : vector<10x16x32xbf16> to vector<8x16x32xbf16>
    %146 = tpu.concatenate %143, %144, %145 in 2 : vector<8x16x32xbf16>, vector<8x16x32xbf16>, vector<8x16x32xbf16> -> vector<8x16x96xbf16>
    %147 = vector.shape_cast %146 : vector<8x16x96xbf16> to vector<128x96xbf16>
    %c1_81 = arith.constant 1 : index
    %c0_82 = arith.constant 0 : index
    %c0_83 = arith.constant 0 : index
    %c0_84 = arith.constant 0 : index
    %148 = vector.load %arg8[%c1_81, %c0_82, %c0_83, %c0_84] : memref<3x3x96x32xbf16, #tpu.memory_space<vmem>>, vector<1x1x96x32xbf16>
    %149 = vector.shape_cast %148 : vector<1x1x96x32xbf16> to vector<96x32xbf16>
    %cst_85 = arith.constant dense<0.000000e+00> : vector<128x32xf32>
    %150 = tpu.matmul %147, %149, %cst_85 {dimension_numbers = #tpu.dot_dimension_numbers<[1], [0], [0], [1], [0, 0, 1, 1], [], []>} : vector<128x96xbf16>, vector<96x32xbf16>, vector<128x32xf32> -> vector<128x32xf32>
    %151 = arith.addf %127, %150 : vector<128x32xf32>
    %152 = arith.index_cast %139 : i32 to index
    %c0_86 = arith.constant 0 : index
    %c8_87 = arith.constant 8 : index
    %c0_88 = arith.constant 0 : index
    %153 = vector.load %arg12[%152, %c0_86, %c8_87, %c0_88] : memref<3x10x32x32xbf16, #tpu.memory_space<vmem>>, vector<1x10x16x32xbf16>
    %154 = vector.shape_cast %153 : vector<1x10x16x32xbf16> to vector<10x16x32xbf16>
    %155 = vector.extract_strided_slice %154 {offsets = [0, 0, 0], sizes = [8, 16, 32], strides = [1, 1, 1]} : vector<10x16x32xbf16> to vector<8x16x32xbf16>
    %156 = vector.extract_strided_slice %154 {offsets = [1, 0, 0], sizes = [8, 16, 32], strides = [1, 1, 1]} : vector<10x16x32xbf16> to vector<8x16x32xbf16>
    %157 = vector.extract_strided_slice %154 {offsets = [2, 0, 0], sizes = [8, 16, 32], strides = [1, 1, 1]} : vector<10x16x32xbf16> to vector<8x16x32xbf16>
    %158 = tpu.concatenate %155, %156, %157 in 2 : vector<8x16x32xbf16>, vector<8x16x32xbf16>, vector<8x16x32xbf16> -> vector<8x16x96xbf16>
    %159 = vector.shape_cast %158 : vector<8x16x96xbf16> to vector<128x96xbf16>
    %c1_89 = arith.constant 1 : index
    %c1_90 = arith.constant 1 : index
    %c0_91 = arith.constant 0 : index
    %c0_92 = arith.constant 0 : index
    %160 = vector.load %arg8[%c1_89, %c1_90, %c0_91, %c0_92] : memref<3x3x96x32xbf16, #tpu.memory_space<vmem>>, vector<1x1x96x32xbf16>
    %161 = vector.shape_cast %160 : vector<1x1x96x32xbf16> to vector<96x32xbf16>
    %cst_93 = arith.constant dense<0.000000e+00> : vector<128x32xf32>
    %162 = tpu.matmul %159, %161, %cst_93 {dimension_numbers = #tpu.dot_dimension_numbers<[1], [0], [0], [1], [0, 0, 1, 1], [], []>} : vector<128x96xbf16>, vector<96x32xbf16>, vector<128x32xf32> -> vector<128x32xf32>
    %163 = arith.addf %151, %162 : vector<128x32xf32>
    %164 = arith.index_cast %139 : i32 to index
    %c0_94 = arith.constant 0 : index
    %c9_95 = arith.constant 9 : index
    %c0_96 = arith.constant 0 : index
    %165 = vector.load %arg12[%164, %c0_94, %c9_95, %c0_96] : memref<3x10x32x32xbf16, #tpu.memory_space<vmem>>, vector<1x10x16x32xbf16>
    %166 = vector.shape_cast %165 : vector<1x10x16x32xbf16> to vector<10x16x32xbf16>
    %167 = vector.extract_strided_slice %166 {offsets = [0, 0, 0], sizes = [8, 16, 32], strides = [1, 1, 1]} : vector<10x16x32xbf16> to vector<8x16x32xbf16>
    %168 = vector.extract_strided_slice %166 {offsets = [1, 0, 0], sizes = [8, 16, 32], strides = [1, 1, 1]} : vector<10x16x32xbf16> to vector<8x16x32xbf16>
    %169 = vector.extract_strided_slice %166 {offsets = [2, 0, 0], sizes = [8, 16, 32], strides = [1, 1, 1]} : vector<10x16x32xbf16> to vector<8x16x32xbf16>
    %170 = tpu.concatenate %167, %168, %169 in 2 : vector<8x16x32xbf16>, vector<8x16x32xbf16>, vector<8x16x32xbf16> -> vector<8x16x96xbf16>
    %171 = vector.shape_cast %170 : vector<8x16x96xbf16> to vector<128x96xbf16>
    %c1_97 = arith.constant 1 : index
    %c2_98 = arith.constant 2 : index
    %c0_99 = arith.constant 0 : index
    %c0_100 = arith.constant 0 : index
    %172 = vector.load %arg8[%c1_97, %c2_98, %c0_99, %c0_100] : memref<3x3x96x32xbf16, #tpu.memory_space<vmem>>, vector<1x1x96x32xbf16>
    %173 = vector.shape_cast %172 : vector<1x1x96x32xbf16> to vector<96x32xbf16>
    %cst_101 = arith.constant dense<0.000000e+00> : vector<128x32xf32>
    %174 = tpu.matmul %171, %173, %cst_101 {dimension_numbers = #tpu.dot_dimension_numbers<[1], [0], [0], [1], [0, 0, 1, 1], [], []>} : vector<128x96xbf16>, vector<96x32xbf16>, vector<128x32xf32> -> vector<128x32xf32>
    %175 = arith.addf %163, %174 : vector<128x32xf32>
    %c2_i32 = arith.constant 2 : i32
    %176 = arith.addi %arg2, %c2_i32 : i32
    %c1_i32_102 = arith.constant 1 : i32
    %177 = arith.addi %176, %c1_i32_102 : i32
    %c3_i32_103 = arith.constant 3 : i32
    %c0_i32_104 = arith.constant 0 : i32
    %178 = arith.cmpi eq, %c3_i32_103, %c0_i32_104 : i32
    %c1_i32_105 = arith.constant 1 : i32
    %179 = arith.select %178, %c1_i32_105, %c3_i32_103 : i32
    %180 = arith.remsi %177, %179 : i32
    %c0_i32_106 = arith.constant 0 : i32
    %181 = arith.cmpi ne, %180, %c0_i32_106 : i32
    %c0_i32_107 = arith.constant 0 : i32
    %182 = arith.cmpi slt, %180, %c0_i32_107 : i32
    %c0_i32_108 = arith.constant 0 : i32
    %183 = arith.cmpi slt, %179, %c0_i32_108 : i32
    %184 = arith.xori %182, %183 : i1
    %185 = arith.andi %184, %181 : i1
    %186 = arith.addi %180, %179 : i32
    %187 = arith.select %185, %186, %180 : i32
    %188 = arith.index_cast %187 : i32 to index
    %c0_109 = arith.constant 0 : index
    %c7_110 = arith.constant 7 : index
    %c0_111 = arith.constant 0 : index
    %189 = vector.load %arg12[%188, %c0_109, %c7_110, %c0_111] : memref<3x10x32x32xbf16, #tpu.memory_space<vmem>>, vector<1x10x16x32xbf16>
    %190 = vector.shape_cast %189 : vector<1x10x16x32xbf16> to vector<10x16x32xbf16>
    %191 = vector.extract_strided_slice %190 {offsets = [0, 0, 0], sizes = [8, 16, 32], strides = [1, 1, 1]} : vector<10x16x32xbf16> to vector<8x16x32xbf16>
    %192 = vector.extract_strided_slice %190 {offsets = [1, 0, 0], sizes = [8, 16, 32], strides = [1, 1, 1]} : vector<10x16x32xbf16> to vector<8x16x32xbf16>
    %193 = vector.extract_strided_slice %190 {offsets = [2, 0, 0], sizes = [8, 16, 32], strides = [1, 1, 1]} : vector<10x16x32xbf16> to vector<8x16x32xbf16>
    %194 = tpu.concatenate %191, %192, %193 in 2 : vector<8x16x32xbf16>, vector<8x16x32xbf16>, vector<8x16x32xbf16> -> vector<8x16x96xbf16>
    %195 = vector.shape_cast %194 : vector<8x16x96xbf16> to vector<128x96xbf16>
    %c2_112 = arith.constant 2 : index
    %c0_113 = arith.constant 0 : index
    %c0_114 = arith.constant 0 : index
    %c0_115 = arith.constant 0 : index
    %196 = vector.load %arg8[%c2_112, %c0_113, %c0_114, %c0_115] : memref<3x3x96x32xbf16, #tpu.memory_space<vmem>>, vector<1x1x96x32xbf16>
    %197 = vector.shape_cast %196 : vector<1x1x96x32xbf16> to vector<96x32xbf16>
    %cst_116 = arith.constant dense<0.000000e+00> : vector<128x32xf32>
    %198 = tpu.matmul %195, %197, %cst_116 {dimension_numbers = #tpu.dot_dimension_numbers<[1], [0], [0], [1], [0, 0, 1, 1], [], []>} : vector<128x96xbf16>, vector<96x32xbf16>, vector<128x32xf32> -> vector<128x32xf32>
    %199 = arith.addf %175, %198 : vector<128x32xf32>
    %200 = arith.index_cast %187 : i32 to index
    %c0_117 = arith.constant 0 : index
    %c8_118 = arith.constant 8 : index
    %c0_119 = arith.constant 0 : index
    %201 = vector.load %arg12[%200, %c0_117, %c8_118, %c0_119] : memref<3x10x32x32xbf16, #tpu.memory_space<vmem>>, vector<1x10x16x32xbf16>
    %202 = vector.shape_cast %201 : vector<1x10x16x32xbf16> to vector<10x16x32xbf16>
    %203 = vector.extract_strided_slice %202 {offsets = [0, 0, 0], sizes = [8, 16, 32], strides = [1, 1, 1]} : vector<10x16x32xbf16> to vector<8x16x32xbf16>
    %204 = vector.extract_strided_slice %202 {offsets = [1, 0, 0], sizes = [8, 16, 32], strides = [1, 1, 1]} : vector<10x16x32xbf16> to vector<8x16x32xbf16>
    %205 = vector.extract_strided_slice %202 {offsets = [2, 0, 0], sizes = [8, 16, 32], strides = [1, 1, 1]} : vector<10x16x32xbf16> to vector<8x16x32xbf16>
    %206 = tpu.concatenate %203, %204, %205 in 2 : vector<8x16x32xbf16>, vector<8x16x32xbf16>, vector<8x16x32xbf16> -> vector<8x16x96xbf16>
    %207 = vector.shape_cast %206 : vector<8x16x96xbf16> to vector<128x96xbf16>
    %c2_120 = arith.constant 2 : index
    %c1_121 = arith.constant 1 : index
    %c0_122 = arith.constant 0 : index
    %c0_123 = arith.constant 0 : index
    %208 = vector.load %arg8[%c2_120, %c1_121, %c0_122, %c0_123] : memref<3x3x96x32xbf16, #tpu.memory_space<vmem>>, vector<1x1x96x32xbf16>
    %209 = vector.shape_cast %208 : vector<1x1x96x32xbf16> to vector<96x32xbf16>
    %cst_124 = arith.constant dense<0.000000e+00> : vector<128x32xf32>
    %210 = tpu.matmul %207, %209, %cst_124 {dimension_numbers = #tpu.dot_dimension_numbers<[1], [0], [0], [1], [0, 0, 1, 1], [], []>} : vector<128x96xbf16>, vector<96x32xbf16>, vector<128x32xf32> -> vector<128x32xf32>
    %211 = arith.addf %199, %210 : vector<128x32xf32>
    %212 = arith.index_cast %187 : i32 to index
    %c0_125 = arith.constant 0 : index
    %c9_126 = arith.constant 9 : index
    %c0_127 = arith.constant 0 : index
    %213 = vector.load %arg12[%212, %c0_125, %c9_126, %c0_127] : memref<3x10x32x32xbf16, #tpu.memory_space<vmem>>, vector<1x10x16x32xbf16>
    %214 = vector.shape_cast %213 : vector<1x10x16x32xbf16> to vector<10x16x32xbf16>
    %215 = vector.extract_strided_slice %214 {offsets = [0, 0, 0], sizes = [8, 16, 32], strides = [1, 1, 1]} : vector<10x16x32xbf16> to vector<8x16x32xbf16>
    %216 = vector.extract_strided_slice %214 {offsets = [1, 0, 0], sizes = [8, 16, 32], strides = [1, 1, 1]} : vector<10x16x32xbf16> to vector<8x16x32xbf16>
    %217 = vector.extract_strided_slice %214 {offsets = [2, 0, 0], sizes = [8, 16, 32], strides = [1, 1, 1]} : vector<10x16x32xbf16> to vector<8x16x32xbf16>
    %218 = tpu.concatenate %215, %216, %217 in 2 : vector<8x16x32xbf16>, vector<8x16x32xbf16>, vector<8x16x32xbf16> -> vector<8x16x96xbf16>
    %219 = vector.shape_cast %218 : vector<8x16x96xbf16> to vector<128x96xbf16>
    %c2_128 = arith.constant 2 : index
    %c2_129 = arith.constant 2 : index
    %c0_130 = arith.constant 0 : index
    %c0_131 = arith.constant 0 : index
    %220 = vector.load %arg8[%c2_128, %c2_129, %c0_130, %c0_131] : memref<3x3x96x32xbf16, #tpu.memory_space<vmem>>, vector<1x1x96x32xbf16>
    %221 = vector.shape_cast %220 : vector<1x1x96x32xbf16> to vector<96x32xbf16>
    %cst_132 = arith.constant dense<0.000000e+00> : vector<128x32xf32>
    %222 = tpu.matmul %219, %221, %cst_132 {dimension_numbers = #tpu.dot_dimension_numbers<[1], [0], [0], [1], [0, 0, 1, 1], [], []>} : vector<128x96xbf16>, vector<96x32xbf16>, vector<128x32xf32> -> vector<128x32xf32>
    %223 = arith.addf %211, %222 : vector<128x32xf32>
    %c0_133 = arith.constant 0 : index
    %c0_134 = arith.constant 0 : index
    %224 = vector.load %arg9[%c0_133, %c0_134] : memref<1x32xf32, #tpu.memory_space<vmem>>, vector<1x32xf32>
    %225 = vector.broadcast %224 : vector<1x32xf32> to vector<128x32xf32>
    %226 = arith.addf %223, %225 : vector<128x32xf32>
    %c0_135 = arith.constant 0 : index
    %c0_136 = arith.constant 0 : index
    %c0_137 = arith.constant 0 : index
    %c0_138 = arith.constant 0 : index
    %227 = vector.load %arg10[%c0_135, %c0_136, %c0_137, %c0_138] : memref<1x1x128x32xf32, #tpu.memory_space<vmem>>, vector<1x1x128x32xf32>
    %228 = vector.shape_cast %227 : vector<1x1x128x32xf32> to vector<128x32xf32>
    %229 = arith.addf %226, %228 : vector<128x32xf32>
    %c0_139 = arith.constant 0 : index
    %c0_140 = arith.constant 0 : index
    %c0_141 = arith.constant 0 : index
    %c0_142 = arith.constant 0 : index
    %230 = vector.load %arg11[%c0_139, %c0_140, %c0_141, %c0_142] : memref<1x1x128x32xf32, #tpu.memory_space<vmem>>, vector<1x1x128x32xf32>
    %231 = vector.shape_cast %230 : vector<1x1x128x32xf32> to vector<128x32xf32>
    %232 = vector.shape_cast %229 : vector<128x32xf32> to vector<1x1x128x32xf32>
    tpu.vector_store %arg11[%c0_139, %c0_140, %c0_141, %c0_142], %232 {strides = array<i32>} : memref<1x1x128x32xf32, #tpu.memory_space<vmem>>, vector<1x1x128x32xf32>,
    return
  }
  func.func @transform_0(%arg0: i32, %arg1: i32, %arg2: i32) -> (i32, i32, i32, i32, i32) {
    %c0_i32 = arith.constant 0 : i32
    %c0_i32_0 = arith.constant 0 : i32
    %c0_i32_1 = arith.constant 0 : i32
    return %arg0, %arg2, %arg1, %c0_i32, %c0_i32_0 : i32, i32, i32, i32, i32
  }
  func.func @transform_1(%arg0: i32, %arg1: i32, %arg2: i32) -> (i32, i32, i32, i32, i32) {
    %c8_i32 = arith.constant 8 : i32
    %0 = arith.muli %arg1, %c8_i32 : i32
    %c1_i32 = arith.constant 1 : i32
    %1 = arith.subi %0, %c1_i32 : i32
    %c0_i32 = arith.constant 0 : i32
    %2 = arith.maxsi %1, %c0_i32 : i32
    %c0_i32_0 = arith.constant 0 : i32
    %c0_i32_1 = arith.constant 0 : i32
    %c0_i32_2 = arith.constant 0 : i32
    return %arg0, %arg2, %2, %c0_i32_0, %c0_i32_1 : i32, i32, i32, i32, i32
  }
  func.func @transform_2(%arg0: i32, %arg1: i32, %arg2: i32) -> (i32, i32, i32, i32, i32) {
    %c1_i32 = arith.constant 1 : i32
    %0 = arith.addi %arg1, %c1_i32 : i32
    %c8_i32 = arith.constant 8 : i32
    %1 = arith.muli %0, %c8_i32 : i32
    %c15_i32 = arith.constant 15 : i32
    %2 = arith.minsi %1, %c15_i32 : i32
    %c0_i32 = arith.constant 0 : i32
    %c0_i32_0 = arith.constant 0 : i32
    %c0_i32_1 = arith.constant 0 : i32
    return %arg0, %arg2, %2, %c0_i32, %c0_i32_0 : i32, i32, i32, i32, i32
  }
  func.func @transform_3(%arg0: i32, %arg1: i32, %arg2: i32) -> (i32, i32, i32, i32) {
    %c0_i32 = arith.constant 0 : i32
    %c0_i32_0 = arith.constant 0 : i32
    %c0_i32_1 = arith.constant 0 : i32
    return %arg0, %arg2, %c0_i32, %c0_i32_0 : i32, i32, i32, i32
  }
  func.func @transform_4(%arg0: i32, %arg1: i32, %arg2: i32) -> (i32, i32, i32, i32) {
    %c0_i32 = arith.constant 0 : i32
    %c0_i32_0 = arith.constant 0 : i32
    %c0_i32_1 = arith.constant 0 : i32
    return %arg0, %arg2, %c0_i32, %c0_i32_0 : i32, i32, i32, i32
  }
  func.func @transform_5(%arg0: i32, %arg1: i32, %arg2: i32) -> (i32, i32, i32, i32) {
    %c0_i32 = arith.constant 0 : i32
    %c0_i32_0 = arith.constant 0 : i32
    %c0_i32_1 = arith.constant 0 : i32
    %c0_i32_2 = arith.constant 0 : i32
    %c0_i32_3 = arith.constant 0 : i32
    return %c0_i32, %c0_i32_0, %c0_i32_1, %c0_i32_2 : i32, i32, i32, i32
  }
  func.func @transform_6(%arg0: i32, %arg1: i32, %arg2: i32) -> (i32, i32) {
    %c0_i32 = arith.constant 0 : i32
    %c0_i32_0 = arith.constant 0 : i32
    %c0_i32_1 = arith.constant 0 : i32
    return %c0_i32, %c0_i32_0 : i32, i32
  }
  func.func @transform_7(%arg0: i32, %arg1: i32, %arg2: i32) -> (i32, i32, i32, i32) {
    %c0_i32 = arith.constant 0 : i32
    %c0_i32_0 = arith.constant 0 : i32
    return %arg0, %arg2, %arg1, %c0_i32 : i32, i32, i32, i32
  }
  func.func @transform_8(%arg0: i32, %arg1: i32, %arg2: i32) -> (i32, i32, i32, i32) {
    %c0_i32 = arith.constant 0 : i32
    %c0_i32_0 = arith.constant 0 : i32
    return %arg0, %arg2, %arg1, %c0_i32 : i32, i32, i32, i32
  }
}

</mosaic_0001>

<llo_original>
// kernel: res_block_forward.4
$region0: #{res_block_forward.4}
  #allocation0 [shape = 'u32[]', space=smem, size = 0x4, offset = 0x4, fixed_abs, tag = 'smem constant byte address 0x4 - core index']
  #allocation1 [shape = 'u32[144,128]{1,0:T(1,128)}', space=vmem, size = 0x12000, scoped, tag = 'internal scratch']
  %s0 = inlined_call_operand.hbm [shape: f32[2,4,16,16,32], index: 0, kind: input, shape index: {}]
  %s1 = inlined_call_operand.vmem [shape: f32[2,4,1,32], index: 1, kind: output, shape index: {0}]
  %s2 = inlined_call_operand.vmem [shape: f32[2,4,1,32], index: 2, kind: output, shape index: {1}]
  %3 = xla_tuple %s1, %s2
  %s4 = sld [smem:[#allocation0]]
  $region53: #{res_block_forward.4} parent=0
    _
  %s6 = ssub.s32 1, %s4
  %s7 = scalar_select 0, %s6, %s4
  $region1: #{res_block_forward.4} parent=0
    #allocation2 [shape = 'u8[131072]{0}', space=vmem, size = 0x20000, scoped, tag = 'input window, operand 0']
    #allocation3 [shape = 's32[2]{0}', space=sflag, size = 0x8, scoped, tag = 'scoped memory for res_block_forward.4']
    %8 = vsyncpa [#allocation3], 0
    %s9 = scalar_lea.sflag [#allocation3], 1
    %10 = vsyncpa %s9, 0
    loop: start=0, step=1, limit=18
    $region2: #{res_block_forward.4} parent=1 // loop_pre_header
      _
    $region3: #{res_block_forward.4} parent=1 // loop_header
      %s12 = sphi 0, %s16
      %p13 = scmp.ge.s32.totalorder %s12, 18
      %s19 = sphi 0, %s38
      %s20 = sphi 0, %s34
      %s21 = sphi 0, %s30
      %s22 = sphi 0, %s19
      %s23 = sphi 0, %s20
      %s24 = sphi 0, %s21
      %s25 = sphi 0, %s22
      %s26 = sphi 0, %s23
      %s27 = sphi 0, %s24
      %s45 = sphi 0, %s47
      %s48 = sphi 0, %s45
      %s49 = sphi 0, %s48
      %s65 = sphi 0, %s49
      %s73 = sphi 0, %s75
      %s76 = sphi 0, %s73
      %s77 = sphi 0, %s76
      %s93 = sphi 0, %s77
      %s101 = sphi 0, %s103
      %s104 = sphi 0, %s101
      %s105 = sphi 0, %s104
      %s121 = sphi 0, %s105
    $region4: #{res_block_forward.4} parent=1 // loop_header_branch
      %15 = sbr.rel (%p13) target = $region8
    $region5: #{res_block_forward.4} parent=1 // loop_body
      %s17 = ssub.s32 %s12, 1
      %s18 = ssub.s32 %s12, 2
      %s28 = sadd.s32 1, %s21
      %p29 = scmp.ge.s32.totalorder %s28, 2
      %s30 = scalar_select %p29, 0, %s28
      %s31 = sadd.s32 1, %s20
      %s32 = scalar_select %p29, %s31, %s20
      %p33 = scmp.ge.s32.totalorder %s32, 4
      %s34 = scalar_select %p33, 0, %s32
      %s35 = sadd.s32 1, %s19
      %s36 = scalar_select %p33, %s35, %s19
      %p37 = scmp.ge.s32.totalorder %s36, 2
      %s38 = scalar_select %p37, 0, %s36
      %s39 = ssub.s32 %s19, %s38
      %s40 = ssub.s32 %s20, %s34
      %s41 = sor.u32 %s39, %s40
      %s42 = ssub.s32 %s21, %s30
      %s43 = sor.u32 %s41, %s42
      %p44 = scmp.eq.s32.totalorder %s43, 0
      %s46 = sadd.s32 %s45, 1
      %s47 = scalar_select %p44, %s45, %s46
      %p50 = pneg %p44
      %p51 = scmp.eq.s32.totalorder %s12, 15
      %p52 = por %p50, %p51
      %p53 = scmp.ne.s32.totalorder %s45, %s48
      %p54 = scmp.eq.s32.totalorder %s12, 0
      %p55 = por %p53, %p54
      %p56 = scmp.ne.s32.totalorder %s45, %s48
      %p57 = scmp.eq.s32.totalorder %s17, 15
      %p58 = por %p56, %p57
      %p59 = scmp.ne.s32.totalorder %s48, %s49
      %p60 = scmp.eq.s32.totalorder %s17, 0
      %p61 = por %p59, %p60
      %p62 = scmp.ne.s32.totalorder %s48, %s49
      %p63 = scmp.eq.s32.totalorder %s18, 15
      %p64 = por %p62, %p63
      %p66 = scmp.ne.s32.totalorder %s49, %s65
      %p67 = scmp.eq.s32.totalorder %s18, 0
      %p68 = por %p66, %p67
      %s69 = ssub.s32 %s19, %s38
      %s70 = ssub.s32 %s20, %s34
      %s71 = sor.u32 %s69, %s70
      %p72 = scmp.eq.s32.totalorder %s71, 0
      %s74 = sadd.s32 %s73, 1
      %s75 = scalar_select %p72, %s73, %s74
      %p78 = pneg %p72
      %p79 = scmp.eq.s32.totalorder %s12, 15
      %p80 = por %p78, %p79
      %p81 = scmp.ne.s32.totalorder %s73, %s76
      %p82 = scmp.eq.s32.totalorder %s12, 0
      %p83 = por %p81, %p82
      %p84 = scmp.ne.s32.totalorder %s73, %s76
      %p85 = scmp.eq.s32.totalorder %s17, 15
      %p86 = por %p84, %p85
      %p87 = scmp.ne.s32.totalorder %s76, %s77
      %p88 = scmp.eq.s32.totalorder %s17, 0
      %p89 = por %p87, %p88
      %p90 = scmp.ne.s32.totalorder %s76, %s77
      %p91 = scmp.eq.s32.totalorder %s18, 15
      %p92 = por %p90, %p91
      %p94 = scmp.ne.s32.totalorder %s77, %s93
      %p95 = scmp.eq.s32.totalorder %s18, 0
      %p96 = por %p94, %p95
      %s97 = ssub.s32 %s19, %s38
      %s98 = ssub.s32 %s20, %s34
      %s99 = sor.u32 %s97, %s98
      %p100 = scmp.eq.s32.totalorder %s99, 0
      %s102 = sadd.s32 %s101, 1
      %s103 = scalar_select %p100, %s101, %s102
      %p106 = pneg %p100
      %p107 = scmp.eq.s32.totalorder %s12, 15
      %p108 = por %p106, %p107
      %p109 = scmp.ne.s32.totalorder %s101, %s104
      %p110 = scmp.eq.s32.totalorder %s12, 0
      %p111 = por %p109, %p110
      %p112 = scmp.ne.s32.totalorder %s101, %s104
      %p113 = scmp.eq.s32.totalorder %s17, 15
      %p114 = por %p112, %p113
      %p115 = scmp.ne.s32.totalorder %s104, %s105
      %p116 = scmp.eq.s32.totalorder %s17, 0
      %p117 = por %p115, %p116
      %p118 = scmp.ne.s32.totalorder %s104, %s105
      %p119 = scmp.eq.s32.totalorder %s18, 15
      %p120 = por %p118, %p119
      %p122 = scmp.ne.s32.totalorder %s105, %s121
      %p123 = scmp.eq.s32.totalorder %s18, 0
      %p124 = por %p122, %p123
      %p125 = scmp.le.s32.totalorder 1, %s12
      %p126 = scmp.lt.s32.totalorder %s12, 17
      %p127 = pnand %p125, %p126
      %p128 = pneg %p127
      // Predicated region
      $region9: #{res_block_forward.4} parent=5 // pred_check
        _
      $region10: #{res_block_forward.4} parent=5 // pred_check_branch
        %130 = sbr.rel (%p127) target = $region12
      $region11: #{res_block_forward.4} parent=5 // pred_region
        %s131 = ssub.s32 %s12, 1
      $region12: #{res_block_forward.4} parent=5 // pred_fallthru
        _
      %p132 = scmp.lt.s32.totalorder %s12, 16
      // Predicated region
      $region13: #{res_block_forward.4} parent=5 // pred_check
        %p133 = pneg %p132
      $region14: #{res_block_forward.4} parent=5 // pred_check_branch
        %135 = sbr.rel (%p133) target = $region16
      $region15: #{res_block_forward.4} parent=5 // pred_region
        // Predicated region
        $region17: #{res_block_forward.4} parent=15 // pred_check
          %p136 = pneg %p55
        $region18: #{res_block_forward.4} parent=15 // pred_check_branch
          %138 = sbr.rel (%p136) target = $region20
        $region19: #{res_block_forward.4} parent=15 // pred_region
          %s139 = sand.u32 %s45, 1
          %s140 = scalar_lea.sflag [#allocation3], %s139
          %s141 = sand.u32 %s45, 1
          %s142 = smul.addr %s141, 128
          %s143 = scalar_lea.vmem [#allocation2], %s142
          %s144 = smul.u32 8, %s21
          %s146 = ssub.s32 2048, 2048
          %147 = vsyncadd %s140, %s146
          %s148 = smul.addr %s144, 2
          %s149 = smul.addr %s20, 32
          %s150 = sadd.s32 %s148, %s149
          %s151 = smul.addr %s19, 128
          %s152 = sadd.s32 %s150, %s151
          %s153 = smul.addr %s152, 128
          %s154 = scalar_lea.hbm %s0, %s153
          %s155 = sshll.u32 %s143, 4
          %s156 = int_to_ptr.vmem [resolvable:$true] %s155
          %161 = dma.hbm_to_vmem [thread:$0]  %s154, 2048, %s156, %s140, 128, 128, 8
        $region20: #{res_block_forward.4} parent=15 // pred_fallthru
          _
      $region16: #{res_block_forward.4} parent=5 // pred_fallthru
        _
      %p162 = scmp.le.s32.totalorder 1, %s12
      %p163 = scmp.lt.s32.totalorder %s12, 17
      %p164 = pnand %p162, %p163
      %p165 = pneg %p164
      // Predicated region
      $region21: #{res_block_forward.4} parent=5 // pred_check
        _
      $region22: #{res_block_forward.4} parent=5 // pred_check_branch
        %167 = sbr.rel (%p164) target = $region24
      $region23: #{res_block_forward.4} parent=5 // pred_region
        %s168 = ssub.s32 %s12, 1
        %s169 = sand.u32 %s48, 1
        %s170 = scalar_lea.sflag [#allocation3], %s169
        %s171 = sand.u32 %s48, 1
        %s172 = smul.addr %s171, 128
        %s173 = scalar_lea.vmem [#allocation2], %s172
        // Predicated region
        $region25: #{res_block_forward.4} parent=23 // pred_check
          %p174 = pneg %p61
        $region26: #{res_block_forward.4} parent=23 // pred_check_branch
          %176 = sbr.rel (%p174) target = $region28
        $region27: #{res_block_forward.4} parent=23 // pred_region
          %177 = dma.done %s170, 2048
        $region28: #{res_block_forward.4} parent=23 // pred_fallthru
          _
        %s178 = sand.u32 %s48, 1
        %s179 = scalar_lea.sflag [#allocation3], %s178
        %s180 = sand.u32 %s48, 1
        %s181 = smul.addr %s180, 128
        %s182 = scalar_lea.vmem [#allocation2], %s181
        %p183 = pneg %p61
        %p184 = pneg %p58
        %p185 = pneg %p89
        %p186 = pneg %p86
        %p187 = scmp.lt.s32.totalorder %s22, 1
        %s188 = scalar_select %p187, %s22, 1
        %p189 = scmp.lt.s32.totalorder %s23, 3
        %s190 = scalar_select %p189, %s23, 3
        %s191 = smul.addr %s188, 4
        %s192 = sadd.s32 %s190, %s191
        %s193 = scalar_lea.vmem %s1, %s192
        %p194 = pneg %p117
        %p195 = pneg %p114
        %p196 = scmp.lt.s32.totalorder %s22, 1
        %s197 = scalar_select %p196, %s22, 1
        %p198 = scmp.lt.s32.totalorder %s23, 3
        %s199 = scalar_select %p198, %s23, 3
        %s200 = smul.addr %s197, 4
        %s201 = sadd.s32 %s199, %s200
        %s202 = scalar_lea.vmem %s2, %s201
        %s203 = smul.u32 8, %s24
        %p204 = scmp.lt.s32.totalorder %s22, 1
        %s205 = scalar_select %p204, %s22, 1
        %p206 = scmp.lt.s32.totalorder %s23, 3
        %s207 = scalar_select %p206, %s23, 3
        %s208 = smul.addr %s205, 4
        %s209 = sadd.s32 %s207, %s208
        %s210 = scalar_lea.vmem %s1, %s209
        %p211 = scmp.lt.s32.totalorder %s22, 1
        %s212 = scalar_select %p211, %s22, 1
        %p213 = scmp.lt.s32.totalorder %s23, 3
        %s214 = scalar_select %p213, %s23, 3
        %s215 = smul.addr %s212, 4
        %s216 = sadd.s32 %s214, %s215
        %s217 = scalar_lea.vmem %s2, %s216
        %p218 = scmp.eq.s32.totalorder %s24, 0
        // Predicated region
        $region29: #{res_block_forward.4} parent=23 // pred_check
          %p219 = pneg %p218
        $region30: #{res_block_forward.4} parent=23 // pred_check_branch
          %221 = sbr.rel (%p219) target = $region32
        $region31: #{res_block_forward.4} parent=23 // pred_region
          %vm222 = vcmask 253952
          %223 = vst.msk [vmem:[%s210] sm:$0x1] %vm222, 0.0
          %224 = vst.msk [vmem:[%s217] sm:$0x1] %vm222, 0.0
        $region32: #{res_block_forward.4} parent=23 // pred_fallthru
          _
        %v225 = vld [vmem:[%s173] sm:$0xff]
        %v226 = vld [vmem:[%s173 + $0x8] sm:$0xff]
        %v227 = vld [vmem:[%s173 + $0x10] sm:$0xff]
        %v228 = vld [vmem:[%s173 + $0x18] sm:$0xff]
        %v229 = vld [vmem:[%s173 + $0x20] sm:$0xff]
        %v230 = vld [vmem:[%s173 + $0x28] sm:$0xff]
        %v231 = vld [vmem:[%s173 + $0x30] sm:$0xff]
        %v232 = vld [vmem:[%s173 + $0x38] sm:$0xff]
        %v233 = vld [vmem:[%s173 + $0x40] sm:$0xff]
        %v234 = vld [vmem:[%s173 + $0x48] sm:$0xff]
        %v235 = vld [vmem:[%s173 + $0x50] sm:$0xff]
        %v236 = vld [vmem:[%s173 + $0x58] sm:$0xff]
        %v237 = vld [vmem:[%s173 + $0x60] sm:$0xff]
        %v238 = vld [vmem:[%s173 + $0x68] sm:$0xff]
        %v239 = vld [vmem:[%s173 + $0x70] sm:$0xff]
        %v240 = vld [vmem:[%s173 + $0x78] sm:$0xff]
        %v241 = vld [vmem:[%s210] sm:$0x1]
        %vm242 = vcmask 261120
        %v243 = vsel %vm242, %v225, 0.0
        %v244 = vsel %vm242, %v226, 0.0
        %v245 = vadd.f32 %v243, %v244
        %v246 = vsel %vm242, %v227, 0.0
        %v247 = vadd.f32 %v245, %v246
        %v248 = vsel %vm242, %v228, 0.0
        %v249 = vadd.f32 %v247, %v248
        %v250 = vsel %vm242, %v229, 0.0
        %v251 = vadd.f32 %v249, %v250
        %v252 = vsel %vm242, %v230, 0.0
        %v253 = vadd.f32 %v251, %v252
        %v254 = vsel %vm242, %v231, 0.0
        %v255 = vadd.f32 %v253, %v254
        %v256 = vsel %vm242, %v232, 0.0
        %v257 = vadd.f32 %v255, %v256
        %v258 = vsel %vm242, %v233, 0.0
        %v259 = vadd.f32 %v257, %v258
        %v260 = vsel %vm242, %v234, 0.0
        %v261 = vadd.f32 %v259, %v260
        %v262 = vsel %vm242, %v235, 0.0
        %v263 = vadd.f32 %v261, %v262
        %v264 = vsel %vm242, %v236, 0.0
        %v265 = vadd.f32 %v263, %v264
        %v266 = vsel %vm242, %v237, 0.0
        %v267 = vadd.f32 %v265, %v266
        %v268 = vsel %vm242, %v238, 0.0
        %v269 = vadd.f32 %v267, %v268
        %v270 = vsel %vm242, %v239, 0.0
        %v271 = vadd.f32 %v269, %v270
        %v272 = vsel %vm242, %v240, 0.0
        %v273 = vadd.f32 %v271, %v272
        %v274 = vrot.slane %v273, 4
        %v275 = vadd.f32 %v273, %v274
        %v276 = vrot.slane %v275, 2
        %v277 = vadd.f32 %v275, %v276
        %v278 = vrot.slane %v277, 1
        %v279 = vadd.f32 %v277, %v278
        %v280 = vadd.f32 %v241, %v279
        %vm281 = vcmask 253952
        %282 = vst.msk [vmem:[%s210] sm:$0x1] %vm281, %v280
        %v283 = vld [vmem:[%s217] sm:$0x1]
        %v284 = vmul.f32 %v225, %v225
        %v285 = vmul.f32 %v226, %v226
        %v286 = vmul.f32 %v227, %v227
        %v287 = vmul.f32 %v228, %v228
        %v288 = vmul.f32 %v229, %v229
        %v289 = vmul.f32 %v230, %v230
        %v290 = vmul.f32 %v231, %v231
        %v291 = vmul.f32 %v232, %v232
        %v292 = vmul.f32 %v233, %v233
        %v293 = vmul.f32 %v234, %v234
        %v294 = vmul.f32 %v235, %v235
        %v295 = vmul.f32 %v236, %v236
        %v296 = vmul.f32 %v237, %v237
        %v297 = vmul.f32 %v238, %v238
        %v298 = vmul.f32 %v239, %v239
        %v299 = vmul.f32 %v240, %v240
        %v300 = vsel %vm242, %v284, 0.0
        %v301 = vsel %vm242, %v285, 0.0
        %v302 = vadd.f32 %v300, %v301
        %v303 = vsel %vm242, %v286, 0.0
        %v304 = vadd.f32 %v302, %v303
        %v305 = vsel %vm242, %v287, 0.0
        %v306 = vadd.f32 %v304, %v305
        %v307 = vsel %vm242, %v288, 0.0
        %v308 = vadd.f32 %v306, %v307
        %v309 = vsel %vm242, %v289, 0.0
        %v310 = vadd.f32 %v308, %v309
        %v311 = vsel %vm242, %v290, 0.0
        %v312 = vadd.f32 %v310, %v311
        %v313 = vsel %vm242, %v291, 0.0
        %v314 = vadd.f32 %v312, %v313
        %v315 = vsel %vm242, %v292, 0.0
        %v316 = vadd.f32 %v314, %v315
        %v317 = vsel %vm242, %v293, 0.0
        %v318 = vadd.f32 %v316, %v317
        %v319 = vsel %vm242, %v294, 0.0
        %v320 = vadd.f32 %v318, %v319
        %v321 = vsel %vm242, %v295, 0.0
        %v322 = vadd.f32 %v320, %v321
        %v323 = vsel %vm242, %v296, 0.0
        %v324 = vadd.f32 %v322, %v323
        %v325 = vsel %vm242, %v297, 0.0
        %v326 = vadd.f32 %v324, %v325
        %v327 = vsel %vm242, %v298, 0.0
        %v328 = vadd.f32 %v326, %v327
        %v329 = vsel %vm242, %v299, 0.0
        %v330 = vadd.f32 %v328, %v329
        %v331 = vrot.slane %v330, 4
        %v332 = vadd.f32 %v330, %v331
        %v333 = vrot.slane %v332, 2
        %v334 = vadd.f32 %v332, %v333
        %v335 = vrot.slane %v334, 1
        %v336 = vadd.f32 %v334, %v335
        %v337 = vadd.f32 %v283, %v336
        %338 = vst.msk [vmem:[%s217] sm:$0x1] %vm281, %v337
        %p339 = scmp.lt.s32.totalorder %s22, 1
        %s340 = scalar_select %p339, %s22, 1
        %p341 = scmp.lt.s32.totalorder %s23, 3
        %s342 = scalar_select %p341, %s23, 3
        %s343 = smul.addr %s340, 4
        %s344 = sadd.s32 %s342, %s343
        %s345 = scalar_lea.vmem %s1, %s344
        %p346 = scmp.lt.s32.totalorder %s22, 1
        %s347 = scalar_select %p346, %s22, 1
        %p348 = scmp.lt.s32.totalorder %s23, 3
        %s349 = scalar_select %p348, %s23, 3
        %s350 = smul.addr %s347, 4
        %s351 = sadd.s32 %s349, %s350
        %s352 = scalar_lea.vmem %s2, %s351
        // Predicated region
        $region33: #{res_block_forward.4} parent=23 // pred_check
          %p353 = pneg %p86
        $region34: #{res_block_forward.4} parent=23 // pred_check_branch
          %355 = sbr.rel (%p353) target = $region36
        $region35: #{res_block_forward.4} parent=23 // pred_region
          _
        $region36: #{res_block_forward.4} parent=23 // pred_fallthru
          _
        // Predicated region
        $region37: #{res_block_forward.4} parent=23 // pred_check
          %p356 = pneg %p114
        $region38: #{res_block_forward.4} parent=23 // pred_check_branch
          %358 = sbr.rel (%p356) target = $region40
        $region39: #{res_block_forward.4} parent=23 // pred_region
          _
        $region40: #{res_block_forward.4} parent=23 // pred_fallthru
          _
      $region24: #{res_block_forward.4} parent=5 // pred_fallthru
        _
      %p359 = scmp.le.s32.totalorder 2, %s12
      // Predicated region
      $region41: #{res_block_forward.4} parent=5 // pred_check
        %p360 = pneg %p359
      $region42: #{res_block_forward.4} parent=5 // pred_check_branch
        %362 = sbr.rel (%p360) target = $region44
      $region43: #{res_block_forward.4} parent=5 // pred_region
        %s363 = ssub.s32 %s12, 2
        // Predicated region
        $region45: #{res_block_forward.4} parent=43 // pred_check
          %p364 = pneg %p92
        $region46: #{res_block_forward.4} parent=43 // pred_check_branch
          %366 = sbr.rel (%p364) target = $region48
        $region47: #{res_block_forward.4} parent=43 // pred_region
          %p367 = scmp.lt.s32.totalorder %s25, 1
          %s368 = scalar_select %p367, %s25, 1
          %p369 = scmp.lt.s32.totalorder %s26, 3
          %s370 = scalar_select %p369, %s26, 3
          %s371 = smul.addr %s368, 4
          %s372 = sadd.s32 %s370, %s371
          %s373 = scalar_lea.vmem %s1, %s372
        $region48: #{res_block_forward.4} parent=43 // pred_fallthru
          _
        // Predicated region
        $region49: #{res_block_forward.4} parent=43 // pred_check
          %p374 = pneg %p120
        $region50: #{res_block_forward.4} parent=43 // pred_check_branch
          %376 = sbr.rel (%p374) target = $region52
        $region51: #{res_block_forward.4} parent=43 // pred_region
          %p377 = scmp.lt.s32.totalorder %s25, 1
          %s378 = scalar_select %p377, %s25, 1
          %p379 = scmp.lt.s32.totalorder %s26, 3
          %s380 = scalar_select %p379, %s26, 3
          %s381 = smul.addr %s378, 4
          %s382 = sadd.s32 %s380, %s381
          %s383 = scalar_lea.vmem %s2, %s382
        $region52: #{res_block_forward.4} parent=43 // pred_fallthru
          _
      $region44: #{res_block_forward.4} parent=5 // pred_fallthru
        _
    $region6: #{res_block_forward.4} parent=1 // loop_footer
      %s16 = sadd.s32 1, %s12
    $region7: #{res_block_forward.4} parent=1 // loop_footer_branch
      %11 = sbr.rel target = $region3
    $region8: #{res_block_forward.4} parent=1 // loop_exit
      _
    %384 = vsyncpa [#allocation3], 1
    %s385 = scalar_lea.sflag [#allocation3], 1
    %386 = vsyncpa %s385, 1

// kernel: res_block_forward.6
$region0: #{res_block_forward.6}
  #allocation0 [shape = 'u32[]', space=smem, size = 0x4, offset = 0x4, fixed_abs, tag = 'smem constant byte address 0x4 - core index']
  #allocation1 [shape = 'u32[144,128]{1,0:T(1,128)}', space=vmem, size = 0x12000, scoped, tag = 'internal scratch']
  %s0 = inlined_call_operand.vmem [shape: bf16[2,4,16,16,32], index: 0, kind: input, shape index: {}]
  %s1 = inlined_call_operand.vmem [shape: f32[2,4,1,32], index: 1, kind: output, shape index: {0}]
  %s2 = inlined_call_operand.vmem [shape: f32[2,4,1,32], index: 2, kind: output, shape index: {1}]
  %3 = xla_tuple %s1, %s2
  %s4 = sld [smem:[#allocation0]]
  $region49: #{res_block_forward.6} parent=0
    _
  %s6 = ssub.s32 1, %s4
  %s7 = scalar_select 0, %s6, %s4
  loop: start=0, step=1, limit=18
  $region2: #{res_block_forward.6} parent=0 // loop_pre_header
    _
  $region3: #{res_block_forward.6} parent=0 // loop_header
    %s9 = sphi 0, %s13
    %p10 = scmp.ge.s32.totalorder %s9, 18
    %s16 = sphi 0, %s35
    %s17 = sphi 0, %s31
    %s18 = sphi 0, %s27
    %s19 = sphi 0, %s16
    %s20 = sphi 0, %s17
    %s21 = sphi 0, %s18
    %s22 = sphi 0, %s19
    %s23 = sphi 0, %s20
    %s24 = sphi 0, %s21
    %s42 = sphi 0, %s44
    %s45 = sphi 0, %s42
    %s46 = sphi 0, %s45
    %s62 = sphi 0, %s46
    %s70 = sphi 0, %s72
    %s73 = sphi 0, %s70
    %s74 = sphi 0, %s73
    %s90 = sphi 0, %s74
    %s98 = sphi 0, %s100
    %s101 = sphi 0, %s98
    %s102 = sphi 0, %s101
    %s118 = sphi 0, %s102
  $region4: #{res_block_forward.6} parent=0 // loop_header_branch
    %12 = sbr.rel (%p10) target = $region8
  $region5: #{res_block_forward.6} parent=0 // loop_body
    %s14 = ssub.s32 %s9, 1
    %s15 = ssub.s32 %s9, 2
    %s25 = sadd.s32 1, %s18
    %p26 = scmp.ge.s32.totalorder %s25, 2
    %s27 = scalar_select %p26, 0, %s25
    %s28 = sadd.s32 1, %s17
    %s29 = scalar_select %p26, %s28, %s17
    %p30 = scmp.ge.s32.totalorder %s29, 4
    %s31 = scalar_select %p30, 0, %s29
    %s32 = sadd.s32 1, %s16
    %s33 = scalar_select %p30, %s32, %s16
    %p34 = scmp.ge.s32.totalorder %s33, 2
    %s35 = scalar_select %p34, 0, %s33
    %s36 = ssub.s32 %s16, %s35
    %s37 = ssub.s32 %s17, %s31
    %s38 = sor.u32 %s36, %s37
    %s39 = ssub.s32 %s18, %s27
    %s40 = sor.u32 %s38, %s39
    %p41 = scmp.eq.s32.totalorder %s40, 0
    %s43 = sadd.s32 %s42, 1
    %s44 = scalar_select %p41, %s42, %s43
    %p47 = pneg %p41
    %p48 = scmp.eq.s32.totalorder %s9, 15
    %p49 = por %p47, %p48
    %p50 = scmp.ne.s32.totalorder %s42, %s45
    %p51 = scmp.eq.s32.totalorder %s9, 0
    %p52 = por %p50, %p51
    %p53 = scmp.ne.s32.totalorder %s42, %s45
    %p54 = scmp.eq.s32.totalorder %s14, 15
    %p55 = por %p53, %p54
    %p56 = scmp.ne.s32.totalorder %s45, %s46
    %p57 = scmp.eq.s32.totalorder %s14, 0
    %p58 = por %p56, %p57
    %p59 = scmp.ne.s32.totalorder %s45, %s46
    %p60 = scmp.eq.s32.totalorder %s15, 15
    %p61 = por %p59, %p60
    %p63 = scmp.ne.s32.totalorder %s46, %s62
    %p64 = scmp.eq.s32.totalorder %s15, 0
    %p65 = por %p63, %p64
    %s66 = ssub.s32 %s16, %s35
    %s67 = ssub.s32 %s17, %s31
    %s68 = sor.u32 %s66, %s67
    %p69 = scmp.eq.s32.totalorder %s68, 0
    %s71 = sadd.s32 %s70, 1
    %s72 = scalar_select %p69, %s70, %s71
    %p75 = pneg %p69
    %p76 = scmp.eq.s32.totalorder %s9, 15
    %p77 = por %p75, %p76
    %p78 = scmp.ne.s32.totalorder %s70, %s73
    %p79 = scmp.eq.s32.totalorder %s9, 0
    %p80 = por %p78, %p79
    %p81 = scmp.ne.s32.totalorder %s70, %s73
    %p82 = scmp.eq.s32.totalorder %s14, 15
    %p83 = por %p81, %p82
    %p84 = scmp.ne.s32.totalorder %s73, %s74
    %p85 = scmp.eq.s32.totalorder %s14, 0
    %p86 = por %p84, %p85
    %p87 = scmp.ne.s32.totalorder %s73, %s74
    %p88 = scmp.eq.s32.totalorder %s15, 15
    %p89 = por %p87, %p88
    %p91 = scmp.ne.s32.totalorder %s74, %s90
    %p92 = scmp.eq.s32.totalorder %s15, 0
    %p93 = por %p91, %p92
    %s94 = ssub.s32 %s16, %s35
    %s95 = ssub.s32 %s17, %s31
    %s96 = sor.u32 %s94, %s95
    %p97 = scmp.eq.s32.totalorder %s96, 0
    %s99 = sadd.s32 %s98, 1
    %s100 = scalar_select %p97, %s98, %s99
    %p103 = pneg %p97
    %p104 = scmp.eq.s32.totalorder %s9, 15
    %p105 = por %p103, %p104
    %p106 = scmp.ne.s32.totalorder %s98, %s101
    %p107 = scmp.eq.s32.totalorder %s9, 0
    %p108 = por %p106, %p107
    %p109 = scmp.ne.s32.totalorder %s98, %s101
    %p110 = scmp.eq.s32.totalorder %s14, 15
    %p111 = por %p109, %p110
    %p112 = scmp.ne.s32.totalorder %s101, %s102
    %p113 = scmp.eq.s32.totalorder %s14, 0
    %p114 = por %p112, %p113
    %p115 = scmp.ne.s32.totalorder %s101, %s102
    %p116 = scmp.eq.s32.totalorder %s15, 15
    %p117 = por %p115, %p116
    %p119 = scmp.ne.s32.totalorder %s102, %s118
    %p120 = scmp.eq.s32.totalorder %s15, 0
    %p121 = por %p119, %p120
    %p122 = scmp.le.s32.totalorder 1, %s9
    %p123 = scmp.lt.s32.totalorder %s9, 17
    %p124 = pnand %p122, %p123
    %p125 = pneg %p124
    // Predicated region
    $region9: #{res_block_forward.6} parent=5 // pred_check
      _
    $region10: #{res_block_forward.6} parent=5 // pred_check_branch
      %127 = sbr.rel (%p124) target = $region12
    $region11: #{res_block_forward.6} parent=5 // pred_region
      %s128 = ssub.s32 %s9, 1
    $region12: #{res_block_forward.6} parent=5 // pred_fallthru
      _
    %p129 = scmp.lt.s32.totalorder %s9, 16
    // Predicated region
    $region13: #{res_block_forward.6} parent=5 // pred_check
      %p130 = pneg %p129
    $region14: #{res_block_forward.6} parent=5 // pred_check_branch
      %132 = sbr.rel (%p130) target = $region16
    $region15: #{res_block_forward.6} parent=5 // pred_region
      // Predicated region
      $region17: #{res_block_forward.6} parent=15 // pred_check
        %p133 = pneg %p52
      $region18: #{res_block_forward.6} parent=15 // pred_check_branch
        %135 = sbr.rel (%p133) target = $region20
      $region19: #{res_block_forward.6} parent=15 // pred_region
        %s136 = smul.u32 8, %s18
        %p137 = scmp.lt.s32.totalorder %s16, 1
        %s138 = scalar_select %p137, %s16, 1
        %p139 = scmp.lt.s32.totalorder %s17, 3
        %s140 = scalar_select %p139, %s17, 3
        %p141 = scmp.lt.s32.totalorder %s136, 15
        %s142 = scalar_select %p141, %s136, 15
        %s143 = smul.addr %s142, 2
        %s144 = smul.addr %s140, 32
        %s145 = sadd.s32 %s143, %s144
        %s146 = smul.addr %s138, 128
        %s147 = sadd.s32 %s145, %s146
        %s148 = smul.addr %s147, 4
        %s149 = scalar_lea.vmem %s0, %s148
        %s150 = smul.u32 8, %s18
      $region20: #{res_block_forward.6} parent=15 // pred_fallthru
        _
    $region16: #{res_block_forward.6} parent=5 // pred_fallthru
      _
    %p151 = scmp.le.s32.totalorder 1, %s9
    %p152 = scmp.lt.s32.totalorder %s9, 17
    %p153 = pnand %p151, %p152
    %p154 = pneg %p153
    // Predicated region
    $region21: #{res_block_forward.6} parent=5 // pred_check
      _
    $region22: #{res_block_forward.6} parent=5 // pred_check_branch
      %156 = sbr.rel (%p153) target = $region24
    $region23: #{res_block_forward.6} parent=5 // pred_region
      %s157 = ssub.s32 %s9, 1
      %s158 = smul.u32 8, %s21
      %p159 = scmp.lt.s32.totalorder %s19, 1
      %s160 = scalar_select %p159, %s19, 1
      %p161 = scmp.lt.s32.totalorder %s20, 3
      %s162 = scalar_select %p161, %s20, 3
      %p163 = scmp.lt.s32.totalorder %s158, 15
      %s164 = scalar_select %p163, %s158, 15
      %s165 = smul.addr %s164, 2
      %s166 = smul.addr %s162, 32
      %s167 = sadd.s32 %s165, %s166
      %s168 = smul.addr %s160, 128
      %s169 = sadd.s32 %s167, %s168
      %s170 = smul.addr %s169, 4
      %s171 = scalar_lea.vmem %s0, %s170
      %p172 = pneg %p58
      %p173 = pneg %p55
      %p174 = pneg %p86
      %p175 = pneg %p83
      %p176 = scmp.lt.s32.totalorder %s19, 1
      %s177 = scalar_select %p176, %s19, 1
      %p178 = scmp.lt.s32.totalorder %s20, 3
      %s179 = scalar_select %p178, %s20, 3
      %s180 = smul.addr %s177, 4
      %s181 = sadd.s32 %s179, %s180
      %s182 = scalar_lea.vmem %s1, %s181
      %p183 = pneg %p114
      %p184 = pneg %p111
      %p185 = scmp.lt.s32.totalorder %s19, 1
      %s186 = scalar_select %p185, %s19, 1
      %p187 = scmp.lt.s32.totalorder %s20, 3
      %s188 = scalar_select %p187, %s20, 3
      %s189 = smul.addr %s186, 4
      %s190 = sadd.s32 %s188, %s189
      %s191 = scalar_lea.vmem %s2, %s190
      %s192 = smul.u32 8, %s21
      %p193 = scmp.lt.s32.totalorder %s19, 1
      %s194 = scalar_select %p193, %s19, 1
      %p195 = scmp.lt.s32.totalorder %s20, 3
      %s196 = scalar_select %p195, %s20, 3
      %p197 = scmp.lt.s32.totalorder %s192, 15
      %s198 = scalar_select %p197, %s192, 15
      %s199 = smul.addr %s198, 2
      %s200 = smul.addr %s196, 32
      %s201 = sadd.s32 %s199, %s200
      %s202 = smul.addr %s194, 128
      %s203 = sadd.s32 %s201, %s202
      %s204 = smul.addr %s203, 4
      %s205 = scalar_lea.vmem %s0, %s204
      %s206 = smul.u32 8, %s21
      %p207 = scmp.lt.s32.totalorder %s19, 1
      %s208 = scalar_select %p207, %s19, 1
      %p209 = scmp.lt.s32.totalorder %s20, 3
      %s210 = scalar_select %p209, %s20, 3
      %s211 = smul.addr %s208, 4
      %s212 = sadd.s32 %s210, %s211
      %s213 = scalar_lea.vmem %s1, %s212
      %p214 = scmp.lt.s32.totalorder %s19, 1
      %s215 = scalar_select %p214, %s19, 1
      %p216 = scmp.lt.s32.totalorder %s20, 3
      %s217 = scalar_select %p216, %s20, 3
      %s218 = smul.addr %s215, 4
      %s219 = sadd.s32 %s217, %s218
      %s220 = scalar_lea.vmem %s2, %s219
      %p221 = scmp.eq.s32.totalorder %s21, 0
      // Predicated region
      $region25: #{res_block_forward.6} parent=23 // pred_check
        %p222 = pneg %p221
      $region26: #{res_block_forward.6} parent=23 // pred_check_branch
        %224 = sbr.rel (%p222) target = $region28
      $region27: #{res_block_forward.6} parent=23 // pred_region
        %vm225 = vcmask 253952
        %226 = vst.msk [vmem:[%s213] sm:$0x1] %vm225, 0.0
        %227 = vst.msk [vmem:[%s220] sm:$0x1] %vm225, 0.0
      $region28: #{res_block_forward.6} parent=23 // pred_fallthru
        _
      %v228 = vld [vmem:[%s205] sm:$0xf]
      %v229 = vld [vmem:[%s205 + $0x4] sm:$0xf]
      %v230 = vld [vmem:[%s205 + $0x8] sm:$0xf]
      %v231 = vld [vmem:[%s205 + $0xc] sm:$0xf]
      %v232 = vld [vmem:[%s205 + $0x10] sm:$0xf]
      %v233 = vld [vmem:[%s205 + $0x14] sm:$0xf]
      %v234 = vld [vmem:[%s205 + $0x18] sm:$0xf]
      %v235 = vld [vmem:[%s205 + $0x1c] sm:$0xf]
      %v236 = vld [vmem:[%s205 + $0x20] sm:$0xf]
      %v237 = vld [vmem:[%s205 + $0x24] sm:$0xf]
      %v238 = vld [vmem:[%s205 + $0x28] sm:$0xf]
      %v239 = vld [vmem:[%s205 + $0x2c] sm:$0xf]
      %v240 = vld [vmem:[%s205 + $0x30] sm:$0xf]
      %v241 = vld [vmem:[%s205 + $0x34] sm:$0xf]
      %v242 = vld [vmem:[%s205 + $0x38] sm:$0xf]
      %v243 = vld [vmem:[%s205 + $0x3c] sm:$0xf]
      %v244 = vunpack.c.l.bf16 %v228
      %v245 = vunpack.c.l.bf16 %v229
      %v246 = vunpack.c.l.bf16 %v230
      %v247 = vunpack.c.l.bf16 %v231
      %v248 = vunpack.c.l.bf16 %v232
      %v249 = vunpack.c.l.bf16 %v233
      %v250 = vunpack.c.l.bf16 %v234
      %v251 = vunpack.c.l.bf16 %v235
      %v252 = vunpack.c.l.bf16 %v236
      %v253 = vunpack.c.l.bf16 %v237
      %v254 = vunpack.c.l.bf16 %v238
      %v255 = vunpack.c.l.bf16 %v239
      %v256 = vunpack.c.l.bf16 %v240
      %v257 = vunpack.c.l.bf16 %v241
      %v258 = vunpack.c.l.bf16 %v242
      %v259 = vunpack.c.l.bf16 %v243
      %v260 = vld [vmem:[%s213] sm:$0x1]
      %vm261 = vcmask 261120
      %v262 = vsel %vm261, %v244, 0.0
      %v263 = vsel %vm261, %v245, 0.0
      %v264 = vadd.f32 %v262, %v263
      %v265 = vsel %vm261, %v246, 0.0
      %v266 = vadd.f32 %v264, %v265
      %v267 = vsel %vm261, %v247, 0.0
      %v268 = vadd.f32 %v266, %v267
      %v269 = vsel %vm261, %v248, 0.0
      %v270 = vadd.f32 %v268, %v269
      %v271 = vsel %vm261, %v249, 0.0
      %v272 = vadd.f32 %v270, %v271
      %v273 = vsel %vm261, %v250, 0.0
      %v274 = vadd.f32 %v272, %v273
      %v275 = vsel %vm261, %v251, 0.0
      %v276 = vadd.f32 %v274, %v275
      %v277 = vsel %vm261, %v252, 0.0
      %v278 = vadd.f32 %v276, %v277
      %v279 = vsel %vm261, %v253, 0.0
      %v280 = vadd.f32 %v278, %v279
      %v281 = vsel %vm261, %v254, 0.0
      %v282 = vadd.f32 %v280, %v281
      %v283 = vsel %vm261, %v255, 0.0
      %v284 = vadd.f32 %v282, %v283
      %v285 = vsel %vm261, %v256, 0.0
      %v286 = vadd.f32 %v284, %v285
      %v287 = vsel %vm261, %v257, 0.0
      %v288 = vadd.f32 %v286, %v287
      %v289 = vsel %vm261, %v258, 0.0
      %v290 = vadd.f32 %v288, %v289
      %v291 = vsel %vm261, %v259, 0.0
      %v292 = vadd.f32 %v290, %v291
      %v293 = vrot.slane %v292, 4
      %v294 = vadd.f32 %v292, %v293
      %v295 = vrot.slane %v294, 2
      %v296 = vadd.f32 %v294, %v295
      %v297 = vrot.slane %v296, 1
      %v298 = vadd.f32 %v296, %v297
      %v299 = vadd.f32 %v260, %v298
      %vm300 = vcmask 253952
      %301 = vst.msk [vmem:[%s213] sm:$0x1] %vm300, %v299
      %v302 = vld [vmem:[%s220] sm:$0x1]
      %v303 = vmul.f32 %v244, %v244
      %v304 = vmul.f32 %v245, %v245
      %v305 = vmul.f32 %v246, %v246
      %v306 = vmul.f32 %v247, %v247
      %v307 = vmul.f32 %v248, %v248
      %v308 = vmul.f32 %v249, %v249
      %v309 = vmul.f32 %v250, %v250
      %v310 = vmul.f32 %v251, %v251
      %v311 = vmul.f32 %v252, %v252
      %v312 = vmul.f32 %v253, %v253
      %v313 = vmul.f32 %v254, %v254
      %v314 = vmul.f32 %v255, %v255
      %v315 = vmul.f32 %v256, %v256
      %v316 = vmul.f32 %v257, %v257
      %v317 = vmul.f32 %v258, %v258
      %v318 = vmul.f32 %v259, %v259
      %v319 = vsel %vm261, %v303, 0.0
      %v320 = vsel %vm261, %v304, 0.0
      %v321 = vadd.f32 %v319, %v320
      %v322 = vsel %vm261, %v305, 0.0
      %v323 = vadd.f32 %v321, %v322
      %v324 = vsel %vm261, %v306, 0.0
      %v325 = vadd.f32 %v323, %v324
      %v326 = vsel %vm261, %v307, 0.0
      %v327 = vadd.f32 %v325, %v326
      %v328 = vsel %vm261, %v308, 0.0
      %v329 = vadd.f32 %v327, %v328
      %v330 = vsel %vm261, %v309, 0.0
      %v331 = vadd.f32 %v329, %v330
      %v332 = vsel %vm261, %v310, 0.0
      %v333 = vadd.f32 %v331, %v332
      %v334 = vsel %vm261, %v311, 0.0
      %v335 = vadd.f32 %v333, %v334
      %v336 = vsel %vm261, %v312, 0.0
      %v337 = vadd.f32 %v335, %v336
      %v338 = vsel %vm261, %v313, 0.0
      %v339 = vadd.f32 %v337, %v338
      %v340 = vsel %vm261, %v314, 0.0
      %v341 = vadd.f32 %v339, %v340
      %v342 = vsel %vm261, %v315, 0.0
      %v343 = vadd.f32 %v341, %v342
      %v344 = vsel %vm261, %v316, 0.0
      %v345 = vadd.f32 %v343, %v344
      %v346 = vsel %vm261, %v317, 0.0
      %v347 = vadd.f32 %v345, %v346
      %v348 = vsel %vm261, %v318, 0.0
      %v349 = vadd.f32 %v347, %v348
      %v350 = vrot.slane %v349, 4
      %v351 = vadd.f32 %v349, %v350
      %v352 = vrot.slane %v351, 2
      %v353 = vadd.f32 %v351, %v352
      %v354 = vrot.slane %v353, 1
      %v355 = vadd.f32 %v353, %v354
      %v356 = vadd.f32 %v302, %v355
      %357 = vst.msk [vmem:[%s220] sm:$0x1] %vm300, %v356
      %p358 = scmp.lt.s32.totalorder %s19, 1
      %s359 = scalar_select %p358, %s19, 1
      %p360 = scmp.lt.s32.totalorder %s20, 3
      %s361 = scalar_select %p360, %s20, 3
      %s362 = smul.addr %s359, 4
      %s363 = sadd.s32 %s361, %s362
      %s364 = scalar_lea.vmem %s1, %s363
      %p365 = scmp.lt.s32.totalorder %s19, 1
      %s366 = scalar_select %p365, %s19, 1
      %p367 = scmp.lt.s32.totalorder %s20, 3
      %s368 = scalar_select %p367, %s20, 3
      %s369 = smul.addr %s366, 4
      %s370 = sadd.s32 %s368, %s369
      %s371 = scalar_lea.vmem %s2, %s370
      // Predicated region
      $region29: #{res_block_forward.6} parent=23 // pred_check
        %p372 = pneg %p83
      $region30: #{res_block_forward.6} parent=23 // pred_check_branch
        %374 = sbr.rel (%p372) target = $region32
      $region31: #{res_block_forward.6} parent=23 // pred_region
        _
      $region32: #{res_block_forward.6} parent=23 // pred_fallthru
        _
      // Predicated region
      $region33: #{res_block_forward.6} parent=23 // pred_check
        %p375 = pneg %p111
      $region34: #{res_block_forward.6} parent=23 // pred_check_branch
        %377 = sbr.rel (%p375) target = $region36
      $region35: #{res_block_forward.6} parent=23 // pred_region
        _
      $region36: #{res_block_forward.6} parent=23 // pred_fallthru
        _
    $region24: #{res_block_forward.6} parent=5 // pred_fallthru
      _
    %p378 = scmp.le.s32.totalorder 2, %s9
    // Predicated region
    $region37: #{res_block_forward.6} parent=5 // pred_check
      %p379 = pneg %p378
    $region38: #{res_block_forward.6} parent=5 // pred_check_branch
      %381 = sbr.rel (%p379) target = $region40
    $region39: #{res_block_forward.6} parent=5 // pred_region
      %s382 = ssub.s32 %s9, 2
      // Predicated region
      $region41: #{res_block_forward.6} parent=39 // pred_check
        %p383 = pneg %p89
      $region42: #{res_block_forward.6} parent=39 // pred_check_branch
        %385 = sbr.rel (%p383) target = $region44
      $region43: #{res_block_forward.6} parent=39 // pred_region
        %p386 = scmp.lt.s32.totalorder %s22, 1
        %s387 = scalar_select %p386, %s22, 1
        %p388 = scmp.lt.s32.totalorder %s23, 3
        %s389 = scalar_select %p388, %s23, 3
        %s390 = smul.addr %s387, 4
        %s391 = sadd.s32 %s389, %s390
        %s392 = scalar_lea.vmem %s1, %s391
      $region44: #{res_block_forward.6} parent=39 // pred_fallthru
        _
      // Predicated region
      $region45: #{res_block_forward.6} parent=39 // pred_check
        %p393 = pneg %p117
      $region46: #{res_block_forward.6} parent=39 // pred_check_branch
        %395 = sbr.rel (%p393) target = $region48
      $region47: #{res_block_forward.6} parent=39 // pred_region
        %p396 = scmp.lt.s32.totalorder %s22, 1
        %s397 = scalar_select %p396, %s22, 1
        %p398 = scmp.lt.s32.totalorder %s23, 3
        %s399 = scalar_select %p398, %s23, 3
        %s400 = smul.addr %s397, 4
        %s401 = sadd.s32 %s399, %s400
        %s402 = scalar_lea.vmem %s2, %s401
      $region48: #{res_block_forward.6} parent=39 // pred_fallthru
        _
    $region40: #{res_block_forward.6} parent=5 // pred_fallthru
      _
  $region6: #{res_block_forward.6} parent=0 // loop_footer
    %s13 = sadd.s32 1, %s9
  $region7: #{res_block_forward.6} parent=0 // loop_footer_branch
    %8 = sbr.rel target = $region3
  $region8: #{res_block_forward.6} parent=0 // loop_exit
    _

// kernel: res_block_forward.5
$region0: #{res_block_forward.5}
  #allocation0 [shape = 'u32[]', space=smem, size = 0x4, offset = 0x4, fixed_abs, tag = 'smem constant byte address 0x4 - core index']
  #allocation1 [shape = 'u32[144,128]{1,0:T(1,128)}', space=vmem, size = 0x12000, scoped, tag = 'internal scratch']
  #allocation2 [shape = 'bf16[3,10,32,32]{3,2,1,0:T(8,128)(2,1)}', space=vmem, size = 0x3c000, scoped, tag = 'scratch operand']
  %s0 = inlined_call_operand.vmem [shape: f32[2,4,16,16,32], index: 0, kind: input, shape index: {}, may-alias: {0,1,2}]
  %s1 = inlined_call_operand.vmem [shape: f32[2,4,16,16,32], index: 1, kind: input, shape index: {}, may-alias: {0,1,2}]
  %s2 = inlined_call_operand.vmem [shape: f32[2,4,16,16,32], index: 2, kind: input, shape index: {}, may-alias: {0,1,2}]
  %s3 = inlined_call_operand.vmem [shape: f32[2,4,1,32], index: 3, kind: input, shape index: {}]
  %s4 = inlined_call_operand.vmem [shape: f32[2,4,1,32], index: 4, kind: input, shape index: {}]
  %s5 = inlined_call_operand.vmem [shape: bf16[3,3,96,32], index: 5, kind: input, shape index: {}]
  %s6 = inlined_call_operand.vmem [shape: f32[1,32], index: 6, kind: input, shape index: {}]
  %s7 = inlined_call_operand.vmem [shape: bf16[2,4,256,32], index: 7, kind: output, shape index: {}]
  %s8 = sld [smem:[#allocation0]]
  $region65: #{res_block_forward.5} parent=0
    _
  %s10 = ssub.s32 1, %s8
  %s11 = scalar_select 0, %s10, %s8
  loop: start=0, step=1, limit=18
  $region2: #{res_block_forward.5} parent=0 // loop_pre_header
    _
  $region3: #{res_block_forward.5} parent=0 // loop_header
    %s13 = sphi 0, %s17
    %p14 = scmp.ge.s32.totalorder %s13, 18
    %s20 = sphi 0, %s39
    %s21 = sphi 0, %s35
    %s22 = sphi 0, %s31
    %s23 = sphi 0, %s20
    %s24 = sphi 0, %s21
    %s25 = sphi 0, %s22
    %s26 = sphi 0, %s23
    %s27 = sphi 0, %s24
    %s28 = sphi 0, %s25
    %s46 = sphi 0, %s48
    %s49 = sphi 0, %s46
    %s50 = sphi 0, %s49
    %s66 = sphi 0, %s50
    %s84 = sphi 0, %s86
    %s87 = sphi 0, %s84
    %s88 = sphi 0, %s87
    %s104 = sphi 0, %s88
    %s122 = sphi 0, %s124
    %s125 = sphi 0, %s122
    %s126 = sphi 0, %s125
    %s142 = sphi 0, %s126
    %s150 = sphi 0, %s152
    %s153 = sphi 0, %s150
    %s154 = sphi 0, %s153
    %s170 = sphi 0, %s154
    %s178 = sphi 0, %s180
    %s181 = sphi 0, %s178
    %s182 = sphi 0, %s181
    %s198 = sphi 0, %s182
    %s202 = sphi 0, %s202
    %s204 = sphi 0, %s202
    %s205 = sphi 0, %s204
    %s219 = sphi 0, %s205
    %s223 = sphi 0, %s223
    %s225 = sphi 0, %s223
    %s226 = sphi 0, %s225
    %s240 = sphi 0, %s226
    %s250 = sphi 0, %s252
    %s253 = sphi 0, %s250
    %s254 = sphi 0, %s253
    %s270 = sphi 0, %s254
  $region4: #{res_block_forward.5} parent=0 // loop_header_branch
    %16 = sbr.rel (%p14) target = $region8
  $region5: #{res_block_forward.5} parent=0 // loop_body
    %s18 = ssub.s32 %s13, 1
    %s19 = ssub.s32 %s13, 2
    %s29 = sadd.s32 1, %s22
    %p30 = scmp.ge.s32.totalorder %s29, 4
    %s31 = scalar_select %p30, 0, %s29
    %s32 = sadd.s32 1, %s21
    %s33 = scalar_select %p30, %s32, %s21
    %p34 = scmp.ge.s32.totalorder %s33, 2
    %s35 = scalar_select %p34, 0, %s33
    %s36 = sadd.s32 1, %s20
    %s37 = scalar_select %p34, %s36, %s20
    %p38 = scmp.ge.s32.totalorder %s37, 2
    %s39 = scalar_select %p38, 0, %s37
    %s40 = ssub.s32 %s20, %s39
    %s41 = ssub.s32 %s22, %s31
    %s42 = sor.u32 %s40, %s41
    %s43 = ssub.s32 %s21, %s35
    %s44 = sor.u32 %s42, %s43
    %p45 = scmp.eq.s32.totalorder %s44, 0
    %s47 = sadd.s32 %s46, 1
    %s48 = scalar_select %p45, %s46, %s47
    %p51 = pneg %p45
    %p52 = scmp.eq.s32.totalorder %s13, 15
    %p53 = por %p51, %p52
    %p54 = scmp.ne.s32.totalorder %s46, %s49
    %p55 = scmp.eq.s32.totalorder %s13, 0
    %p56 = por %p54, %p55
    %p57 = scmp.ne.s32.totalorder %s46, %s49
    %p58 = scmp.eq.s32.totalorder %s18, 15
    %p59 = por %p57, %p58
    %p60 = scmp.ne.s32.totalorder %s49, %s50
    %p61 = scmp.eq.s32.totalorder %s18, 0
    %p62 = por %p60, %p61
    %p63 = scmp.ne.s32.totalorder %s49, %s50
    %p64 = scmp.eq.s32.totalorder %s19, 15
    %p65 = por %p63, %p64
    %p67 = scmp.ne.s32.totalorder %s50, %s66
    %p68 = scmp.eq.s32.totalorder %s19, 0
    %p69 = por %p67, %p68
    %s70 = smul.u32 %s21, 8
    %s71 = ssub.s32 %s70, 1
    %p72 = scmp.gt.s32.totalorder %s71, 0
    %s73 = scalar_select %p72, %s71, 0
    %s74 = smul.u32 %s35, 8
    %s75 = ssub.s32 %s74, 1
    %p76 = scmp.gt.s32.totalorder %s75, 0
    %s77 = scalar_select %p76, %s75, 0
    %s78 = ssub.s32 %s20, %s39
    %s79 = ssub.s32 %s22, %s31
    %s80 = sor.u32 %s78, %s79
    %s81 = ssub.s32 %s73, %s77
    %s82 = sor.u32 %s80, %s81
    %p83 = scmp.eq.s32.totalorder %s82, 0
    %s85 = sadd.s32 %s84, 1
    %s86 = scalar_select %p83, %s84, %s85
    %p89 = pneg %p83
    %p90 = scmp.eq.s32.totalorder %s13, 15
    %p91 = por %p89, %p90
    %p92 = scmp.ne.s32.totalorder %s84, %s87
    %p93 = scmp.eq.s32.totalorder %s13, 0
    %p94 = por %p92, %p93
    %p95 = scmp.ne.s32.totalorder %s84, %s87
    %p96 = scmp.eq.s32.totalorder %s18, 15
    %p97 = por %p95, %p96
    %p98 = scmp.ne.s32.totalorder %s87, %s88
    %p99 = scmp.eq.s32.totalorder %s18, 0
    %p100 = por %p98, %p99
    %p101 = scmp.ne.s32.totalorder %s87, %s88
    %p102 = scmp.eq.s32.totalorder %s19, 15
    %p103 = por %p101, %p102
    %p105 = scmp.ne.s32.totalorder %s88, %s104
    %p106 = scmp.eq.s32.totalorder %s19, 0
    %p107 = por %p105, %p106
    %s108 = sadd.s32 %s21, 1
    %s109 = smul.u32 %s108, 8
    %p110 = scmp.lt.s32.totalorder %s109, 15
    %s111 = scalar_select %p110, %s109, 15
    %s112 = sadd.s32 %s35, 1
    %s113 = smul.u32 %s112, 8
    %p114 = scmp.lt.s32.totalorder %s113, 15
    %s115 = scalar_select %p114, %s113, 15
    %s116 = ssub.s32 %s20, %s39
    %s117 = ssub.s32 %s22, %s31
    %s118 = sor.u32 %s116, %s117
    %s119 = ssub.s32 %s111, %s115
    %s120 = sor.u32 %s118, %s119
    %p121 = scmp.eq.s32.totalorder %s120, 0
    %s123 = sadd.s32 %s122, 1
    %s124 = scalar_select %p121, %s122, %s123
    %p127 = pneg %p121
    %p128 = scmp.eq.s32.totalorder %s13, 15
    %p129 = por %p127, %p128
    %p130 = scmp.ne.s32.totalorder %s122, %s125
    %p131 = scmp.eq.s32.totalorder %s13, 0
    %p132 = por %p130, %p131
    %p133 = scmp.ne.s32.totalorder %s122, %s125
    %p134 = scmp.eq.s32.totalorder %s18, 15
    %p135 = por %p133, %p134
    %p136 = scmp.ne.s32.totalorder %s125, %s126
    %p137 = scmp.eq.s32.totalorder %s18, 0
    %p138 = por %p136, %p137
    %p139 = scmp.ne.s32.totalorder %s125, %s126
    %p140 = scmp.eq.s32.totalorder %s19, 15
    %p141 = por %p139, %p140
    %p143 = scmp.ne.s32.totalorder %s126, %s142
    %p144 = scmp.eq.s32.totalorder %s19, 0
    %p145 = por %p143, %p144
    %s146 = ssub.s32 %s20, %s39
    %s147 = ssub.s32 %s22, %s31
    %s148 = sor.u32 %s146, %s147
    %p149 = scmp.eq.s32.totalorder %s148, 0
    %s151 = sadd.s32 %s150, 1
    %s152 = scalar_select %p149, %s150, %s151
    %p155 = pneg %p149
    %p156 = scmp.eq.s32.totalorder %s13, 15
    %p157 = por %p155, %p156
    %p158 = scmp.ne.s32.totalorder %s150, %s153
    %p159 = scmp.eq.s32.totalorder %s13, 0
    %p160 = por %p158, %p159
    %p161 = scmp.ne.s32.totalorder %s150, %s153
    %p162 = scmp.eq.s32.totalorder %s18, 15
    %p163 = por %p161, %p162
    %p164 = scmp.ne.s32.totalorder %s153, %s154
    %p165 = scmp.eq.s32.totalorder %s18, 0
    %p166 = por %p164, %p165
    %p167 = scmp.ne.s32.totalorder %s153, %s154
    %p168 = scmp.eq.s32.totalorder %s19, 15
    %p169 = por %p167, %p168
    %p171 = scmp.ne.s32.totalorder %s154, %s170
    %p172 = scmp.eq.s32.totalorder %s19, 0
    %p173 = por %p171, %p172
    %s174 = ssub.s32 %s20, %s39
    %s175 = ssub.s32 %s22, %s31
    %s176 = sor.u32 %s174, %s175
    %p177 = scmp.eq.s32.totalorder %s176, 0
    %s179 = sadd.s32 %s178, 1
    %s180 = scalar_select %p177, %s178, %s179
    %p183 = pneg %p177
    %p184 = scmp.eq.s32.totalorder %s13, 15
    %p185 = por %p183, %p184
    %p186 = scmp.ne.s32.totalorder %s178, %s181
    %p187 = scmp.eq.s32.totalorder %s13, 0
    %p188 = por %p186, %p187
    %p189 = scmp.ne.s32.totalorder %s178, %s181
    %p190 = scmp.eq.s32.totalorder %s18, 15
    %p191 = por %p189, %p190
    %p192 = scmp.ne.s32.totalorder %s181, %s182
    %p193 = scmp.eq.s32.totalorder %s18, 0
    %p194 = por %p192, %p193
    %p195 = scmp.ne.s32.totalorder %s181, %s182
    %p196 = scmp.eq.s32.totalorder %s19, 15
    %p197 = por %p195, %p196
    %p199 = scmp.ne.s32.totalorder %s182, %s198
    %p200 = scmp.eq.s32.totalorder %s19, 0
    %p201 = por %p199, %p200
    %s203 = sadd.s32 %s202, 1
    %p206 = scmp.eq.s32.totalorder %s13, 15
    %p207 = scmp.ne.s32.totalorder %s202, %s204
    %p208 = scmp.eq.s32.totalorder %s13, 0
    %p209 = por %p207, %p208
    %p210 = scmp.ne.s32.totalorder %s202, %s204
    %p211 = scmp.eq.s32.totalorder %s18, 15
    %p212 = por %p210, %p211
    %p213 = scmp.ne.s32.totalorder %s204, %s205
    %p214 = scmp.eq.s32.totalorder %s18, 0
    %p215 = por %p213, %p214
    %p216 = scmp.ne.s32.totalorder %s204, %s205
    %p217 = scmp.eq.s32.totalorder %s19, 15
    %p218 = por %p216, %p217
    %p220 = scmp.ne.s32.totalorder %s205, %s219
    %p221 = scmp.eq.s32.totalorder %s19, 0
    %p222 = por %p220, %p221
    %s224 = sadd.s32 %s223, 1
    %p227 = scmp.eq.s32.totalorder %s13, 15
    %p228 = scmp.ne.s32.totalorder %s223, %s225
    %p229 = scmp.eq.s32.totalorder %s13, 0
    %p230 = por %p228, %p229
    %p231 = scmp.ne.s32.totalorder %s223, %s225
    %p232 = scmp.eq.s32.totalorder %s18, 15
    %p233 = por %p231, %p232
    %p234 = scmp.ne.s32.totalorder %s225, %s226
    %p235 = scmp.eq.s32.totalorder %s18, 0
    %p236 = por %p234, %p235
    %p237 = scmp.ne.s32.totalorder %s225, %s226
    %p238 = scmp.eq.s32.totalorder %s19, 15
    %p239 = por %p237, %p238
    %p241 = scmp.ne.s32.totalorder %s226, %s240
    %p242 = scmp.eq.s32.totalorder %s19, 0
    %p243 = por %p241, %p242
    %s244 = ssub.s32 %s20, %s39
    %s245 = ssub.s32 %s22, %s31
    %s246 = sor.u32 %s244, %s245
    %s247 = ssub.s32 %s21, %s35
    %s248 = sor.u32 %s246, %s247
    %p249 = scmp.eq.s32.totalorder %s248, 0
    %s251 = sadd.s32 %s250, 1
    %s252 = scalar_select %p249, %s250, %s251
    %p255 = pneg %p249
    %p256 = scmp.eq.s32.totalorder %s13, 15
    %p257 = por %p255, %p256
    %p258 = scmp.ne.s32.totalorder %s250, %s253
    %p259 = scmp.eq.s32.totalorder %s13, 0
    %p260 = por %p258, %p259
    %p261 = scmp.ne.s32.totalorder %s250, %s253
    %p262 = scmp.eq.s32.totalorder %s18, 15
    %p263 = por %p261, %p262
    %p264 = scmp.ne.s32.totalorder %s253, %s254
    %p265 = scmp.eq.s32.totalorder %s18, 0
    %p266 = por %p264, %p265
    %p267 = scmp.ne.s32.totalorder %s253, %s254
    %p268 = scmp.eq.s32.totalorder %s19, 15
    %p269 = por %p267, %p268
    %p271 = scmp.ne.s32.totalorder %s254, %s270
    %p272 = scmp.eq.s32.totalorder %s19, 0
    %p273 = por %p271, %p272
    %p274 = scmp.le.s32.totalorder 1, %s13
    %p275 = scmp.lt.s32.totalorder %s13, 17
    %p276 = pnand %p274, %p275
    %p277 = pneg %p276
    // Predicated region
    $region9: #{res_block_forward.5} parent=5 // pred_check
      _
    $region10: #{res_block_forward.5} parent=5 // pred_check_branch
      %279 = sbr.rel (%p276) target = $region12
    $region11: #{res_block_forward.5} parent=5 // pred_region
      %s280 = ssub.s32 %s13, 1
      // Predicated region
      $region13: #{res_block_forward.5} parent=11 // pred_check
        %p281 = pneg %p215
      $region14: #{res_block_forward.5} parent=11 // pred_check_branch
        %283 = sbr.rel (%p281) target = $region16
      $region15: #{res_block_forward.5} parent=11 // pred_region
        _
      $region16: #{res_block_forward.5} parent=11 // pred_fallthru
        _
      // Predicated region
      $region17: #{res_block_forward.5} parent=11 // pred_check
        %p284 = pneg %p236
      $region18: #{res_block_forward.5} parent=11 // pred_check_branch
        %286 = sbr.rel (%p284) target = $region20
      $region19: #{res_block_forward.5} parent=11 // pred_region
        _
      $region20: #{res_block_forward.5} parent=11 // pred_fallthru
        _
    $region12: #{res_block_forward.5} parent=5 // pred_fallthru
      _
    %p287 = scmp.lt.s32.totalorder %s13, 16
    // Predicated region
    $region21: #{res_block_forward.5} parent=5 // pred_check
      %p288 = pneg %p287
    $region22: #{res_block_forward.5} parent=5 // pred_check_branch
      %290 = sbr.rel (%p288) target = $region24
    $region23: #{res_block_forward.5} parent=5 // pred_region
      // Predicated region
      $region25: #{res_block_forward.5} parent=23 // pred_check
        %p291 = pneg %p56
      $region26: #{res_block_forward.5} parent=23 // pred_check_branch
        %293 = sbr.rel (%p291) target = $region28
      $region27: #{res_block_forward.5} parent=23 // pred_region
        %s294 = smul.u32 8, %s21
        %p295 = scmp.lt.s32.totalorder %s20, 1
        %s296 = scalar_select %p295, %s20, 1
        %p297 = scmp.lt.s32.totalorder %s22, 3
        %s298 = scalar_select %p297, %s22, 3
        %p299 = scmp.lt.s32.totalorder %s294, 15
        %s300 = scalar_select %p299, %s294, 15
        %s301 = smul.addr %s300, 2
        %s302 = smul.addr %s298, 32
        %s303 = sadd.s32 %s301, %s302
        %s304 = smul.addr %s296, 128
        %s305 = sadd.s32 %s303, %s304
        %s306 = smul.addr %s305, 8
        %s307 = scalar_lea.vmem %s0, %s306
        %s308 = smul.u32 8, %s21
      $region28: #{res_block_forward.5} parent=23 // pred_fallthru
        _
      // Predicated region
      $region29: #{res_block_forward.5} parent=23 // pred_check
        %p309 = pneg %p94
      $region30: #{res_block_forward.5} parent=23 // pred_check_branch
        %311 = sbr.rel (%p309) target = $region32
      $region31: #{res_block_forward.5} parent=23 // pred_region
        %s312 = smul.u32 %s21, 8
        %s313 = ssub.s32 %s312, 1
        %p314 = scmp.gt.s32.totalorder %s313, 0
        %s315 = scalar_select %p314, %s313, 0
        %p316 = scmp.lt.s32.totalorder %s20, 1
        %s317 = scalar_select %p316, %s20, 1
        %p318 = scmp.lt.s32.totalorder %s22, 3
        %s319 = scalar_select %p318, %s22, 3
        %p320 = scmp.lt.s32.totalorder %s315, 15
        %s321 = scalar_select %p320, %s315, 15
        %s322 = smul.addr %s321, 2
        %s323 = smul.addr %s319, 32
        %s324 = sadd.s32 %s322, %s323
        %s325 = smul.addr %s317, 128
        %s326 = sadd.s32 %s324, %s325
        %s327 = smul.addr %s326, 8
        %s328 = scalar_lea.vmem %s1, %s327
        %s329 = smul.u32 %s21, 8
        %s330 = ssub.s32 %s329, 1
        %p331 = scmp.gt.s32.totalorder %s330, 0
        %s332 = scalar_select %p331, %s330, 0
      $region32: #{res_block_forward.5} parent=23 // pred_fallthru
        _
      // Predicated region
      $region33: #{res_block_forward.5} parent=23 // pred_check
        %p333 = pneg %p132
      $region34: #{res_block_forward.5} parent=23 // pred_check_branch
        %335 = sbr.rel (%p333) target = $region36
      $region35: #{res_block_forward.5} parent=23 // pred_region
        %s336 = sadd.s32 %s21, 1
        %s337 = smul.u32 %s336, 8
        %p338 = scmp.lt.s32.totalorder %s337, 15
        %s339 = scalar_select %p338, %s337, 15
        %p340 = scmp.lt.s32.totalorder %s20, 1
        %s341 = scalar_select %p340, %s20, 1
        %p342 = scmp.lt.s32.totalorder %s22, 3
        %s343 = scalar_select %p342, %s22, 3
        %p344 = scmp.lt.s32.totalorder %s339, 15
        %s345 = scalar_select %p344, %s339, 15
        %s346 = smul.addr %s345, 2
        %s347 = smul.addr %s343, 32
        %s348 = sadd.s32 %s346, %s347
        %s349 = smul.addr %s341, 128
        %s350 = sadd.s32 %s348, %s349
        %s351 = smul.addr %s350, 8
        %s352 = scalar_lea.vmem %s2, %s351
        %s353 = sadd.s32 %s21, 1
        %s354 = smul.u32 %s353, 8
        %p355 = scmp.lt.s32.totalorder %s354, 15
        %s356 = scalar_select %p355, %s354, 15
      $region36: #{res_block_forward.5} parent=23 // pred_fallthru
        _
      // Predicated region
      $region37: #{res_block_forward.5} parent=23 // pred_check
        %p357 = pneg %p160
      $region38: #{res_block_forward.5} parent=23 // pred_check_branch
        %359 = sbr.rel (%p357) target = $region40
      $region39: #{res_block_forward.5} parent=23 // pred_region
        %p360 = scmp.lt.s32.totalorder %s20, 1
        %s361 = scalar_select %p360, %s20, 1
        %p362 = scmp.lt.s32.totalorder %s22, 3
        %s363 = scalar_select %p362, %s22, 3
        %s364 = smul.addr %s361, 4
        %s365 = sadd.s32 %s363, %s364
        %s366 = scalar_lea.vmem %s3, %s365
      $region40: #{res_block_forward.5} parent=23 // pred_fallthru
        _
      // Predicated region
      $region41: #{res_block_forward.5} parent=23 // pred_check
        %p367 = pneg %p188
      $region42: #{res_block_forward.5} parent=23 // pred_check_branch
        %369 = sbr.rel (%p367) target = $region44
      $region43: #{res_block_forward.5} parent=23 // pred_region
        %p370 = scmp.lt.s32.totalorder %s20, 1
        %s371 = scalar_select %p370, %s20, 1
        %p372 = scmp.lt.s32.totalorder %s22, 3
        %s373 = scalar_select %p372, %s22, 3
        %s374 = smul.addr %s371, 4
        %s375 = sadd.s32 %s373, %s374
        %s376 = scalar_lea.vmem %s4, %s375
      $region44: #{res_block_forward.5} parent=23 // pred_fallthru
        _
    $region24: #{res_block_forward.5} parent=5 // pred_fallthru
      _
    %p377 = scmp.le.s32.totalorder 1, %s13
    %p378 = scmp.lt.s32.totalorder %s13, 17
    %p379 = pnand %p377, %p378
    %p380 = pneg %p379
    // Predicated region
    $region45: #{res_block_forward.5} parent=5 // pred_check
      _
    $region46: #{res_block_forward.5} parent=5 // pred_check_branch
      %382 = sbr.rel (%p379) target = $region48
    $region47: #{res_block_forward.5} parent=5 // pred_region
      %s383 = ssub.s32 %s13, 1
      %s384 = smul.u32 8, %s24
      %p385 = scmp.lt.s32.totalorder %s23, 1
      %s386 = scalar_select %p385, %s23, 1
      %p387 = scmp.lt.s32.totalorder %s25, 3
      %s388 = scalar_select %p387, %s25, 3
      %p389 = scmp.lt.s32.totalorder %s384, 15
      %s390 = scalar_select %p389, %s384, 15
      %s391 = smul.addr %s390, 2
      %s392 = smul.addr %s388, 32
      %s393 = sadd.s32 %s391, %s392
      %s394 = smul.addr %s386, 128
      %s395 = sadd.s32 %s393, %s394
      %s396 = smul.addr %s395, 8
      %s397 = scalar_lea.vmem %s0, %s396
      %p398 = pneg %p62
      %p399 = pneg %p59
      %s400 = smul.u32 %s24, 8
      %s401 = ssub.s32 %s400, 1
      %p402 = scmp.gt.s32.totalorder %s401, 0
      %s403 = scalar_select %p402, %s401, 0
      %p404 = scmp.lt.s32.totalorder %s23, 1
      %s405 = scalar_select %p404, %s23, 1
      %p406 = scmp.lt.s32.totalorder %s25, 3
      %s407 = scalar_select %p406, %s25, 3
      %p408 = scmp.lt.s32.totalorder %s403, 15
      %s409 = scalar_select %p408, %s403, 15
      %s410 = smul.addr %s409, 2
      %s411 = smul.addr %s407, 32
      %s412 = sadd.s32 %s410, %s411
      %s413 = smul.addr %s405, 128
      %s414 = sadd.s32 %s412, %s413
      %s415 = smul.addr %s414, 8
      %s416 = scalar_lea.vmem %s1, %s415
      %p417 = pneg %p100
      %p418 = pneg %p97
      %s419 = sadd.s32 %s24, 1
      %s420 = smul.u32 %s419, 8
      %p421 = scmp.lt.s32.totalorder %s420, 15
      %s422 = scalar_select %p421, %s420, 15
      %p423 = scmp.lt.s32.totalorder %s23, 1
      %s424 = scalar_select %p423, %s23, 1
      %p425 = scmp.lt.s32.totalorder %s25, 3
      %s426 = scalar_select %p425, %s25, 3
      %p427 = scmp.lt.s32.totalorder %s422, 15
      %s428 = scalar_select %p427, %s422, 15
      %s429 = smul.addr %s428, 2
      %s430 = smul.addr %s426, 32
      %s431 = sadd.s32 %s429, %s430
      %s432 = smul.addr %s424, 128
      %s433 = sadd.s32 %s431, %s432
      %s434 = smul.addr %s433, 8
      %s435 = scalar_lea.vmem %s2, %s434
      %p436 = pneg %p138
      %p437 = pneg %p135
      %p438 = scmp.lt.s32.totalorder %s23, 1
      %s439 = scalar_select %p438, %s23, 1
      %p440 = scmp.lt.s32.totalorder %s25, 3
      %s441 = scalar_select %p440, %s25, 3
      %s442 = smul.addr %s439, 4
      %s443 = sadd.s32 %s441, %s442
      %s444 = scalar_lea.vmem %s3, %s443
      %p445 = pneg %p166
      %p446 = pneg %p163
      %p447 = scmp.lt.s32.totalorder %s23, 1
      %s448 = scalar_select %p447, %s23, 1
      %p449 = scmp.lt.s32.totalorder %s25, 3
      %s450 = scalar_select %p449, %s25, 3
      %s451 = smul.addr %s448, 4
      %s452 = sadd.s32 %s450, %s451
      %s453 = scalar_lea.vmem %s4, %s452
      %p454 = pneg %p194
      %p455 = pneg %p191
      %p456 = pneg %p215
      %p457 = pneg %p212
      %p458 = pneg %p236
      %p459 = pneg %p233
      %p460 = pneg %p266
      %p461 = pneg %p263
      %s462 = smul.u32 16, %s24
      %p463 = scmp.lt.s32.totalorder %s23, 1
      %s464 = scalar_select %p463, %s23, 1
      %p465 = scmp.lt.s32.totalorder %s25, 3
      %s466 = scalar_select %p465, %s25, 3
      %p467 = scmp.lt.s32.totalorder %s462, 31
      %s468 = scalar_select %p467, %s462, 31
      %s469 = smul.addr %s466, 32
      %s470 = sadd.s32 %s468, %s469
      %s471 = smul.addr %s464, 128
      %s472 = sadd.s32 %s470, %s471
      %s473 = smul.addr %s472, 4
      %s474 = scalar_lea.vmem %s7, %s473
      %s475 = smul.u32 8, %s24
      %p476 = scmp.lt.s32.totalorder %s23, 1
      %s477 = scalar_select %p476, %s23, 1
      %p478 = scmp.lt.s32.totalorder %s25, 3
      %s479 = scalar_select %p478, %s25, 3
      %p480 = scmp.lt.s32.totalorder %s475, 15
      %s481 = scalar_select %p480, %s475, 15
      %s482 = smul.addr %s481, 2
      %s483 = smul.addr %s479, 32
      %s484 = sadd.s32 %s482, %s483
      %s485 = smul.addr %s477, 128
      %s486 = sadd.s32 %s484, %s485
      %s487 = smul.addr %s486, 8
      %s488 = scalar_lea.vmem %s0, %s487
      %s489 = smul.u32 8, %s24
      %s490 = smul.u32 %s24, 8
      %s491 = ssub.s32 %s490, 1
      %p492 = scmp.gt.s32.totalorder %s491, 0
      %s493 = scalar_select %p492, %s491, 0
      %p494 = scmp.lt.s32.totalorder %s23, 1
      %s495 = scalar_select %p494, %s23, 1
      %p496 = scmp.lt.s32.totalorder %s25, 3
      %s497 = scalar_select %p496, %s25, 3
      %p498 = scmp.lt.s32.totalorder %s493, 15
      %s499 = scalar_select %p498, %s493, 15
      %s500 = smul.addr %s499, 2
      %s501 = smul.addr %s497, 32
      %s502 = sadd.s32 %s500, %s501
      %s503 = smul.addr %s495, 128
      %s504 = sadd.s32 %s502, %s503
      %s505 = smul.addr %s504, 8
      %s506 = scalar_lea.vmem %s1, %s505
      %s507 = smul.u32 %s24, 8
      %s508 = ssub.s32 %s507, 1
      %p509 = scmp.gt.s32.totalorder %s508, 0
      %s510 = scalar_select %p509, %s508, 0
      %s511 = sadd.s32 %s24, 1
      %s512 = smul.u32 %s511, 8
      %p513 = scmp.lt.s32.totalorder %s512, 15
      %s514 = scalar_select %p513, %s512, 15
      %p515 = scmp.lt.s32.totalorder %s23, 1
      %s516 = scalar_select %p515, %s23, 1
      %p517 = scmp.lt.s32.totalorder %s25, 3
      %s518 = scalar_select %p517, %s25, 3
      %p519 = scmp.lt.s32.totalorder %s514, 15
      %s520 = scalar_select %p519, %s514, 15
      %s521 = smul.addr %s520, 2
      %s522 = smul.addr %s518, 32
      %s523 = sadd.s32 %s521, %s522
      %s524 = smul.addr %s516, 128
      %s525 = sadd.s32 %s523, %s524
      %s526 = smul.addr %s525, 8
      %s527 = scalar_lea.vmem %s2, %s526
      %s528 = sadd.s32 %s24, 1
      %s529 = smul.u32 %s528, 8
      %p530 = scmp.lt.s32.totalorder %s529, 15
      %s531 = scalar_select %p530, %s529, 15
      %p532 = scmp.lt.s32.totalorder %s23, 1
      %s533 = scalar_select %p532, %s23, 1
      %p534 = scmp.lt.s32.totalorder %s25, 3
      %s535 = scalar_select %p534, %s25, 3
      %s536 = smul.addr %s533, 4
      %s537 = sadd.s32 %s535, %s536
      %s538 = scalar_lea.vmem %s3, %s537
      %p539 = scmp.lt.s32.totalorder %s23, 1
      %s540 = scalar_select %p539, %s23, 1
      %p541 = scmp.lt.s32.totalorder %s25, 3
      %s542 = scalar_select %p541, %s25, 3
      %s543 = smul.addr %s540, 4
      %s544 = sadd.s32 %s542, %s543
      %s545 = scalar_lea.vmem %s4, %s544
      %s546 = smul.u32 16, %s24
      %p547 = scmp.lt.s32.totalorder %s23, 1
      %s548 = scalar_select %p547, %s23, 1
      %p549 = scmp.lt.s32.totalorder %s25, 3
      %s550 = scalar_select %p549, %s25, 3
      %p551 = scmp.lt.s32.totalorder %s546, 31
      %s552 = scalar_select %p551, %s546, 31
      %s553 = smul.addr %s550, 32
      %s554 = sadd.s32 %s552, %s553
      %s555 = smul.addr %s548, 128
      %s556 = sadd.s32 %s554, %s555
      %s557 = smul.addr %s556, 4
      %s558 = scalar_lea.vmem %s7, %s557
      %s559 = smul.u32 16, %s24
      %p561 = scmp.eq.s32.totalorder %s25, 0
      // Predicated region
      $region49: #{res_block_forward.5} parent=47 // pred_check
        %p562 = pneg %p561
      $region50: #{res_block_forward.5} parent=47 // pred_check_branch
        %564 = sbr.rel (%p562) target = $region52
      $region51: #{res_block_forward.5} parent=47 // pred_region
        %vm565 = vcmask 257024
        %566 = vst.msk [vmem:[#allocation2] sm:$0xf] %vm565, 0
        %567 = vst.msk [vmem:[#allocation2 + $0x4] sm:$0xf] %vm565, 0
        %568 = vst.msk [vmem:[#allocation2 + $0x8] sm:$0xf] %vm565, 0
        %569 = vst.msk [vmem:[#allocation2 + $0xc] sm:$0xf] %vm565, 0
        %570 = vst.msk [vmem:[#allocation2 + $0x10] sm:$0xf] %vm565, 0
        %571 = vst.msk [vmem:[#allocation2 + $0x14] sm:$0xf] %vm565, 0
        %572 = vst.msk [vmem:[#allocation2 + $0x18] sm:$0xf] %vm565, 0
        %573 = vst.msk [vmem:[#allocation2 + $0x1c] sm:$0xf] %vm565, 0
        %574 = vst.msk [vmem:[#allocation2 + $0x20] sm:$0xf] %vm565, 0
        %575 = vst.msk [vmem:[#allocation2 + $0x24] sm:$0xf] %vm565, 0
        %576 = vst.msk [vmem:[#allocation2 + $0x28] sm:$0xf] %vm565, 0
        %577 = vst.msk [vmem:[#allocation2 + $0x2c] sm:$0xf] %vm565, 0
        %578 = vst.msk [vmem:[#allocation2 + $0x30] sm:$0xf] %vm565, 0
        %579 = vst.msk [vmem:[#allocation2 + $0x34] sm:$0xf] %vm565, 0
        %580 = vst.msk [vmem:[#allocation2 + $0x38] sm:$0xf] %vm565, 0
        %581 = vst.msk [vmem:[#allocation2 + $0x3c] sm:$0xf] %vm565, 0
        %582 = vst.msk [vmem:[#allocation2 + $0x40] sm:$0xf] %vm565, 0
        %583 = vst.msk [vmem:[#allocation2 + $0x44] sm:$0xf] %vm565, 0
        %584 = vst.msk [vmem:[#allocation2 + $0x48] sm:$0xf] %vm565, 0
        %585 = vst.msk [vmem:[#allocation2 + $0x4c] sm:$0xf] %vm565, 0
        %586 = vst.msk [vmem:[#allocation2 + $0x50] sm:$0xf] %vm565, 0
        %587 = vst.msk [vmem:[#allocation2 + $0x54] sm:$0xf] %vm565, 0
        %588 = vst.msk [vmem:[#allocation2 + $0x58] sm:$0xf] %vm565, 0
        %589 = vst.msk [vmem:[#allocation2 + $0x5c] sm:$0xf] %vm565, 0
        %590 = vst.msk [vmem:[#allocation2 + $0x60] sm:$0xf] %vm565, 0
        %591 = vst.msk [vmem:[#allocation2 + $0x64] sm:$0xf] %vm565, 0
        %592 = vst.msk [vmem:[#allocation2 + $0x68] sm:$0xf] %vm565, 0
        %593 = vst.msk [vmem:[#allocation2 + $0x6c] sm:$0xf] %vm565, 0
        %594 = vst.msk [vmem:[#allocation2 + $0x70] sm:$0xf] %vm565, 0
        %595 = vst.msk [vmem:[#allocation2 + $0x74] sm:$0xf] %vm565, 0
        %596 = vst.msk [vmem:[#allocation2 + $0x78] sm:$0xf] %vm565, 0
        %597 = vst.msk [vmem:[#allocation2 + $0x7c] sm:$0xf] %vm565, 0
        %598 = vst.msk [vmem:[#allocation2 + $0x80] sm:$0xf] %vm565, 0
        %599 = vst.msk [vmem:[#allocation2 + $0x84] sm:$0xf] %vm565, 0
        %600 = vst.msk [vmem:[#allocation2 + $0x88] sm:$0xf] %vm565, 0
        %601 = vst.msk [vmem:[#allocation2 + $0x8c] sm:$0xf] %vm565, 0
        %602 = vst.msk [vmem:[#allocation2 + $0x90] sm:$0xf] %vm565, 0
        %603 = vst.msk [vmem:[#allocation2 + $0x94] sm:$0xf] %vm565, 0
        %604 = vst.msk [vmem:[#allocation2 + $0x98] sm:$0xf] %vm565, 0
        %605 = vst.msk [vmem:[#allocation2 + $0x9c] sm:$0xf] %vm565, 0
        %606 = vst.msk [vmem:[#allocation2 + $0xa0] sm:$0xf] %vm565, 0
        %607 = vst.msk [vmem:[#allocation2 + $0xa4] sm:$0xf] %vm565, 0
        %608 = vst.msk [vmem:[#allocation2 + $0xa8] sm:$0xf] %vm565, 0
        %609 = vst.msk [vmem:[#allocation2 + $0xac] sm:$0xf] %vm565, 0
        %610 = vst.msk [vmem:[#allocation2 + $0xb0] sm:$0xf] %vm565, 0
        %611 = vst.msk [vmem:[#allocation2 + $0xb4] sm:$0xf] %vm565, 0
        %612 = vst.msk [vmem:[#allocation2 + $0xb8] sm:$0xf] %vm565, 0
        %613 = vst.msk [vmem:[#allocation2 + $0xbc] sm:$0xf] %vm565, 0
        %614 = vst.msk [vmem:[#allocation2 + $0xc0] sm:$0xf] %vm565, 0
        %615 = vst.msk [vmem:[#allocation2 + $0xc4] sm:$0xf] %vm565, 0
        %616 = vst.msk [vmem:[#allocation2 + $0xc8] sm:$0xf] %vm565, 0
        %617 = vst.msk [vmem:[#allocation2 + $0xcc] sm:$0xf] %vm565, 0
        %618 = vst.msk [vmem:[#allocation2 + $0xd0] sm:$0xf] %vm565, 0
        %619 = vst.msk [vmem:[#allocation2 + $0xd4] sm:$0xf] %vm565, 0
        %620 = vst.msk [vmem:[#allocation2 + $0xd8] sm:$0xf] %vm565, 0
        %621 = vst.msk [vmem:[#allocation2 + $0xdc] sm:$0xf] %vm565, 0
        %622 = vst.msk [vmem:[#allocation2 + $0xe0] sm:$0xf] %vm565, 0
        %623 = vst.msk [vmem:[#allocation2 + $0xe4] sm:$0xf] %vm565, 0
        %624 = vst.msk [vmem:[#allocation2 + $0xe8] sm:$0xf] %vm565, 0
        %625 = vst.msk [vmem:[#allocation2 + $0xec] sm:$0xf] %vm565, 0
        %626 = vst.msk [vmem:[#allocation2 + $0xf0] sm:$0xf] %vm565, 0
        %627 = vst.msk [vmem:[#allocation2 + $0xf4] sm:$0xf] %vm565, 0
        %628 = vst.msk [vmem:[#allocation2 + $0xf8] sm:$0xf] %vm565, 0
        %629 = vst.msk [vmem:[#allocation2 + $0xfc] sm:$0xf] %vm565, 0
        %630 = vst.msk [vmem:[#allocation2 + $0x100] sm:$0xf] %vm565, 0
        %631 = vst.msk [vmem:[#allocation2 + $0x104] sm:$0xf] %vm565, 0
        %632 = vst.msk [vmem:[#allocation2 + $0x108] sm:$0xf] %vm565, 0
        %633 = vst.msk [vmem:[#allocation2 + $0x10c] sm:$0xf] %vm565, 0
        %634 = vst.msk [vmem:[#allocation2 + $0x110] sm:$0xf] %vm565, 0
        %635 = vst.msk [vmem:[#allocation2 + $0x114] sm:$0xf] %vm565, 0
        %636 = vst.msk [vmem:[#allocation2 + $0x118] sm:$0xf] %vm565, 0
        %637 = vst.msk [vmem:[#allocation2 + $0x11c] sm:$0xf] %vm565, 0
        %638 = vst.msk [vmem:[#allocation2 + $0x120] sm:$0xf] %vm565, 0
        %639 = vst.msk [vmem:[#allocation2 + $0x124] sm:$0xf] %vm565, 0
        %640 = vst.msk [vmem:[#allocation2 + $0x128] sm:$0xf] %vm565, 0
        %641 = vst.msk [vmem:[#allocation2 + $0x12c] sm:$0xf] %vm565, 0
        %642 = vst.msk [vmem:[#allocation2 + $0x130] sm:$0xf] %vm565, 0
        %643 = vst.msk [vmem:[#allocation2 + $0x134] sm:$0xf] %vm565, 0
        %644 = vst.msk [vmem:[#allocation2 + $0x138] sm:$0xf] %vm565, 0
        %645 = vst.msk [vmem:[#allocation2 + $0x13c] sm:$0xf] %vm565, 0
        %646 = vst.msk [vmem:[#allocation2 + $0x140] sm:$0xf] %vm565, 0
        %647 = vst.msk [vmem:[#allocation2 + $0x144] sm:$0xf] %vm565, 0
        %648 = vst.msk [vmem:[#allocation2 + $0x148] sm:$0xf] %vm565, 0
        %649 = vst.msk [vmem:[#allocation2 + $0x14c] sm:$0xf] %vm565, 0
        %650 = vst.msk [vmem:[#allocation2 + $0x150] sm:$0xf] %vm565, 0
        %651 = vst.msk [vmem:[#allocation2 + $0x154] sm:$0xf] %vm565, 0
        %652 = vst.msk [vmem:[#allocation2 + $0x158] sm:$0xf] %vm565, 0
        %653 = vst.msk [vmem:[#allocation2 + $0x15c] sm:$0xf] %vm565, 0
        %654 = vst.msk [vmem:[#allocation2 + $0x160] sm:$0xf] %vm565, 0
        %655 = vst.msk [vmem:[#allocation2 + $0x164] sm:$0xf] %vm565, 0
        %656 = vst.msk [vmem:[#allocation2 + $0x168] sm:$0xf] %vm565, 0
        %657 = vst.msk [vmem:[#allocation2 + $0x16c] sm:$0xf] %vm565, 0
        %658 = vst.msk [vmem:[#allocation2 + $0x170] sm:$0xf] %vm565, 0
        %659 = vst.msk [vmem:[#allocation2 + $0x174] sm:$0xf] %vm565, 0
        %660 = vst.msk [vmem:[#allocation2 + $0x178] sm:$0xf] %vm565, 0
        %661 = vst.msk [vmem:[#allocation2 + $0x17c] sm:$0xf] %vm565, 0
        %662 = vst.msk [vmem:[#allocation2 + $0x180] sm:$0xf] %vm565, 0
        %663 = vst.msk [vmem:[#allocation2 + $0x184] sm:$0xf] %vm565, 0
        %664 = vst.msk [vmem:[#allocation2 + $0x188] sm:$0xf] %vm565, 0
        %665 = vst.msk [vmem:[#allocation2 + $0x18c] sm:$0xf] %vm565, 0
        %666 = vst.msk [vmem:[#allocation2 + $0x190] sm:$0xf] %vm565, 0
        %667 = vst.msk [vmem:[#allocation2 + $0x194] sm:$0xf] %vm565, 0
        %668 = vst.msk [vmem:[#allocation2 + $0x198] sm:$0xf] %vm565, 0
        %669 = vst.msk [vmem:[#allocation2 + $0x19c] sm:$0xf] %vm565, 0
        %670 = vst.msk [vmem:[#allocation2 + $0x1a0] sm:$0xf] %vm565, 0
        %671 = vst.msk [vmem:[#allocation2 + $0x1a4] sm:$0xf] %vm565, 0
        %672 = vst.msk [vmem:[#allocation2 + $0x1a8] sm:$0xf] %vm565, 0
        %673 = vst.msk [vmem:[#allocation2 + $0x1ac] sm:$0xf] %vm565, 0
        %674 = vst.msk [vmem:[#allocation2 + $0x1b0] sm:$0xf] %vm565, 0
        %675 = vst.msk [vmem:[#allocation2 + $0x1b4] sm:$0xf] %vm565, 0
        %676 = vst.msk [vmem:[#allocation2 + $0x1b8] sm:$0xf] %vm565, 0
        %677 = vst.msk [vmem:[#allocation2 + $0x1bc] sm:$0xf] %vm565, 0
        %678 = vst.msk [vmem:[#allocation2 + $0x1c0] sm:$0xf] %vm565, 0
        %679 = vst.msk [vmem:[#allocation2 + $0x1c4] sm:$0xf] %vm565, 0
        %680 = vst.msk [vmem:[#allocation2 + $0x1c8] sm:$0xf] %vm565, 0
        %681 = vst.msk [vmem:[#allocation2 + $0x1cc] sm:$0xf] %vm565, 0
        %682 = vst.msk [vmem:[#allocation2 + $0x1d0] sm:$0xf] %vm565, 0
        %683 = vst.msk [vmem:[#allocation2 + $0x1d4] sm:$0xf] %vm565, 0
        %684 = vst.msk [vmem:[#allocation2 + $0x1d8] sm:$0xf] %vm565, 0
        %685 = vst.msk [vmem:[#allocation2 + $0x1dc] sm:$0xf] %vm565, 0
      $region52: #{res_block_forward.5} parent=47 // pred_fallthru
        _
      %v686 = vld [vmem:[%s538] sm:$0x1]
      %v687 = vld [vmem:[%s545] sm:$0x1]
      %p688 = scmp.lt.s32.totalorder %s25, 0
      %s689 = ssub.s32 0, %s25
      %s690 = scalar_select %p688, %s689, %s25
      %s691 = sdiv.u32.pop %s690, 3
      %s692 = srem.u32.pop %s690, 3
      %s693 = ssub.s32 0, %s692
      %s694 = scalar_select %p688, %s693, %s692
      %p695 = scmp.ne.s32.totalorder %s694, 0
      %p696 = scmp.lt.s32.totalorder %s694, 0
      %p697 = pnand %p696, %p695
      %p698 = pneg %p697
      %s699 = sadd.s32 %s694, 3
      %s700 = scalar_select %p698, %s699, %s694
      %v701 = vld [vmem:[%s488] sm:$0xff]
      %v702 = vld [vmem:[%s488 + $0x8] sm:$0xff]
      %v703 = vld [vmem:[%s488 + $0x10] sm:$0xff]
      %v704 = vld [vmem:[%s488 + $0x18] sm:$0xff]
      %v705 = vld [vmem:[%s488 + $0x20] sm:$0xff]
      %v706 = vld [vmem:[%s488 + $0x28] sm:$0xff]
      %v707 = vld [vmem:[%s488 + $0x30] sm:$0xff]
      %v708 = vld [vmem:[%s488 + $0x38] sm:$0xff]
      %v709 = vld [vmem:[%s488 + $0x40] sm:$0xff]
      %v710 = vld [vmem:[%s488 + $0x48] sm:$0xff]
      %v711 = vld [vmem:[%s488 + $0x50] sm:$0xff]
      %v712 = vld [vmem:[%s488 + $0x58] sm:$0xff]
      %v713 = vld [vmem:[%s488 + $0x60] sm:$0xff]
      %v714 = vld [vmem:[%s488 + $0x68] sm:$0xff]
      %v715 = vld [vmem:[%s488 + $0x70] sm:$0xff]
      %v716 = vld [vmem:[%s488 + $0x78] sm:$0xff]
      %v718 = vlaneseq
      %v719 = vshrl.u32 %v718, 7
      %v720 = vsub.s32 0, %v719
      %v721 = vrot.slane %v686, %v720
      %v723 = vmul.f32 %v701, %v721
      %v724 = vmul.f32 %v702, %v721
      %v725 = vmul.f32 %v703, %v721
      %v726 = vmul.f32 %v704, %v721
      %v727 = vmul.f32 %v705, %v721
      %v728 = vmul.f32 %v706, %v721
      %v729 = vmul.f32 %v707, %v721
      %v730 = vmul.f32 %v708, %v721
      %v731 = vmul.f32 %v709, %v721
      %v732 = vmul.f32 %v710, %v721
      %v733 = vmul.f32 %v711, %v721
      %v734 = vmul.f32 %v712, %v721
      %v735 = vmul.f32 %v713, %v721
      %v736 = vmul.f32 %v714, %v721
      %v737 = vmul.f32 %v715, %v721
      %v738 = vmul.f32 %v716, %v721
      %v740 = vlaneseq
      %v741 = vshrl.u32 %v740, 7
      %v742 = vsub.s32 0, %v741
      %v743 = vrot.slane %v687, %v742
      %v745 = vadd.f32 %v723, %v743
      %v746 = vadd.f32 %v724, %v743
      %v747 = vadd.f32 %v725, %v743
      %v748 = vadd.f32 %v726, %v743
      %v749 = vadd.f32 %v727, %v743
      %v750 = vadd.f32 %v728, %v743
      %v751 = vadd.f32 %v729, %v743
      %v752 = vadd.f32 %v730, %v743
      %v753 = vadd.f32 %v731, %v743
      %v754 = vadd.f32 %v732, %v743
      %v755 = vadd.f32 %v733, %v743
      %v756 = vadd.f32 %v734, %v743
      %v757 = vadd.f32 %v735, %v743
      %v758 = vadd.f32 %v736, %v743
      %v759 = vadd.f32 %v737, %v743
      %v760 = vadd.f32 %v738, %v743
      %v761 = vxor.u32 %v745, 2147483648
      %v762 = vxor.u32 %v746, 2147483648
      %v763 = vxor.u32 %v747, 2147483648
      %v764 = vxor.u32 %v748, 2147483648
      %v765 = vxor.u32 %v749, 2147483648
      %v766 = vxor.u32 %v750, 2147483648
      %v767 = vxor.u32 %v751, 2147483648
      %v768 = vxor.u32 %v752, 2147483648
      %v769 = vxor.u32 %v753, 2147483648
      %v770 = vxor.u32 %v754, 2147483648
      %v771 = vxor.u32 %v755, 2147483648
      %v772 = vxor.u32 %v756, 2147483648
      %v773 = vxor.u32 %v757, 2147483648
      %v774 = vxor.u32 %v758, 2147483648
      %v775 = vxor.u32 %v759, 2147483648
      %v776 = vxor.u32 %v760, 2147483648
      %v777 = vmul.f32 %v761, 1.442695
      %v778 = vpow.pop %v777
      %v779 = vmul.f32 %v762, 1.442695
      %v780 = vpow.pop %v779
      %v781 = vmul.f32 %v763, 1.442695
      %v782 = vpow.pop %v781
      %v783 = vmul.f32 %v764, 1.442695
      %v784 = vpow.pop %v783
      %v785 = vmul.f32 %v765, 1.442695
      %v786 = vpow.pop %v785
      %v787 = vmul.f32 %v766, 1.442695
      %v788 = vpow.pop %v787
      %v789 = vmul.f32 %v767, 1.442695
      %v790 = vpow.pop %v789
      %v791 = vmul.f32 %v768, 1.442695
      %v792 = vpow.pop %v791
      %v793 = vmul.f32 %v769, 1.442695
      %v794 = vpow.pop %v793
      %v795 = vmul.f32 %v770, 1.442695
      %v796 = vpow.pop %v795
      %v797 = vmul.f32 %v771, 1.442695
      %v798 = vpow.pop %v797
      %v799 = vmul.f32 %v772, 1.442695
      %v800 = vpow.pop %v799
      %v801 = vmul.f32 %v773, 1.442695
      %v802 = vpow.pop %v801
      %v803 = vmul.f32 %v774, 1.442695
      %v804 = vpow.pop %v803
      %v805 = vmul.f32 %v775, 1.442695
      %v806 = vpow.pop %v805
      %v807 = vmul.f32 %v776, 1.442695
      %v808 = vpow.pop %v807
      %v809 = vadd.f32 %v778, 1.0
      %v810 = vadd.f32 %v780, 1.0
      %v811 = vadd.f32 %v782, 1.0
      %v812 = vadd.f32 %v784, 1.0
      %v813 = vadd.f32 %v786, 1.0
      %v814 = vadd.f32 %v788, 1.0
      %v815 = vadd.f32 %v790, 1.0
      %v816 = vadd.f32 %v792, 1.0
      %v817 = vadd.f32 %v794, 1.0
      %v818 = vadd.f32 %v796, 1.0
      %v819 = vadd.f32 %v798, 1.0
      %v820 = vadd.f32 %v800, 1.0
      %v821 = vadd.f32 %v802, 1.0
      %v822 = vadd.f32 %v804, 1.0
      %v823 = vadd.f32 %v806, 1.0
      %v824 = vadd.f32 %v808, 1.0
      %v825 = vrcp.pop %v809
      %v826 = vmul.f32 1.0, %v825
      %v827 = vrcp.pop %v810
      %v828 = vmul.f32 1.0, %v827
      %v829 = vrcp.pop %v811
      %v830 = vmul.f32 1.0, %v829
      %v831 = vrcp.pop %v812
      %v832 = vmul.f32 1.0, %v831
      %v833 = vrcp.pop %v813
      %v834 = vmul.f32 1.0, %v833
      %v835 = vrcp.pop %v814
      %v836 = vmul.f32 1.0, %v835
      %v837 = vrcp.pop %v815
      %v838 = vmul.f32 1.0, %v837
      %v839 = vrcp.pop %v816
      %v840 = vmul.f32 1.0, %v839
      %v841 = vrcp.pop %v817
      %v842 = vmul.f32 1.0, %v841
      %v843 = vrcp.pop %v818
      %v844 = vmul.f32 1.0, %v843
      %v845 = vrcp.pop %v819
      %v846 = vmul.f32 1.0, %v845
      %v847 = vrcp.pop %v820
      %v848 = vmul.f32 1.0, %v847
      %v849 = vrcp.pop %v821
      %v850 = vmul.f32 1.0, %v849
      %v851 = vrcp.pop %v822
      %v852 = vmul.f32 1.0, %v851
      %v853 = vrcp.pop %v823
      %v854 = vmul.f32 1.0, %v853
      %v855 = vrcp.pop %v824
      %v856 = vmul.f32 1.0, %v855
      %v857 = vmul.f32 %v745, %v826
      %v858 = vmul.f32 %v746, %v828
      %v859 = vmul.f32 %v747, %v830
      %v860 = vmul.f32 %v748, %v832
      %v861 = vmul.f32 %v749, %v834
      %v862 = vmul.f32 %v750, %v836
      %v863 = vmul.f32 %v751, %v838
      %v864 = vmul.f32 %v752, %v840
      %v865 = vmul.f32 %v753, %v842
      %v866 = vmul.f32 %v754, %v844
      %v867 = vmul.f32 %v755, %v846
      %v868 = vmul.f32 %v756, %v848
      %v869 = vmul.f32 %v757, %v850
      %v870 = vmul.f32 %v758, %v852
      %v871 = vmul.f32 %v759, %v854
      %v872 = vmul.f32 %v760, %v856
      %v873 = vpack.c.bf16 %v858, %v857
      %v874 = vpack.c.bf16 %v860, %v859
      %v875 = vpack.c.bf16 %v862, %v861
      %v876 = vpack.c.bf16 %v864, %v863
      %v877 = vpack.c.bf16 %v866, %v865
      %v878 = vpack.c.bf16 %v868, %v867
      %v879 = vpack.c.bf16 %v870, %v869
      %v880 = vpack.c.bf16 %v872, %v871
      %v889 = vunpack.c.l.b16 %v873
      %v890 = vunpack.c.h.b16 %v873
      %v891 = vunpack.c.l.b16 %v874
      %v892 = vunpack.c.h.b16 %v874
      %v893 = vunpack.c.l.b16 %v875
      %v894 = vunpack.c.h.b16 %v875
      %v895 = vunpack.c.l.b16 %v876
      %v896 = vunpack.c.h.b16 %v876
      %v897 = vunpack.c.l.b16 %v877
      %v898 = vunpack.c.h.b16 %v877
      %v899 = vunpack.c.l.b16 %v878
      %v900 = vunpack.c.h.b16 %v878
      %v901 = vunpack.c.l.b16 %v879
      %v902 = vunpack.c.h.b16 %v879
      %v903 = vunpack.c.l.b16 %v880
      %v904 = vunpack.c.h.b16 %v880
      %v905 = vpack.c.b16 %v889, %v889
      %v906 = vpack.c.b16 %v890, %v890
      %v907 = vpack.c.b16 %v891, %v891
      %v908 = vpack.c.b16 %v892, %v892
      %v909 = vpack.c.b16 %v893, %v893
      %v910 = vpack.c.b16 %v894, %v894
      %v911 = vpack.c.b16 %v895, %v895
      %v912 = vpack.c.b16 %v896, %v896
      %v913 = vpack.c.b16 %v897, %v897
      %v914 = vpack.c.b16 %v898, %v898
      %v915 = vpack.c.b16 %v899, %v899
      %v916 = vpack.c.b16 %v900, %v900
      %v917 = vpack.c.b16 %v901, %v901
      %v918 = vpack.c.b16 %v902, %v902
      %v919 = vpack.c.b16 %v903, %v903
      %v920 = vpack.c.b16 %v904, %v904
      %s937 = smul.u32 %s700, 40
      %s938 = sadd.s32 4, %s937
      %s939 = smul.addr %s938, 4
      %s940 = scalar_lea.vmem [#allocation2], %s939
      %vm941 = vcmask 257024
      %942 = vst.msk [vmem:[%s940 + $0x4] sm:$0xf] %vm941, %v905
      %943 = vst.msk [vmem:[%s940 + $0x8] sm:$0xf] %vm941, %v906
      %944 = vst.msk [vmem:[%s940 + $0x14] sm:$0xf] %vm941, %v907
      %945 = vst.msk [vmem:[%s940 + $0x18] sm:$0xf] %vm941, %v908
      %946 = vst.msk [vmem:[%s940 + $0x24] sm:$0xf] %vm941, %v909
      %947 = vst.msk [vmem:[%s940 + $0x28] sm:$0xf] %vm941, %v910
      %948 = vst.msk [vmem:[%s940 + $0x34] sm:$0xf] %vm941, %v911
      %949 = vst.msk [vmem:[%s940 + $0x38] sm:$0xf] %vm941, %v912
      %950 = vst.msk [vmem:[%s940 + $0x44] sm:$0xf] %vm941, %v913
      %951 = vst.msk [vmem:[%s940 + $0x48] sm:$0xf] %vm941, %v914
      %952 = vst.msk [vmem:[%s940 + $0x54] sm:$0xf] %vm941, %v915
      %953 = vst.msk [vmem:[%s940 + $0x58] sm:$0xf] %vm941, %v916
      %954 = vst.msk [vmem:[%s940 + $0x64] sm:$0xf] %vm941, %v917
      %955 = vst.msk [vmem:[%s940 + $0x68] sm:$0xf] %vm941, %v918
      %956 = vst.msk [vmem:[%s940 + $0x74] sm:$0xf] %vm941, %v919
      %957 = vst.msk [vmem:[%s940 + $0x78] sm:$0xf] %vm941, %v920
      %v958 = vld [vmem:[%s506] sm:$0xff]
      %v959 = vld [vmem:[%s506 + $0x8] sm:$0xff]
      %v960 = vmul.f32 %v958, %v721
      %v961 = vmul.f32 %v959, %v721
      %v962 = vadd.f32 %v960, %v743
      %v963 = vadd.f32 %v961, %v743
      %v964 = vxor.u32 %v962, 2147483648
      %v965 = vxor.u32 %v963, 2147483648
      %v966 = vmul.f32 %v964, 1.442695
      %v967 = vpow.pop %v966
      %v968 = vmul.f32 %v965, 1.442695
      %v969 = vpow.pop %v968
      %v970 = vadd.f32 %v967, 1.0
      %v971 = vadd.f32 %v969, 1.0
      %v972 = vrcp.pop %v970
      %v973 = vmul.f32 1.0, %v972
      %v974 = vrcp.pop %v971
      %v975 = vmul.f32 1.0, %v974
      %v976 = vmul.f32 %v962, %v973
      %v977 = vmul.f32 %v963, %v975
      %v978 = vpack.c.bf16 %v977, %v976
      %p979 = scmp.gt.s32.totalorder %s24, 0
      %s980 = scalar_select %p979, 1, 0
      %v981 = vstv %s980
      %vm982 = vcmp.eq.s32.totalorder %v981, 1
      %v983 = vsel %vm982, %v978, 0
      %v984 = vld [vmem:[%s527] sm:$0xff]
      %v985 = vld [vmem:[%s527 + $0x8] sm:$0xff]
      %v986 = vmul.f32 %v984, %v721
      %v987 = vmul.f32 %v985, %v721
      %v988 = vadd.f32 %v986, %v743
      %v989 = vadd.f32 %v987, %v743
      %v990 = vxor.u32 %v988, 2147483648
      %v991 = vxor.u32 %v989, 2147483648
      %v992 = vmul.f32 %v990, 1.442695
      %v993 = vpow.pop %v992
      %v994 = vmul.f32 %v991, 1.442695
      %v995 = vpow.pop %v994
      %v996 = vadd.f32 %v993, 1.0
      %v997 = vadd.f32 %v995, 1.0
      %v998 = vrcp.pop %v996
      %v999 = vmul.f32 1.0, %v998
      %v1000 = vrcp.pop %v997
      %v1001 = vmul.f32 1.0, %v1000
      %v1002 = vmul.f32 %v988, %v999
      %v1003 = vmul.f32 %v989, %v1001
      %v1004 = vpack.c.bf16 %v1003, %v1002
      %p1005 = scmp.lt.s32.totalorder %s24, 1
      %s1006 = scalar_select %p1005, 1, 0
      %v1007 = vstv %s1006
      %vm1008 = vcmp.eq.s32.totalorder %v1007, 1
      %v1009 = vsel %vm1008, %v1004, 0
      %v1011 = vunpack.c.l.b16 %v983
      %v1012 = vunpack.c.h.b16 %v983
      %v1013 = vpack.c.b16 %v1011, %v1011
      %v1014 = vpack.c.b16 %v1012, %v1012
      %s1017 = smul.addr %s937, 4
      %s1018 = scalar_lea.vmem [#allocation2], %s1017
      %1019 = vst.msk [vmem:[%s1018 + $0x4] sm:$0xf] %vm941, %v1013
      %1020 = vst.msk [vmem:[%s1018 + $0x8] sm:$0xf] %vm941, %v1014
      %v1022 = vunpack.c.l.b16 %v1009
      %v1023 = vunpack.c.h.b16 %v1009
      %v1024 = vpack.c.b16 %v1022, %v1022
      %v1025 = vpack.c.b16 %v1023, %v1023
      %s1028 = sadd.s32 36, %s937
      %s1029 = smul.addr %s1028, 4
      %s1030 = scalar_lea.vmem [#allocation2], %s1029
      %1031 = vst.msk [vmem:[%s1030 + $0x4] sm:$0xf] %vm941, %v1024
      %1032 = vst.msk [vmem:[%s1030 + $0x8] sm:$0xf] %vm941, %v1025
      %s1033 = sadd.s32 %s25, 1
      %p1034 = scmp.lt.s32.totalorder %s1033, 0
      %s1035 = ssub.s32 0, %s1033
      %s1036 = scalar_select %p1034, %s1035, %s1033
      %s1037 = sdiv.u32.pop %s1036, 3
      %s1038 = srem.u32.pop %s1036, 3
      %s1039 = ssub.s32 0, %s1038
      %s1040 = scalar_select %p1034, %s1039, %s1038
      %p1041 = scmp.ne.s32.totalorder %s1040, 0
      %p1042 = scmp.lt.s32.totalorder %s1040, 0
      %p1043 = pnand %p1042, %p1041
      %p1044 = pneg %p1043
      %s1045 = sadd.s32 %s1040, 3
      %s1046 = scalar_select %p1044, %s1045, %s1040
      %s1047 = smul.u32 %s1046, 40
      %s1048 = smul.addr %s1047, 4
      %s1049 = scalar_lea.vmem [#allocation2], %s1048
      %v1050 = vld [vmem:[%s1049] sm:$0x8]
      %v1051 = vld [vmem:[%s1049 + $0x4] sm:$0xf]
      %v1052 = vld [vmem:[%s1049 + $0x8] sm:$0xf]
      %v1053 = vld [vmem:[%s1049 + $0x10] sm:$0x8]
      %v1054 = vld [vmem:[%s1049 + $0x14] sm:$0xf]
      %v1055 = vld [vmem:[%s1049 + $0x18] sm:$0xf]
      %v1056 = vld [vmem:[%s1049 + $0x20] sm:$0x8]
      %v1057 = vld [vmem:[%s1049 + $0x24] sm:$0xf]
      %v1058 = vld [vmem:[%s1049 + $0x28] sm:$0xf]
      %v1059 = vld [vmem:[%s1049 + $0x30] sm:$0x8]
      %v1060 = vld [vmem:[%s1049 + $0x34] sm:$0xf]
      %v1061 = vld [vmem:[%s1049 + $0x38] sm:$0xf]
      %v1062 = vld [vmem:[%s1049 + $0x40] sm:$0x8]
      %v1063 = vld [vmem:[%s1049 + $0x44] sm:$0xf]
      %v1064 = vld [vmem:[%s1049 + $0x48] sm:$0xf]
      %v1065 = vld [vmem:[%s1049 + $0x50] sm:$0x8]
      %v1066 = vld [vmem:[%s1049 + $0x54] sm:$0xf]
      %v1067 = vld [vmem:[%s1049 + $0x58] sm:$0xf]
      %v1068 = vld [vmem:[%s1049 + $0x60] sm:$0x8]
      %v1069 = vld [vmem:[%s1049 + $0x64] sm:$0xf]
      %v1070 = vld [vmem:[%s1049 + $0x68] sm:$0xf]
      %v1071 = vld [vmem:[%s1049 + $0x70] sm:$0x8]
      %v1072 = vld [vmem:[%s1049 + $0x74] sm:$0xf]
      %v1073 = vld [vmem:[%s1049 + $0x78] sm:$0xf]
      %v1074 = vld [vmem:[%s1049 + $0x80] sm:$0x8]
      %v1075 = vld [vmem:[%s1049 + $0x84] sm:$0xf]
      %v1076 = vld [vmem:[%s1049 + $0x88] sm:$0xf]
      %v1077 = vld [vmem:[%s1049 + $0x90] sm:$0x8]
      %v1078 = vld [vmem:[%s1049 + $0x94] sm:$0xf]
      %v1079 = vld [vmem:[%s1049 + $0x98] sm:$0xf]
      %v1104 = vunpack.c.l.b16 %v1050
      %v1105 = vunpack.c.l.b16 %v1051
      %v1106 = vunpack.c.l.b16 %v1052
      %v1107 = vunpack.c.l.b16 %v1053
      %v1108 = vunpack.c.l.b16 %v1054
      %v1109 = vunpack.c.l.b16 %v1055
      %v1110 = vunpack.c.l.b16 %v1056
      %v1111 = vunpack.c.l.b16 %v1057
      %v1112 = vunpack.c.l.b16 %v1058
      %v1113 = vunpack.c.l.b16 %v1059
      %v1114 = vunpack.c.l.b16 %v1060
      %v1115 = vunpack.c.l.b16 %v1061
      %v1116 = vunpack.c.l.b16 %v1062
      %v1117 = vunpack.c.l.b16 %v1063
      %v1118 = vunpack.c.l.b16 %v1064
      %v1119 = vunpack.c.l.b16 %v1065
      %v1120 = vunpack.c.l.b16 %v1066
      %v1121 = vunpack.c.l.b16 %v1067
      %v1122 = vunpack.c.l.b16 %v1068
      %v1123 = vunpack.c.l.b16 %v1069
      %v1124 = vunpack.c.l.b16 %v1070
      %v1125 = vunpack.c.l.b16 %v1071
      %v1126 = vunpack.c.l.b16 %v1072
      %v1127 = vunpack.c.l.b16 %v1073
      %v1128 = vpack.c.b16 %v1105, %v1104
      %v1129 = vpack.c.b16 %v1106, %v1106
      %v1130 = vpack.c.b16 %v1108, %v1107
      %v1131 = vpack.c.b16 %v1109, %v1109
      %v1132 = vpack.c.b16 %v1111, %v1110
      %v1133 = vpack.c.b16 %v1112, %v1112
      %v1134 = vpack.c.b16 %v1114, %v1113
      %v1135 = vpack.c.b16 %v1115, %v1115
      %v1136 = vpack.c.b16 %v1117, %v1116
      %v1137 = vpack.c.b16 %v1118, %v1118
      %v1138 = vpack.c.b16 %v1120, %v1119
      %v1139 = vpack.c.b16 %v1121, %v1121
      %v1140 = vpack.c.b16 %v1123, %v1122
      %v1141 = vpack.c.b16 %v1124, %v1124
      %v1142 = vpack.c.b16 %v1126, %v1125
      %v1143 = vpack.c.b16 %v1127, %v1127
      %v1147 = vunpack.c.l.b16 %v1074
      %v1148 = vunpack.c.l.b16 %v1075
      %v1149 = vunpack.c.l.b16 %v1076
      %v1150 = vpack.c.b16 %v1148, %v1147
      %v1151 = vpack.c.b16 %v1149, %v1149
      %1152 = vrot.lane.b32.xlu0 %v1130, 32
      %v1153 = vpop.permute.xlu0 %1152
      %1154 = vrot.lane.b32.xlu0 %v1131, 32
      %v1155 = vpop.permute.xlu0 %1154
      %1156 = vrot.lane.b32.xlu0 %v1132, 32
      %v1157 = vpop.permute.xlu0 %1156
      %1158 = vrot.lane.b32.xlu0 %v1133, 32
      %v1159 = vpop.permute.xlu0 %1158
      %1160 = vrot.lane.b32.xlu0 %v1134, 32
      %v1161 = vpop.permute.xlu0 %1160
      %1162 = vrot.lane.b32.xlu0 %v1135, 32
      %v1163 = vpop.permute.xlu0 %1162
      %1164 = vrot.lane.b32.xlu0 %v1136, 32
      %v1165 = vpop.permute.xlu0 %1164
      %1166 = vrot.lane.b32.xlu0 %v1137, 32
      %v1167 = vpop.permute.xlu0 %1166
      %1168 = vrot.lane.b32.xlu0 %v1138, 32
      %v1169 = vpop.permute.xlu0 %1168
      %1170 = vrot.lane.b32.xlu0 %v1139, 32
      %v1171 = vpop.permute.xlu0 %1170
      %1172 = vrot.lane.b32.xlu0 %v1140, 32
      %v1173 = vpop.permute.xlu0 %1172
      %1174 = vrot.lane.b32.xlu0 %v1141, 32
      %v1175 = vpop.permute.xlu0 %1174
      %1176 = vrot.lane.b32.xlu0 %v1142, 32
      %v1177 = vpop.permute.xlu0 %1176
      %1178 = vrot.lane.b32.xlu0 %v1143, 32
      %v1179 = vpop.permute.xlu0 %1178
      %1180 = vrot.lane.b32.xlu0 %v1150, 32
      %v1181 = vpop.permute.xlu0 %1180
      %1182 = vrot.lane.b32.xlu0 %v1151, 32
      %v1183 = vpop.permute.xlu0 %1182
      %v1187 = vunpack.c.l.b16 %v1077
      %v1188 = vunpack.c.l.b16 %v1078
      %v1189 = vunpack.c.l.b16 %v1079
      %v1190 = vpack.c.b16 %v1188, %v1187
      %v1191 = vpack.c.b16 %v1189, %v1189
      %1192 = vrot.lane.b32.xlu0 %v1132, 64
      %v1193 = vpop.permute.xlu0 %1192
      %1194 = vrot.lane.b32.xlu0 %v1133, 64
      %v1195 = vpop.permute.xlu0 %1194
      %1196 = vrot.lane.b32.xlu0 %v1134, 64
      %v1197 = vpop.permute.xlu0 %1196
      %1198 = vrot.lane.b32.xlu0 %v1135, 64
      %v1199 = vpop.permute.xlu0 %1198
      %1200 = vrot.lane.b32.xlu0 %v1136, 64
      %v1201 = vpop.permute.xlu0 %1200
      %1202 = vrot.lane.b32.xlu0 %v1137, 64
      %v1203 = vpop.permute.xlu0 %1202
      %1204 = vrot.lane.b32.xlu0 %v1138, 64
      %v1205 = vpop.permute.xlu0 %1204
      %1206 = vrot.lane.b32.xlu0 %v1139, 64
      %v1207 = vpop.permute.xlu0 %1206
      %1208 = vrot.lane.b32.xlu0 %v1140, 64
      %v1209 = vpop.permute.xlu0 %1208
      %1210 = vrot.lane.b32.xlu0 %v1141, 64
      %v1211 = vpop.permute.xlu0 %1210
      %1212 = vrot.lane.b32.xlu0 %v1142, 64
      %v1213 = vpop.permute.xlu0 %1212
      %1214 = vrot.lane.b32.xlu0 %v1143, 64
      %v1215 = vpop.permute.xlu0 %1214
      %1216 = vrot.lane.b32.xlu0 %v1150, 64
      %v1217 = vpop.permute.xlu0 %1216
      %1218 = vrot.lane.b32.xlu0 %v1151, 64
      %v1219 = vpop.permute.xlu0 %1218
      %1220 = vrot.lane.b32.xlu0 %v1190, 64
      %v1221 = vpop.permute.xlu0 %1220
      %1222 = vrot.lane.b32.xlu0 %v1191, 64
      %v1223 = vpop.permute.xlu0 %1222
      %vm1224 = vcmask 261120
      %v1227 = vsel %vm1224, %v1128, %v1153
      %v1230 = vsel %vm1224, %v1129, %v1155
      %v1233 = vsel %vm1224, %v1130, %v1157
      %v1236 = vsel %vm1224, %v1131, %v1159
      %v1239 = vsel %vm1224, %v1132, %v1161
      %v1242 = vsel %vm1224, %v1133, %v1163
      %v1245 = vsel %vm1224, %v1134, %v1165
      %v1248 = vsel %vm1224, %v1135, %v1167
      %v1251 = vsel %vm1224, %v1136, %v1169
      %v1254 = vsel %vm1224, %v1137, %v1171
      %v1257 = vsel %vm1224, %v1138, %v1173
      %v1260 = vsel %vm1224, %v1139, %v1175
      %v1263 = vsel %vm1224, %v1140, %v1177
      %v1266 = vsel %vm1224, %v1141, %v1179
      %v1269 = vsel %vm1224, %v1142, %v1181
      %v1272 = vsel %vm1224, %v1143, %v1183
      %vm1273 = vcmask 523264
      %v1275 = vsel %vm1273, %v1227, %v1193
      %v1277 = vsel %vm1273, %v1230, %v1195
      %v1279 = vsel %vm1273, %v1233, %v1197
      %v1281 = vsel %vm1273, %v1236, %v1199
      %v1283 = vsel %vm1273, %v1239, %v1201
      %v1285 = vsel %vm1273, %v1242, %v1203
      %v1287 = vsel %vm1273, %v1245, %v1205
      %v1289 = vsel %vm1273, %v1248, %v1207
      %v1291 = vsel %vm1273, %v1251, %v1209
      %v1293 = vsel %vm1273, %v1254, %v1211
      %v1295 = vsel %vm1273, %v1257, %v1213
      %v1297 = vsel %vm1273, %v1260, %v1215
      %v1299 = vsel %vm1273, %v1263, %v1217
      %v1301 = vsel %vm1273, %v1266, %v1219
      %v1303 = vsel %vm1273, %v1269, %v1221
      %v1305 = vsel %vm1273, %v1272, %v1223
      %vm1306 = vsmask.f32 4352
      %v1307 = vshrl.u32 %v1275, 16
      %v1309 = vrot.slane %v1307, 3
      %v1310 = vshll.u32 %v1275, 16
      %v1312 = vrot.slane %v1310, 4
      %v1313 = vor.u32 %v1309, %v1312
      %v1314 = vshrl.u32 %v1277, 16
      %v1316 = vrot.slane %v1314, 3
      %v1317 = vshll.u32 %v1277, 16
      %v1319 = vrot.slane %v1317, 4
      %v1320 = vor.u32 %v1316, %v1319
      %v1321 = vsel %vm1306, %v1313, %v1320
      %v1322 = vshrl.u32 %v1279, 16
      %v1324 = vrot.slane %v1322, 3
      %v1325 = vshll.u32 %v1279, 16
      %v1327 = vrot.slane %v1325, 4
      %v1328 = vor.u32 %v1324, %v1327
      %v1329 = vshrl.u32 %v1281, 16
      %v1331 = vrot.slane %v1329, 3
      %v1332 = vshll.u32 %v1281, 16
      %v1334 = vrot.slane %v1332, 4
      %v1335 = vor.u32 %v1331, %v1334
      %v1336 = vsel %vm1306, %v1328, %v1335
      %v1337 = vshrl.u32 %v1283, 16
      %v1339 = vrot.slane %v1337, 3
      %v1340 = vshll.u32 %v1283, 16
      %v1342 = vrot.slane %v1340, 4
      %v1343 = vor.u32 %v1339, %v1342
      %v1344 = vshrl.u32 %v1285, 16
      %v1346 = vrot.slane %v1344, 3
      %v1347 = vshll.u32 %v1285, 16
      %v1349 = vrot.slane %v1347, 4
      %v1350 = vor.u32 %v1346, %v1349
      %v1351 = vsel %vm1306, %v1343, %v1350
      %v1352 = vshrl.u32 %v1287, 16
      %v1354 = vrot.slane %v1352, 3
      %v1355 = vshll.u32 %v1287, 16
      %v1357 = vrot.slane %v1355, 4
      %v1358 = vor.u32 %v1354, %v1357
      %v1359 = vshrl.u32 %v1289, 16
      %v1361 = vrot.slane %v1359, 3
      %v1362 = vshll.u32 %v1289, 16
      %v1364 = vrot.slane %v1362, 4
      %v1365 = vor.u32 %v1361, %v1364
      %v1366 = vsel %vm1306, %v1358, %v1365
      %v1367 = vshrl.u32 %v1291, 16
      %v1369 = vrot.slane %v1367, 3
      %v1370 = vshll.u32 %v1291, 16
      %v1372 = vrot.slane %v1370, 4
      %v1373 = vor.u32 %v1369, %v1372
      %v1374 = vshrl.u32 %v1293, 16
      %v1376 = vrot.slane %v1374, 3
      %v1377 = vshll.u32 %v1293, 16
      %v1379 = vrot.slane %v1377, 4
      %v1380 = vor.u32 %v1376, %v1379
      %v1381 = vsel %vm1306, %v1373, %v1380
      %v1382 = vshrl.u32 %v1295, 16
      %v1384 = vrot.slane %v1382, 3
      %v1385 = vshll.u32 %v1295, 16
      %v1387 = vrot.slane %v1385, 4
      %v1388 = vor.u32 %v1384, %v1387
      %v1389 = vshrl.u32 %v1297, 16
      %v1391 = vrot.slane %v1389, 3
      %v1392 = vshll.u32 %v1297, 16
      %v1394 = vrot.slane %v1392, 4
      %v1395 = vor.u32 %v1391, %v1394
      %v1396 = vsel %vm1306, %v1388, %v1395
      %v1397 = vshrl.u32 %v1299, 16
      %v1399 = vrot.slane %v1397, 3
      %v1400 = vshll.u32 %v1299, 16
      %v1402 = vrot.slane %v1400, 4
      %v1403 = vor.u32 %v1399, %v1402
      %v1404 = vshrl.u32 %v1301, 16
      %v1406 = vrot.slane %v1404, 3
      %v1407 = vshll.u32 %v1301, 16
      %v1409 = vrot.slane %v1407, 4
      %v1410 = vor.u32 %v1406, %v1409
      %v1411 = vsel %vm1306, %v1403, %v1410
      %v1412 = vshrl.u32 %v1303, 16
      %v1414 = vrot.slane %v1412, 3
      %v1415 = vshll.u32 %v1303, 16
      %v1417 = vrot.slane %v1415, 4
      %v1418 = vor.u32 %v1414, %v1417
      %v1419 = vshrl.u32 %v1305, 16
      %v1421 = vrot.slane %v1419, 3
      %v1422 = vshll.u32 %v1305, 16
      %v1424 = vrot.slane %v1422, 4
      %v1425 = vor.u32 %v1421, %v1424
      %v1426 = vsel %vm1306, %v1418, %v1425
      %v1427 = vld [vmem:[%s5] sm:$0xf]
      %v1428 = vld [vmem:[%s5 + $0x4] sm:$0xf]
      %v1429 = vld [vmem:[%s5 + $0x8] sm:$0xf]
      %v1430 = vld [vmem:[%s5 + $0xc] sm:$0xf]
      %v1431 = vld [vmem:[%s5 + $0x10] sm:$0xf]
      %v1432 = vld [vmem:[%s5 + $0x14] sm:$0xf]
      %v1433 = vld [vmem:[%s5 + $0x18] sm:$0xf]
      %v1434 = vld [vmem:[%s5 + $0x1c] sm:$0xf]
      %v1435 = vld [vmem:[%s5 + $0x20] sm:$0xf]
      %v1436 = vld [vmem:[%s5 + $0x24] sm:$0xf]
      %v1437 = vld [vmem:[%s5 + $0x28] sm:$0xf]
      %v1438 = vld [vmem:[%s5 + $0x2c] sm:$0xf]
      %v1439 = vpack.c.b16 %v1106, %v1105
      %v1440 = vpack.c.b16 %v1109, %v1108
      %v1441 = vpack.c.b16 %v1112, %v1111
      %v1442 = vpack.c.b16 %v1115, %v1114
      %v1443 = vpack.c.b16 %v1118, %v1117
      %v1444 = vpack.c.b16 %v1121, %v1120
      %v1445 = vpack.c.b16 %v1124, %v1123
      %v1446 = vpack.c.b16 %v1127, %v1126
      %v1447 = vpack.c.b16 %v1149, %v1148
      %1448 = vrot.lane.b32.xlu0 %v1440, 32
      %v1449 = vpop.permute.xlu0 %1448
      %1450 = vrot.lane.b32.xlu0 %v1441, 32
      %v1451 = vpop.permute.xlu0 %1450
      %1452 = vrot.lane.b32.xlu0 %v1442, 32
      %v1453 = vpop.permute.xlu0 %1452
      %1454 = vrot.lane.b32.xlu0 %v1443, 32
      %v1455 = vpop.permute.xlu0 %1454
      %1456 = vrot.lane.b32.xlu0 %v1444, 32
      %v1457 = vpop.permute.xlu0 %1456
      %1458 = vrot.lane.b32.xlu0 %v1445, 32
      %v1459 = vpop.permute.xlu0 %1458
      %1460 = vrot.lane.b32.xlu0 %v1446, 32
      %v1461 = vpop.permute.xlu0 %1460
      %1462 = vrot.lane.b32.xlu0 %v1447, 32
      %v1463 = vpop.permute.xlu0 %1462
      %v1464 = vpack.c.b16 %v1189, %v1188
      %1465 = vrot.lane.b32.xlu0 %v1441, 64
      %v1466 = vpop.permute.xlu0 %1465
      %1467 = vrot.lane.b32.xlu0 %v1442, 64
      %v1468 = vpop.permute.xlu0 %1467
      %1469 = vrot.lane.b32.xlu0 %v1443, 64
      %v1470 = vpop.permute.xlu0 %1469
      %1471 = vrot.lane.b32.xlu0 %v1444, 64
      %v1472 = vpop.permute.xlu0 %1471
      %1473 = vrot.lane.b32.xlu0 %v1445, 64
      %v1474 = vpop.permute.xlu0 %1473
      %1475 = vrot.lane.b32.xlu0 %v1446, 64
      %v1476 = vpop.permute.xlu0 %1475
      %1477 = vrot.lane.b32.xlu0 %v1447, 64
      %v1478 = vpop.permute.xlu0 %1477
      %1479 = vrot.lane.b32.xlu0 %v1464, 64
      %v1480 = vpop.permute.xlu0 %1479
      %v1483 = vsel %vm1224, %v1439, %v1449
      %v1486 = vsel %vm1224, %v1440, %v1451
      %v1489 = vsel %vm1224, %v1441, %v1453
      %v1492 = vsel %vm1224, %v1442, %v1455
      %v1495 = vsel %vm1224, %v1443, %v1457
      %v1498 = vsel %vm1224, %v1444, %v1459
      %v1501 = vsel %vm1224, %v1445, %v1461
      %v1504 = vsel %vm1224, %v1446, %v1463
      %v1506 = vsel %vm1273, %v1483, %v1466
      %v1508 = vsel %vm1273, %v1486, %v1468
      %v1510 = vsel %vm1273, %v1489, %v1470
      %v1512 = vsel %vm1273, %v1492, %v1472
      %v1514 = vsel %vm1273, %v1495, %v1474
      %v1516 = vsel %vm1273, %v1498, %v1476
      %v1518 = vsel %vm1273, %v1501, %v1478
      %v1520 = vsel %vm1273, %v1504, %v1480
      %s1521 = scalar_lea.vmem %s5, 48
      %v1522 = vld [vmem:[%s1521] sm:$0xf]
      %v1523 = vld [vmem:[%s1521 + $0x4] sm:$0xf]
      %v1524 = vld [vmem:[%s1521 + $0x8] sm:$0xf]
      %v1525 = vld [vmem:[%s1521 + $0xc] sm:$0xf]
      %v1526 = vld [vmem:[%s1521 + $0x10] sm:$0xf]
      %v1527 = vld [vmem:[%s1521 + $0x14] sm:$0xf]
      %v1528 = vld [vmem:[%s1521 + $0x18] sm:$0xf]
      %v1529 = vld [vmem:[%s1521 + $0x1c] sm:$0xf]
      %v1530 = vld [vmem:[%s1521 + $0x20] sm:$0xf]
      %v1531 = vld [vmem:[%s1521 + $0x24] sm:$0xf]
      %v1532 = vld [vmem:[%s1521 + $0x28] sm:$0xf]
      %v1533 = vld [vmem:[%s1521 + $0x2c] sm:$0xf]
      %v1546 = vunpack.c.l.b16 %v1522
      %v1547 = vunpack.c.l.b16 %v1523
      %v1548 = vunpack.c.l.b16 %v1524
      %v1549 = vunpack.c.l.b16 %v1525
      %v1550 = vunpack.c.l.b16 %v1526
      %v1551 = vunpack.c.l.b16 %v1527
      %v1552 = vunpack.c.l.b16 %v1528
      %v1553 = vunpack.c.l.b16 %v1529
      %v1554 = vunpack.c.l.b16 %v1530
      %v1555 = vunpack.c.l.b16 %v1531
      %v1556 = vunpack.c.l.b16 %v1532
      %v1557 = vunpack.c.l.b16 %v1533
      %v1558 = vpack.c.b16 %v1547, %v1546
      %v1559 = vpack.c.b16 %v1549, %v1548
      %v1560 = vpack.c.b16 %v1551, %v1550
      %v1561 = vpack.c.b16 %v1553, %v1552
      %v1562 = vpack.c.b16 %v1555, %v1554
      %v1563 = vpack.c.b16 %v1557, %v1556
      %vm1570 = vcmask 785408
      %v1571 = vsel %vm1570, %v1506, 0
      %v1573 = vsel %vm1570, %v1508, 0
      %v1575 = vsel %vm1570, %v1510, 0
      %v1577 = vsel %vm1570, %v1512, 0
      %v1579 = vsel %vm1570, %v1514, 0
      %v1581 = vsel %vm1570, %v1516, 0
      %v1583 = vsel %vm1570, %v1518, 0
      %v1585 = vsel %vm1570, %v1520, 0
      %1587 = vmatprep.subr.bf16.mxu0 0
      %1588 = vmatpush1.bf16.msra.mxu0 0
      %1589 = vmatprep.subr.bf16.mxu0 0
      %1590 = vmatpush1.bf16.msra.mxu0 0
      %1591 = vmatprep.subr.bf16.mxu0 0
      %1592 = vmatpush1.bf16.msra.mxu0 %v1563
      %1593 = vmatprep.subr.bf16.mxu0 0
      %1594 = vmatpush1.bf16.msra.mxu0 %v1562
      %1595 = vmatprep.subr.bf16.mxu0 0
      %1596 = vmatpush1.bf16.msra.mxu0 %v1561
      %1597 = vmatprep.subr.bf16.mxu0 0
      %1598 = vmatpush1.bf16.msra.mxu0 %v1560
      %1599 = vmatprep.subr.bf16.mxu0 0
      %1600 = vmatpush1.bf16.msra.mxu0 %v1559
      %1601 = vmatprep.subr.bf16.mxu0 0
      %1602 = vmatpush1.bf16.msra.mxu0 %v1558
      %1603 = vmatprep.subr.bf16.mxu0 0
      %1604 = vmatpush2.bf16.msra.mxu0 0
      %1605 = vmatprep.subr.bf16.mxu0 0
      %1606 = vmatpush2.bf16.msra.mxu0 0
      %1607 = vmatprep.subr.bf16.mxu0 0
      %1608 = vmatpush2.bf16.msra.mxu0 0
      %1609 = vmatprep.subr.bf16.mxu0 0
      %1610 = vmatpush2.bf16.msra.mxu0 0
      %1611 = vmatprep.subr.bf16.mxu0 0
      %1612 = vmatpush2.bf16.msra.mxu0 0
      %1613 = vmatprep.subr.bf16.mxu0 0
      %1614 = vmatpush2.bf16.msra.mxu0 0
      %1615 = vmatprep.subr.bf16.mxu0 0
      %1616 = vmatpush2.bf16.msra.mxu0 0
      %1617 = vmatprep.subr.bf16.mxu0 0
      %1618 = vmatpush2.bf16.msra.mxu0 0
      %1619 = vmatprep.mubr.bf16.mxu0 0
      %1620 = vmatmul.mubr.bf16.gmra.mxu0 %v1571
      %v1621 = vpop.f32.mrf.mxu0
      %v1622 = vadd.f32 0.0, %v1621
      %v1623 = vpop.f32.mrf.mxu0
      %v1624 = vpop.f32.mrf.mxu0
      %v1625 = vadd.f32 0.0, %v1624
      %v1626 = vpop.f32.mrf.mxu0
      %1627 = vmatprep.mubr.bf16.mxu0 0
      %1628 = vmatmul.mubr.bf16.gmra.mxu0 %v1573
      %v1629 = vpop.f32.mrf.mxu0
      %v1630 = vadd.f32 0.0, %v1629
      %v1631 = vpop.f32.mrf.mxu0
      %v1632 = vpop.f32.mrf.mxu0
      %v1633 = vadd.f32 0.0, %v1632
      %v1634 = vpop.f32.mrf.mxu0
      %1635 = vmatprep.mubr.bf16.mxu0 0
      %1636 = vmatmul.mubr.bf16.gmra.mxu0 %v1575
      %v1637 = vpop.f32.mrf.mxu0
      %v1638 = vadd.f32 0.0, %v1637
      %v1639 = vpop.f32.mrf.mxu0
      %v1640 = vpop.f32.mrf.mxu0
      %v1641 = vadd.f32 0.0, %v1640
      %v1642 = vpop.f32.mrf.mxu0
      %1643 = vmatprep.mubr.bf16.mxu0 0
      %1644 = vmatmul.mubr.bf16.gmra.mxu0 %v1577
      %v1645 = vpop.f32.mrf.mxu0
      %v1646 = vadd.f32 0.0, %v1645
      %v1647 = vpop.f32.mrf.mxu0
      %v1648 = vpop.f32.mrf.mxu0
      %v1649 = vadd.f32 0.0, %v1648
      %v1650 = vpop.f32.mrf.mxu0
      %1651 = vmatprep.mubr.bf16.mxu0 0
      %1652 = vmatmul.mubr.bf16.gmra.mxu0 %v1579
      %v1653 = vpop.f32.mrf.mxu0
      %v1654 = vadd.f32 0.0, %v1653
      %v1655 = vpop.f32.mrf.mxu0
      %v1656 = vpop.f32.mrf.mxu0
      %v1657 = vadd.f32 0.0, %v1656
      %v1658 = vpop.f32.mrf.mxu0
      %1659 = vmatprep.mubr.bf16.mxu0 0
      %1660 = vmatmul.mubr.bf16.gmra.mxu0 %v1581
      %v1661 = vpop.f32.mrf.mxu0
      %v1662 = vadd.f32 0.0, %v1661
      %v1663 = vpop.f32.mrf.mxu0
      %v1664 = vpop.f32.mrf.mxu0
      %v1665 = vadd.f32 0.0, %v1664
      %v1666 = vpop.f32.mrf.mxu0
      %1667 = vmatprep.mubr.bf16.mxu0 0
      %1668 = vmatmul.mubr.bf16.gmra.mxu0 %v1583
      %v1669 = vpop.f32.mrf.mxu0
      %v1670 = vadd.f32 0.0, %v1669
      %v1671 = vpop.f32.mrf.mxu0
      %v1672 = vpop.f32.mrf.mxu0
      %v1673 = vadd.f32 0.0, %v1672
      %v1674 = vpop.f32.mrf.mxu0
      %1675 = vmatprep.mubr.bf16.mxu0 0
      %1676 = vmatmul.mubr.bf16.gmra.mxu0 %v1585
      %v1677 = vpop.f32.mrf.mxu0
      %v1678 = vadd.f32 0.0, %v1677
      %v1679 = vpop.f32.mrf.mxu0
      %v1680 = vpop.f32.mrf.mxu0
      %v1681 = vadd.f32 0.0, %v1680
      %v1682 = vpop.f32.mrf.mxu0
      %1683 = vdwg.mxu0
      %v1696 = vunpack.c.l.b16 %v1427
      %v1697 = vunpack.c.l.b16 %v1428
      %v1698 = vunpack.c.l.b16 %v1429
      %v1699 = vunpack.c.l.b16 %v1430
      %v1700 = vunpack.c.l.b16 %v1431
      %v1701 = vunpack.c.l.b16 %v1432
      %v1702 = vunpack.c.l.b16 %v1433
      %v1703 = vunpack.c.l.b16 %v1434
      %v1704 = vunpack.c.l.b16 %v1435
      %v1705 = vunpack.c.l.b16 %v1436
      %v1706 = vunpack.c.l.b16 %v1437
      %v1707 = vunpack.c.l.b16 %v1438
      %v1708 = vpack.c.b16 %v1697, %v1696
      %v1709 = vpack.c.b16 %v1699, %v1698
      %v1710 = vpack.c.b16 %v1701, %v1700
      %v1711 = vpack.c.b16 %v1703, %v1702
      %v1712 = vpack.c.b16 %v1705, %v1704
      %v1713 = vpack.c.b16 %v1707, %v1706
      %v1721 = vsel %vm1570, %v1321, 0
      %v1724 = vsel %vm1570, %v1336, 0
      %v1727 = vsel %vm1570, %v1351, 0
      %v1730 = vsel %vm1570, %v1366, 0
      %v1733 = vsel %vm1570, %v1381, 0
      %v1736 = vsel %vm1570, %v1396, 0
      %v1739 = vsel %vm1570, %v1411, 0
      %v1742 = vsel %vm1570, %v1426, 0
      %1744 = vmatprep.subr.bf16.mxu0 0
      %1745 = vmatpush1.bf16.msra.mxu0 0
      %1746 = vmatprep.subr.bf16.mxu0 0
      %1747 = vmatpush1.bf16.msra.mxu0 0
      %1748 = vmatprep.subr.bf16.mxu0 0
      %1749 = vmatpush1.bf16.msra.mxu0 %v1713
      %1750 = vmatprep.subr.bf16.mxu0 0
      %1751 = vmatpush1.bf16.msra.mxu0 %v1712
      %1752 = vmatprep.subr.bf16.mxu0 0
      %1753 = vmatpush1.bf16.msra.mxu0 %v1711
      %1754 = vmatprep.subr.bf16.mxu0 0
      %1755 = vmatpush1.bf16.msra.mxu0 %v1710
      %1756 = vmatprep.subr.bf16.mxu0 0
      %1757 = vmatpush1.bf16.msra.mxu0 %v1709
      %1758 = vmatprep.subr.bf16.mxu0 0
      %1759 = vmatpush1.bf16.msra.mxu0 %v1708
      %1760 = vmatprep.subr.bf16.mxu0 0
      %1761 = vmatpush2.bf16.msra.mxu0 0
      %1762 = vmatprep.subr.bf16.mxu0 0
      %1763 = vmatpush2.bf16.msra.mxu0 0
      %1764 = vmatprep.subr.bf16.mxu0 0
      %1765 = vmatpush2.bf16.msra.mxu0 0
      %1766 = vmatprep.subr.bf16.mxu0 0
      %1767 = vmatpush2.bf16.msra.mxu0 0
      %1768 = vmatprep.subr.bf16.mxu0 0
      %1769 = vmatpush2.bf16.msra.mxu0 0
      %1770 = vmatprep.subr.bf16.mxu0 0
      %1771 = vmatpush2.bf16.msra.mxu0 0
      %1772 = vmatprep.subr.bf16.mxu0 0
      %1773 = vmatpush2.bf16.msra.mxu0 0
      %1774 = vmatprep.subr.bf16.mxu0 0
      %1775 = vmatpush2.bf16.msra.mxu0 0
      %1776 = vmatprep.mubr.bf16.mxu0 0
      %1777 = vmatmul.mubr.bf16.gmra.mxu0 %v1721
      %v1778 = vpop.f32.mrf.mxu0
      %v1779 = vadd.f32 %v1622, %v1778
      %v1780 = vpop.f32.mrf.mxu0
      %v1781 = vpop.f32.mrf.mxu0
      %v1782 = vadd.f32 %v1625, %v1781
      %v1783 = vpop.f32.mrf.mxu0
      %1784 = vmatprep.mubr.bf16.mxu0 0
      %1785 = vmatmul.mubr.bf16.gmra.mxu0 %v1724
      %v1786 = vpop.f32.mrf.mxu0
      %v1787 = vadd.f32 %v1630, %v1786
      %v1788 = vpop.f32.mrf.mxu0
      %v1789 = vpop.f32.mrf.mxu0
      %v1790 = vadd.f32 %v1633, %v1789
      %v1791 = vpop.f32.mrf.mxu0
      %1792 = vmatprep.mubr.bf16.mxu0 0
      %1793 = vmatmul.mubr.bf16.gmra.mxu0 %v1727
      %v1794 = vpop.f32.mrf.mxu0
      %v1795 = vadd.f32 %v1638, %v1794
      %v1796 = vpop.f32.mrf.mxu0
      %v1797 = vpop.f32.mrf.mxu0
      %v1798 = vadd.f32 %v1641, %v1797
      %v1799 = vpop.f32.mrf.mxu0
      %1800 = vmatprep.mubr.bf16.mxu0 0
      %1801 = vmatmul.mubr.bf16.gmra.mxu0 %v1730
      %v1802 = vpop.f32.mrf.mxu0
      %v1803 = vadd.f32 %v1646, %v1802
      %v1804 = vpop.f32.mrf.mxu0
      %v1805 = vpop.f32.mrf.mxu0
      %v1806 = vadd.f32 %v1649, %v1805
      %v1807 = vpop.f32.mrf.mxu0
      %1808 = vmatprep.mubr.bf16.mxu0 0
      %1809 = vmatmul.mubr.bf16.gmra.mxu0 %v1733
      %v1810 = vpop.f32.mrf.mxu0
      %v1811 = vadd.f32 %v1654, %v1810
      %v1812 = vpop.f32.mrf.mxu0
      %v1813 = vpop.f32.mrf.mxu0
      %v1814 = vadd.f32 %v1657, %v1813
      %v1815 = vpop.f32.mrf.mxu0
      %1816 = vmatprep.mubr.bf16.mxu0 0
      %1817 = vmatmul.mubr.bf16.gmra.mxu0 %v1736
      %v1818 = vpop.f32.mrf.mxu0
      %v1819 = vadd.f32 %v1662, %v1818
      %v1820 = vpop.f32.mrf.mxu0
      %v1821 = vpop.f32.mrf.mxu0
      %v1822 = vadd.f32 %v1665, %v1821
      %v1823 = vpop.f32.mrf.mxu0
      %1824 = vmatprep.mubr.bf16.mxu0 0
      %1825 = vmatmul.mubr.bf16.gmra.mxu0 %v1739
      %v1826 = vpop.f32.mrf.mxu0
      %v1827 = vadd.f32 %v1670, %v1826
      %v1828 = vpop.f32.mrf.mxu0
      %v1829 = vpop.f32.mrf.mxu0
      %v1830 = vadd.f32 %v1673, %v1829
      %v1831 = vpop.f32.mrf.mxu0
      %1832 = vmatprep.mubr.bf16.mxu0 0
      %1833 = vmatmul.mubr.bf16.gmra.mxu0 %v1742
      %v1834 = vpop.f32.mrf.mxu0
      %v1835 = vadd.f32 %v1678, %v1834
      %v1836 = vpop.f32.mrf.mxu0
      %v1837 = vpop.f32.mrf.mxu0
      %v1838 = vadd.f32 %v1681, %v1837
      %v1839 = vpop.f32.mrf.mxu0
      %1840 = vdwg.mxu0
      %v1841 = vld [vmem:[%s1049 + $0x4] sm:$0xf]
      %v1842 = vld [vmem:[%s1049 + $0x8] sm:$0xf]
      %v1843 = vld [vmem:[%s1049 + $0xc] sm:$0x1]
      %v1844 = vld [vmem:[%s1049 + $0x14] sm:$0xf]
      %v1845 = vld [vmem:[%s1049 + $0x18] sm:$0xf]
      %v1846 = vld [vmem:[%s1049 + $0x1c] sm:$0x1]
      %v1847 = vld [vmem:[%s1049 + $0x24] sm:$0xf]
      %v1848 = vld [vmem:[%s1049 + $0x28] sm:$0xf]
      %v1849 = vld [vmem:[%s1049 + $0x2c] sm:$0x1]
      %v1850 = vld [vmem:[%s1049 + $0x34] sm:$0xf]
      %v1851 = vld [vmem:[%s1049 + $0x38] sm:$0xf]
      %v1852 = vld [vmem:[%s1049 + $0x3c] sm:$0x1]
      %v1853 = vld [vmem:[%s1049 + $0x44] sm:$0xf]
      %v1854 = vld [vmem:[%s1049 + $0x48] sm:$0xf]
      %v1855 = vld [vmem:[%s1049 + $0x4c] sm:$0x1]
      %v1856 = vld [vmem:[%s1049 + $0x54] sm:$0xf]
      %v1857 = vld [vmem:[%s1049 + $0x58] sm:$0xf]
      %v1858 = vld [vmem:[%s1049 + $0x5c] sm:$0x1]
      %v1859 = vld [vmem:[%s1049 + $0x64] sm:$0xf]
      %v1860 = vld [vmem:[%s1049 + $0x68] sm:$0xf]
      %v1861 = vld [vmem:[%s1049 + $0x6c] sm:$0x1]
      %v1862 = vld [vmem:[%s1049 + $0x74] sm:$0xf]
      %v1863 = vld [vmem:[%s1049 + $0x78] sm:$0xf]
      %v1864 = vld [vmem:[%s1049 + $0x7c] sm:$0x1]
      %v1865 = vld [vmem:[%s1049 + $0x84] sm:$0xf]
      %v1866 = vld [vmem:[%s1049 + $0x88] sm:$0xf]
      %v1867 = vld [vmem:[%s1049 + $0x8c] sm:$0x1]
      %v1868 = vld [vmem:[%s1049 + $0x94] sm:$0xf]
      %v1869 = vld [vmem:[%s1049 + $0x98] sm:$0xf]
      %v1870 = vld [vmem:[%s1049 + $0x9c] sm:$0x1]
      %v1895 = vunpack.c.l.b16 %v1841
      %v1896 = vunpack.c.l.b16 %v1842
      %v1897 = vunpack.c.l.b16 %v1843
      %v1898 = vunpack.c.l.b16 %v1844
      %v1899 = vunpack.c.l.b16 %v1845
      %v1900 = vunpack.c.l.b16 %v1846
      %v1901 = vunpack.c.l.b16 %v1847
      %v1902 = vunpack.c.l.b16 %v1848
      %v1903 = vunpack.c.l.b16 %v1849
      %v1904 = vunpack.c.l.b16 %v1850
      %v1905 = vunpack.c.l.b16 %v1851
      %v1906 = vunpack.c.l.b16 %v1852
      %v1907 = vunpack.c.l.b16 %v1853
      %v1908 = vunpack.c.l.b16 %v1854
      %v1909 = vunpack.c.l.b16 %v1855
      %v1910 = vunpack.c.l.b16 %v1856
      %v1911 = vunpack.c.l.b16 %v1857
      %v1912 = vunpack.c.l.b16 %v1858
      %v1913 = vunpack.c.l.b16 %v1859
      %v1914 = vunpack.c.l.b16 %v1860
      %v1915 = vunpack.c.l.b16 %v1861
      %v1916 = vunpack.c.l.b16 %v1862
      %v1917 = vunpack.c.l.b16 %v1863
      %v1918 = vunpack.c.l.b16 %v1864
      %v1919 = vpack.c.b16 %v1896, %v1895
      %v1920 = vpack.c.b16 %v1897, %v1897
      %v1921 = vpack.c.b16 %v1899, %v1898
      %v1922 = vpack.c.b16 %v1900, %v1900
      %v1923 = vpack.c.b16 %v1902, %v1901
      %v1924 = vpack.c.b16 %v1903, %v1903
      %v1925 = vpack.c.b16 %v1905, %v1904
      %v1926 = vpack.c.b16 %v1906, %v1906
      %v1927 = vpack.c.b16 %v1908, %v1907
      %v1928 = vpack.c.b16 %v1909, %v1909
      %v1929 = vpack.c.b16 %v1911, %v1910
      %v1930 = vpack.c.b16 %v1912, %v1912
      %v1931 = vpack.c.b16 %v1914, %v1913
      %v1932 = vpack.c.b16 %v1915, %v1915
      %v1933 = vpack.c.b16 %v1917, %v1916
      %v1934 = vpack.c.b16 %v1918, %v1918
      %v1938 = vunpack.c.l.b16 %v1865
      %v1939 = vunpack.c.l.b16 %v1866
      %v1940 = vunpack.c.l.b16 %v1867
      %v1941 = vpack.c.b16 %v1939, %v1938
      %v1942 = vpack.c.b16 %v1940, %v1940
      %1943 = vrot.lane.b32.xlu0 %v1921, 32
      %v1944 = vpop.permute.xlu0 %1943
      %1945 = vrot.lane.b32.xlu0 %v1922, 32
      %v1946 = vpop.permute.xlu0 %1945
      %1947 = vrot.lane.b32.xlu0 %v1923, 32
      %v1948 = vpop.permute.xlu0 %1947
      %1949 = vrot.lane.b32.xlu0 %v1924, 32
      %v1950 = vpop.permute.xlu0 %1949
      %1951 = vrot.lane.b32.xlu0 %v1925, 32
      %v1952 = vpop.permute.xlu0 %1951
      %1953 = vrot.lane.b32.xlu0 %v1926, 32
      %v1954 = vpop.permute.xlu0 %1953
      %1955 = vrot.lane.b32.xlu0 %v1927, 32
      %v1956 = vpop.permute.xlu0 %1955
      %1957 = vrot.lane.b32.xlu0 %v1928, 32
      %v1958 = vpop.permute.xlu0 %1957
      %1959 = vrot.lane.b32.xlu0 %v1929, 32
      %v1960 = vpop.permute.xlu0 %1959
      %1961 = vrot.lane.b32.xlu0 %v1930, 32
      %v1962 = vpop.permute.xlu0 %1961
      %1963 = vrot.lane.b32.xlu0 %v1931, 32
      %v1964 = vpop.permute.xlu0 %1963
      %1965 = vrot.lane.b32.xlu0 %v1932, 32
      %v1966 = vpop.permute.xlu0 %1965
      %1967 = vrot.lane.b32.xlu0 %v1933, 32
      %v1968 = vpop.permute.xlu0 %1967
      %1969 = vrot.lane.b32.xlu0 %v1934, 32
      %v1970 = vpop.permute.xlu0 %1969
      %1971 = vrot.lane.b32.xlu0 %v1941, 32
      %v1972 = vpop.permute.xlu0 %1971
      %1973 = vrot.lane.b32.xlu0 %v1942, 32
      %v1974 = vpop.permute.xlu0 %1973
      %v1978 = vunpack.c.l.b16 %v1868
      %v1979 = vunpack.c.l.b16 %v1869
      %v1980 = vunpack.c.l.b16 %v1870
      %v1981 = vpack.c.b16 %v1979, %v1978
      %v1982 = vpack.c.b16 %v1980, %v1980
      %1983 = vrot.lane.b32.xlu0 %v1923, 64
      %v1984 = vpop.permute.xlu0 %1983
      %1985 = vrot.lane.b32.xlu0 %v1924, 64
      %v1986 = vpop.permute.xlu0 %1985
      %1987 = vrot.lane.b32.xlu0 %v1925, 64
      %v1988 = vpop.permute.xlu0 %1987
      %1989 = vrot.lane.b32.xlu0 %v1926, 64
      %v1990 = vpop.permute.xlu0 %1989
      %1991 = vrot.lane.b32.xlu0 %v1927, 64
      %v1992 = vpop.permute.xlu0 %1991
      %1993 = vrot.lane.b32.xlu0 %v1928, 64
      %v1994 = vpop.permute.xlu0 %1993
      %1995 = vrot.lane.b32.xlu0 %v1929, 64
      %v1996 = vpop.permute.xlu0 %1995
      %1997 = vrot.lane.b32.xlu0 %v1930, 64
      %v1998 = vpop.permute.xlu0 %1997
      %1999 = vrot.lane.b32.xlu0 %v1931, 64
      %v2000 = vpop.permute.xlu0 %1999
      %2001 = vrot.lane.b32.xlu0 %v1932, 64
      %v2002 = vpop.permute.xlu0 %2001
      %2003 = vrot.lane.b32.xlu0 %v1933, 64
      %v2004 = vpop.permute.xlu0 %2003
      %2005 = vrot.lane.b32.xlu0 %v1934, 64
      %v2006 = vpop.permute.xlu0 %2005
      %2007 = vrot.lane.b32.xlu0 %v1941, 64
      %v2008 = vpop.permute.xlu0 %2007
      %2009 = vrot.lane.b32.xlu0 %v1942, 64
      %v2010 = vpop.permute.xlu0 %2009
      %2011 = vrot.lane.b32.xlu0 %v1981, 64
      %v2012 = vpop.permute.xlu0 %2011
      %2013 = vrot.lane.b32.xlu0 %v1982, 64
      %v2014 = vpop.permute.xlu0 %2013
      %v2017 = vsel %vm1224, %v1919, %v1944
      %v2020 = vsel %vm1224, %v1920, %v1946
      %v2023 = vsel %vm1224, %v1921, %v1948
      %v2026 = vsel %vm1224, %v1922, %v1950
      %v2029 = vsel %vm1224, %v1923, %v1952
      %v2032 = vsel %vm1224, %v1924, %v1954
      %v2035 = vsel %vm1224, %v1925, %v1956
      %v2038 = vsel %vm1224, %v1926, %v1958
      %v2041 = vsel %vm1224, %v1927, %v1960
      %v2044 = vsel %vm1224, %v1928, %v1962
      %v2047 = vsel %vm1224, %v1929, %v1964
      %v2050 = vsel %vm1224, %v1930, %v1966
      %v2053 = vsel %vm1224, %v1931, %v1968
      %v2056 = vsel %vm1224, %v1932, %v1970
      %v2059 = vsel %vm1224, %v1933, %v1972
      %v2062 = vsel %vm1224, %v1934, %v1974
      %v2064 = vsel %vm1273, %v2017, %v1984
      %v2066 = vsel %vm1273, %v2020, %v1986
      %v2068 = vsel %vm1273, %v2023, %v1988
      %v2070 = vsel %vm1273, %v2026, %v1990
      %v2072 = vsel %vm1273, %v2029, %v1992
      %v2074 = vsel %vm1273, %v2032, %v1994
      %v2076 = vsel %vm1273, %v2035, %v1996
      %v2078 = vsel %vm1273, %v2038, %v1998
      %v2080 = vsel %vm1273, %v2041, %v2000
      %v2082 = vsel %vm1273, %v2044, %v2002
      %v2084 = vsel %vm1273, %v2047, %v2004
      %v2086 = vsel %vm1273, %v2050, %v2006
      %v2088 = vsel %vm1273, %v2053, %v2008
      %v2090 = vsel %vm1273, %v2056, %v2010
      %v2092 = vsel %vm1273, %v2059, %v2012
      %v2094 = vsel %vm1273, %v2062, %v2014
      %vm2095 = vsmask.f32 7424
      %v2096 = vshrl.u32 %v2064, 16
      %v2098 = vshll.u32 %v2064, 16
      %v2100 = vrot.slane %v2098, 1
      %v2101 = vor.u32 %v2096, %v2100
      %v2102 = vshll.u32 %v2066, 16
      %v2104 = vrot.slane %v2102, 1
      %v2105 = vsel %vm2095, %v2101, %v2104
      %v2106 = vshrl.u32 %v2068, 16
      %v2108 = vshll.u32 %v2068, 16
      %v2110 = vrot.slane %v2108, 1
      %v2111 = vor.u32 %v2106, %v2110
      %v2112 = vshll.u32 %v2070, 16
      %v2114 = vrot.slane %v2112, 1
      %v2115 = vsel %vm2095, %v2111, %v2114
      %v2116 = vshrl.u32 %v2072, 16
      %v2118 = vshll.u32 %v2072, 16
      %v2120 = vrot.slane %v2118, 1
      %v2121 = vor.u32 %v2116, %v2120
      %v2122 = vshll.u32 %v2074, 16
      %v2124 = vrot.slane %v2122, 1
      %v2125 = vsel %vm2095, %v2121, %v2124
      %v2126 = vshrl.u32 %v2076, 16
      %v2128 = vshll.u32 %v2076, 16
      %v2130 = vrot.slane %v2128, 1
      %v2131 = vor.u32 %v2126, %v2130
      %v2132 = vshll.u32 %v2078, 16
      %v2134 = vrot.slane %v2132, 1
      %v2135 = vsel %vm2095, %v2131, %v2134
      %v2136 = vshrl.u32 %v2080, 16
      %v2138 = vshll.u32 %v2080, 16
      %v2140 = vrot.slane %v2138, 1
      %v2141 = vor.u32 %v2136, %v2140
      %v2142 = vshll.u32 %v2082, 16
      %v2144 = vrot.slane %v2142, 1
      %v2145 = vsel %vm2095, %v2141, %v2144
      %v2146 = vshrl.u32 %v2084, 16
      %v2148 = vshll.u32 %v2084, 16
      %v2150 = vrot.slane %v2148, 1
      %v2151 = vor.u32 %v2146, %v2150
      %v2152 = vshll.u32 %v2086, 16
      %v2154 = vrot.slane %v2152, 1
      %v2155 = vsel %vm2095, %v2151, %v2154
      %v2156 = vshrl.u32 %v2088, 16
      %v2158 = vshll.u32 %v2088, 16
      %v2160 = vrot.slane %v2158, 1
      %v2161 = vor.u32 %v2156, %v2160
      %v2162 = vshll.u32 %v2090, 16
      %v2164 = vrot.slane %v2162, 1
      %v2165 = vsel %vm2095, %v2161, %v2164
      %v2166 = vshrl.u32 %v2092, 16
      %v2168 = vshll.u32 %v2092, 16
      %v2170 = vrot.slane %v2168, 1
      %v2171 = vor.u32 %v2166, %v2170
      %v2172 = vshll.u32 %v2094, 16
      %v2174 = vrot.slane %v2172, 1
      %v2175 = vsel %vm2095, %v2171, %v2174
      %s2176 = scalar_lea.vmem %s5, 96
      %v2177 = vld [vmem:[%s2176] sm:$0xf]
      %v2178 = vld [vmem:[%s2176 + $0x4] sm:$0xf]
      %v2179 = vld [vmem:[%s2176 + $0x8] sm:$0xf]
      %v2180 = vld [vmem:[%s2176 + $0xc] sm:$0xf]
      %v2181 = vld [vmem:[%s2176 + $0x10] sm:$0xf]
      %v2182 = vld [vmem:[%s2176 + $0x14] sm:$0xf]
      %v2183 = vld [vmem:[%s2176 + $0x18] sm:$0xf]
      %v2184 = vld [vmem:[%s2176 + $0x1c] sm:$0xf]
      %v2185 = vld [vmem:[%s2176 + $0x20] sm:$0xf]
      %v2186 = vld [vmem:[%s2176 + $0x24] sm:$0xf]
      %v2187 = vld [vmem:[%s2176 + $0x28] sm:$0xf]
      %v2188 = vld [vmem:[%s2176 + $0x2c] sm:$0xf]
      %v2201 = vunpack.c.l.b16 %v2177
      %v2202 = vunpack.c.l.b16 %v2178
      %v2203 = vunpack.c.l.b16 %v2179
      %v2204 = vunpack.c.l.b16 %v2180
      %v2205 = vunpack.c.l.b16 %v2181
      %v2206 = vunpack.c.l.b16 %v2182
      %v2207 = vunpack.c.l.b16 %v2183
      %v2208 = vunpack.c.l.b16 %v2184
      %v2209 = vunpack.c.l.b16 %v2185
      %v2210 = vunpack.c.l.b16 %v2186
      %v2211 = vunpack.c.l.b16 %v2187
      %v2212 = vunpack.c.l.b16 %v2188
      %v2213 = vpack.c.b16 %v2202, %v2201
      %v2214 = vpack.c.b16 %v2204, %v2203
      %v2215 = vpack.c.b16 %v2206, %v2205
      %v2216 = vpack.c.b16 %v2208, %v2207
      %v2217 = vpack.c.b16 %v2210, %v2209
      %v2218 = vpack.c.b16 %v2212, %v2211
      %v2226 = vsel %vm1570, %v2105, 0
      %v2229 = vsel %vm1570, %v2115, 0
      %v2232 = vsel %vm1570, %v2125, 0
      %v2235 = vsel %vm1570, %v2135, 0
      %v2238 = vsel %vm1570, %v2145, 0
      %v2241 = vsel %vm1570, %v2155, 0
      %v2244 = vsel %vm1570, %v2165, 0
      %v2247 = vsel %vm1570, %v2175, 0
      %2249 = vmatprep.subr.bf16.mxu0 0
      %2250 = vmatpush1.bf16.msra.mxu0 0
      %2251 = vmatprep.subr.bf16.mxu0 0
      %2252 = vmatpush1.bf16.msra.mxu0 0
      %2253 = vmatprep.subr.bf16.mxu0 0
      %2254 = vmatpush1.bf16.msra.mxu0 %v2218
      %2255 = vmatprep.subr.bf16.mxu0 0
      %2256 = vmatpush1.bf16.msra.mxu0 %v2217
      %2257 = vmatprep.subr.bf16.mxu0 0
      %2258 = vmatpush1.bf16.msra.mxu0 %v2216
      %2259 = vmatprep.subr.bf16.mxu0 0
      %2260 = vmatpush1.bf16.msra.mxu0 %v2215
      %2261 = vmatprep.subr.bf16.mxu0 0
      %2262 = vmatpush1.bf16.msra.mxu0 %v2214
      %2263 = vmatprep.subr.bf16.mxu0 0
      %2264 = vmatpush1.bf16.msra.mxu0 %v2213
      %2265 = vmatprep.subr.bf16.mxu0 0
      %2266 = vmatpush2.bf16.msra.mxu0 0
      %2267 = vmatprep.subr.bf16.mxu0 0
      %2268 = vmatpush2.bf16.msra.mxu0 0
      %2269 = vmatprep.subr.bf16.mxu0 0
      %2270 = vmatpush2.bf16.msra.mxu0 0
      %2271 = vmatprep.subr.bf16.mxu0 0
      %2272 = vmatpush2.bf16.msra.mxu0 0
      %2273 = vmatprep.subr.bf16.mxu0 0
      %2274 = vmatpush2.bf16.msra.mxu0 0
      %2275 = vmatprep.subr.bf16.mxu0 0
      %2276 = vmatpush2.bf16.msra.mxu0 0
      %2277 = vmatprep.subr.bf16.mxu0 0
      %2278 = vmatpush2.bf16.msra.mxu0 0
      %2279 = vmatprep.subr.bf16.mxu0 0
      %2280 = vmatpush2.bf16.msra.mxu0 0
      %2281 = vmatprep.mubr.bf16.mxu0 0
      %2282 = vmatmul.mubr.bf16.gmra.mxu0 %v2226
      %v2283 = vpop.f32.mrf.mxu0
      %v2284 = vadd.f32 0.0, %v2283
      %v2285 = vpop.f32.mrf.mxu0
      %v2286 = vpop.f32.mrf.mxu0
      %v2287 = vadd.f32 0.0, %v2286
      %v2288 = vpop.f32.mrf.mxu0
      %2289 = vmatprep.mubr.bf16.mxu0 0
      %2290 = vmatmul.mubr.bf16.gmra.mxu0 %v2229
      %v2291 = vpop.f32.mrf.mxu0
      %v2292 = vadd.f32 0.0, %v2291
      %v2293 = vpop.f32.mrf.mxu0
      %v2294 = vpop.f32.mrf.mxu0
      %v2295 = vadd.f32 0.0, %v2294
      %v2296 = vpop.f32.mrf.mxu0
      %2297 = vmatprep.mubr.bf16.mxu0 0
      %2298 = vmatmul.mubr.bf16.gmra.mxu0 %v2232
      %v2299 = vpop.f32.mrf.mxu0
      %v2300 = vadd.f32 0.0, %v2299
      %v2301 = vpop.f32.mrf.mxu0
      %v2302 = vpop.f32.mrf.mxu0
      %v2303 = vadd.f32 0.0, %v2302
      %v2304 = vpop.f32.mrf.mxu0
      %2305 = vmatprep.mubr.bf16.mxu0 0
      %2306 = vmatmul.mubr.bf16.gmra.mxu0 %v2235
      %v2307 = vpop.f32.mrf.mxu0
      %v2308 = vadd.f32 0.0, %v2307
      %v2309 = vpop.f32.mrf.mxu0
      %v2310 = vpop.f32.mrf.mxu0
      %v2311 = vadd.f32 0.0, %v2310
      %v2312 = vpop.f32.mrf.mxu0
      %2313 = vmatprep.mubr.bf16.mxu0 0
      %2314 = vmatmul.mubr.bf16.gmra.mxu0 %v2238
      %v2315 = vpop.f32.mrf.mxu0
      %v2316 = vadd.f32 0.0, %v2315
      %v2317 = vpop.f32.mrf.mxu0
      %v2318 = vpop.f32.mrf.mxu0
      %v2319 = vadd.f32 0.0, %v2318
      %v2320 = vpop.f32.mrf.mxu0
      %2321 = vmatprep.mubr.bf16.mxu0 0
      %2322 = vmatmul.mubr.bf16.gmra.mxu0 %v2241
      %v2323 = vpop.f32.mrf.mxu0
      %v2324 = vadd.f32 0.0, %v2323
      %v2325 = vpop.f32.mrf.mxu0
      %v2326 = vpop.f32.mrf.mxu0
      %v2327 = vadd.f32 0.0, %v2326
      %v2328 = vpop.f32.mrf.mxu0
      %2329 = vmatprep.mubr.bf16.mxu0 0
      %2330 = vmatmul.mubr.bf16.gmra.mxu0 %v2244
      %v2331 = vpop.f32.mrf.mxu0
      %v2332 = vadd.f32 0.0, %v2331
      %v2333 = vpop.f32.mrf.mxu0
      %v2334 = vpop.f32.mrf.mxu0
      %v2335 = vadd.f32 0.0, %v2334
      %v2336 = vpop.f32.mrf.mxu0
      %2337 = vmatprep.mubr.bf16.mxu0 0
      %2338 = vmatmul.mubr.bf16.gmra.mxu0 %v2247
      %v2339 = vpop.f32.mrf.mxu0
      %v2340 = vadd.f32 0.0, %v2339
      %v2341 = vpop.f32.mrf.mxu0
      %v2342 = vpop.f32.mrf.mxu0
      %v2343 = vadd.f32 0.0, %v2342
      %v2344 = vpop.f32.mrf.mxu0
      %2345 = vdwg.mxu0
      %v2346 = vadd.f32 %v1779, %v2284
      %v2347 = vadd.f32 %v1782, %v2287
      %v2348 = vadd.f32 %v1787, %v2292
      %v2349 = vadd.f32 %v1790, %v2295
      %v2350 = vadd.f32 %v1795, %v2300
      %v2351 = vadd.f32 %v1798, %v2303
      %v2352 = vadd.f32 %v1803, %v2308
      %v2353 = vadd.f32 %v1806, %v2311
      %v2354 = vadd.f32 %v1811, %v2316
      %v2355 = vadd.f32 %v1814, %v2319
      %v2356 = vadd.f32 %v1819, %v2324
      %v2357 = vadd.f32 %v1822, %v2327
      %v2358 = vadd.f32 %v1827, %v2332
      %v2359 = vadd.f32 %v1830, %v2335
      %v2360 = vadd.f32 %v1835, %v2340
      %v2361 = vadd.f32 %v1838, %v2343
      %s2362 = sadd.s32 %s25, 2
      %p2363 = scmp.lt.s32.totalorder %s2362, 0
      %s2364 = ssub.s32 0, %s2362
      %s2365 = scalar_select %p2363, %s2364, %s2362
      %s2366 = sdiv.u32.pop %s2365, 3
      %s2367 = srem.u32.pop %s2365, 3
      %s2368 = ssub.s32 0, %s2367
      %s2369 = scalar_select %p2363, %s2368, %s2367
      %p2370 = scmp.ne.s32.totalorder %s2369, 0
      %p2371 = scmp.lt.s32.totalorder %s2369, 0
      %p2372 = pnand %p2371, %p2370
      %p2373 = pneg %p2372
      %s2374 = sadd.s32 %s2369, 3
      %s2375 = scalar_select %p2373, %s2374, %s2369
      %s2376 = smul.u32 %s2375, 40
      %s2377 = smul.addr %s2376, 4
      %s2378 = scalar_lea.vmem [#allocation2], %s2377
      %v2379 = vld [vmem:[%s2378] sm:$0x8]
      %v2380 = vld [vmem:[%s2378 + $0x4] sm:$0xf]
      %v2381 = vld [vmem:[%s2378 + $0x8] sm:$0xf]
      %v2382 = vld [vmem:[%s2378 + $0x10] sm:$0x8]
      %v2383 = vld [vmem:[%s2378 + $0x14] sm:$0xf]
      %v2384 = vld [vmem:[%s2378 + $0x18] sm:$0xf]
      %v2385 = vld [vmem:[%s2378 + $0x20] sm:$0x8]
      %v2386 = vld [vmem:[%s2378 + $0x24] sm:$0xf]
      %v2387 = vld [vmem:[%s2378 + $0x28] sm:$0xf]
      %v2388 = vld [vmem:[%s2378 + $0x30] sm:$0x8]
      %v2389 = vld [vmem:[%s2378 + $0x34] sm:$0xf]
      %v2390 = vld [vmem:[%s2378 + $0x38] sm:$0xf]
      %v2391 = vld [vmem:[%s2378 + $0x40] sm:$0x8]
      %v2392 = vld [vmem:[%s2378 + $0x44] sm:$0xf]
      %v2393 = vld [vmem:[%s2378 + $0x48] sm:$0xf]
      %v2394 = vld [vmem:[%s2378 + $0x50] sm:$0x8]
      %v2395 = vld [vmem:[%s2378 + $0x54] sm:$0xf]
      %v2396 = vld [vmem:[%s2378 + $0x58] sm:$0xf]
      %v2397 = vld [vmem:[%s2378 + $0x60] sm:$0x8]
      %v2398 = vld [vmem:[%s2378 + $0x64] sm:$0xf]
      %v2399 = vld [vmem:[%s2378 + $0x68] sm:$0xf]
      %v2400 = vld [vmem:[%s2378 + $0x70] sm:$0x8]
      %v2401 = vld [vmem:[%s2378 + $0x74] sm:$0xf]
      %v2402 = vld [vmem:[%s2378 + $0x78] sm:$0xf]
      %v2403 = vld [vmem:[%s2378 + $0x80] sm:$0x8]
      %v2404 = vld [vmem:[%s2378 + $0x84] sm:$0xf]
      %v2405 = vld [vmem:[%s2378 + $0x88] sm:$0xf]
      %v2406 = vld [vmem:[%s2378 + $0x90] sm:$0x8]
      %v2407 = vld [vmem:[%s2378 + $0x94] sm:$0xf]
      %v2408 = vld [vmem:[%s2378 + $0x98] sm:$0xf]
      %v2433 = vunpack.c.l.b16 %v2379
      %v2434 = vunpack.c.l.b16 %v2380
      %v2435 = vunpack.c.l.b16 %v2381
      %v2436 = vunpack.c.l.b16 %v2382
      %v2437 = vunpack.c.l.b16 %v2383
      %v2438 = vunpack.c.l.b16 %v2384
      %v2439 = vunpack.c.l.b16 %v2385
      %v2440 = vunpack.c.l.b16 %v2386
      %v2441 = vunpack.c.l.b16 %v2387
      %v2442 = vunpack.c.l.b16 %v2388
      %v2443 = vunpack.c.l.b16 %v2389
      %v2444 = vunpack.c.l.b16 %v2390
      %v2445 = vunpack.c.l.b16 %v2391
      %v2446 = vunpack.c.l.b16 %v2392
      %v2447 = vunpack.c.l.b16 %v2393
      %v2448 = vunpack.c.l.b16 %v2394
      %v2449 = vunpack.c.l.b16 %v2395
      %v2450 = vunpack.c.l.b16 %v2396
      %v2451 = vunpack.c.l.b16 %v2397
      %v2452 = vunpack.c.l.b16 %v2398
      %v2453 = vunpack.c.l.b16 %v2399
      %v2454 = vunpack.c.l.b16 %v2400
      %v2455 = vunpack.c.l.b16 %v2401
      %v2456 = vunpack.c.l.b16 %v2402
      %v2457 = vpack.c.b16 %v2434, %v2433
      %v2458 = vpack.c.b16 %v2435, %v2435
      %v2459 = vpack.c.b16 %v2437, %v2436
      %v2460 = vpack.c.b16 %v2438, %v2438
      %v2461 = vpack.c.b16 %v2440, %v2439
      %v2462 = vpack.c.b16 %v2441, %v2441
      %v2463 = vpack.c.b16 %v2443, %v2442
      %v2464 = vpack.c.b16 %v2444, %v2444
      %v2465 = vpack.c.b16 %v2446, %v2445
      %v2466 = vpack.c.b16 %v2447, %v2447
      %v2467 = vpack.c.b16 %v2449, %v2448
      %v2468 = vpack.c.b16 %v2450, %v2450
      %v2469 = vpack.c.b16 %v2452, %v2451
      %v2470 = vpack.c.b16 %v2453, %v2453
      %v2471 = vpack.c.b16 %v2455, %v2454
      %v2472 = vpack.c.b16 %v2456, %v2456
      %v2476 = vunpack.c.l.b16 %v2403
      %v2477 = vunpack.c.l.b16 %v2404
      %v2478 = vunpack.c.l.b16 %v2405
      %v2479 = vpack.c.b16 %v2477, %v2476
      %v2480 = vpack.c.b16 %v2478, %v2478
      %2481 = vrot.lane.b32.xlu0 %v2459, 32
      %v2482 = vpop.permute.xlu0 %2481
      %2483 = vrot.lane.b32.xlu0 %v2460, 32
      %v2484 = vpop.permute.xlu0 %2483
      %2485 = vrot.lane.b32.xlu0 %v2461, 32
      %v2486 = vpop.permute.xlu0 %2485
      %2487 = vrot.lane.b32.xlu0 %v2462, 32
      %v2488 = vpop.permute.xlu0 %2487
      %2489 = vrot.lane.b32.xlu0 %v2463, 32
      %v2490 = vpop.permute.xlu0 %2489
      %2491 = vrot.lane.b32.xlu0 %v2464, 32
      %v2492 = vpop.permute.xlu0 %2491
      %2493 = vrot.lane.b32.xlu0 %v2465, 32
      %v2494 = vpop.permute.xlu0 %2493
      %2495 = vrot.lane.b32.xlu0 %v2466, 32
      %v2496 = vpop.permute.xlu0 %2495
      %2497 = vrot.lane.b32.xlu0 %v2467, 32
      %v2498 = vpop.permute.xlu0 %2497
      %2499 = vrot.lane.b32.xlu0 %v2468, 32
      %v2500 = vpop.permute.xlu0 %2499
      %2501 = vrot.lane.b32.xlu0 %v2469, 32
      %v2502 = vpop.permute.xlu0 %2501
      %2503 = vrot.lane.b32.xlu0 %v2470, 32
      %v2504 = vpop.permute.xlu0 %2503
      %2505 = vrot.lane.b32.xlu0 %v2471, 32
      %v2506 = vpop.permute.xlu0 %2505
      %2507 = vrot.lane.b32.xlu0 %v2472, 32
      %v2508 = vpop.permute.xlu0 %2507
      %2509 = vrot.lane.b32.xlu0 %v2479, 32
      %v2510 = vpop.permute.xlu0 %2509
      %2511 = vrot.lane.b32.xlu0 %v2480, 32
      %v2512 = vpop.permute.xlu0 %2511
      %v2516 = vunpack.c.l.b16 %v2406
      %v2517 = vunpack.c.l.b16 %v2407
      %v2518 = vunpack.c.l.b16 %v2408
      %v2519 = vpack.c.b16 %v2517, %v2516
      %v2520 = vpack.c.b16 %v2518, %v2518
      %2521 = vrot.lane.b32.xlu0 %v2461, 64
      %v2522 = vpop.permute.xlu0 %2521
      %2523 = vrot.lane.b32.xlu0 %v2462, 64
      %v2524 = vpop.permute.xlu0 %2523
      %2525 = vrot.lane.b32.xlu0 %v2463, 64
      %v2526 = vpop.permute.xlu0 %2525
      %2527 = vrot.lane.b32.xlu0 %v2464, 64
      %v2528 = vpop.permute.xlu0 %2527
      %2529 = vrot.lane.b32.xlu0 %v2465, 64
      %v2530 = vpop.permute.xlu0 %2529
      %2531 = vrot.lane.b32.xlu0 %v2466, 64
      %v2532 = vpop.permute.xlu0 %2531
      %2533 = vrot.lane.b32.xlu0 %v2467, 64
      %v2534 = vpop.permute.xlu0 %2533
      %2535 = vrot.lane.b32.xlu0 %v2468, 64
      %v2536 = vpop.permute.xlu0 %2535
      %2537 = vrot.lane.b32.xlu0 %v2469, 64
      %v2538 = vpop.permute.xlu0 %2537
      %2539 = vrot.lane.b32.xlu0 %v2470, 64
      %v2540 = vpop.permute.xlu0 %2539
      %2541 = vrot.lane.b32.xlu0 %v2471, 64
      %v2542 = vpop.permute.xlu0 %2541
      %2543 = vrot.lane.b32.xlu0 %v2472, 64
      %v2544 = vpop.permute.xlu0 %2543
      %2545 = vrot.lane.b32.xlu0 %v2479, 64
      %v2546 = vpop.permute.xlu0 %2545
      %2547 = vrot.lane.b32.xlu0 %v2480, 64
      %v2548 = vpop.permute.xlu0 %2547
      %2549 = vrot.lane.b32.xlu0 %v2519, 64
      %v2550 = vpop.permute.xlu0 %2549
      %2551 = vrot.lane.b32.xlu0 %v2520, 64
      %v2552 = vpop.permute.xlu0 %2551
      %v2555 = vsel %vm1224, %v2457, %v2482
      %v2558 = vsel %vm1224, %v2458, %v2484
      %v2561 = vsel %vm1224, %v2459, %v2486
      %v2564 = vsel %vm1224, %v2460, %v2488
      %v2567 = vsel %vm1224, %v2461, %v2490
      %v2570 = vsel %vm1224, %v2462, %v2492
      %v2573 = vsel %vm1224, %v2463, %v2494
      %v2576 = vsel %vm1224, %v2464, %v2496
      %v2579 = vsel %vm1224, %v2465, %v2498
      %v2582 = vsel %vm1224, %v2466, %v2500
      %v2585 = vsel %vm1224, %v2467, %v2502
      %v2588 = vsel %vm1224, %v2468, %v2504
      %v2591 = vsel %vm1224, %v2469, %v2506
      %v2594 = vsel %vm1224, %v2470, %v2508
      %v2597 = vsel %vm1224, %v2471, %v2510
      %v2600 = vsel %vm1224, %v2472, %v2512
      %v2602 = vsel %vm1273, %v2555, %v2522
      %v2604 = vsel %vm1273, %v2558, %v2524
      %v2606 = vsel %vm1273, %v2561, %v2526
      %v2608 = vsel %vm1273, %v2564, %v2528
      %v2610 = vsel %vm1273, %v2567, %v2530
      %v2612 = vsel %vm1273, %v2570, %v2532
      %v2614 = vsel %vm1273, %v2573, %v2534
      %v2616 = vsel %vm1273, %v2576, %v2536
      %v2618 = vsel %vm1273, %v2579, %v2538
      %v2620 = vsel %vm1273, %v2582, %v2540
      %v2622 = vsel %vm1273, %v2585, %v2542
      %v2624 = vsel %vm1273, %v2588, %v2544
      %v2626 = vsel %vm1273, %v2591, %v2546
      %v2628 = vsel %vm1273, %v2594, %v2548
      %v2630 = vsel %vm1273, %v2597, %v2550
      %v2632 = vsel %vm1273, %v2600, %v2552
      %v2633 = vshrl.u32 %v2602, 16
      %v2635 = vrot.slane %v2633, 3
      %v2636 = vshll.u32 %v2602, 16
      %v2638 = vrot.slane %v2636, 4
      %v2639 = vor.u32 %v2635, %v2638
      %v2640 = vshrl.u32 %v2604, 16
      %v2642 = vrot.slane %v2640, 3
      %v2643 = vshll.u32 %v2604, 16
      %v2645 = vrot.slane %v2643, 4
      %v2646 = vor.u32 %v2642, %v2645
      %v2647 = vsel %vm1306, %v2639, %v2646
      %v2648 = vshrl.u32 %v2606, 16
      %v2650 = vrot.slane %v2648, 3
      %v2651 = vshll.u32 %v2606, 16
      %v2653 = vrot.slane %v2651, 4
      %v2654 = vor.u32 %v2650, %v2653
      %v2655 = vshrl.u32 %v2608, 16
      %v2657 = vrot.slane %v2655, 3
      %v2658 = vshll.u32 %v2608, 16
      %v2660 = vrot.slane %v2658, 4
      %v2661 = vor.u32 %v2657, %v2660
      %v2662 = vsel %vm1306, %v2654, %v2661
      %v2663 = vshrl.u32 %v2610, 16
      %v2665 = vrot.slane %v2663, 3
      %v2666 = vshll.u32 %v2610, 16
      %v2668 = vrot.slane %v2666, 4
      %v2669 = vor.u32 %v2665, %v2668
      %v2670 = vshrl.u32 %v2612, 16
      %v2672 = vrot.slane %v2670, 3
      %v2673 = vshll.u32 %v2612, 16
      %v2675 = vrot.slane %v2673, 4
      %v2676 = vor.u32 %v2672, %v2675
      %v2677 = vsel %vm1306, %v2669, %v2676
      %v2678 = vshrl.u32 %v2614, 16
      %v2680 = vrot.slane %v2678, 3
      %v2681 = vshll.u32 %v2614, 16
      %v2683 = vrot.slane %v2681, 4
      %v2684 = vor.u32 %v2680, %v2683
      %v2685 = vshrl.u32 %v2616, 16
      %v2687 = vrot.slane %v2685, 3
      %v2688 = vshll.u32 %v2616, 16
      %v2690 = vrot.slane %v2688, 4
      %v2691 = vor.u32 %v2687, %v2690
      %v2692 = vsel %vm1306, %v2684, %v2691
      %v2693 = vshrl.u32 %v2618, 16
      %v2695 = vrot.slane %v2693, 3
      %v2696 = vshll.u32 %v2618, 16
      %v2698 = vrot.slane %v2696, 4
      %v2699 = vor.u32 %v2695, %v2698
      %v2700 = vshrl.u32 %v2620, 16
      %v2702 = vrot.slane %v2700, 3
      %v2703 = vshll.u32 %v2620, 16
      %v2705 = vrot.slane %v2703, 4
      %v2706 = vor.u32 %v2702, %v2705
      %v2707 = vsel %vm1306, %v2699, %v2706
      %v2708 = vshrl.u32 %v2622, 16
      %v2710 = vrot.slane %v2708, 3
      %v2711 = vshll.u32 %v2622, 16
      %v2713 = vrot.slane %v2711, 4
      %v2714 = vor.u32 %v2710, %v2713
      %v2715 = vshrl.u32 %v2624, 16
      %v2717 = vrot.slane %v2715, 3
      %v2718 = vshll.u32 %v2624, 16
      %v2720 = vrot.slane %v2718, 4
      %v2721 = vor.u32 %v2717, %v2720
      %v2722 = vsel %vm1306, %v2714, %v2721
      %v2723 = vshrl.u32 %v2626, 16
      %v2725 = vrot.slane %v2723, 3
      %v2726 = vshll.u32 %v2626, 16
      %v2728 = vrot.slane %v2726, 4
      %v2729 = vor.u32 %v2725, %v2728
      %v2730 = vshrl.u32 %v2628, 16
      %v2732 = vrot.slane %v2730, 3
      %v2733 = vshll.u32 %v2628, 16
      %v2735 = vrot.slane %v2733, 4
      %v2736 = vor.u32 %v2732, %v2735
      %v2737 = vsel %vm1306, %v2729, %v2736
      %v2738 = vshrl.u32 %v2630, 16
      %v2740 = vrot.slane %v2738, 3
      %v2741 = vshll.u32 %v2630, 16
      %v2743 = vrot.slane %v2741, 4
      %v2744 = vor.u32 %v2740, %v2743
      %v2745 = vshrl.u32 %v2632, 16
      %v2747 = vrot.slane %v2745, 3
      %v2748 = vshll.u32 %v2632, 16
      %v2750 = vrot.slane %v2748, 4
      %v2751 = vor.u32 %v2747, %v2750
      %v2752 = vsel %vm1306, %v2744, %v2751
      %s2753 = scalar_lea.vmem %s5, 144
      %v2754 = vld [vmem:[%s2753] sm:$0xf]
      %v2755 = vld [vmem:[%s2753 + $0x4] sm:$0xf]
      %v2756 = vld [vmem:[%s2753 + $0x8] sm:$0xf]
      %v2757 = vld [vmem:[%s2753 + $0xc] sm:$0xf]
      %v2758 = vld [vmem:[%s2753 + $0x10] sm:$0xf]
      %v2759 = vld [vmem:[%s2753 + $0x14] sm:$0xf]
      %v2760 = vld [vmem:[%s2753 + $0x18] sm:$0xf]
      %v2761 = vld [vmem:[%s2753 + $0x1c] sm:$0xf]
      %v2762 = vld [vmem:[%s2753 + $0x20] sm:$0xf]
      %v2763 = vld [vmem:[%s2753 + $0x24] sm:$0xf]
      %v2764 = vld [vmem:[%s2753 + $0x28] sm:$0xf]
      %v2765 = vld [vmem:[%s2753 + $0x2c] sm:$0xf]
      %v2778 = vunpack.c.l.b16 %v2754
      %v2779 = vunpack.c.l.b16 %v2755
      %v2780 = vunpack.c.l.b16 %v2756
      %v2781 = vunpack.c.l.b16 %v2757
      %v2782 = vunpack.c.l.b16 %v2758
      %v2783 = vunpack.c.l.b16 %v2759
      %v2784 = vunpack.c.l.b16 %v2760
      %v2785 = vunpack.c.l.b16 %v2761
      %v2786 = vunpack.c.l.b16 %v2762
      %v2787 = vunpack.c.l.b16 %v2763
      %v2788 = vunpack.c.l.b16 %v2764
      %v2789 = vunpack.c.l.b16 %v2765
      %v2790 = vpack.c.b16 %v2779, %v2778
      %v2791 = vpack.c.b16 %v2781, %v2780
      %v2792 = vpack.c.b16 %v2783, %v2782
      %v2793 = vpack.c.b16 %v2785, %v2784
      %v2794 = vpack.c.b16 %v2787, %v2786
      %v2795 = vpack.c.b16 %v2789, %v2788
      %v2803 = vsel %vm1570, %v2647, 0
      %v2806 = vsel %vm1570, %v2662, 0
      %v2809 = vsel %vm1570, %v2677, 0
      %v2812 = vsel %vm1570, %v2692, 0
      %v2815 = vsel %vm1570, %v2707, 0
      %v2818 = vsel %vm1570, %v2722, 0
      %v2821 = vsel %vm1570, %v2737, 0
      %v2824 = vsel %vm1570, %v2752, 0
      %2826 = vmatprep.subr.bf16.mxu0 0
      %2827 = vmatpush1.bf16.msra.mxu0 0
      %2828 = vmatprep.subr.bf16.mxu0 0
      %2829 = vmatpush1.bf16.msra.mxu0 0
      %2830 = vmatprep.subr.bf16.mxu0 0
      %2831 = vmatpush1.bf16.msra.mxu0 %v2795
      %2832 = vmatprep.subr.bf16.mxu0 0
      %2833 = vmatpush1.bf16.msra.mxu0 %v2794
      %2834 = vmatprep.subr.bf16.mxu0 0
      %2835 = vmatpush1.bf16.msra.mxu0 %v2793
      %2836 = vmatprep.subr.bf16.mxu0 0
      %2837 = vmatpush1.bf16.msra.mxu0 %v2792
      %2838 = vmatprep.subr.bf16.mxu0 0
      %2839 = vmatpush1.bf16.msra.mxu0 %v2791
      %2840 = vmatprep.subr.bf16.mxu0 0
      %2841 = vmatpush1.bf16.msra.mxu0 %v2790
      %2842 = vmatprep.subr.bf16.mxu0 0
      %2843 = vmatpush2.bf16.msra.mxu0 0
      %2844 = vmatprep.subr.bf16.mxu0 0
      %2845 = vmatpush2.bf16.msra.mxu0 0
      %2846 = vmatprep.subr.bf16.mxu0 0
      %2847 = vmatpush2.bf16.msra.mxu0 0
      %2848 = vmatprep.subr.bf16.mxu0 0
      %2849 = vmatpush2.bf16.msra.mxu0 0
      %2850 = vmatprep.subr.bf16.mxu0 0
      %2851 = vmatpush2.bf16.msra.mxu0 0
      %2852 = vmatprep.subr.bf16.mxu0 0
      %2853 = vmatpush2.bf16.msra.mxu0 0
      %2854 = vmatprep.subr.bf16.mxu0 0
      %2855 = vmatpush2.bf16.msra.mxu0 0
      %2856 = vmatprep.subr.bf16.mxu0 0
      %2857 = vmatpush2.bf16.msra.mxu0 0
      %2858 = vmatprep.mubr.bf16.mxu0 0
      %2859 = vmatmul.mubr.bf16.gmra.mxu0 %v2803
      %v2860 = vpop.f32.mrf.mxu0
      %v2861 = vadd.f32 0.0, %v2860
      %v2862 = vpop.f32.mrf.mxu0
      %v2863 = vpop.f32.mrf.mxu0
      %v2864 = vadd.f32 0.0, %v2863
      %v2865 = vpop.f32.mrf.mxu0
      %2866 = vmatprep.mubr.bf16.mxu0 0
      %2867 = vmatmul.mubr.bf16.gmra.mxu0 %v2806
      %v2868 = vpop.f32.mrf.mxu0
      %v2869 = vadd.f32 0.0, %v2868
      %v2870 = vpop.f32.mrf.mxu0
      %v2871 = vpop.f32.mrf.mxu0
      %v2872 = vadd.f32 0.0, %v2871
      %v2873 = vpop.f32.mrf.mxu0
      %2874 = vmatprep.mubr.bf16.mxu0 0
      %2875 = vmatmul.mubr.bf16.gmra.mxu0 %v2809
      %v2876 = vpop.f32.mrf.mxu0
      %v2877 = vadd.f32 0.0, %v2876
      %v2878 = vpop.f32.mrf.mxu0
      %v2879 = vpop.f32.mrf.mxu0
      %v2880 = vadd.f32 0.0, %v2879
      %v2881 = vpop.f32.mrf.mxu0
      %2882 = vmatprep.mubr.bf16.mxu0 0
      %2883 = vmatmul.mubr.bf16.gmra.mxu0 %v2812
      %v2884 = vpop.f32.mrf.mxu0
      %v2885 = vadd.f32 0.0, %v2884
      %v2886 = vpop.f32.mrf.mxu0
      %v2887 = vpop.f32.mrf.mxu0
      %v2888 = vadd.f32 0.0, %v2887
      %v2889 = vpop.f32.mrf.mxu0
      %2890 = vmatprep.mubr.bf16.mxu0 0
      %2891 = vmatmul.mubr.bf16.gmra.mxu0 %v2815
      %v2892 = vpop.f32.mrf.mxu0
      %v2893 = vadd.f32 0.0, %v2892
      %v2894 = vpop.f32.mrf.mxu0
      %v2895 = vpop.f32.mrf.mxu0
      %v2896 = vadd.f32 0.0, %v2895
      %v2897 = vpop.f32.mrf.mxu0
      %2898 = vmatprep.mubr.bf16.mxu0 0
      %2899 = vmatmul.mubr.bf16.gmra.mxu0 %v2818
      %v2900 = vpop.f32.mrf.mxu0
      %v2901 = vadd.f32 0.0, %v2900
      %v2902 = vpop.f32.mrf.mxu0
      %v2903 = vpop.f32.mrf.mxu0
      %v2904 = vadd.f32 0.0, %v2903
      %v2905 = vpop.f32.mrf.mxu0
      %2906 = vmatprep.mubr.bf16.mxu0 0
      %2907 = vmatmul.mubr.bf16.gmra.mxu0 %v2821
      %v2908 = vpop.f32.mrf.mxu0
      %v2909 = vadd.f32 0.0, %v2908
      %v2910 = vpop.f32.mrf.mxu0
      %v2911 = vpop.f32.mrf.mxu0
      %v2912 = vadd.f32 0.0, %v2911
      %v2913 = vpop.f32.mrf.mxu0
      %2914 = vmatprep.mubr.bf16.mxu0 0
      %2915 = vmatmul.mubr.bf16.gmra.mxu0 %v2824
      %v2916 = vpop.f32.mrf.mxu0
      %v2917 = vadd.f32 0.0, %v2916
      %v2918 = vpop.f32.mrf.mxu0
      %v2919 = vpop.f32.mrf.mxu0
      %v2920 = vadd.f32 0.0, %v2919
      %v2921 = vpop.f32.mrf.mxu0
      %2922 = vdwg.mxu0
      %v2923 = vadd.f32 %v2346, %v2861
      %v2924 = vadd.f32 %v2347, %v2864
      %v2925 = vadd.f32 %v2348, %v2869
      %v2926 = vadd.f32 %v2349, %v2872
      %v2927 = vadd.f32 %v2350, %v2877
      %v2928 = vadd.f32 %v2351, %v2880
      %v2929 = vadd.f32 %v2352, %v2885
      %v2930 = vadd.f32 %v2353, %v2888
      %v2931 = vadd.f32 %v2354, %v2893
      %v2932 = vadd.f32 %v2355, %v2896
      %v2933 = vadd.f32 %v2356, %v2901
      %v2934 = vadd.f32 %v2357, %v2904
      %v2935 = vadd.f32 %v2358, %v2909
      %v2936 = vadd.f32 %v2359, %v2912
      %v2937 = vadd.f32 %v2360, %v2917
      %v2938 = vadd.f32 %v2361, %v2920
      %v2939 = vpack.c.b16 %v2435, %v2434
      %v2940 = vpack.c.b16 %v2438, %v2437
      %v2941 = vpack.c.b16 %v2441, %v2440
      %v2942 = vpack.c.b16 %v2444, %v2443
      %v2943 = vpack.c.b16 %v2447, %v2446
      %v2944 = vpack.c.b16 %v2450, %v2449
      %v2945 = vpack.c.b16 %v2453, %v2452
      %v2946 = vpack.c.b16 %v2456, %v2455
      %v2947 = vpack.c.b16 %v2478, %v2477
      %2948 = vrot.lane.b32.xlu0 %v2940, 32
      %v2949 = vpop.permute.xlu0 %2948
      %2950 = vrot.lane.b32.xlu0 %v2941, 32
      %v2951 = vpop.permute.xlu0 %2950
      %2952 = vrot.lane.b32.xlu0 %v2942, 32
      %v2953 = vpop.permute.xlu0 %2952
      %2954 = vrot.lane.b32.xlu0 %v2943, 32
      %v2955 = vpop.permute.xlu0 %2954
      %2956 = vrot.lane.b32.xlu0 %v2944, 32
      %v2957 = vpop.permute.xlu0 %2956
      %2958 = vrot.lane.b32.xlu0 %v2945, 32
      %v2959 = vpop.permute.xlu0 %2958
      %2960 = vrot.lane.b32.xlu0 %v2946, 32
      %v2961 = vpop.permute.xlu0 %2960
      %2962 = vrot.lane.b32.xlu0 %v2947, 32
      %v2963 = vpop.permute.xlu0 %2962
      %v2964 = vpack.c.b16 %v2518, %v2517
      %2965 = vrot.lane.b32.xlu0 %v2941, 64
      %v2966 = vpop.permute.xlu0 %2965
      %2967 = vrot.lane.b32.xlu0 %v2942, 64
      %v2968 = vpop.permute.xlu0 %2967
      %2969 = vrot.lane.b32.xlu0 %v2943, 64
      %v2970 = vpop.permute.xlu0 %2969
      %2971 = vrot.lane.b32.xlu0 %v2944, 64
      %v2972 = vpop.permute.xlu0 %2971
      %2973 = vrot.lane.b32.xlu0 %v2945, 64
      %v2974 = vpop.permute.xlu0 %2973
      %2975 = vrot.lane.b32.xlu0 %v2946, 64
      %v2976 = vpop.permute.xlu0 %2975
      %2977 = vrot.lane.b32.xlu0 %v2947, 64
      %v2978 = vpop.permute.xlu0 %2977
      %2979 = vrot.lane.b32.xlu0 %v2964, 64
      %v2980 = vpop.permute.xlu0 %2979
      %v2983 = vsel %vm1224, %v2939, %v2949
      %v2986 = vsel %vm1224, %v2940, %v2951
      %v2989 = vsel %vm1224, %v2941, %v2953
      %v2992 = vsel %vm1224, %v2942, %v2955
      %v2995 = vsel %vm1224, %v2943, %v2957
      %v2998 = vsel %vm1224, %v2944, %v2959
      %v3001 = vsel %vm1224, %v2945, %v2961
      %v3004 = vsel %vm1224, %v2946, %v2963
      %v3006 = vsel %vm1273, %v2983, %v2966
      %v3008 = vsel %vm1273, %v2986, %v2968
      %v3010 = vsel %vm1273, %v2989, %v2970
      %v3012 = vsel %vm1273, %v2992, %v2972
      %v3014 = vsel %vm1273, %v2995, %v2974
      %v3016 = vsel %vm1273, %v2998, %v2976
      %v3018 = vsel %vm1273, %v3001, %v2978
      %v3020 = vsel %vm1273, %v3004, %v2980
      %s3021 = scalar_lea.vmem %s5, 192
      %v3022 = vld [vmem:[%s3021] sm:$0xf]
      %v3023 = vld [vmem:[%s3021 + $0x4] sm:$0xf]
      %v3024 = vld [vmem:[%s3021 + $0x8] sm:$0xf]
      %v3025 = vld [vmem:[%s3021 + $0xc] sm:$0xf]
      %v3026 = vld [vmem:[%s3021 + $0x10] sm:$0xf]
      %v3027 = vld [vmem:[%s3021 + $0x14] sm:$0xf]
      %v3028 = vld [vmem:[%s3021 + $0x18] sm:$0xf]
      %v3029 = vld [vmem:[%s3021 + $0x1c] sm:$0xf]
      %v3030 = vld [vmem:[%s3021 + $0x20] sm:$0xf]
      %v3031 = vld [vmem:[%s3021 + $0x24] sm:$0xf]
      %v3032 = vld [vmem:[%s3021 + $0x28] sm:$0xf]
      %v3033 = vld [vmem:[%s3021 + $0x2c] sm:$0xf]
      %v3046 = vunpack.c.l.b16 %v3022
      %v3047 = vunpack.c.l.b16 %v3023
      %v3048 = vunpack.c.l.b16 %v3024
      %v3049 = vunpack.c.l.b16 %v3025
      %v3050 = vunpack.c.l.b16 %v3026
      %v3051 = vunpack.c.l.b16 %v3027
      %v3052 = vunpack.c.l.b16 %v3028
      %v3053 = vunpack.c.l.b16 %v3029
      %v3054 = vunpack.c.l.b16 %v3030
      %v3055 = vunpack.c.l.b16 %v3031
      %v3056 = vunpack.c.l.b16 %v3032
      %v3057 = vunpack.c.l.b16 %v3033
      %v3058 = vpack.c.b16 %v3047, %v3046
      %v3059 = vpack.c.b16 %v3049, %v3048
      %v3060 = vpack.c.b16 %v3051, %v3050
      %v3061 = vpack.c.b16 %v3053, %v3052
      %v3062 = vpack.c.b16 %v3055, %v3054
      %v3063 = vpack.c.b16 %v3057, %v3056
      %v3070 = vsel %vm1570, %v3006, 0
      %v3072 = vsel %vm1570, %v3008, 0
      %v3074 = vsel %vm1570, %v3010, 0
      %v3076 = vsel %vm1570, %v3012, 0
      %v3078 = vsel %vm1570, %v3014, 0
      %v3080 = vsel %vm1570, %v3016, 0
      %v3082 = vsel %vm1570, %v3018, 0
      %v3084 = vsel %vm1570, %v3020, 0
      %3086 = vmatprep.subr.bf16.mxu0 0
      %3087 = vmatpush1.bf16.msra.mxu0 0
      %3088 = vmatprep.subr.bf16.mxu0 0
      %3089 = vmatpush1.bf16.msra.mxu0 0
      %3090 = vmatprep.subr.bf16.mxu0 0
      %3091 = vmatpush1.bf16.msra.mxu0 %v3063
      %3092 = vmatprep.subr.bf16.mxu0 0
      %3093 = vmatpush1.bf16.msra.mxu0 %v3062
      %3094 = vmatprep.subr.bf16.mxu0 0
      %3095 = vmatpush1.bf16.msra.mxu0 %v3061
      %3096 = vmatprep.subr.bf16.mxu0 0
      %3097 = vmatpush1.bf16.msra.mxu0 %v3060
      %3098 = vmatprep.subr.bf16.mxu0 0
      %3099 = vmatpush1.bf16.msra.mxu0 %v3059
      %3100 = vmatprep.subr.bf16.mxu0 0
      %3101 = vmatpush1.bf16.msra.mxu0 %v3058
      %3102 = vmatprep.subr.bf16.mxu0 0
      %3103 = vmatpush2.bf16.msra.mxu0 0
      %3104 = vmatprep.subr.bf16.mxu0 0
      %3105 = vmatpush2.bf16.msra.mxu0 0
      %3106 = vmatprep.subr.bf16.mxu0 0
      %3107 = vmatpush2.bf16.msra.mxu0 0
      %3108 = vmatprep.subr.bf16.mxu0 0
      %3109 = vmatpush2.bf16.msra.mxu0 0
      %3110 = vmatprep.subr.bf16.mxu0 0
      %3111 = vmatpush2.bf16.msra.mxu0 0
      %3112 = vmatprep.subr.bf16.mxu0 0
      %3113 = vmatpush2.bf16.msra.mxu0 0
      %3114 = vmatprep.subr.bf16.mxu0 0
      %3115 = vmatpush2.bf16.msra.mxu0 0
      %3116 = vmatprep.subr.bf16.mxu0 0
      %3117 = vmatpush2.bf16.msra.mxu0 0
      %3118 = vmatprep.mubr.bf16.mxu0 0
      %3119 = vmatmul.mubr.bf16.gmra.mxu0 %v3070
      %v3120 = vpop.f32.mrf.mxu0
      %v3121 = vadd.f32 0.0, %v3120
      %v3122 = vpop.f32.mrf.mxu0
      %v3123 = vpop.f32.mrf.mxu0
      %v3124 = vadd.f32 0.0, %v3123
      %v3125 = vpop.f32.mrf.mxu0
      %3126 = vmatprep.mubr.bf16.mxu0 0
      %3127 = vmatmul.mubr.bf16.gmra.mxu0 %v3072
      %v3128 = vpop.f32.mrf.mxu0
      %v3129 = vadd.f32 0.0, %v3128
      %v3130 = vpop.f32.mrf.mxu0
      %v3131 = vpop.f32.mrf.mxu0
      %v3132 = vadd.f32 0.0, %v3131
      %v3133 = vpop.f32.mrf.mxu0
      %3134 = vmatprep.mubr.bf16.mxu0 0
      %3135 = vmatmul.mubr.bf16.gmra.mxu0 %v3074
      %v3136 = vpop.f32.mrf.mxu0
      %v3137 = vadd.f32 0.0, %v3136
      %v3138 = vpop.f32.mrf.mxu0
      %v3139 = vpop.f32.mrf.mxu0
      %v3140 = vadd.f32 0.0, %v3139
      %v3141 = vpop.f32.mrf.mxu0
      %3142 = vmatprep.mubr.bf16.mxu0 0
      %3143 = vmatmul.mubr.bf16.gmra.mxu0 %v3076
      %v3144 = vpop.f32.mrf.mxu0
      %v3145 = vadd.f32 0.0, %v3144
      %v3146 = vpop.f32.mrf.mxu0
      %v3147 = vpop.f32.mrf.mxu0
      %v3148 = vadd.f32 0.0, %v3147
      %v3149 = vpop.f32.mrf.mxu0
      %3150 = vmatprep.mubr.bf16.mxu0 0
      %3151 = vmatmul.mubr.bf16.gmra.mxu0 %v3078
      %v3152 = vpop.f32.mrf.mxu0
      %v3153 = vadd.f32 0.0, %v3152
      %v3154 = vpop.f32.mrf.mxu0
      %v3155 = vpop.f32.mrf.mxu0
      %v3156 = vadd.f32 0.0, %v3155
      %v3157 = vpop.f32.mrf.mxu0
      %3158 = vmatprep.mubr.bf16.mxu0 0
      %3159 = vmatmul.mubr.bf16.gmra.mxu0 %v3080
      %v3160 = vpop.f32.mrf.mxu0
      %v3161 = vadd.f32 0.0, %v3160
      %v3162 = vpop.f32.mrf.mxu0
      %v3163 = vpop.f32.mrf.mxu0
      %v3164 = vadd.f32 0.0, %v3163
      %v3165 = vpop.f32.mrf.mxu0
      %3166 = vmatprep.mubr.bf16.mxu0 0
      %3167 = vmatmul.mubr.bf16.gmra.mxu0 %v3082
      %v3168 = vpop.f32.mrf.mxu0
      %v3169 = vadd.f32 0.0, %v3168
      %v3170 = vpop.f32.mrf.mxu0
      %v3171 = vpop.f32.mrf.mxu0
      %v3172 = vadd.f32 0.0, %v3171
      %v3173 = vpop.f32.mrf.mxu0
      %3174 = vmatprep.mubr.bf16.mxu0 0
      %3175 = vmatmul.mubr.bf16.gmra.mxu0 %v3084
      %v3176 = vpop.f32.mrf.mxu0
      %v3177 = vadd.f32 0.0, %v3176
      %v3178 = vpop.f32.mrf.mxu0
      %v3179 = vpop.f32.mrf.mxu0
      %v3180 = vadd.f32 0.0, %v3179
      %v3181 = vpop.f32.mrf.mxu0
      %3182 = vdwg.mxu0
      %v3183 = vadd.f32 %v2923, %v3121
      %v3184 = vadd.f32 %v2924, %v3124
      %v3185 = vadd.f32 %v2925, %v3129
      %v3186 = vadd.f32 %v2926, %v3132
      %v3187 = vadd.f32 %v2927, %v3137
      %v3188 = vadd.f32 %v2928, %v3140
      %v3189 = vadd.f32 %v2929, %v3145
      %v3190 = vadd.f32 %v2930, %v3148
      %v3191 = vadd.f32 %v2931, %v3153
      %v3192 = vadd.f32 %v2932, %v3156
      %v3193 = vadd.f32 %v2933, %v3161
      %v3194 = vadd.f32 %v2934, %v3164
      %v3195 = vadd.f32 %v2935, %v3169
      %v3196 = vadd.f32 %v2936, %v3172
      %v3197 = vadd.f32 %v2937, %v3177
      %v3198 = vadd.f32 %v2938, %v3180
      %v3199 = vld [vmem:[%s2378 + $0x4] sm:$0xf]
      %v3200 = vld [vmem:[%s2378 + $0x8] sm:$0xf]
      %v3201 = vld [vmem:[%s2378 + $0xc] sm:$0x1]
      %v3202 = vld [vmem:[%s2378 + $0x14] sm:$0xf]
      %v3203 = vld [vmem:[%s2378 + $0x18] sm:$0xf]
      %v3204 = vld [vmem:[%s2378 + $0x1c] sm:$0x1]
      %v3205 = vld [vmem:[%s2378 + $0x24] sm:$0xf]
      %v3206 = vld [vmem:[%s2378 + $0x28] sm:$0xf]
      %v3207 = vld [vmem:[%s2378 + $0x2c] sm:$0x1]
      %v3208 = vld [vmem:[%s2378 + $0x34] sm:$0xf]
      %v3209 = vld [vmem:[%s2378 + $0x38] sm:$0xf]
      %v3210 = vld [vmem:[%s2378 + $0x3c] sm:$0x1]
      %v3211 = vld [vmem:[%s2378 + $0x44] sm:$0xf]
      %v3212 = vld [vmem:[%s2378 + $0x48] sm:$0xf]
      %v3213 = vld [vmem:[%s2378 + $0x4c] sm:$0x1]
      %v3214 = vld [vmem:[%s2378 + $0x54] sm:$0xf]
      %v3215 = vld [vmem:[%s2378 + $0x58] sm:$0xf]
      %v3216 = vld [vmem:[%s2378 + $0x5c] sm:$0x1]
      %v3217 = vld [vmem:[%s2378 + $0x64] sm:$0xf]
      %v3218 = vld [vmem:[%s2378 + $0x68] sm:$0xf]
      %v3219 = vld [vmem:[%s2378 + $0x6c] sm:$0x1]
      %v3220 = vld [vmem:[%s2378 + $0x74] sm:$0xf]
      %v3221 = vld [vmem:[%s2378 + $0x78] sm:$0xf]
      %v3222 = vld [vmem:[%s2378 + $0x7c] sm:$0x1]
      %v3223 = vld [vmem:[%s2378 + $0x84] sm:$0xf]
      %v3224 = vld [vmem:[%s2378 + $0x88] sm:$0xf]
      %v3225 = vld [vmem:[%s2378 + $0x8c] sm:$0x1]
      %v3226 = vld [vmem:[%s2378 + $0x94] sm:$0xf]
      %v3227 = vld [vmem:[%s2378 + $0x98] sm:$0xf]
      %v3228 = vld [vmem:[%s2378 + $0x9c] sm:$0x1]
      %v3253 = vunpack.c.l.b16 %v3199
      %v3254 = vunpack.c.l.b16 %v3200
      %v3255 = vunpack.c.l.b16 %v3201
      %v3256 = vunpack.c.l.b16 %v3202
      %v3257 = vunpack.c.l.b16 %v3203
      %v3258 = vunpack.c.l.b16 %v3204
      %v3259 = vunpack.c.l.b16 %v3205
      %v3260 = vunpack.c.l.b16 %v3206
      %v3261 = vunpack.c.l.b16 %v3207
      %v3262 = vunpack.c.l.b16 %v3208
      %v3263 = vunpack.c.l.b16 %v3209
      %v3264 = vunpack.c.l.b16 %v3210
      %v3265 = vunpack.c.l.b16 %v3211
      %v3266 = vunpack.c.l.b16 %v3212
      %v3267 = vunpack.c.l.b16 %v3213
      %v3268 = vunpack.c.l.b16 %v3214
      %v3269 = vunpack.c.l.b16 %v3215
      %v3270 = vunpack.c.l.b16 %v3216
      %v3271 = vunpack.c.l.b16 %v3217
      %v3272 = vunpack.c.l.b16 %v3218
      %v3273 = vunpack.c.l.b16 %v3219
      %v3274 = vunpack.c.l.b16 %v3220
      %v3275 = vunpack.c.l.b16 %v3221
      %v3276 = vunpack.c.l.b16 %v3222
      %v3277 = vpack.c.b16 %v3254, %v3253
      %v3278 = vpack.c.b16 %v3255, %v3255
      %v3279 = vpack.c.b16 %v3257, %v3256
      %v3280 = vpack.c.b16 %v3258, %v3258
      %v3281 = vpack.c.b16 %v3260, %v3259
      %v3282 = vpack.c.b16 %v3261, %v3261
      %v3283 = vpack.c.b16 %v3263, %v3262
      %v3284 = vpack.c.b16 %v3264, %v3264
      %v3285 = vpack.c.b16 %v3266, %v3265
      %v3286 = vpack.c.b16 %v3267, %v3267
      %v3287 = vpack.c.b16 %v3269, %v3268
      %v3288 = vpack.c.b16 %v3270, %v3270
      %v3289 = vpack.c.b16 %v3272, %v3271
      %v3290 = vpack.c.b16 %v3273, %v3273
      %v3291 = vpack.c.b16 %v3275, %v3274
      %v3292 = vpack.c.b16 %v3276, %v3276
      %v3296 = vunpack.c.l.b16 %v3223
      %v3297 = vunpack.c.l.b16 %v3224
      %v3298 = vunpack.c.l.b16 %v3225
      %v3299 = vpack.c.b16 %v3297, %v3296
      %v3300 = vpack.c.b16 %v3298, %v3298
      %3301 = vrot.lane.b32.xlu0 %v3279, 32
      %v3302 = vpop.permute.xlu0 %3301
      %3303 = vrot.lane.b32.xlu0 %v3280, 32
      %v3304 = vpop.permute.xlu0 %3303
      %3305 = vrot.lane.b32.xlu0 %v3281, 32
      %v3306 = vpop.permute.xlu0 %3305
      %3307 = vrot.lane.b32.xlu0 %v3282, 32
      %v3308 = vpop.permute.xlu0 %3307
      %3309 = vrot.lane.b32.xlu0 %v3283, 32
      %v3310 = vpop.permute.xlu0 %3309
      %3311 = vrot.lane.b32.xlu0 %v3284, 32
      %v3312 = vpop.permute.xlu0 %3311
      %3313 = vrot.lane.b32.xlu0 %v3285, 32
      %v3314 = vpop.permute.xlu0 %3313
      %3315 = vrot.lane.b32.xlu0 %v3286, 32
      %v3316 = vpop.permute.xlu0 %3315
      %3317 = vrot.lane.b32.xlu0 %v3287, 32
      %v3318 = vpop.permute.xlu0 %3317
      %3319 = vrot.lane.b32.xlu0 %v3288, 32
      %v3320 = vpop.permute.xlu0 %3319
      %3321 = vrot.lane.b32.xlu0 %v3289, 32
      %v3322 = vpop.permute.xlu0 %3321
      %3323 = vrot.lane.b32.xlu0 %v3290, 32
      %v3324 = vpop.permute.xlu0 %3323
      %3325 = vrot.lane.b32.xlu0 %v3291, 32
      %v3326 = vpop.permute.xlu0 %3325
      %3327 = vrot.lane.b32.xlu0 %v3292, 32
      %v3328 = vpop.permute.xlu0 %3327
      %3329 = vrot.lane.b32.xlu0 %v3299, 32
      %v3330 = vpop.permute.xlu0 %3329
      %3331 = vrot.lane.b32.xlu0 %v3300, 32
      %v3332 = vpop.permute.xlu0 %3331
      %v3336 = vunpack.c.l.b16 %v3226
      %v3337 = vunpack.c.l.b16 %v3227
      %v3338 = vunpack.c.l.b16 %v3228
      %v3339 = vpack.c.b16 %v3337, %v3336
      %v3340 = vpack.c.b16 %v3338, %v3338
      %3341 = vrot.lane.b32.xlu0 %v3281, 64
      %v3342 = vpop.permute.xlu0 %3341
      %3343 = vrot.lane.b32.xlu0 %v3282, 64
      %v3344 = vpop.permute.xlu0 %3343
      %3345 = vrot.lane.b32.xlu0 %v3283, 64
      %v3346 = vpop.permute.xlu0 %3345
      %3347 = vrot.lane.b32.xlu0 %v3284, 64
      %v3348 = vpop.permute.xlu0 %3347
      %3349 = vrot.lane.b32.xlu0 %v3285, 64
      %v3350 = vpop.permute.xlu0 %3349
      %3351 = vrot.lane.b32.xlu0 %v3286, 64
      %v3352 = vpop.permute.xlu0 %3351
      %3353 = vrot.lane.b32.xlu0 %v3287, 64
      %v3354 = vpop.permute.xlu0 %3353
      %3355 = vrot.lane.b32.xlu0 %v3288, 64
      %v3356 = vpop.permute.xlu0 %3355
      %3357 = vrot.lane.b32.xlu0 %v3289, 64
      %v3358 = vpop.permute.xlu0 %3357
      %3359 = vrot.lane.b32.xlu0 %v3290, 64
      %v3360 = vpop.permute.xlu0 %3359
      %3361 = vrot.lane.b32.xlu0 %v3291, 64
      %v3362 = vpop.permute.xlu0 %3361
      %3363 = vrot.lane.b32.xlu0 %v3292, 64
      %v3364 = vpop.permute.xlu0 %3363
      %3365 = vrot.lane.b32.xlu0 %v3299, 64
      %v3366 = vpop.permute.xlu0 %3365
      %3367 = vrot.lane.b32.xlu0 %v3300, 64
      %v3368 = vpop.permute.xlu0 %3367
      %3369 = vrot.lane.b32.xlu0 %v3339, 64
      %v3370 = vpop.permute.xlu0 %3369
      %3371 = vrot.lane.b32.xlu0 %v3340, 64
      %v3372 = vpop.permute.xlu0 %3371
      %v3375 = vsel %vm1224, %v3277, %v3302
      %v3378 = vsel %vm1224, %v3278, %v3304
      %v3381 = vsel %vm1224, %v3279, %v3306
      %v3384 = vsel %vm1224, %v3280, %v3308
      %v3387 = vsel %vm1224, %v3281, %v3310
      %v3390 = vsel %vm1224, %v3282, %v3312
      %v3393 = vsel %vm1224, %v3283, %v3314
      %v3396 = vsel %vm1224, %v3284, %v3316
      %v3399 = vsel %vm1224, %v3285, %v3318
      %v3402 = vsel %vm1224, %v3286, %v3320
      %v3405 = vsel %vm1224, %v3287, %v3322
      %v3408 = vsel %vm1224, %v3288, %v3324
      %v3411 = vsel %vm1224, %v3289, %v3326
      %v3414 = vsel %vm1224, %v3290, %v3328
      %v3417 = vsel %vm1224, %v3291, %v3330
      %v3420 = vsel %vm1224, %v3292, %v3332
      %v3422 = vsel %vm1273, %v3375, %v3342
      %v3424 = vsel %vm1273, %v3378, %v3344
      %v3426 = vsel %vm1273, %v3381, %v3346
      %v3428 = vsel %vm1273, %v3384, %v3348
      %v3430 = vsel %vm1273, %v3387, %v3350
      %v3432 = vsel %vm1273, %v3390, %v3352
      %v3434 = vsel %vm1273, %v3393, %v3354
      %v3436 = vsel %vm1273, %v3396, %v3356
      %v3438 = vsel %vm1273, %v3399, %v3358
      %v3440 = vsel %vm1273, %v3402, %v3360
      %v3442 = vsel %vm1273, %v3405, %v3362
      %v3444 = vsel %vm1273, %v3408, %v3364
      %v3446 = vsel %vm1273, %v3411, %v3366
      %v3448 = vsel %vm1273, %v3414, %v3368
      %v3450 = vsel %vm1273, %v3417, %v3370
      %v3452 = vsel %vm1273, %v3420, %v3372
      %v3453 = vshrl.u32 %v3422, 16
      %v3455 = vshll.u32 %v3422, 16
      %v3457 = vrot.slane %v3455, 1
      %v3458 = vor.u32 %v3453, %v3457
      %v3459 = vshll.u32 %v3424, 16
      %v3461 = vrot.slane %v3459, 1
      %v3462 = vsel %vm2095, %v3458, %v3461
      %v3463 = vshrl.u32 %v3426, 16
      %v3465 = vshll.u32 %v3426, 16
      %v3467 = vrot.slane %v3465, 1
      %v3468 = vor.u32 %v3463, %v3467
      %v3469 = vshll.u32 %v3428, 16
      %v3471 = vrot.slane %v3469, 1
      %v3472 = vsel %vm2095, %v3468, %v3471
      %v3473 = vshrl.u32 %v3430, 16
      %v3475 = vshll.u32 %v3430, 16
      %v3477 = vrot.slane %v3475, 1
      %v3478 = vor.u32 %v3473, %v3477
      %v3479 = vshll.u32 %v3432, 16
      %v3481 = vrot.slane %v3479, 1
      %v3482 = vsel %vm2095, %v3478, %v3481
      %v3483 = vshrl.u32 %v3434, 16
      %v3485 = vshll.u32 %v3434, 16
      %v3487 = vrot.slane %v3485, 1
      %v3488 = vor.u32 %v3483, %v3487
      %v3489 = vshll.u32 %v3436, 16
      %v3491 = vrot.slane %v3489, 1
      %v3492 = vsel %vm2095, %v3488, %v3491
      %v3493 = vshrl.u32 %v3438, 16
      %v3495 = vshll.u32 %v3438, 16
      %v3497 = vrot.slane %v3495, 1
      %v3498 = vor.u32 %v3493, %v3497
      %v3499 = vshll.u32 %v3440, 16
      %v3501 = vrot.slane %v3499, 1
      %v3502 = vsel %vm2095, %v3498, %v3501
      %v3503 = vshrl.u32 %v3442, 16
      %v3505 = vshll.u32 %v3442, 16
      %v3507 = vrot.slane %v3505, 1
      %v3508 = vor.u32 %v3503, %v3507
      %v3509 = vshll.u32 %v3444, 16
      %v3511 = vrot.slane %v3509, 1
      %v3512 = vsel %vm2095, %v3508, %v3511
      %v3513 = vshrl.u32 %v3446, 16
      %v3515 = vshll.u32 %v3446, 16
      %v3517 = vrot.slane %v3515, 1
      %v3518 = vor.u32 %v3513, %v3517
      %v3519 = vshll.u32 %v3448, 16
      %v3521 = vrot.slane %v3519, 1
      %v3522 = vsel %vm2095, %v3518, %v3521
      %v3523 = vshrl.u32 %v3450, 16
      %v3525 = vshll.u32 %v3450, 16
      %v3527 = vrot.slane %v3525, 1
      %v3528 = vor.u32 %v3523, %v3527
      %v3529 = vshll.u32 %v3452, 16
      %v3531 = vrot.slane %v3529, 1
      %v3532 = vsel %vm2095, %v3528, %v3531
      %s3533 = scalar_lea.vmem %s5, 240
      %v3534 = vld [vmem:[%s3533] sm:$0xf]
      %v3535 = vld [vmem:[%s3533 + $0x4] sm:$0xf]
      %v3536 = vld [vmem:[%s3533 + $0x8] sm:$0xf]
      %v3537 = vld [vmem:[%s3533 + $0xc] sm:$0xf]
      %v3538 = vld [vmem:[%s3533 + $0x10] sm:$0xf]
      %v3539 = vld [vmem:[%s3533 + $0x14] sm:$0xf]
      %v3540 = vld [vmem:[%s3533 + $0x18] sm:$0xf]
      %v3541 = vld [vmem:[%s3533 + $0x1c] sm:$0xf]
      %v3542 = vld [vmem:[%s3533 + $0x20] sm:$0xf]
      %v3543 = vld [vmem:[%s3533 + $0x24] sm:$0xf]
      %v3544 = vld [vmem:[%s3533 + $0x28] sm:$0xf]
      %v3545 = vld [vmem:[%s3533 + $0x2c] sm:$0xf]
      %v3558 = vunpack.c.l.b16 %v3534
      %v3559 = vunpack.c.l.b16 %v3535
      %v3560 = vunpack.c.l.b16 %v3536
      %v3561 = vunpack.c.l.b16 %v3537
      %v3562 = vunpack.c.l.b16 %v3538
      %v3563 = vunpack.c.l.b16 %v3539
      %v3564 = vunpack.c.l.b16 %v3540
      %v3565 = vunpack.c.l.b16 %v3541
      %v3566 = vunpack.c.l.b16 %v3542
      %v3567 = vunpack.c.l.b16 %v3543
      %v3568 = vunpack.c.l.b16 %v3544
      %v3569 = vunpack.c.l.b16 %v3545
      %v3570 = vpack.c.b16 %v3559, %v3558
      %v3571 = vpack.c.b16 %v3561, %v3560
      %v3572 = vpack.c.b16 %v3563, %v3562
      %v3573 = vpack.c.b16 %v3565, %v3564
      %v3574 = vpack.c.b16 %v3567, %v3566
      %v3575 = vpack.c.b16 %v3569, %v3568
      %v3583 = vsel %vm1570, %v3462, 0
      %v3586 = vsel %vm1570, %v3472, 0
      %v3589 = vsel %vm1570, %v3482, 0
      %v3592 = vsel %vm1570, %v3492, 0
      %v3595 = vsel %vm1570, %v3502, 0
      %v3598 = vsel %vm1570, %v3512, 0
      %v3601 = vsel %vm1570, %v3522, 0
      %v3604 = vsel %vm1570, %v3532, 0
      %3606 = vmatprep.subr.bf16.mxu0 0
      %3607 = vmatpush1.bf16.msra.mxu0 0
      %3608 = vmatprep.subr.bf16.mxu0 0
      %3609 = vmatpush1.bf16.msra.mxu0 0
      %3610 = vmatprep.subr.bf16.mxu0 0
      %3611 = vmatpush1.bf16.msra.mxu0 %v3575
      %3612 = vmatprep.subr.bf16.mxu0 0
      %3613 = vmatpush1.bf16.msra.mxu0 %v3574
      %3614 = vmatprep.subr.bf16.mxu0 0
      %3615 = vmatpush1.bf16.msra.mxu0 %v3573
      %3616 = vmatprep.subr.bf16.mxu0 0
      %3617 = vmatpush1.bf16.msra.mxu0 %v3572
      %3618 = vmatprep.subr.bf16.mxu0 0
      %3619 = vmatpush1.bf16.msra.mxu0 %v3571
      %3620 = vmatprep.subr.bf16.mxu0 0
      %3621 = vmatpush1.bf16.msra.mxu0 %v3570
      %3622 = vmatprep.subr.bf16.mxu0 0
      %3623 = vmatpush2.bf16.msra.mxu0 0
      %3624 = vmatprep.subr.bf16.mxu0 0
      %3625 = vmatpush2.bf16.msra.mxu0 0
      %3626 = vmatprep.subr.bf16.mxu0 0
      %3627 = vmatpush2.bf16.msra.mxu0 0
      %3628 = vmatprep.subr.bf16.mxu0 0
      %3629 = vmatpush2.bf16.msra.mxu0 0
      %3630 = vmatprep.subr.bf16.mxu0 0
      %3631 = vmatpush2.bf16.msra.mxu0 0
      %3632 = vmatprep.subr.bf16.mxu0 0
      %3633 = vmatpush2.bf16.msra.mxu0 0
      %3634 = vmatprep.subr.bf16.mxu0 0
      %3635 = vmatpush2.bf16.msra.mxu0 0
      %3636 = vmatprep.subr.bf16.mxu0 0
      %3637 = vmatpush2.bf16.msra.mxu0 0
      %3638 = vmatprep.mubr.bf16.mxu0 0
      %3639 = vmatmul.mubr.bf16.gmra.mxu0 %v3583
      %v3640 = vpop.f32.mrf.mxu0
      %v3641 = vadd.f32 0.0, %v3640
      %v3642 = vpop.f32.mrf.mxu0
      %v3643 = vpop.f32.mrf.mxu0
      %v3644 = vadd.f32 0.0, %v3643
      %v3645 = vpop.f32.mrf.mxu0
      %3646 = vmatprep.mubr.bf16.mxu0 0
      %3647 = vmatmul.mubr.bf16.gmra.mxu0 %v3586
      %v3648 = vpop.f32.mrf.mxu0
      %v3649 = vadd.f32 0.0, %v3648
      %v3650 = vpop.f32.mrf.mxu0
      %v3651 = vpop.f32.mrf.mxu0
      %v3652 = vadd.f32 0.0, %v3651
      %v3653 = vpop.f32.mrf.mxu0
      %3654 = vmatprep.mubr.bf16.mxu0 0
      %3655 = vmatmul.mubr.bf16.gmra.mxu0 %v3589
      %v3656 = vpop.f32.mrf.mxu0
      %v3657 = vadd.f32 0.0, %v3656
      %v3658 = vpop.f32.mrf.mxu0
      %v3659 = vpop.f32.mrf.mxu0
      %v3660 = vadd.f32 0.0, %v3659
      %v3661 = vpop.f32.mrf.mxu0
      %3662 = vmatprep.mubr.bf16.mxu0 0
      %3663 = vmatmul.mubr.bf16.gmra.mxu0 %v3592
      %v3664 = vpop.f32.mrf.mxu0
      %v3665 = vadd.f32 0.0, %v3664
      %v3666 = vpop.f32.mrf.mxu0
      %v3667 = vpop.f32.mrf.mxu0
      %v3668 = vadd.f32 0.0, %v3667
      %v3669 = vpop.f32.mrf.mxu0
      %3670 = vmatprep.mubr.bf16.mxu0 0
      %3671 = vmatmul.mubr.bf16.gmra.mxu0 %v3595
      %v3672 = vpop.f32.mrf.mxu0
      %v3673 = vadd.f32 0.0, %v3672
      %v3674 = vpop.f32.mrf.mxu0
      %v3675 = vpop.f32.mrf.mxu0
      %v3676 = vadd.f32 0.0, %v3675
      %v3677 = vpop.f32.mrf.mxu0
      %3678 = vmatprep.mubr.bf16.mxu0 0
      %3679 = vmatmul.mubr.bf16.gmra.mxu0 %v3598
      %v3680 = vpop.f32.mrf.mxu0
      %v3681 = vadd.f32 0.0, %v3680
      %v3682 = vpop.f32.mrf.mxu0
      %v3683 = vpop.f32.mrf.mxu0
      %v3684 = vadd.f32 0.0, %v3683
      %v3685 = vpop.f32.mrf.mxu0
      %3686 = vmatprep.mubr.bf16.mxu0 0
      %3687 = vmatmul.mubr.bf16.gmra.mxu0 %v3601
      %v3688 = vpop.f32.mrf.mxu0
      %v3689 = vadd.f32 0.0, %v3688
      %v3690 = vpop.f32.mrf.mxu0
      %v3691 = vpop.f32.mrf.mxu0
      %v3692 = vadd.f32 0.0, %v3691
      %v3693 = vpop.f32.mrf.mxu0
      %3694 = vmatprep.mubr.bf16.mxu0 0
      %3695 = vmatmul.mubr.bf16.gmra.mxu0 %v3604
      %v3696 = vpop.f32.mrf.mxu0
      %v3697 = vadd.f32 0.0, %v3696
      %v3698 = vpop.f32.mrf.mxu0
      %v3699 = vpop.f32.mrf.mxu0
      %v3700 = vadd.f32 0.0, %v3699
      %v3701 = vpop.f32.mrf.mxu0
      %3702 = vdwg.mxu0
      %v3703 = vadd.f32 %v3183, %v3641
      %v3704 = vadd.f32 %v3184, %v3644
      %v3705 = vadd.f32 %v3185, %v3649
      %v3706 = vadd.f32 %v3186, %v3652
      %v3707 = vadd.f32 %v3187, %v3657
      %v3708 = vadd.f32 %v3188, %v3660
      %v3709 = vadd.f32 %v3189, %v3665
      %v3710 = vadd.f32 %v3190, %v3668
      %v3711 = vadd.f32 %v3191, %v3673
      %v3712 = vadd.f32 %v3192, %v3676
      %v3713 = vadd.f32 %v3193, %v3681
      %v3714 = vadd.f32 %v3194, %v3684
      %v3715 = vadd.f32 %v3195, %v3689
      %v3716 = vadd.f32 %v3196, %v3692
      %v3717 = vadd.f32 %v3197, %v3697
      %v3718 = vadd.f32 %v3198, %v3700
      %s3719 = sadd.s32 %s25, 3
      %p3720 = scmp.lt.s32.totalorder %s3719, 0
      %s3721 = ssub.s32 0, %s3719
      %s3722 = scalar_select %p3720, %s3721, %s3719
      %s3723 = sdiv.u32.pop %s3722, 3
      %s3724 = srem.u32.pop %s3722, 3
      %s3725 = ssub.s32 0, %s3724
      %s3726 = scalar_select %p3720, %s3725, %s3724
      %p3727 = scmp.ne.s32.totalorder %s3726, 0
      %p3728 = scmp.lt.s32.totalorder %s3726, 0
      %p3729 = pnand %p3728, %p3727
      %p3730 = pneg %p3729
      %s3731 = sadd.s32 %s3726, 3
      %s3732 = scalar_select %p3730, %s3731, %s3726
      %s3733 = smul.u32 %s3732, 40
      %s3734 = smul.addr %s3733, 4
      %s3735 = scalar_lea.vmem [#allocation2], %s3734
      %v3736 = vld [vmem:[%s3735] sm:$0x8]
      %v3737 = vld [vmem:[%s3735 + $0x4] sm:$0xf]
      %v3738 = vld [vmem:[%s3735 + $0x8] sm:$0xf]
      %v3739 = vld [vmem:[%s3735 + $0x10] sm:$0x8]
      %v3740 = vld [vmem:[%s3735 + $0x14] sm:$0xf]
      %v3741 = vld [vmem:[%s3735 + $0x18] sm:$0xf]
      %v3742 = vld [vmem:[%s3735 + $0x20] sm:$0x8]
      %v3743 = vld [vmem:[%s3735 + $0x24] sm:$0xf]
      %v3744 = vld [vmem:[%s3735 + $0x28] sm:$0xf]
      %v3745 = vld [vmem:[%s3735 + $0x30] sm:$0x8]
      %v3746 = vld [vmem:[%s3735 + $0x34] sm:$0xf]
      %v3747 = vld [vmem:[%s3735 + $0x38] sm:$0xf]
      %v3748 = vld [vmem:[%s3735 + $0x40] sm:$0x8]
      %v3749 = vld [vmem:[%s3735 + $0x44] sm:$0xf]
      %v3750 = vld [vmem:[%s3735 + $0x48] sm:$0xf]
      %v3751 = vld [vmem:[%s3735 + $0x50] sm:$0x8]
      %v3752 = vld [vmem:[%s3735 + $0x54] sm:$0xf]
      %v3753 = vld [vmem:[%s3735 + $0x58] sm:$0xf]
      %v3754 = vld [vmem:[%s3735 + $0x60] sm:$0x8]
      %v3755 = vld [vmem:[%s3735 + $0x64] sm:$0xf]
      %v3756 = vld [vmem:[%s3735 + $0x68] sm:$0xf]
      %v3757 = vld [vmem:[%s3735 + $0x70] sm:$0x8]
      %v3758 = vld [vmem:[%s3735 + $0x74] sm:$0xf]
      %v3759 = vld [vmem:[%s3735 + $0x78] sm:$0xf]
      %v3760 = vld [vmem:[%s3735 + $0x80] sm:$0x8]
      %v3761 = vld [vmem:[%s3735 + $0x84] sm:$0xf]
      %v3762 = vld [vmem:[%s3735 + $0x88] sm:$0xf]
      %v3763 = vld [vmem:[%s3735 + $0x90] sm:$0x8]
      %v3764 = vld [vmem:[%s3735 + $0x94] sm:$0xf]
      %v3765 = vld [vmem:[%s3735 + $0x98] sm:$0xf]
      %v3790 = vunpack.c.l.b16 %v3736
      %v3791 = vunpack.c.l.b16 %v3737
      %v3792 = vunpack.c.l.b16 %v3738
      %v3793 = vunpack.c.l.b16 %v3739
      %v3794 = vunpack.c.l.b16 %v3740
      %v3795 = vunpack.c.l.b16 %v3741
      %v3796 = vunpack.c.l.b16 %v3742
      %v3797 = vunpack.c.l.b16 %v3743
      %v3798 = vunpack.c.l.b16 %v3744
      %v3799 = vunpack.c.l.b16 %v3745
      %v3800 = vunpack.c.l.b16 %v3746
      %v3801 = vunpack.c.l.b16 %v3747
      %v3802 = vunpack.c.l.b16 %v3748
      %v3803 = vunpack.c.l.b16 %v3749
      %v3804 = vunpack.c.l.b16 %v3750
      %v3805 = vunpack.c.l.b16 %v3751
      %v3806 = vunpack.c.l.b16 %v3752
      %v3807 = vunpack.c.l.b16 %v3753
      %v3808 = vunpack.c.l.b16 %v3754
      %v3809 = vunpack.c.l.b16 %v3755
      %v3810 = vunpack.c.l.b16 %v3756
      %v3811 = vunpack.c.l.b16 %v3757
      %v3812 = vunpack.c.l.b16 %v3758
      %v3813 = vunpack.c.l.b16 %v3759
      %v3814 = vpack.c.b16 %v3791, %v3790
      %v3815 = vpack.c.b16 %v3792, %v3792
      %v3816 = vpack.c.b16 %v3794, %v3793
      %v3817 = vpack.c.b16 %v3795, %v3795
      %v3818 = vpack.c.b16 %v3797, %v3796
      %v3819 = vpack.c.b16 %v3798, %v3798
      %v3820 = vpack.c.b16 %v3800, %v3799
      %v3821 = vpack.c.b16 %v3801, %v3801
      %v3822 = vpack.c.b16 %v3803, %v3802
      %v3823 = vpack.c.b16 %v3804, %v3804
      %v3824 = vpack.c.b16 %v3806, %v3805
      %v3825 = vpack.c.b16 %v3807, %v3807
      %v3826 = vpack.c.b16 %v3809, %v3808
      %v3827 = vpack.c.b16 %v3810, %v3810
      %v3828 = vpack.c.b16 %v3812, %v3811
      %v3829 = vpack.c.b16 %v3813, %v3813
      %v3833 = vunpack.c.l.b16 %v3760
      %v3834 = vunpack.c.l.b16 %v3761
      %v3835 = vunpack.c.l.b16 %v3762
      %v3836 = vpack.c.b16 %v3834, %v3833
      %v3837 = vpack.c.b16 %v3835, %v3835
      %3838 = vrot.lane.b32.xlu0 %v3816, 32
      %v3839 = vpop.permute.xlu0 %3838
      %3840 = vrot.lane.b32.xlu0 %v3817, 32
      %v3841 = vpop.permute.xlu0 %3840
      %3842 = vrot.lane.b32.xlu0 %v3818, 32
      %v3843 = vpop.permute.xlu0 %3842
      %3844 = vrot.lane.b32.xlu0 %v3819, 32
      %v3845 = vpop.permute.xlu0 %3844
      %3846 = vrot.lane.b32.xlu0 %v3820, 32
      %v3847 = vpop.permute.xlu0 %3846
      %3848 = vrot.lane.b32.xlu0 %v3821, 32
      %v3849 = vpop.permute.xlu0 %3848
      %3850 = vrot.lane.b32.xlu0 %v3822, 32
      %v3851 = vpop.permute.xlu0 %3850
      %3852 = vrot.lane.b32.xlu0 %v3823, 32
      %v3853 = vpop.permute.xlu0 %3852
      %3854 = vrot.lane.b32.xlu0 %v3824, 32
      %v3855 = vpop.permute.xlu0 %3854
      %3856 = vrot.lane.b32.xlu0 %v3825, 32
      %v3857 = vpop.permute.xlu0 %3856
      %3858 = vrot.lane.b32.xlu0 %v3826, 32
      %v3859 = vpop.permute.xlu0 %3858
      %3860 = vrot.lane.b32.xlu0 %v3827, 32
      %v3861 = vpop.permute.xlu0 %3860
      %3862 = vrot.lane.b32.xlu0 %v3828, 32
      %v3863 = vpop.permute.xlu0 %3862
      %3864 = vrot.lane.b32.xlu0 %v3829, 32
      %v3865 = vpop.permute.xlu0 %3864
      %3866 = vrot.lane.b32.xlu0 %v3836, 32
      %v3867 = vpop.permute.xlu0 %3866
      %3868 = vrot.lane.b32.xlu0 %v3837, 32
      %v3869 = vpop.permute.xlu0 %3868
      %v3873 = vunpack.c.l.b16 %v3763
      %v3874 = vunpack.c.l.b16 %v3764
      %v3875 = vunpack.c.l.b16 %v3765
      %v3876 = vpack.c.b16 %v3874, %v3873
      %v3877 = vpack.c.b16 %v3875, %v3875
      %3878 = vrot.lane.b32.xlu0 %v3818, 64
      %v3879 = vpop.permute.xlu0 %3878
      %3880 = vrot.lane.b32.xlu0 %v3819, 64
      %v3881 = vpop.permute.xlu0 %3880
      %3882 = vrot.lane.b32.xlu0 %v3820, 64
      %v3883 = vpop.permute.xlu0 %3882
      %3884 = vrot.lane.b32.xlu0 %v3821, 64
      %v3885 = vpop.permute.xlu0 %3884
      %3886 = vrot.lane.b32.xlu0 %v3822, 64
      %v3887 = vpop.permute.xlu0 %3886
      %3888 = vrot.lane.b32.xlu0 %v3823, 64
      %v3889 = vpop.permute.xlu0 %3888
      %3890 = vrot.lane.b32.xlu0 %v3824, 64
      %v3891 = vpop.permute.xlu0 %3890
      %3892 = vrot.lane.b32.xlu0 %v3825, 64
      %v3893 = vpop.permute.xlu0 %3892
      %3894 = vrot.lane.b32.xlu0 %v3826, 64
      %v3895 = vpop.permute.xlu0 %3894
      %3896 = vrot.lane.b32.xlu0 %v3827, 64
      %v3897 = vpop.permute.xlu0 %3896
      %3898 = vrot.lane.b32.xlu0 %v3828, 64
      %v3899 = vpop.permute.xlu0 %3898
      %3900 = vrot.lane.b32.xlu0 %v3829, 64
      %v3901 = vpop.permute.xlu0 %3900
      %3902 = vrot.lane.b32.xlu0 %v3836, 64
      %v3903 = vpop.permute.xlu0 %3902
      %3904 = vrot.lane.b32.xlu0 %v3837, 64
      %v3905 = vpop.permute.xlu0 %3904
      %3906 = vrot.lane.b32.xlu0 %v3876, 64
      %v3907 = vpop.permute.xlu0 %3906
      %3908 = vrot.lane.b32.xlu0 %v3877, 64
      %v3909 = vpop.permute.xlu0 %3908
      %v3912 = vsel %vm1224, %v3814, %v3839
      %v3915 = vsel %vm1224, %v3815, %v3841
      %v3918 = vsel %vm1224, %v3816, %v3843
      %v3921 = vsel %vm1224, %v3817, %v3845
      %v3924 = vsel %vm1224, %v3818, %v3847
      %v3927 = vsel %vm1224, %v3819, %v3849
      %v3930 = vsel %vm1224, %v3820, %v3851
      %v3933 = vsel %vm1224, %v3821, %v3853
      %v3936 = vsel %vm1224, %v3822, %v3855
      %v3939 = vsel %vm1224, %v3823, %v3857
      %v3942 = vsel %vm1224, %v3824, %v3859
      %v3945 = vsel %vm1224, %v3825, %v3861
      %v3948 = vsel %vm1224, %v3826, %v3863
      %v3951 = vsel %vm1224, %v3827, %v3865
      %v3954 = vsel %vm1224, %v3828, %v3867
      %v3957 = vsel %vm1224, %v3829, %v3869
      %v3959 = vsel %vm1273, %v3912, %v3879
      %v3961 = vsel %vm1273, %v3915, %v3881
      %v3963 = vsel %vm1273, %v3918, %v3883
      %v3965 = vsel %vm1273, %v3921, %v3885
      %v3967 = vsel %vm1273, %v3924, %v3887
      %v3969 = vsel %vm1273, %v3927, %v3889
      %v3971 = vsel %vm1273, %v3930, %v3891
      %v3973 = vsel %vm1273, %v3933, %v3893
      %v3975 = vsel %vm1273, %v3936, %v3895
      %v3977 = vsel %vm1273, %v3939, %v3897
      %v3979 = vsel %vm1273, %v3942, %v3899
      %v3981 = vsel %vm1273, %v3945, %v3901
      %v3983 = vsel %vm1273, %v3948, %v3903
      %v3985 = vsel %vm1273, %v3951, %v3905
      %v3987 = vsel %vm1273, %v3954, %v3907
      %v3989 = vsel %vm1273, %v3957, %v3909
      %v3990 = vshrl.u32 %v3959, 16
      %v3992 = vrot.slane %v3990, 3
      %v3993 = vshll.u32 %v3959, 16
      %v3995 = vrot.slane %v3993, 4
      %v3996 = vor.u32 %v3992, %v3995
      %v3997 = vshrl.u32 %v3961, 16
      %v3999 = vrot.slane %v3997, 3
      %v4000 = vshll.u32 %v3961, 16
      %v4002 = vrot.slane %v4000, 4
      %v4003 = vor.u32 %v3999, %v4002
      %v4004 = vsel %vm1306, %v3996, %v4003
      %v4005 = vshrl.u32 %v3963, 16
      %v4007 = vrot.slane %v4005, 3
      %v4008 = vshll.u32 %v3963, 16
      %v4010 = vrot.slane %v4008, 4
      %v4011 = vor.u32 %v4007, %v4010
      %v4012 = vshrl.u32 %v3965, 16
      %v4014 = vrot.slane %v4012, 3
      %v4015 = vshll.u32 %v3965, 16
      %v4017 = vrot.slane %v4015, 4
      %v4018 = vor.u32 %v4014, %v4017
      %v4019 = vsel %vm1306, %v4011, %v4018
      %v4020 = vshrl.u32 %v3967, 16
      %v4022 = vrot.slane %v4020, 3
      %v4023 = vshll.u32 %v3967, 16
      %v4025 = vrot.slane %v4023, 4
      %v4026 = vor.u32 %v4022, %v4025
      %v4027 = vshrl.u32 %v3969, 16
      %v4029 = vrot.slane %v4027, 3
      %v4030 = vshll.u32 %v3969, 16
      %v4032 = vrot.slane %v4030, 4
      %v4033 = vor.u32 %v4029, %v4032
      %v4034 = vsel %vm1306, %v4026, %v4033
      %v4035 = vshrl.u32 %v3971, 16
      %v4037 = vrot.slane %v4035, 3
      %v4038 = vshll.u32 %v3971, 16
      %v4040 = vrot.slane %v4038, 4
      %v4041 = vor.u32 %v4037, %v4040
      %v4042 = vshrl.u32 %v3973, 16
      %v4044 = vrot.slane %v4042, 3
      %v4045 = vshll.u32 %v3973, 16
      %v4047 = vrot.slane %v4045, 4
      %v4048 = vor.u32 %v4044, %v4047
      %v4049 = vsel %vm1306, %v4041, %v4048
      %v4050 = vshrl.u32 %v3975, 16
      %v4052 = vrot.slane %v4050, 3
      %v4053 = vshll.u32 %v3975, 16
      %v4055 = vrot.slane %v4053, 4
      %v4056 = vor.u32 %v4052, %v4055
      %v4057 = vshrl.u32 %v3977, 16
      %v4059 = vrot.slane %v4057, 3
      %v4060 = vshll.u32 %v3977, 16
      %v4062 = vrot.slane %v4060, 4
      %v4063 = vor.u32 %v4059, %v4062
      %v4064 = vsel %vm1306, %v4056, %v4063
      %v4065 = vshrl.u32 %v3979, 16
      %v4067 = vrot.slane %v4065, 3
      %v4068 = vshll.u32 %v3979, 16
      %v4070 = vrot.slane %v4068, 4
      %v4071 = vor.u32 %v4067, %v4070
      %v4072 = vshrl.u32 %v3981, 16
      %v4074 = vrot.slane %v4072, 3
      %v4075 = vshll.u32 %v3981, 16
      %v4077 = vrot.slane %v4075, 4
      %v4078 = vor.u32 %v4074, %v4077
      %v4079 = vsel %vm1306, %v4071, %v4078
      %v4080 = vshrl.u32 %v3983, 16
      %v4082 = vrot.slane %v4080, 3
      %v4083 = vshll.u32 %v3983, 16
      %v4085 = vrot.slane %v4083, 4
      %v4086 = vor.u32 %v4082, %v4085
      %v4087 = vshrl.u32 %v3985, 16
      %v4089 = vrot.slane %v4087, 3
      %v4090 = vshll.u32 %v3985, 16
      %v4092 = vrot.slane %v4090, 4
      %v4093 = vor.u32 %v4089, %v4092
      %v4094 = vsel %vm1306, %v4086, %v4093
      %v4095 = vshrl.u32 %v3987, 16
      %v4097 = vrot.slane %v4095, 3
      %v4098 = vshll.u32 %v3987, 16
      %v4100 = vrot.slane %v4098, 4
      %v4101 = vor.u32 %v4097, %v4100
      %v4102 = vshrl.u32 %v3989, 16
      %v4104 = vrot.slane %v4102, 3
      %v4105 = vshll.u32 %v3989, 16
      %v4107 = vrot.slane %v4105, 4
      %v4108 = vor.u32 %v4104, %v4107
      %v4109 = vsel %vm1306, %v4101, %v4108
      %s4110 = scalar_lea.vmem %s5, 288
      %v4111 = vld [vmem:[%s4110] sm:$0xf]
      %v4112 = vld [vmem:[%s4110 + $0x4] sm:$0xf]
      %v4113 = vld [vmem:[%s4110 + $0x8] sm:$0xf]
      %v4114 = vld [vmem:[%s4110 + $0xc] sm:$0xf]
      %v4115 = vld [vmem:[%s4110 + $0x10] sm:$0xf]
      %v4116 = vld [vmem:[%s4110 + $0x14] sm:$0xf]
      %v4117 = vld [vmem:[%s4110 + $0x18] sm:$0xf]
      %v4118 = vld [vmem:[%s4110 + $0x1c] sm:$0xf]
      %v4119 = vld [vmem:[%s4110 + $0x20] sm:$0xf]
      %v4120 = vld [vmem:[%s4110 + $0x24] sm:$0xf]
      %v4121 = vld [vmem:[%s4110 + $0x28] sm:$0xf]
      %v4122 = vld [vmem:[%s4110 + $0x2c] sm:$0xf]
      %v4135 = vunpack.c.l.b16 %v4111
      %v4136 = vunpack.c.l.b16 %v4112
      %v4137 = vunpack.c.l.b16 %v4113
      %v4138 = vunpack.c.l.b16 %v4114
      %v4139 = vunpack.c.l.b16 %v4115
      %v4140 = vunpack.c.l.b16 %v4116
      %v4141 = vunpack.c.l.b16 %v4117
      %v4142 = vunpack.c.l.b16 %v4118
      %v4143 = vunpack.c.l.b16 %v4119
      %v4144 = vunpack.c.l.b16 %v4120
      %v4145 = vunpack.c.l.b16 %v4121
      %v4146 = vunpack.c.l.b16 %v4122
      %v4147 = vpack.c.b16 %v4136, %v4135
      %v4148 = vpack.c.b16 %v4138, %v4137
      %v4149 = vpack.c.b16 %v4140, %v4139
      %v4150 = vpack.c.b16 %v4142, %v4141
      %v4151 = vpack.c.b16 %v4144, %v4143
      %v4152 = vpack.c.b16 %v4146, %v4145
      %v4160 = vsel %vm1570, %v4004, 0
      %v4163 = vsel %vm1570, %v4019, 0
      %v4166 = vsel %vm1570, %v4034, 0
      %v4169 = vsel %vm1570, %v4049, 0
      %v4172 = vsel %vm1570, %v4064, 0
      %v4175 = vsel %vm1570, %v4079, 0
      %v4178 = vsel %vm1570, %v4094, 0
      %v4181 = vsel %vm1570, %v4109, 0
      %4183 = vmatprep.subr.bf16.mxu0 0
      %4184 = vmatpush1.bf16.msra.mxu0 0
      %4185 = vmatprep.subr.bf16.mxu0 0
      %4186 = vmatpush1.bf16.msra.mxu0 0
      %4187 = vmatprep.subr.bf16.mxu0 0
      %4188 = vmatpush1.bf16.msra.mxu0 %v4152
      %4189 = vmatprep.subr.bf16.mxu0 0
      %4190 = vmatpush1.bf16.msra.mxu0 %v4151
      %4191 = vmatprep.subr.bf16.mxu0 0
      %4192 = vmatpush1.bf16.msra.mxu0 %v4150
      %4193 = vmatprep.subr.bf16.mxu0 0
      %4194 = vmatpush1.bf16.msra.mxu0 %v4149
      %4195 = vmatprep.subr.bf16.mxu0 0
      %4196 = vmatpush1.bf16.msra.mxu0 %v4148
      %4197 = vmatprep.subr.bf16.mxu0 0
      %4198 = vmatpush1.bf16.msra.mxu0 %v4147
      %4199 = vmatprep.subr.bf16.mxu0 0
      %4200 = vmatpush2.bf16.msra.mxu0 0
      %4201 = vmatprep.subr.bf16.mxu0 0
      %4202 = vmatpush2.bf16.msra.mxu0 0
      %4203 = vmatprep.subr.bf16.mxu0 0
      %4204 = vmatpush2.bf16.msra.mxu0 0
      %4205 = vmatprep.subr.bf16.mxu0 0
      %4206 = vmatpush2.bf16.msra.mxu0 0
      %4207 = vmatprep.subr.bf16.mxu0 0
      %4208 = vmatpush2.bf16.msra.mxu0 0
      %4209 = vmatprep.subr.bf16.mxu0 0
      %4210 = vmatpush2.bf16.msra.mxu0 0
      %4211 = vmatprep.subr.bf16.mxu0 0
      %4212 = vmatpush2.bf16.msra.mxu0 0
      %4213 = vmatprep.subr.bf16.mxu0 0
      %4214 = vmatpush2.bf16.msra.mxu0 0
      %4215 = vmatprep.mubr.bf16.mxu0 0
      %4216 = vmatmul.mubr.bf16.gmra.mxu0 %v4160
      %v4217 = vpop.f32.mrf.mxu0
      %v4218 = vadd.f32 0.0, %v4217
      %v4219 = vpop.f32.mrf.mxu0
      %v4220 = vpop.f32.mrf.mxu0
      %v4221 = vadd.f32 0.0, %v4220
      %v4222 = vpop.f32.mrf.mxu0
      %4223 = vmatprep.mubr.bf16.mxu0 0
      %4224 = vmatmul.mubr.bf16.gmra.mxu0 %v4163
      %v4225 = vpop.f32.mrf.mxu0
      %v4226 = vadd.f32 0.0, %v4225
      %v4227 = vpop.f32.mrf.mxu0
      %v4228 = vpop.f32.mrf.mxu0
      %v4229 = vadd.f32 0.0, %v4228
      %v4230 = vpop.f32.mrf.mxu0
      %4231 = vmatprep.mubr.bf16.mxu0 0
      %4232 = vmatmul.mubr.bf16.gmra.mxu0 %v4166
      %v4233 = vpop.f32.mrf.mxu0
      %v4234 = vadd.f32 0.0, %v4233
      %v4235 = vpop.f32.mrf.mxu0
      %v4236 = vpop.f32.mrf.mxu0
      %v4237 = vadd.f32 0.0, %v4236
      %v4238 = vpop.f32.mrf.mxu0
      %4239 = vmatprep.mubr.bf16.mxu0 0
      %4240 = vmatmul.mubr.bf16.gmra.mxu0 %v4169
      %v4241 = vpop.f32.mrf.mxu0
      %v4242 = vadd.f32 0.0, %v4241
      %v4243 = vpop.f32.mrf.mxu0
      %v4244 = vpop.f32.mrf.mxu0
      %v4245 = vadd.f32 0.0, %v4244
      %v4246 = vpop.f32.mrf.mxu0
      %4247 = vmatprep.mubr.bf16.mxu0 0
      %4248 = vmatmul.mubr.bf16.gmra.mxu0 %v4172
      %v4249 = vpop.f32.mrf.mxu0
      %v4250 = vadd.f32 0.0, %v4249
      %v4251 = vpop.f32.mrf.mxu0
      %v4252 = vpop.f32.mrf.mxu0
      %v4253 = vadd.f32 0.0, %v4252
      %v4254 = vpop.f32.mrf.mxu0
      %4255 = vmatprep.mubr.bf16.mxu0 0
      %4256 = vmatmul.mubr.bf16.gmra.mxu0 %v4175
      %v4257 = vpop.f32.mrf.mxu0
      %v4258 = vadd.f32 0.0, %v4257
      %v4259 = vpop.f32.mrf.mxu0
      %v4260 = vpop.f32.mrf.mxu0
      %v4261 = vadd.f32 0.0, %v4260
      %v4262 = vpop.f32.mrf.mxu0
      %4263 = vmatprep.mubr.bf16.mxu0 0
      %4264 = vmatmul.mubr.bf16.gmra.mxu0 %v4178
      %v4265 = vpop.f32.mrf.mxu0
      %v4266 = vadd.f32 0.0, %v4265
      %v4267 = vpop.f32.mrf.mxu0
      %v4268 = vpop.f32.mrf.mxu0
      %v4269 = vadd.f32 0.0, %v4268
      %v4270 = vpop.f32.mrf.mxu0
      %4271 = vmatprep.mubr.bf16.mxu0 0
      %4272 = vmatmul.mubr.bf16.gmra.mxu0 %v4181
      %v4273 = vpop.f32.mrf.mxu0
      %v4274 = vadd.f32 0.0, %v4273
      %v4275 = vpop.f32.mrf.mxu0
      %v4276 = vpop.f32.mrf.mxu0
      %v4277 = vadd.f32 0.0, %v4276
      %v4278 = vpop.f32.mrf.mxu0
      %4279 = vdwg.mxu0
      %v4280 = vadd.f32 %v3703, %v4218
      %v4281 = vadd.f32 %v3704, %v4221
      %v4282 = vadd.f32 %v3705, %v4226
      %v4283 = vadd.f32 %v3706, %v4229
      %v4284 = vadd.f32 %v3707, %v4234
      %v4285 = vadd.f32 %v3708, %v4237
      %v4286 = vadd.f32 %v3709, %v4242
      %v4287 = vadd.f32 %v3710, %v4245
      %v4288 = vadd.f32 %v3711, %v4250
      %v4289 = vadd.f32 %v3712, %v4253
      %v4290 = vadd.f32 %v3713, %v4258
      %v4291 = vadd.f32 %v3714, %v4261
      %v4292 = vadd.f32 %v3715, %v4266
      %v4293 = vadd.f32 %v3716, %v4269
      %v4294 = vadd.f32 %v3717, %v4274
      %v4295 = vadd.f32 %v3718, %v4277
      %v4296 = vpack.c.b16 %v3792, %v3791
      %v4297 = vpack.c.b16 %v3795, %v3794
      %v4298 = vpack.c.b16 %v3798, %v3797
      %v4299 = vpack.c.b16 %v3801, %v3800
      %v4300 = vpack.c.b16 %v3804, %v3803
      %v4301 = vpack.c.b16 %v3807, %v3806
      %v4302 = vpack.c.b16 %v3810, %v3809
      %v4303 = vpack.c.b16 %v3813, %v3812
      %v4304 = vpack.c.b16 %v3835, %v3834
      %4305 = vrot.lane.b32.xlu0 %v4297, 32
      %v4306 = vpop.permute.xlu0 %4305
      %4307 = vrot.lane.b32.xlu0 %v4298, 32
      %v4308 = vpop.permute.xlu0 %4307
      %4309 = vrot.lane.b32.xlu0 %v4299, 32
      %v4310 = vpop.permute.xlu0 %4309
      %4311 = vrot.lane.b32.xlu0 %v4300, 32
      %v4312 = vpop.permute.xlu0 %4311
      %4313 = vrot.lane.b32.xlu0 %v4301, 32
      %v4314 = vpop.permute.xlu0 %4313
      %4315 = vrot.lane.b32.xlu0 %v4302, 32
      %v4316 = vpop.permute.xlu0 %4315
      %4317 = vrot.lane.b32.xlu0 %v4303, 32
      %v4318 = vpop.permute.xlu0 %4317
      %4319 = vrot.lane.b32.xlu0 %v4304, 32
      %v4320 = vpop.permute.xlu0 %4319
      %v4321 = vpack.c.b16 %v3875, %v3874
      %4322 = vrot.lane.b32.xlu0 %v4298, 64
      %v4323 = vpop.permute.xlu0 %4322
      %4324 = vrot.lane.b32.xlu0 %v4299, 64
      %v4325 = vpop.permute.xlu0 %4324
      %4326 = vrot.lane.b32.xlu0 %v4300, 64
      %v4327 = vpop.permute.xlu0 %4326
      %4328 = vrot.lane.b32.xlu0 %v4301, 64
      %v4329 = vpop.permute.xlu0 %4328
      %4330 = vrot.lane.b32.xlu0 %v4302, 64
      %v4331 = vpop.permute.xlu0 %4330
      %4332 = vrot.lane.b32.xlu0 %v4303, 64
      %v4333 = vpop.permute.xlu0 %4332
      %4334 = vrot.lane.b32.xlu0 %v4304, 64
      %v4335 = vpop.permute.xlu0 %4334
      %4336 = vrot.lane.b32.xlu0 %v4321, 64
      %v4337 = vpop.permute.xlu0 %4336
      %v4340 = vsel %vm1224, %v4296, %v4306
      %v4343 = vsel %vm1224, %v4297, %v4308
      %v4346 = vsel %vm1224, %v4298, %v4310
      %v4349 = vsel %vm1224, %v4299, %v4312
      %v4352 = vsel %vm1224, %v4300, %v4314
      %v4355 = vsel %vm1224, %v4301, %v4316
      %v4358 = vsel %vm1224, %v4302, %v4318
      %v4361 = vsel %vm1224, %v4303, %v4320
      %v4363 = vsel %vm1273, %v4340, %v4323
      %v4365 = vsel %vm1273, %v4343, %v4325
      %v4367 = vsel %vm1273, %v4346, %v4327
      %v4369 = vsel %vm1273, %v4349, %v4329
      %v4371 = vsel %vm1273, %v4352, %v4331
      %v4373 = vsel %vm1273, %v4355, %v4333
      %v4375 = vsel %vm1273, %v4358, %v4335
      %v4377 = vsel %vm1273, %v4361, %v4337
      %s4378 = scalar_lea.vmem %s5, 336
      %v4379 = vld [vmem:[%s4378] sm:$0xf]
      %v4380 = vld [vmem:[%s4378 + $0x4] sm:$0xf]
      %v4381 = vld [vmem:[%s4378 + $0x8] sm:$0xf]
      %v4382 = vld [vmem:[%s4378 + $0xc] sm:$0xf]
      %v4383 = vld [vmem:[%s4378 + $0x10] sm:$0xf]
      %v4384 = vld [vmem:[%s4378 + $0x14] sm:$0xf]
      %v4385 = vld [vmem:[%s4378 + $0x18] sm:$0xf]
      %v4386 = vld [vmem:[%s4378 + $0x1c] sm:$0xf]
      %v4387 = vld [vmem:[%s4378 + $0x20] sm:$0xf]
      %v4388 = vld [vmem:[%s4378 + $0x24] sm:$0xf]
      %v4389 = vld [vmem:[%s4378 + $0x28] sm:$0xf]
      %v4390 = vld [vmem:[%s4378 + $0x2c] sm:$0xf]
      %v4403 = vunpack.c.l.b16 %v4379
      %v4404 = vunpack.c.l.b16 %v4380
      %v4405 = vunpack.c.l.b16 %v4381
      %v4406 = vunpack.c.l.b16 %v4382
      %v4407 = vunpack.c.l.b16 %v4383
      %v4408 = vunpack.c.l.b16 %v4384
      %v4409 = vunpack.c.l.b16 %v4385
      %v4410 = vunpack.c.l.b16 %v4386
      %v4411 = vunpack.c.l.b16 %v4387
      %v4412 = vunpack.c.l.b16 %v4388
      %v4413 = vunpack.c.l.b16 %v4389
      %v4414 = vunpack.c.l.b16 %v4390
      %v4415 = vpack.c.b16 %v4404, %v4403
      %v4416 = vpack.c.b16 %v4406, %v4405
      %v4417 = vpack.c.b16 %v4408, %v4407
      %v4418 = vpack.c.b16 %v4410, %v4409
      %v4419 = vpack.c.b16 %v4412, %v4411
      %v4420 = vpack.c.b16 %v4414, %v4413
      %v4427 = vsel %vm1570, %v4363, 0
      %v4429 = vsel %vm1570, %v4365, 0
      %v4431 = vsel %vm1570, %v4367, 0
      %v4433 = vsel %vm1570, %v4369, 0
      %v4435 = vsel %vm1570, %v4371, 0
      %v4437 = vsel %vm1570, %v4373, 0
      %v4439 = vsel %vm1570, %v4375, 0
      %v4441 = vsel %vm1570, %v4377, 0
      %4443 = vmatprep.subr.bf16.mxu0 0
      %4444 = vmatpush1.bf16.msra.mxu0 0
      %4445 = vmatprep.subr.bf16.mxu0 0
      %4446 = vmatpush1.bf16.msra.mxu0 0
      %4447 = vmatprep.subr.bf16.mxu0 0
      %4448 = vmatpush1.bf16.msra.mxu0 %v4420
      %4449 = vmatprep.subr.bf16.mxu0 0
      %4450 = vmatpush1.bf16.msra.mxu0 %v4419
      %4451 = vmatprep.subr.bf16.mxu0 0
      %4452 = vmatpush1.bf16.msra.mxu0 %v4418
      %4453 = vmatprep.subr.bf16.mxu0 0
      %4454 = vmatpush1.bf16.msra.mxu0 %v4417
      %4455 = vmatprep.subr.bf16.mxu0 0
      %4456 = vmatpush1.bf16.msra.mxu0 %v4416
      %4457 = vmatprep.subr.bf16.mxu0 0
      %4458 = vmatpush1.bf16.msra.mxu0 %v4415
      %4459 = vmatprep.subr.bf16.mxu0 0
      %4460 = vmatpush2.bf16.msra.mxu0 0
      %4461 = vmatprep.subr.bf16.mxu0 0
      %4462 = vmatpush2.bf16.msra.mxu0 0
      %4463 = vmatprep.subr.bf16.mxu0 0
      %4464 = vmatpush2.bf16.msra.mxu0 0
      %4465 = vmatprep.subr.bf16.mxu0 0
      %4466 = vmatpush2.bf16.msra.mxu0 0
      %4467 = vmatprep.subr.bf16.mxu0 0
      %4468 = vmatpush2.bf16.msra.mxu0 0
      %4469 = vmatprep.subr.bf16.mxu0 0
      %4470 = vmatpush2.bf16.msra.mxu0 0
      %4471 = vmatprep.subr.bf16.mxu0 0
      %4472 = vmatpush2.bf16.msra.mxu0 0
      %4473 = vmatprep.subr.bf16.mxu0 0
      %4474 = vmatpush2.bf16.msra.mxu0 0
      %4475 = vmatprep.mubr.bf16.mxu0 0
      %4476 = vmatmul.mubr.bf16.gmra.mxu0 %v4427
      %v4477 = vpop.f32.mrf.mxu0
      %v4478 = vadd.f32 0.0, %v4477
      %v4479 = vpop.f32.mrf.mxu0
      %v4480 = vpop.f32.mrf.mxu0
      %v4481 = vadd.f32 0.0, %v4480
      %v4482 = vpop.f32.mrf.mxu0
      %4483 = vmatprep.mubr.bf16.mxu0 0
      %4484 = vmatmul.mubr.bf16.gmra.mxu0 %v4429
      %v4485 = vpop.f32.mrf.mxu0
      %v4486 = vadd.f32 0.0, %v4485
      %v4487 = vpop.f32.mrf.mxu0
      %v4488 = vpop.f32.mrf.mxu0
      %v4489 = vadd.f32 0.0, %v4488
      %v4490 = vpop.f32.mrf.mxu0
      %4491 = vmatprep.mubr.bf16.mxu0 0
      %4492 = vmatmul.mubr.bf16.gmra.mxu0 %v4431
      %v4493 = vpop.f32.mrf.mxu0
      %v4494 = vadd.f32 0.0, %v4493
      %v4495 = vpop.f32.mrf.mxu0
      %v4496 = vpop.f32.mrf.mxu0
      %v4497 = vadd.f32 0.0, %v4496
      %v4498 = vpop.f32.mrf.mxu0
      %4499 = vmatprep.mubr.bf16.mxu0 0
      %4500 = vmatmul.mubr.bf16.gmra.mxu0 %v4433
      %v4501 = vpop.f32.mrf.mxu0
      %v4502 = vadd.f32 0.0, %v4501
      %v4503 = vpop.f32.mrf.mxu0
      %v4504 = vpop.f32.mrf.mxu0
      %v4505 = vadd.f32 0.0, %v4504
      %v4506 = vpop.f32.mrf.mxu0
      %4507 = vmatprep.mubr.bf16.mxu0 0
      %4508 = vmatmul.mubr.bf16.gmra.mxu0 %v4435
      %v4509 = vpop.f32.mrf.mxu0
      %v4510 = vadd.f32 0.0, %v4509
      %v4511 = vpop.f32.mrf.mxu0
      %v4512 = vpop.f32.mrf.mxu0
      %v4513 = vadd.f32 0.0, %v4512
      %v4514 = vpop.f32.mrf.mxu0
      %4515 = vmatprep.mubr.bf16.mxu0 0
      %4516 = vmatmul.mubr.bf16.gmra.mxu0 %v4437
      %v4517 = vpop.f32.mrf.mxu0
      %v4518 = vadd.f32 0.0, %v4517
      %v4519 = vpop.f32.mrf.mxu0
      %v4520 = vpop.f32.mrf.mxu0
      %v4521 = vadd.f32 0.0, %v4520
      %v4522 = vpop.f32.mrf.mxu0
      %4523 = vmatprep.mubr.bf16.mxu0 0
      %4524 = vmatmul.mubr.bf16.gmra.mxu0 %v4439
      %v4525 = vpop.f32.mrf.mxu0
      %v4526 = vadd.f32 0.0, %v4525
      %v4527 = vpop.f32.mrf.mxu0
      %v4528 = vpop.f32.mrf.mxu0
      %v4529 = vadd.f32 0.0, %v4528
      %v4530 = vpop.f32.mrf.mxu0
      %4531 = vmatprep.mubr.bf16.mxu0 0
      %4532 = vmatmul.mubr.bf16.gmra.mxu0 %v4441
      %v4533 = vpop.f32.mrf.mxu0
      %v4534 = vadd.f32 0.0, %v4533
      %v4535 = vpop.f32.mrf.mxu0
      %v4536 = vpop.f32.mrf.mxu0
      %v4537 = vadd.f32 0.0, %v4536
      %v4538 = vpop.f32.mrf.mxu0
      %4539 = vdwg.mxu0
      %v4540 = vadd.f32 %v4280, %v4478
      %v4541 = vadd.f32 %v4281, %v4481
      %v4542 = vadd.f32 %v4282, %v4486
      %v4543 = vadd.f32 %v4283, %v4489
      %v4544 = vadd.f32 %v4284, %v4494
      %v4545 = vadd.f32 %v4285, %v4497
      %v4546 = vadd.f32 %v4286, %v4502
      %v4547 = vadd.f32 %v4287, %v4505
      %v4548 = vadd.f32 %v4288, %v4510
      %v4549 = vadd.f32 %v4289, %v4513
      %v4550 = vadd.f32 %v4290, %v4518
      %v4551 = vadd.f32 %v4291, %v4521
      %v4552 = vadd.f32 %v4292, %v4526
      %v4553 = vadd.f32 %v4293, %v4529
      %v4554 = vadd.f32 %v4294, %v4534
      %v4555 = vadd.f32 %v4295, %v4537
      %v4556 = vld [vmem:[%s3735 + $0x4] sm:$0xf]
      %v4557 = vld [vmem:[%s3735 + $0x8] sm:$0xf]
      %v4558 = vld [vmem:[%s3735 + $0xc] sm:$0x1]
      %v4559 = vld [vmem:[%s3735 + $0x14] sm:$0xf]
      %v4560 = vld [vmem:[%s3735 + $0x18] sm:$0xf]
      %v4561 = vld [vmem:[%s3735 + $0x1c] sm:$0x1]
      %v4562 = vld [vmem:[%s3735 + $0x24] sm:$0xf]
      %v4563 = vld [vmem:[%s3735 + $0x28] sm:$0xf]
      %v4564 = vld [vmem:[%s3735 + $0x2c] sm:$0x1]
      %v4565 = vld [vmem:[%s3735 + $0x34] sm:$0xf]
      %v4566 = vld [vmem:[%s3735 + $0x38] sm:$0xf]
      %v4567 = vld [vmem:[%s3735 + $0x3c] sm:$0x1]
      %v4568 = vld [vmem:[%s3735 + $0x44] sm:$0xf]
      %v4569 = vld [vmem:[%s3735 + $0x48] sm:$0xf]
      %v4570 = vld [vmem:[%s3735 + $0x4c] sm:$0x1]
      %v4571 = vld [vmem:[%s3735 + $0x54] sm:$0xf]
      %v4572 = vld [vmem:[%s3735 + $0x58] sm:$0xf]
      %v4573 = vld [vmem:[%s3735 + $0x5c] sm:$0x1]
      %v4574 = vld [vmem:[%s3735 + $0x64] sm:$0xf]
      %v4575 = vld [vmem:[%s3735 + $0x68] sm:$0xf]
      %v4576 = vld [vmem:[%s3735 + $0x6c] sm:$0x1]
      %v4577 = vld [vmem:[%s3735 + $0x74] sm:$0xf]
      %v4578 = vld [vmem:[%s3735 + $0x78] sm:$0xf]
      %v4579 = vld [vmem:[%s3735 + $0x7c] sm:$0x1]
      %v4580 = vld [vmem:[%s3735 + $0x84] sm:$0xf]
      %v4581 = vld [vmem:[%s3735 + $0x88] sm:$0xf]
      %v4582 = vld [vmem:[%s3735 + $0x8c] sm:$0x1]
      %v4583 = vld [vmem:[%s3735 + $0x94] sm:$0xf]
      %v4584 = vld [vmem:[%s3735 + $0x98] sm:$0xf]
      %v4585 = vld [vmem:[%s3735 + $0x9c] sm:$0x1]
      %v4610 = vunpack.c.l.b16 %v4556
      %v4611 = vunpack.c.l.b16 %v4557
      %v4612 = vunpack.c.l.b16 %v4558
      %v4613 = vunpack.c.l.b16 %v4559
      %v4614 = vunpack.c.l.b16 %v4560
      %v4615 = vunpack.c.l.b16 %v4561
      %v4616 = vunpack.c.l.b16 %v4562
      %v4617 = vunpack.c.l.b16 %v4563
      %v4618 = vunpack.c.l.b16 %v4564
      %v4619 = vunpack.c.l.b16 %v4565
      %v4620 = vunpack.c.l.b16 %v4566
      %v4621 = vunpack.c.l.b16 %v4567
      %v4622 = vunpack.c.l.b16 %v4568
      %v4623 = vunpack.c.l.b16 %v4569
      %v4624 = vunpack.c.l.b16 %v4570
      %v4625 = vunpack.c.l.b16 %v4571
      %v4626 = vunpack.c.l.b16 %v4572
      %v4627 = vunpack.c.l.b16 %v4573
      %v4628 = vunpack.c.l.b16 %v4574
      %v4629 = vunpack.c.l.b16 %v4575
      %v4630 = vunpack.c.l.b16 %v4576
      %v4631 = vunpack.c.l.b16 %v4577
      %v4632 = vunpack.c.l.b16 %v4578
      %v4633 = vunpack.c.l.b16 %v4579
      %v4634 = vpack.c.b16 %v4611, %v4610
      %v4635 = vpack.c.b16 %v4612, %v4612
      %v4636 = vpack.c.b16 %v4614, %v4613
      %v4637 = vpack.c.b16 %v4615, %v4615
      %v4638 = vpack.c.b16 %v4617, %v4616
      %v4639 = vpack.c.b16 %v4618, %v4618
      %v4640 = vpack.c.b16 %v4620, %v4619
      %v4641 = vpack.c.b16 %v4621, %v4621
      %v4642 = vpack.c.b16 %v4623, %v4622
      %v4643 = vpack.c.b16 %v4624, %v4624
      %v4644 = vpack.c.b16 %v4626, %v4625
      %v4645 = vpack.c.b16 %v4627, %v4627
      %v4646 = vpack.c.b16 %v4629, %v4628
      %v4647 = vpack.c.b16 %v4630, %v4630
      %v4648 = vpack.c.b16 %v4632, %v4631
      %v4649 = vpack.c.b16 %v4633, %v4633
      %v4653 = vunpack.c.l.b16 %v4580
      %v4654 = vunpack.c.l.b16 %v4581
      %v4655 = vunpack.c.l.b16 %v4582
      %v4656 = vpack.c.b16 %v4654, %v4653
      %v4657 = vpack.c.b16 %v4655, %v4655
      %4658 = vrot.lane.b32.xlu0 %v4636, 32
      %v4659 = vpop.permute.xlu0 %4658
      %4660 = vrot.lane.b32.xlu0 %v4637, 32
      %v4661 = vpop.permute.xlu0 %4660
      %4662 = vrot.lane.b32.xlu0 %v4638, 32
      %v4663 = vpop.permute.xlu0 %4662
      %4664 = vrot.lane.b32.xlu0 %v4639, 32
      %v4665 = vpop.permute.xlu0 %4664
      %4666 = vrot.lane.b32.xlu0 %v4640, 32
      %v4667 = vpop.permute.xlu0 %4666
      %4668 = vrot.lane.b32.xlu0 %v4641, 32
      %v4669 = vpop.permute.xlu0 %4668
      %4670 = vrot.lane.b32.xlu0 %v4642, 32
      %v4671 = vpop.permute.xlu0 %4670
      %4672 = vrot.lane.b32.xlu0 %v4643, 32
      %v4673 = vpop.permute.xlu0 %4672
      %4674 = vrot.lane.b32.xlu0 %v4644, 32
      %v4675 = vpop.permute.xlu0 %4674
      %4676 = vrot.lane.b32.xlu0 %v4645, 32
      %v4677 = vpop.permute.xlu0 %4676
      %4678 = vrot.lane.b32.xlu0 %v4646, 32
      %v4679 = vpop.permute.xlu0 %4678
      %4680 = vrot.lane.b32.xlu0 %v4647, 32
      %v4681 = vpop.permute.xlu0 %4680
      %4682 = vrot.lane.b32.xlu0 %v4648, 32
      %v4683 = vpop.permute.xlu0 %4682
      %4684 = vrot.lane.b32.xlu0 %v4649, 32
      %v4685 = vpop.permute.xlu0 %4684
      %4686 = vrot.lane.b32.xlu0 %v4656, 32
      %v4687 = vpop.permute.xlu0 %4686
      %4688 = vrot.lane.b32.xlu0 %v4657, 32
      %v4689 = vpop.permute.xlu0 %4688
      %v4693 = vunpack.c.l.b16 %v4583
      %v4694 = vunpack.c.l.b16 %v4584
      %v4695 = vunpack.c.l.b16 %v4585
      %v4696 = vpack.c.b16 %v4694, %v4693
      %v4697 = vpack.c.b16 %v4695, %v4695
      %4698 = vrot.lane.b32.xlu0 %v4638, 64
      %v4699 = vpop.permute.xlu0 %4698
      %4700 = vrot.lane.b32.xlu0 %v4639, 64
      %v4701 = vpop.permute.xlu0 %4700
      %4702 = vrot.lane.b32.xlu0 %v4640, 64
      %v4703 = vpop.permute.xlu0 %4702
      %4704 = vrot.lane.b32.xlu0 %v4641, 64
      %v4705 = vpop.permute.xlu0 %4704
      %4706 = vrot.lane.b32.xlu0 %v4642, 64
      %v4707 = vpop.permute.xlu0 %4706
      %4708 = vrot.lane.b32.xlu0 %v4643, 64
      %v4709 = vpop.permute.xlu0 %4708
      %4710 = vrot.lane.b32.xlu0 %v4644, 64
      %v4711 = vpop.permute.xlu0 %4710
      %4712 = vrot.lane.b32.xlu0 %v4645, 64
      %v4713 = vpop.permute.xlu0 %4712
      %4714 = vrot.lane.b32.xlu0 %v4646, 64
      %v4715 = vpop.permute.xlu0 %4714
      %4716 = vrot.lane.b32.xlu0 %v4647, 64
      %v4717 = vpop.permute.xlu0 %4716
      %4718 = vrot.lane.b32.xlu0 %v4648, 64
      %v4719 = vpop.permute.xlu0 %4718
      %4720 = vrot.lane.b32.xlu0 %v4649, 64
      %v4721 = vpop.permute.xlu0 %4720
      %4722 = vrot.lane.b32.xlu0 %v4656, 64
      %v4723 = vpop.permute.xlu0 %4722
      %4724 = vrot.lane.b32.xlu0 %v4657, 64
      %v4725 = vpop.permute.xlu0 %4724
      %4726 = vrot.lane.b32.xlu0 %v4696, 64
      %v4727 = vpop.permute.xlu0 %4726
      %4728 = vrot.lane.b32.xlu0 %v4697, 64
      %v4729 = vpop.permute.xlu0 %4728
      %v4732 = vsel %vm1224, %v4634, %v4659
      %v4735 = vsel %vm1224, %v4635, %v4661
      %v4738 = vsel %vm1224, %v4636, %v4663
      %v4741 = vsel %vm1224, %v4637, %v4665
      %v4744 = vsel %vm1224, %v4638, %v4667
      %v4747 = vsel %vm1224, %v4639, %v4669
      %v4750 = vsel %vm1224, %v4640, %v4671
      %v4753 = vsel %vm1224, %v4641, %v4673
      %v4756 = vsel %vm1224, %v4642, %v4675
      %v4759 = vsel %vm1224, %v4643, %v4677
      %v4762 = vsel %vm1224, %v4644, %v4679
      %v4765 = vsel %vm1224, %v4645, %v4681
      %v4768 = vsel %vm1224, %v4646, %v4683
      %v4771 = vsel %vm1224, %v4647, %v4685
      %v4774 = vsel %vm1224, %v4648, %v4687
      %v4777 = vsel %vm1224, %v4649, %v4689
      %v4779 = vsel %vm1273, %v4732, %v4699
      %v4781 = vsel %vm1273, %v4735, %v4701
      %v4783 = vsel %vm1273, %v4738, %v4703
      %v4785 = vsel %vm1273, %v4741, %v4705
      %v4787 = vsel %vm1273, %v4744, %v4707
      %v4789 = vsel %vm1273, %v4747, %v4709
      %v4791 = vsel %vm1273, %v4750, %v4711
      %v4793 = vsel %vm1273, %v4753, %v4713
      %v4795 = vsel %vm1273, %v4756, %v4715
      %v4797 = vsel %vm1273, %v4759, %v4717
      %v4799 = vsel %vm1273, %v4762, %v4719
      %v4801 = vsel %vm1273, %v4765, %v4721
      %v4803 = vsel %vm1273, %v4768, %v4723
      %v4805 = vsel %vm1273, %v4771, %v4725
      %v4807 = vsel %vm1273, %v4774, %v4727
      %v4809 = vsel %vm1273, %v4777, %v4729
      %v4810 = vshrl.u32 %v4779, 16
      %v4812 = vshll.u32 %v4779, 16
      %v4814 = vrot.slane %v4812, 1
      %v4815 = vor.u32 %v4810, %v4814
      %v4816 = vshll.u32 %v4781, 16
      %v4818 = vrot.slane %v4816, 1
      %v4819 = vsel %vm2095, %v4815, %v4818
      %v4820 = vshrl.u32 %v4783, 16
      %v4822 = vshll.u32 %v4783, 16
      %v4824 = vrot.slane %v4822, 1
      %v4825 = vor.u32 %v4820, %v4824
      %v4826 = vshll.u32 %v4785, 16
      %v4828 = vrot.slane %v4826, 1
      %v4829 = vsel %vm2095, %v4825, %v4828
      %v4830 = vshrl.u32 %v4787, 16
      %v4832 = vshll.u32 %v4787, 16
      %v4834 = vrot.slane %v4832, 1
      %v4835 = vor.u32 %v4830, %v4834
      %v4836 = vshll.u32 %v4789, 16
      %v4838 = vrot.slane %v4836, 1
      %v4839 = vsel %vm2095, %v4835, %v4838
      %v4840 = vshrl.u32 %v4791, 16
      %v4842 = vshll.u32 %v4791, 16
      %v4844 = vrot.slane %v4842, 1
      %v4845 = vor.u32 %v4840, %v4844
      %v4846 = vshll.u32 %v4793, 16
      %v4848 = vrot.slane %v4846, 1
      %v4849 = vsel %vm2095, %v4845, %v4848
      %v4850 = vshrl.u32 %v4795, 16
      %v4852 = vshll.u32 %v4795, 16
      %v4854 = vrot.slane %v4852, 1
      %v4855 = vor.u32 %v4850, %v4854
      %v4856 = vshll.u32 %v4797, 16
      %v4858 = vrot.slane %v4856, 1
      %v4859 = vsel %vm2095, %v4855, %v4858
      %v4860 = vshrl.u32 %v4799, 16
      %v4862 = vshll.u32 %v4799, 16
      %v4864 = vrot.slane %v4862, 1
      %v4865 = vor.u32 %v4860, %v4864
      %v4866 = vshll.u32 %v4801, 16
      %v4868 = vrot.slane %v4866, 1
      %v4869 = vsel %vm2095, %v4865, %v4868
      %v4870 = vshrl.u32 %v4803, 16
      %v4872 = vshll.u32 %v4803, 16
      %v4874 = vrot.slane %v4872, 1
      %v4875 = vor.u32 %v4870, %v4874
      %v4876 = vshll.u32 %v4805, 16
      %v4878 = vrot.slane %v4876, 1
      %v4879 = vsel %vm2095, %v4875, %v4878
      %v4880 = vshrl.u32 %v4807, 16
      %v4882 = vshll.u32 %v4807, 16
      %v4884 = vrot.slane %v4882, 1
      %v4885 = vor.u32 %v4880, %v4884
      %v4886 = vshll.u32 %v4809, 16
      %v4888 = vrot.slane %v4886, 1
      %v4889 = vsel %vm2095, %v4885, %v4888
      %s4890 = scalar_lea.vmem %s5, 384
      %v4891 = vld [vmem:[%s4890] sm:$0xf]
      %v4892 = vld [vmem:[%s4890 + $0x4] sm:$0xf]
      %v4893 = vld [vmem:[%s4890 + $0x8] sm:$0xf]
      %v4894 = vld [vmem:[%s4890 + $0xc] sm:$0xf]
      %v4895 = vld [vmem:[%s4890 + $0x10] sm:$0xf]
      %v4896 = vld [vmem:[%s4890 + $0x14] sm:$0xf]
      %v4897 = vld [vmem:[%s4890 + $0x18] sm:$0xf]
      %v4898 = vld [vmem:[%s4890 + $0x1c] sm:$0xf]
      %v4899 = vld [vmem:[%s4890 + $0x20] sm:$0xf]
      %v4900 = vld [vmem:[%s4890 + $0x24] sm:$0xf]
      %v4901 = vld [vmem:[%s4890 + $0x28] sm:$0xf]
      %v4902 = vld [vmem:[%s4890 + $0x2c] sm:$0xf]
      %v4915 = vunpack.c.l.b16 %v4891
      %v4916 = vunpack.c.l.b16 %v4892
      %v4917 = vunpack.c.l.b16 %v4893
      %v4918 = vunpack.c.l.b16 %v4894
      %v4919 = vunpack.c.l.b16 %v4895
      %v4920 = vunpack.c.l.b16 %v4896
      %v4921 = vunpack.c.l.b16 %v4897
      %v4922 = vunpack.c.l.b16 %v4898
      %v4923 = vunpack.c.l.b16 %v4899
      %v4924 = vunpack.c.l.b16 %v4900
      %v4925 = vunpack.c.l.b16 %v4901
      %v4926 = vunpack.c.l.b16 %v4902
      %v4927 = vpack.c.b16 %v4916, %v4915
      %v4928 = vpack.c.b16 %v4918, %v4917
      %v4929 = vpack.c.b16 %v4920, %v4919
      %v4930 = vpack.c.b16 %v4922, %v4921
      %v4931 = vpack.c.b16 %v4924, %v4923
      %v4932 = vpack.c.b16 %v4926, %v4925
      %v4940 = vsel %vm1570, %v4819, 0
      %v4943 = vsel %vm1570, %v4829, 0
      %v4946 = vsel %vm1570, %v4839, 0
      %v4949 = vsel %vm1570, %v4849, 0
      %v4952 = vsel %vm1570, %v4859, 0
      %v4955 = vsel %vm1570, %v4869, 0
      %v4958 = vsel %vm1570, %v4879, 0
      %v4961 = vsel %vm1570, %v4889, 0
      %4963 = vmatprep.subr.bf16.mxu0 0
      %4964 = vmatpush1.bf16.msra.mxu0 0
      %4965 = vmatprep.subr.bf16.mxu0 0
      %4966 = vmatpush1.bf16.msra.mxu0 0
      %4967 = vmatprep.subr.bf16.mxu0 0
      %4968 = vmatpush1.bf16.msra.mxu0 %v4932
      %4969 = vmatprep.subr.bf16.mxu0 0
      %4970 = vmatpush1.bf16.msra.mxu0 %v4931
      %4971 = vmatprep.subr.bf16.mxu0 0
      %4972 = vmatpush1.bf16.msra.mxu0 %v4930
      %4973 = vmatprep.subr.bf16.mxu0 0
      %4974 = vmatpush1.bf16.msra.mxu0 %v4929
      %4975 = vmatprep.subr.bf16.mxu0 0
      %4976 = vmatpush1.bf16.msra.mxu0 %v4928
      %4977 = vmatprep.subr.bf16.mxu0 0
      %4978 = vmatpush1.bf16.msra.mxu0 %v4927
      %4979 = vmatprep.subr.bf16.mxu0 0
      %4980 = vmatpush2.bf16.msra.mxu0 0
      %4981 = vmatprep.subr.bf16.mxu0 0
      %4982 = vmatpush2.bf16.msra.mxu0 0
      %4983 = vmatprep.subr.bf16.mxu0 0
      %4984 = vmatpush2.bf16.msra.mxu0 0
      %4985 = vmatprep.subr.bf16.mxu0 0
      %4986 = vmatpush2.bf16.msra.mxu0 0
      %4987 = vmatprep.subr.bf16.mxu0 0
      %4988 = vmatpush2.bf16.msra.mxu0 0
      %4989 = vmatprep.subr.bf16.mxu0 0
      %4990 = vmatpush2.bf16.msra.mxu0 0
      %4991 = vmatprep.subr.bf16.mxu0 0
      %4992 = vmatpush2.bf16.msra.mxu0 0
      %4993 = vmatprep.subr.bf16.mxu0 0
      %4994 = vmatpush2.bf16.msra.mxu0 0
      %4995 = vmatprep.mubr.bf16.mxu0 0
      %4996 = vmatmul.mubr.bf16.gmra.mxu0 %v4940
      %v4997 = vpop.f32.mrf.mxu0
      %v4998 = vadd.f32 0.0, %v4997
      %v4999 = vpop.f32.mrf.mxu0
      %v5000 = vpop.f32.mrf.mxu0
      %v5001 = vadd.f32 0.0, %v5000
      %v5002 = vpop.f32.mrf.mxu0
      %5003 = vmatprep.mubr.bf16.mxu0 0
      %5004 = vmatmul.mubr.bf16.gmra.mxu0 %v4943
      %v5005 = vpop.f32.mrf.mxu0
      %v5006 = vadd.f32 0.0, %v5005
      %v5007 = vpop.f32.mrf.mxu0
      %v5008 = vpop.f32.mrf.mxu0
      %v5009 = vadd.f32 0.0, %v5008
      %v5010 = vpop.f32.mrf.mxu0
      %5011 = vmatprep.mubr.bf16.mxu0 0
      %5012 = vmatmul.mubr.bf16.gmra.mxu0 %v4946
      %v5013 = vpop.f32.mrf.mxu0
      %v5014 = vadd.f32 0.0, %v5013
      %v5015 = vpop.f32.mrf.mxu0
      %v5016 = vpop.f32.mrf.mxu0
      %v5017 = vadd.f32 0.0, %v5016
      %v5018 = vpop.f32.mrf.mxu0
      %5019 = vmatprep.mubr.bf16.mxu0 0
      %5020 = vmatmul.mubr.bf16.gmra.mxu0 %v4949
      %v5021 = vpop.f32.mrf.mxu0
      %v5022 = vadd.f32 0.0, %v5021
      %v5023 = vpop.f32.mrf.mxu0
      %v5024 = vpop.f32.mrf.mxu0
      %v5025 = vadd.f32 0.0, %v5024
      %v5026 = vpop.f32.mrf.mxu0
      %5027 = vmatprep.mubr.bf16.mxu0 0
      %5028 = vmatmul.mubr.bf16.gmra.mxu0 %v4952
      %v5029 = vpop.f32.mrf.mxu0
      %v5030 = vadd.f32 0.0, %v5029
      %v5031 = vpop.f32.mrf.mxu0
      %v5032 = vpop.f32.mrf.mxu0
      %v5033 = vadd.f32 0.0, %v5032
      %v5034 = vpop.f32.mrf.mxu0
      %5035 = vmatprep.mubr.bf16.mxu0 0
      %5036 = vmatmul.mubr.bf16.gmra.mxu0 %v4955
      %v5037 = vpop.f32.mrf.mxu0
      %v5038 = vadd.f32 0.0, %v5037
      %v5039 = vpop.f32.mrf.mxu0
      %v5040 = vpop.f32.mrf.mxu0
      %v5041 = vadd.f32 0.0, %v5040
      %v5042 = vpop.f32.mrf.mxu0
      %5043 = vmatprep.mubr.bf16.mxu0 0
      %5044 = vmatmul.mubr.bf16.gmra.mxu0 %v4958
      %v5045 = vpop.f32.mrf.mxu0
      %v5046 = vadd.f32 0.0, %v5045
      %v5047 = vpop.f32.mrf.mxu0
      %v5048 = vpop.f32.mrf.mxu0
      %v5049 = vadd.f32 0.0, %v5048
      %v5050 = vpop.f32.mrf.mxu0
      %5051 = vmatprep.mubr.bf16.mxu0 0
      %5052 = vmatmul.mubr.bf16.gmra.mxu0 %v4961
      %v5053 = vpop.f32.mrf.mxu0
      %v5054 = vadd.f32 0.0, %v5053
      %v5055 = vpop.f32.mrf.mxu0
      %v5056 = vpop.f32.mrf.mxu0
      %v5057 = vadd.f32 0.0, %v5056
      %v5058 = vpop.f32.mrf.mxu0
      %5059 = vdwg.mxu0
      %v5060 = vadd.f32 %v4540, %v4998
      %v5061 = vadd.f32 %v4541, %v5001
      %v5062 = vadd.f32 %v4542, %v5006
      %v5063 = vadd.f32 %v4543, %v5009
      %v5064 = vadd.f32 %v4544, %v5014
      %v5065 = vadd.f32 %v4545, %v5017
      %v5066 = vadd.f32 %v4546, %v5022
      %v5067 = vadd.f32 %v4547, %v5025
      %v5068 = vadd.f32 %v4548, %v5030
      %v5069 = vadd.f32 %v4549, %v5033
      %v5070 = vadd.f32 %v4550, %v5038
      %v5071 = vadd.f32 %v4551, %v5041
      %v5072 = vadd.f32 %v4552, %v5046
      %v5073 = vadd.f32 %v4553, %v5049
      %v5074 = vadd.f32 %v4554, %v5054
      %v5075 = vadd.f32 %v4555, %v5057
      %v5076 = vld [vmem:[%s6] sm:$0x1]
      %v5078 = vlaneseq
      %v5079 = vshrl.u32 %v5078, 7
      %v5080 = vsub.s32 0, %v5079
      %v5081 = vrot.slane %v5076, %v5080
      %v5083 = vadd.f32 %v5060, %v5081
      %v5084 = vadd.f32 %v5061, %v5081
      %v5085 = vadd.f32 %v5062, %v5081
      %v5086 = vadd.f32 %v5063, %v5081
      %v5087 = vadd.f32 %v5064, %v5081
      %v5088 = vadd.f32 %v5065, %v5081
      %v5089 = vadd.f32 %v5066, %v5081
      %v5090 = vadd.f32 %v5067, %v5081
      %v5091 = vadd.f32 %v5068, %v5081
      %v5092 = vadd.f32 %v5069, %v5081
      %v5093 = vadd.f32 %v5070, %v5081
      %v5094 = vadd.f32 %v5071, %v5081
      %v5095 = vadd.f32 %v5072, %v5081
      %v5096 = vadd.f32 %v5073, %v5081
      %v5097 = vadd.f32 %v5074, %v5081
      %v5098 = vadd.f32 %v5075, %v5081
      %v5099 = vpack.c.bf16 %v5084, %v5083
      %v5100 = vpack.c.bf16 %v5086, %v5085
      %v5101 = vpack.c.bf16 %v5088, %v5087
      %v5102 = vpack.c.bf16 %v5090, %v5089
      %v5103 = vpack.c.bf16 %v5092, %v5091
      %v5104 = vpack.c.bf16 %v5094, %v5093
      %v5105 = vpack.c.bf16 %v5096, %v5095
      %v5106 = vpack.c.bf16 %v5098, %v5097
      %v5115 = vunpack.c.l.b16 %v5099
      %v5116 = vunpack.c.h.b16 %v5099
      %v5117 = vunpack.c.l.b16 %v5100
      %v5118 = vunpack.c.h.b16 %v5100
      %v5119 = vunpack.c.l.b16 %v5101
      %v5120 = vunpack.c.h.b16 %v5101
      %v5121 = vunpack.c.l.b16 %v5102
      %v5122 = vunpack.c.h.b16 %v5102
      %v5123 = vunpack.c.l.b16 %v5103
      %v5124 = vunpack.c.h.b16 %v5103
      %v5125 = vunpack.c.l.b16 %v5104
      %v5126 = vunpack.c.h.b16 %v5104
      %v5127 = vunpack.c.l.b16 %v5105
      %v5128 = vunpack.c.h.b16 %v5105
      %v5129 = vunpack.c.l.b16 %v5106
      %v5130 = vunpack.c.h.b16 %v5106
      %v5131 = vpack.c.b16 %v5115, %v5115
      %v5132 = vpack.c.b16 %v5116, %v5116
      %v5133 = vpack.c.b16 %v5117, %v5117
      %v5134 = vpack.c.b16 %v5118, %v5118
      %v5135 = vpack.c.b16 %v5119, %v5119
      %v5136 = vpack.c.b16 %v5120, %v5120
      %v5137 = vpack.c.b16 %v5121, %v5121
      %v5138 = vpack.c.b16 %v5122, %v5122
      %v5139 = vpack.c.b16 %v5123, %v5123
      %v5140 = vpack.c.b16 %v5124, %v5124
      %v5141 = vpack.c.b16 %v5125, %v5125
      %v5142 = vpack.c.b16 %v5126, %v5126
      %v5143 = vpack.c.b16 %v5127, %v5127
      %v5144 = vpack.c.b16 %v5128, %v5128
      %v5145 = vpack.c.b16 %v5129, %v5129
      %v5146 = vpack.c.b16 %v5130, %v5130
      %5163 = vst.msk [vmem:[%s558] sm:$0xf] %vm941, %v5131
      %5164 = vst.msk [vmem:[%s558 + $0x4] sm:$0xf] %vm941, %v5132
      %5165 = vst.msk [vmem:[%s558 + $0x8] sm:$0xf] %vm941, %v5133
      %5166 = vst.msk [vmem:[%s558 + $0xc] sm:$0xf] %vm941, %v5134
      %5167 = vst.msk [vmem:[%s558 + $0x10] sm:$0xf] %vm941, %v5135
      %5168 = vst.msk [vmem:[%s558 + $0x14] sm:$0xf] %vm941, %v5136
      %5169 = vst.msk [vmem:[%s558 + $0x18] sm:$0xf] %vm941, %v5137
      %5170 = vst.msk [vmem:[%s558 + $0x1c] sm:$0xf] %vm941, %v5138
      %5171 = vst.msk [vmem:[%s558 + $0x20] sm:$0xf] %vm941, %v5139
      %5172 = vst.msk [vmem:[%s558 + $0x24] sm:$0xf] %vm941, %v5140
      %5173 = vst.msk [vmem:[%s558 + $0x28] sm:$0xf] %vm941, %v5141
      %5174 = vst.msk [vmem:[%s558 + $0x2c] sm:$0xf] %vm941, %v5142
      %5175 = vst.msk [vmem:[%s558 + $0x30] sm:$0xf] %vm941, %v5143
      %5176 = vst.msk [vmem:[%s558 + $0x34] sm:$0xf] %vm941, %v5144
      %5177 = vst.msk [vmem:[%s558 + $0x38] sm:$0xf] %vm941, %v5145
      %5178 = vst.msk [vmem:[%s558 + $0x3c] sm:$0xf] %vm941, %v5146
      %s5179 = smul.u32 16, %s24
      %p5180 = scmp.lt.s32.totalorder %s23, 1
      %s5181 = scalar_select %p5180, %s23, 1
      %p5182 = scmp.lt.s32.totalorder %s25, 3
      %s5183 = scalar_select %p5182, %s25, 3
      %p5184 = scmp.lt.s32.totalorder %s5179, 31
      %s5185 = scalar_select %p5184, %s5179, 31
      %s5186 = smul.addr %s5183, 32
      %s5187 = sadd.s32 %s5185, %s5186
      %s5188 = smul.addr %s5181, 128
      %s5189 = sadd.s32 %s5187, %s5188
      %s5190 = smul.addr %s5189, 4
      %s5191 = scalar_lea.vmem %s7, %s5190
      // Predicated region
      $region53: #{res_block_forward.5} parent=47 // pred_check
        %p5192 = pneg %p263
      $region54: #{res_block_forward.5} parent=47 // pred_check_branch
        %5194 = sbr.rel (%p5192) target = $region56
      $region55: #{res_block_forward.5} parent=47 // pred_region
        %s5195 = smul.u32 16, %s24
      $region56: #{res_block_forward.5} parent=47 // pred_fallthru
        _
    $region48: #{res_block_forward.5} parent=5 // pred_fallthru
      _
    %p5196 = scmp.le.s32.totalorder 2, %s13
    // Predicated region
    $region57: #{res_block_forward.5} parent=5 // pred_check
      %p5197 = pneg %p5196
    $region58: #{res_block_forward.5} parent=5 // pred_check_branch
      %5199 = sbr.rel (%p5197) target = $region60
    $region59: #{res_block_forward.5} parent=5 // pred_region
      %s5200 = ssub.s32 %s13, 2
      // Predicated region
      $region61: #{res_block_forward.5} parent=59 // pred_check
        %p5201 = pneg %p269
      $region62: #{res_block_forward.5} parent=59 // pred_check_branch
        %5203 = sbr.rel (%p5201) target = $region64
      $region63: #{res_block_forward.5} parent=59 // pred_region
        %s5204 = smul.u32 16, %s27
        %p5205 = scmp.lt.s32.totalorder %s26, 1
        %s5206 = scalar_select %p5205, %s26, 1
        %p5207 = scmp.lt.s32.totalorder %s28, 3
        %s5208 = scalar_select %p5207, %s28, 3
        %p5209 = scmp.lt.s32.totalorder %s5204, 31
        %s5210 = scalar_select %p5209, %s5204, 31
        %s5211 = smul.addr %s5208, 32
        %s5212 = sadd.s32 %s5210, %s5211
        %s5213 = smul.addr %s5206, 128
        %s5214 = sadd.s32 %s5212, %s5213
        %s5215 = smul.addr %s5214, 4
        %s5216 = scalar_lea.vmem %s7, %s5215
      $region64: #{res_block_forward.5} parent=59 // pred_fallthru
        _
    $region60: #{res_block_forward.5} parent=5 // pred_fallthru
      _
  $region6: #{res_block_forward.5} parent=0 // loop_footer
    %s17 = sadd.s32 1, %s13
  $region7: #{res_block_forward.5} parent=0 // loop_footer_branch
    %12 = sbr.rel target = $region3
  $region8: #{res_block_forward.5} parent=0 // loop_exit
    _

// kernel: res_block_forward.7
$region0: #{res_block_forward.7}
  #allocation0 [shape = 'u32[]', space=smem, size = 0x4, offset = 0x4, fixed_abs, tag = 'smem constant byte address 0x4 - core index']
  #allocation1 [shape = 'u32[144,128]{1,0:T(1,128)}', space=vmem, size = 0x12000, scoped, tag = 'internal scratch']
  #allocation2 [shape = 'bf16[3,10,32,32]{3,2,1,0:T(8,128)(2,1)}', space=vmem, size = 0x3c000, scoped, tag = 'scratch operand']
  %s0 = inlined_call_operand.vmem [shape: bf16[2,4,16,16,32], index: 0, kind: input, shape index: {}, may-alias: {0,1,2}]
  %s1 = inlined_call_operand.vmem [shape: bf16[2,4,16,16,32], index: 1, kind: input, shape index: {}, may-alias: {0,1,2}]
  %s2 = inlined_call_operand.vmem [shape: bf16[2,4,16,16,32], index: 2, kind: input, shape index: {}, may-alias: {0,1,2}]
  %s3 = inlined_call_operand.vmem [shape: f32[2,4,1,32], index: 3, kind: input, shape index: {}]
  %s4 = inlined_call_operand.vmem [shape: f32[2,4,1,32], index: 4, kind: input, shape index: {}]
  %s5 = inlined_call_operand.vmem [shape: bf16[3,3,96,32], index: 5, kind: input, shape index: {}]
  %s6 = inlined_call_operand.vmem [shape: f32[1,32], index: 6, kind: input, shape index: {}]
  %s7 = inlined_call_operand.vmem [shape: f32[2,4,256,32], index: 7, kind: input, shape index: {}]
  %s8 = inlined_call_operand.hbm [shape: f32[2,4,256,32], index: 8, kind: output, shape index: {}]
  %s9 = sld [smem:[#allocation0]]
  $region69: #{res_block_forward.7} parent=0
    _
  %s11 = ssub.s32 1, %s9
  %s12 = scalar_select 0, %s11, %s9
  $region1: #{res_block_forward.7} parent=0
    #allocation3 [shape = 'u8[131072]{0}', space=vmem, size = 0x20000, scoped, tag = 'output window, operand 0']
    #allocation4 [shape = 's32[2]{0}', space=sflag, size = 0x8, scoped, tag = 'scoped memory for res_block_forward.7']
    %13 = vsyncpa [#allocation4], 0
    %s14 = scalar_lea.sflag [#allocation4], 1
    %15 = vsyncpa %s14, 0
    loop: start=0, step=1, limit=18
    $region2: #{res_block_forward.7} parent=1 // loop_pre_header
      _
    $region3: #{res_block_forward.7} parent=1 // loop_header
      %s17 = sphi 0, %s21
      %p18 = scmp.ge.s32.totalorder %s17, 18
      %s24 = sphi 0, %s43
      %s25 = sphi 0, %s39
      %s26 = sphi 0, %s35
      %s27 = sphi 0, %s24
      %s28 = sphi 0, %s25
      %s29 = sphi 0, %s26
      %s30 = sphi 0, %s27
      %s31 = sphi 0, %s28
      %s32 = sphi 0, %s29
      %s50 = sphi 0, %s52
      %s53 = sphi 0, %s50
      %s54 = sphi 0, %s53
      %s70 = sphi 0, %s54
      %s88 = sphi 0, %s90
      %s91 = sphi 0, %s88
      %s92 = sphi 0, %s91
      %s108 = sphi 0, %s92
      %s126 = sphi 0, %s128
      %s129 = sphi 0, %s126
      %s130 = sphi 0, %s129
      %s146 = sphi 0, %s130
      %s154 = sphi 0, %s156
      %s157 = sphi 0, %s154
      %s158 = sphi 0, %s157
      %s174 = sphi 0, %s158
      %s182 = sphi 0, %s184
      %s185 = sphi 0, %s182
      %s186 = sphi 0, %s185
      %s202 = sphi 0, %s186
      %s206 = sphi 0, %s206
      %s208 = sphi 0, %s206
      %s209 = sphi 0, %s208
      %s223 = sphi 0, %s209
      %s227 = sphi 0, %s227
      %s229 = sphi 0, %s227
      %s230 = sphi 0, %s229
      %s244 = sphi 0, %s230
      %s254 = sphi 0, %s256
      %s257 = sphi 0, %s254
      %s258 = sphi 0, %s257
      %s274 = sphi 0, %s258
      %s284 = sphi 0, %s286
      %s287 = sphi 0, %s284
      %s288 = sphi 0, %s287
      %s304 = sphi 0, %s288
    $region4: #{res_block_forward.7} parent=1 // loop_header_branch
      %20 = sbr.rel (%p18) target = $region8
    $region5: #{res_block_forward.7} parent=1 // loop_body
      %s22 = ssub.s32 %s17, 1
      %s23 = ssub.s32 %s17, 2
      %s33 = sadd.s32 1, %s26
      %p34 = scmp.ge.s32.totalorder %s33, 4
      %s35 = scalar_select %p34, 0, %s33
      %s36 = sadd.s32 1, %s25
      %s37 = scalar_select %p34, %s36, %s25
      %p38 = scmp.ge.s32.totalorder %s37, 2
      %s39 = scalar_select %p38, 0, %s37
      %s40 = sadd.s32 1, %s24
      %s41 = scalar_select %p38, %s40, %s24
      %p42 = scmp.ge.s32.totalorder %s41, 2
      %s43 = scalar_select %p42, 0, %s41
      %s44 = ssub.s32 %s24, %s43
      %s45 = ssub.s32 %s26, %s35
      %s46 = sor.u32 %s44, %s45
      %s47 = ssub.s32 %s25, %s39
      %s48 = sor.u32 %s46, %s47
      %p49 = scmp.eq.s32.totalorder %s48, 0
      %s51 = sadd.s32 %s50, 1
      %s52 = scalar_select %p49, %s50, %s51
      %p55 = pneg %p49
      %p56 = scmp.eq.s32.totalorder %s17, 15
      %p57 = por %p55, %p56
      %p58 = scmp.ne.s32.totalorder %s50, %s53
      %p59 = scmp.eq.s32.totalorder %s17, 0
      %p60 = por %p58, %p59
      %p61 = scmp.ne.s32.totalorder %s50, %s53
      %p62 = scmp.eq.s32.totalorder %s22, 15
      %p63 = por %p61, %p62
      %p64 = scmp.ne.s32.totalorder %s53, %s54
      %p65 = scmp.eq.s32.totalorder %s22, 0
      %p66 = por %p64, %p65
      %p67 = scmp.ne.s32.totalorder %s53, %s54
      %p68 = scmp.eq.s32.totalorder %s23, 15
      %p69 = por %p67, %p68
      %p71 = scmp.ne.s32.totalorder %s54, %s70
      %p72 = scmp.eq.s32.totalorder %s23, 0
      %p73 = por %p71, %p72
      %s74 = smul.u32 %s25, 8
      %s75 = ssub.s32 %s74, 1
      %p76 = scmp.gt.s32.totalorder %s75, 0
      %s77 = scalar_select %p76, %s75, 0
      %s78 = smul.u32 %s39, 8
      %s79 = ssub.s32 %s78, 1
      %p80 = scmp.gt.s32.totalorder %s79, 0
      %s81 = scalar_select %p80, %s79, 0
      %s82 = ssub.s32 %s24, %s43
      %s83 = ssub.s32 %s26, %s35
      %s84 = sor.u32 %s82, %s83
      %s85 = ssub.s32 %s77, %s81
      %s86 = sor.u32 %s84, %s85
      %p87 = scmp.eq.s32.totalorder %s86, 0
      %s89 = sadd.s32 %s88, 1
      %s90 = scalar_select %p87, %s88, %s89
      %p93 = pneg %p87
      %p94 = scmp.eq.s32.totalorder %s17, 15
      %p95 = por %p93, %p94
      %p96 = scmp.ne.s32.totalorder %s88, %s91
      %p97 = scmp.eq.s32.totalorder %s17, 0
      %p98 = por %p96, %p97
      %p99 = scmp.ne.s32.totalorder %s88, %s91
      %p100 = scmp.eq.s32.totalorder %s22, 15
      %p101 = por %p99, %p100
      %p102 = scmp.ne.s32.totalorder %s91, %s92
      %p103 = scmp.eq.s32.totalorder %s22, 0
      %p104 = por %p102, %p103
      %p105 = scmp.ne.s32.totalorder %s91, %s92
      %p106 = scmp.eq.s32.totalorder %s23, 15
      %p107 = por %p105, %p106
      %p109 = scmp.ne.s32.totalorder %s92, %s108
      %p110 = scmp.eq.s32.totalorder %s23, 0
      %p111 = por %p109, %p110
      %s112 = sadd.s32 %s25, 1
      %s113 = smul.u32 %s112, 8
      %p114 = scmp.lt.s32.totalorder %s113, 15
      %s115 = scalar_select %p114, %s113, 15
      %s116 = sadd.s32 %s39, 1
      %s117 = smul.u32 %s116, 8
      %p118 = scmp.lt.s32.totalorder %s117, 15
      %s119 = scalar_select %p118, %s117, 15
      %s120 = ssub.s32 %s24, %s43
      %s121 = ssub.s32 %s26, %s35
      %s122 = sor.u32 %s120, %s121
      %s123 = ssub.s32 %s115, %s119
      %s124 = sor.u32 %s122, %s123
      %p125 = scmp.eq.s32.totalorder %s124, 0
      %s127 = sadd.s32 %s126, 1
      %s128 = scalar_select %p125, %s126, %s127
      %p131 = pneg %p125
      %p132 = scmp.eq.s32.totalorder %s17, 15
      %p133 = por %p131, %p132
      %p134 = scmp.ne.s32.totalorder %s126, %s129
      %p135 = scmp.eq.s32.totalorder %s17, 0
      %p136 = por %p134, %p135
      %p137 = scmp.ne.s32.totalorder %s126, %s129
      %p138 = scmp.eq.s32.totalorder %s22, 15
      %p139 = por %p137, %p138
      %p140 = scmp.ne.s32.totalorder %s129, %s130
      %p141 = scmp.eq.s32.totalorder %s22, 0
      %p142 = por %p140, %p141
      %p143 = scmp.ne.s32.totalorder %s129, %s130
      %p144 = scmp.eq.s32.totalorder %s23, 15
      %p145 = por %p143, %p144
      %p147 = scmp.ne.s32.totalorder %s130, %s146
      %p148 = scmp.eq.s32.totalorder %s23, 0
      %p149 = por %p147, %p148
      %s150 = ssub.s32 %s24, %s43
      %s151 = ssub.s32 %s26, %s35
      %s152 = sor.u32 %s150, %s151
      %p153 = scmp.eq.s32.totalorder %s152, 0
      %s155 = sadd.s32 %s154, 1
      %s156 = scalar_select %p153, %s154, %s155
      %p159 = pneg %p153
      %p160 = scmp.eq.s32.totalorder %s17, 15
      %p161 = por %p159, %p160
      %p162 = scmp.ne.s32.totalorder %s154, %s157
      %p163 = scmp.eq.s32.totalorder %s17, 0
      %p164 = por %p162, %p163
      %p165 = scmp.ne.s32.totalorder %s154, %s157
      %p166 = scmp.eq.s32.totalorder %s22, 15
      %p167 = por %p165, %p166
      %p168 = scmp.ne.s32.totalorder %s157, %s158
      %p169 = scmp.eq.s32.totalorder %s22, 0
      %p170 = por %p168, %p169
      %p171 = scmp.ne.s32.totalorder %s157, %s158
      %p172 = scmp.eq.s32.totalorder %s23, 15
      %p173 = por %p171, %p172
      %p175 = scmp.ne.s32.totalorder %s158, %s174
      %p176 = scmp.eq.s32.totalorder %s23, 0
      %p177 = por %p175, %p176
      %s178 = ssub.s32 %s24, %s43
      %s179 = ssub.s32 %s26, %s35
      %s180 = sor.u32 %s178, %s179
      %p181 = scmp.eq.s32.totalorder %s180, 0
      %s183 = sadd.s32 %s182, 1
      %s184 = scalar_select %p181, %s182, %s183
      %p187 = pneg %p181
      %p188 = scmp.eq.s32.totalorder %s17, 15
      %p189 = por %p187, %p188
      %p190 = scmp.ne.s32.totalorder %s182, %s185
      %p191 = scmp.eq.s32.totalorder %s17, 0
      %p192 = por %p190, %p191
      %p193 = scmp.ne.s32.totalorder %s182, %s185
      %p194 = scmp.eq.s32.totalorder %s22, 15
      %p195 = por %p193, %p194
      %p196 = scmp.ne.s32.totalorder %s185, %s186
      %p197 = scmp.eq.s32.totalorder %s22, 0
      %p198 = por %p196, %p197
      %p199 = scmp.ne.s32.totalorder %s185, %s186
      %p200 = scmp.eq.s32.totalorder %s23, 15
      %p201 = por %p199, %p200
      %p203 = scmp.ne.s32.totalorder %s186, %s202
      %p204 = scmp.eq.s32.totalorder %s23, 0
      %p205 = por %p203, %p204
      %s207 = sadd.s32 %s206, 1
      %p210 = scmp.eq.s32.totalorder %s17, 15
      %p211 = scmp.ne.s32.totalorder %s206, %s208
      %p212 = scmp.eq.s32.totalorder %s17, 0
      %p213 = por %p211, %p212
      %p214 = scmp.ne.s32.totalorder %s206, %s208
      %p215 = scmp.eq.s32.totalorder %s22, 15
      %p216 = por %p214, %p215
      %p217 = scmp.ne.s32.totalorder %s208, %s209
      %p218 = scmp.eq.s32.totalorder %s22, 0
      %p219 = por %p217, %p218
      %p220 = scmp.ne.s32.totalorder %s208, %s209
      %p221 = scmp.eq.s32.totalorder %s23, 15
      %p222 = por %p220, %p221
      %p224 = scmp.ne.s32.totalorder %s209, %s223
      %p225 = scmp.eq.s32.totalorder %s23, 0
      %p226 = por %p224, %p225
      %s228 = sadd.s32 %s227, 1
      %p231 = scmp.eq.s32.totalorder %s17, 15
      %p232 = scmp.ne.s32.totalorder %s227, %s229
      %p233 = scmp.eq.s32.totalorder %s17, 0
      %p234 = por %p232, %p233
      %p235 = scmp.ne.s32.totalorder %s227, %s229
      %p236 = scmp.eq.s32.totalorder %s22, 15
      %p237 = por %p235, %p236
      %p238 = scmp.ne.s32.totalorder %s229, %s230
      %p239 = scmp.eq.s32.totalorder %s22, 0
      %p240 = por %p238, %p239
      %p241 = scmp.ne.s32.totalorder %s229, %s230
      %p242 = scmp.eq.s32.totalorder %s23, 15
      %p243 = por %p241, %p242
      %p245 = scmp.ne.s32.totalorder %s230, %s244
      %p246 = scmp.eq.s32.totalorder %s23, 0
      %p247 = por %p245, %p246
      %s248 = ssub.s32 %s24, %s43
      %s249 = ssub.s32 %s26, %s35
      %s250 = sor.u32 %s248, %s249
      %s251 = ssub.s32 %s25, %s39
      %s252 = sor.u32 %s250, %s251
      %p253 = scmp.eq.s32.totalorder %s252, 0
      %s255 = sadd.s32 %s254, 1
      %s256 = scalar_select %p253, %s254, %s255
      %p259 = pneg %p253
      %p260 = scmp.eq.s32.totalorder %s17, 15
      %p261 = por %p259, %p260
      %p262 = scmp.ne.s32.totalorder %s254, %s257
      %p263 = scmp.eq.s32.totalorder %s17, 0
      %p264 = por %p262, %p263
      %p265 = scmp.ne.s32.totalorder %s254, %s257
      %p266 = scmp.eq.s32.totalorder %s22, 15
      %p267 = por %p265, %p266
      %p268 = scmp.ne.s32.totalorder %s257, %s258
      %p269 = scmp.eq.s32.totalorder %s22, 0
      %p270 = por %p268, %p269
      %p271 = scmp.ne.s32.totalorder %s257, %s258
      %p272 = scmp.eq.s32.totalorder %s23, 15
      %p273 = por %p271, %p272
      %p275 = scmp.ne.s32.totalorder %s258, %s274
      %p276 = scmp.eq.s32.totalorder %s23, 0
      %p277 = por %p275, %p276
      %s278 = ssub.s32 %s24, %s43
      %s279 = ssub.s32 %s26, %s35
      %s280 = sor.u32 %s278, %s279
      %s281 = ssub.s32 %s25, %s39
      %s282 = sor.u32 %s280, %s281
      %p283 = scmp.eq.s32.totalorder %s282, 0
      %s285 = sadd.s32 %s284, 1
      %s286 = scalar_select %p283, %s284, %s285
      %p289 = pneg %p283
      %p290 = scmp.eq.s32.totalorder %s17, 15
      %p291 = por %p289, %p290
      %p292 = scmp.ne.s32.totalorder %s284, %s287
      %p293 = scmp.eq.s32.totalorder %s17, 0
      %p294 = por %p292, %p293
      %p295 = scmp.ne.s32.totalorder %s284, %s287
      %p296 = scmp.eq.s32.totalorder %s22, 15
      %p297 = por %p295, %p296
      %p298 = scmp.ne.s32.totalorder %s287, %s288
      %p299 = scmp.eq.s32.totalorder %s22, 0
      %p300 = por %p298, %p299
      %p301 = scmp.ne.s32.totalorder %s287, %s288
      %p302 = scmp.eq.s32.totalorder %s23, 15
      %p303 = por %p301, %p302
      %p305 = scmp.ne.s32.totalorder %s288, %s304
      %p306 = scmp.eq.s32.totalorder %s23, 0
      %p307 = por %p305, %p306
      %p308 = scmp.le.s32.totalorder 1, %s17
      %p309 = scmp.lt.s32.totalorder %s17, 17
      %p310 = pnand %p308, %p309
      %p311 = pneg %p310
      // Predicated region
      $region9: #{res_block_forward.7} parent=5 // pred_check
        _
      $region10: #{res_block_forward.7} parent=5 // pred_check_branch
        %313 = sbr.rel (%p310) target = $region12
      $region11: #{res_block_forward.7} parent=5 // pred_region
        %s314 = ssub.s32 %s17, 1
        // Predicated region
        $region13: #{res_block_forward.7} parent=11 // pred_check
          %p315 = pneg %p219
        $region14: #{res_block_forward.7} parent=11 // pred_check_branch
          %317 = sbr.rel (%p315) target = $region16
        $region15: #{res_block_forward.7} parent=11 // pred_region
          _
        $region16: #{res_block_forward.7} parent=11 // pred_fallthru
          _
        // Predicated region
        $region17: #{res_block_forward.7} parent=11 // pred_check
          %p318 = pneg %p240
        $region18: #{res_block_forward.7} parent=11 // pred_check_branch
          %320 = sbr.rel (%p318) target = $region20
        $region19: #{res_block_forward.7} parent=11 // pred_region
          _
        $region20: #{res_block_forward.7} parent=11 // pred_fallthru
          _
      $region12: #{res_block_forward.7} parent=5 // pred_fallthru
        _
      %p321 = scmp.lt.s32.totalorder %s17, 16
      // Predicated region
      $region21: #{res_block_forward.7} parent=5 // pred_check
        %p322 = pneg %p321
      $region22: #{res_block_forward.7} parent=5 // pred_check_branch
        %324 = sbr.rel (%p322) target = $region24
      $region23: #{res_block_forward.7} parent=5 // pred_region
        // Predicated region
        $region25: #{res_block_forward.7} parent=23 // pred_check
          %p325 = pneg %p60
        $region26: #{res_block_forward.7} parent=23 // pred_check_branch
          %327 = sbr.rel (%p325) target = $region28
        $region27: #{res_block_forward.7} parent=23 // pred_region
          %s328 = smul.u32 8, %s25
          %p329 = scmp.lt.s32.totalorder %s24, 1
          %s330 = scalar_select %p329, %s24, 1
          %p331 = scmp.lt.s32.totalorder %s26, 3
          %s332 = scalar_select %p331, %s26, 3
          %p333 = scmp.lt.s32.totalorder %s328, 15
          %s334 = scalar_select %p333, %s328, 15
          %s335 = smul.addr %s334, 2
          %s336 = smul.addr %s332, 32
          %s337 = sadd.s32 %s335, %s336
          %s338 = smul.addr %s330, 128
          %s339 = sadd.s32 %s337, %s338
          %s340 = smul.addr %s339, 4
          %s341 = scalar_lea.vmem %s0, %s340
          %s342 = smul.u32 8, %s25
        $region28: #{res_block_forward.7} parent=23 // pred_fallthru
          _
        // Predicated region
        $region29: #{res_block_forward.7} parent=23 // pred_check
          %p343 = pneg %p98
        $region30: #{res_block_forward.7} parent=23 // pred_check_branch
          %345 = sbr.rel (%p343) target = $region32
        $region31: #{res_block_forward.7} parent=23 // pred_region
          %s346 = smul.u32 %s25, 8
          %s347 = ssub.s32 %s346, 1
          %p348 = scmp.gt.s32.totalorder %s347, 0
          %s349 = scalar_select %p348, %s347, 0
          %p350 = scmp.lt.s32.totalorder %s24, 1
          %s351 = scalar_select %p350, %s24, 1
          %p352 = scmp.lt.s32.totalorder %s26, 3
          %s353 = scalar_select %p352, %s26, 3
          %p354 = scmp.lt.s32.totalorder %s349, 15
          %s355 = scalar_select %p354, %s349, 15
          %s356 = smul.addr %s355, 2
          %s357 = smul.addr %s353, 32
          %s358 = sadd.s32 %s356, %s357
          %s359 = smul.addr %s351, 128
          %s360 = sadd.s32 %s358, %s359
          %s361 = smul.addr %s360, 4
          %s362 = scalar_lea.vmem %s1, %s361
          %s363 = smul.u32 %s25, 8
          %s364 = ssub.s32 %s363, 1
          %p365 = scmp.gt.s32.totalorder %s364, 0
          %s366 = scalar_select %p365, %s364, 0
        $region32: #{res_block_forward.7} parent=23 // pred_fallthru
          _
        // Predicated region
        $region33: #{res_block_forward.7} parent=23 // pred_check
          %p367 = pneg %p136
        $region34: #{res_block_forward.7} parent=23 // pred_check_branch
          %369 = sbr.rel (%p367) target = $region36
        $region35: #{res_block_forward.7} parent=23 // pred_region
          %s370 = sadd.s32 %s25, 1
          %s371 = smul.u32 %s370, 8
          %p372 = scmp.lt.s32.totalorder %s371, 15
          %s373 = scalar_select %p372, %s371, 15
          %p374 = scmp.lt.s32.totalorder %s24, 1
          %s375 = scalar_select %p374, %s24, 1
          %p376 = scmp.lt.s32.totalorder %s26, 3
          %s377 = scalar_select %p376, %s26, 3
          %p378 = scmp.lt.s32.totalorder %s373, 15
          %s379 = scalar_select %p378, %s373, 15
          %s380 = smul.addr %s379, 2
          %s381 = smul.addr %s377, 32
          %s382 = sadd.s32 %s380, %s381
          %s383 = smul.addr %s375, 128
          %s384 = sadd.s32 %s382, %s383
          %s385 = smul.addr %s384, 4
          %s386 = scalar_lea.vmem %s2, %s385
          %s387 = sadd.s32 %s25, 1
          %s388 = smul.u32 %s387, 8
          %p389 = scmp.lt.s32.totalorder %s388, 15
          %s390 = scalar_select %p389, %s388, 15
        $region36: #{res_block_forward.7} parent=23 // pred_fallthru
          _
        // Predicated region
        $region37: #{res_block_forward.7} parent=23 // pred_check
          %p391 = pneg %p164
        $region38: #{res_block_forward.7} parent=23 // pred_check_branch
          %393 = sbr.rel (%p391) target = $region40
        $region39: #{res_block_forward.7} parent=23 // pred_region
          %p394 = scmp.lt.s32.totalorder %s24, 1
          %s395 = scalar_select %p394, %s24, 1
          %p396 = scmp.lt.s32.totalorder %s26, 3
          %s397 = scalar_select %p396, %s26, 3
          %s398 = smul.addr %s395, 4
          %s399 = sadd.s32 %s397, %s398
          %s400 = scalar_lea.vmem %s3, %s399
        $region40: #{res_block_forward.7} parent=23 // pred_fallthru
          _
        // Predicated region
        $region41: #{res_block_forward.7} parent=23 // pred_check
          %p401 = pneg %p192
        $region42: #{res_block_forward.7} parent=23 // pred_check_branch
          %403 = sbr.rel (%p401) target = $region44
        $region43: #{res_block_forward.7} parent=23 // pred_region
          %p404 = scmp.lt.s32.totalorder %s24, 1
          %s405 = scalar_select %p404, %s24, 1
          %p406 = scmp.lt.s32.totalorder %s26, 3
          %s407 = scalar_select %p406, %s26, 3
          %s408 = smul.addr %s405, 4
          %s409 = sadd.s32 %s407, %s408
          %s410 = scalar_lea.vmem %s4, %s409
        $region44: #{res_block_forward.7} parent=23 // pred_fallthru
          _
        // Predicated region
        $region45: #{res_block_forward.7} parent=23 // pred_check
          %p411 = pneg %p264
        $region46: #{res_block_forward.7} parent=23 // pred_check_branch
          %413 = sbr.rel (%p411) target = $region48
        $region47: #{res_block_forward.7} parent=23 // pred_region
          %s414 = smul.u32 16, %s25
          %p415 = scmp.lt.s32.totalorder %s24, 1
          %s416 = scalar_select %p415, %s24, 1
          %p417 = scmp.lt.s32.totalorder %s26, 3
          %s418 = scalar_select %p417, %s26, 3
          %p419 = scmp.lt.s32.totalorder %s414, 31
          %s420 = scalar_select %p419, %s414, 31
          %s421 = smul.addr %s418, 32
          %s422 = sadd.s32 %s420, %s421
          %s423 = smul.addr %s416, 128
          %s424 = sadd.s32 %s422, %s423
          %s425 = smul.addr %s424, 8
          %s426 = scalar_lea.vmem %s7, %s425
          %s427 = smul.u32 16, %s25
        $region48: #{res_block_forward.7} parent=23 // pred_fallthru
          _
      $region24: #{res_block_forward.7} parent=5 // pred_fallthru
        _
      %p428 = scmp.le.s32.totalorder 1, %s17
      %p429 = scmp.lt.s32.totalorder %s17, 17
      %p430 = pnand %p428, %p429
      %p431 = pneg %p430
      // Predicated region
      $region49: #{res_block_forward.7} parent=5 // pred_check
        _
      $region50: #{res_block_forward.7} parent=5 // pred_check_branch
        %433 = sbr.rel (%p430) target = $region52
      $region51: #{res_block_forward.7} parent=5 // pred_region
        %s434 = ssub.s32 %s17, 1
        %s435 = smul.u32 8, %s28
        %p436 = scmp.lt.s32.totalorder %s27, 1
        %s437 = scalar_select %p436, %s27, 1
        %p438 = scmp.lt.s32.totalorder %s29, 3
        %s439 = scalar_select %p438, %s29, 3
        %p440 = scmp.lt.s32.totalorder %s435, 15
        %s441 = scalar_select %p440, %s435, 15
        %s442 = smul.addr %s441, 2
        %s443 = smul.addr %s439, 32
        %s444 = sadd.s32 %s442, %s443
        %s445 = smul.addr %s437, 128
        %s446 = sadd.s32 %s444, %s445
        %s447 = smul.addr %s446, 4
        %s448 = scalar_lea.vmem %s0, %s447
        %p449 = pneg %p66
        %p450 = pneg %p63
        %s451 = smul.u32 %s28, 8
        %s452 = ssub.s32 %s451, 1
        %p453 = scmp.gt.s32.totalorder %s452, 0
        %s454 = scalar_select %p453, %s452, 0
        %p455 = scmp.lt.s32.totalorder %s27, 1
        %s456 = scalar_select %p455, %s27, 1
        %p457 = scmp.lt.s32.totalorder %s29, 3
        %s458 = scalar_select %p457, %s29, 3
        %p459 = scmp.lt.s32.totalorder %s454, 15
        %s460 = scalar_select %p459, %s454, 15
        %s461 = smul.addr %s460, 2
        %s462 = smul.addr %s458, 32
        %s463 = sadd.s32 %s461, %s462
        %s464 = smul.addr %s456, 128
        %s465 = sadd.s32 %s463, %s464
        %s466 = smul.addr %s465, 4
        %s467 = scalar_lea.vmem %s1, %s466
        %p468 = pneg %p104
        %p469 = pneg %p101
        %s470 = sadd.s32 %s28, 1
        %s471 = smul.u32 %s470, 8
        %p472 = scmp.lt.s32.totalorder %s471, 15
        %s473 = scalar_select %p472, %s471, 15
        %p474 = scmp.lt.s32.totalorder %s27, 1
        %s475 = scalar_select %p474, %s27, 1
        %p476 = scmp.lt.s32.totalorder %s29, 3
        %s477 = scalar_select %p476, %s29, 3
        %p478 = scmp.lt.s32.totalorder %s473, 15
        %s479 = scalar_select %p478, %s473, 15
        %s480 = smul.addr %s479, 2
        %s481 = smul.addr %s477, 32
        %s482 = sadd.s32 %s480, %s481
        %s483 = smul.addr %s475, 128
        %s484 = sadd.s32 %s482, %s483
        %s485 = smul.addr %s484, 4
        %s486 = scalar_lea.vmem %s2, %s485
        %p487 = pneg %p142
        %p488 = pneg %p139
        %p489 = scmp.lt.s32.totalorder %s27, 1
        %s490 = scalar_select %p489, %s27, 1
        %p491 = scmp.lt.s32.totalorder %s29, 3
        %s492 = scalar_select %p491, %s29, 3
        %s493 = smul.addr %s490, 4
        %s494 = sadd.s32 %s492, %s493
        %s495 = scalar_lea.vmem %s3, %s494
        %p496 = pneg %p170
        %p497 = pneg %p167
        %p498 = scmp.lt.s32.totalorder %s27, 1
        %s499 = scalar_select %p498, %s27, 1
        %p500 = scmp.lt.s32.totalorder %s29, 3
        %s501 = scalar_select %p500, %s29, 3
        %s502 = smul.addr %s499, 4
        %s503 = sadd.s32 %s501, %s502
        %s504 = scalar_lea.vmem %s4, %s503
        %p505 = pneg %p198
        %p506 = pneg %p195
        %p507 = pneg %p219
        %p508 = pneg %p216
        %p509 = pneg %p240
        %p510 = pneg %p237
        %s511 = smul.u32 16, %s28
        %p512 = scmp.lt.s32.totalorder %s27, 1
        %s513 = scalar_select %p512, %s27, 1
        %p514 = scmp.lt.s32.totalorder %s29, 3
        %s515 = scalar_select %p514, %s29, 3
        %p516 = scmp.lt.s32.totalorder %s511, 31
        %s517 = scalar_select %p516, %s511, 31
        %s518 = smul.addr %s515, 32
        %s519 = sadd.s32 %s517, %s518
        %s520 = smul.addr %s513, 128
        %s521 = sadd.s32 %s519, %s520
        %s522 = smul.addr %s521, 8
        %s523 = scalar_lea.vmem %s7, %s522
        %p524 = pneg %p270
        %p525 = pneg %p267
        %p526 = pneg %p300
        %p527 = pneg %p297
        %s528 = sand.u32 %s287, 1
        %s529 = scalar_lea.sflag [#allocation4], %s528
        %s530 = sand.u32 %s287, 1
        %s531 = smul.addr %s530, 128
        %s532 = scalar_lea.vmem [#allocation3], %s531
        %s533 = smul.u32 8, %s28
        %p534 = scmp.lt.s32.totalorder %s27, 1
        %s535 = scalar_select %p534, %s27, 1
        %p536 = scmp.lt.s32.totalorder %s29, 3
        %s537 = scalar_select %p536, %s29, 3
        %p538 = scmp.lt.s32.totalorder %s533, 15
        %s539 = scalar_select %p538, %s533, 15
        %s540 = smul.addr %s539, 2
        %s541 = smul.addr %s537, 32
        %s542 = sadd.s32 %s540, %s541
        %s543 = smul.addr %s535, 128
        %s544 = sadd.s32 %s542, %s543
        %s545 = smul.addr %s544, 4
        %s546 = scalar_lea.vmem %s0, %s545
        %s547 = smul.u32 8, %s28
        %s548 = smul.u32 %s28, 8
        %s549 = ssub.s32 %s548, 1
        %p550 = scmp.gt.s32.totalorder %s549, 0
        %s551 = scalar_select %p550, %s549, 0
        %p552 = scmp.lt.s32.totalorder %s27, 1
        %s553 = scalar_select %p552, %s27, 1
        %p554 = scmp.lt.s32.totalorder %s29, 3
        %s555 = scalar_select %p554, %s29, 3
        %p556 = scmp.lt.s32.totalorder %s551, 15
        %s557 = scalar_select %p556, %s551, 15
        %s558 = smul.addr %s557, 2
        %s559 = smul.addr %s555, 32
        %s560 = sadd.s32 %s558, %s559
        %s561 = smul.addr %s553, 128
        %s562 = sadd.s32 %s560, %s561
        %s563 = smul.addr %s562, 4
        %s564 = scalar_lea.vmem %s1, %s563
        %s565 = smul.u32 %s28, 8
        %s566 = ssub.s32 %s565, 1
        %p567 = scmp.gt.s32.totalorder %s566, 0
        %s568 = scalar_select %p567, %s566, 0
        %s569 = sadd.s32 %s28, 1
        %s570 = smul.u32 %s569, 8
        %p571 = scmp.lt.s32.totalorder %s570, 15
        %s572 = scalar_select %p571, %s570, 15
        %p573 = scmp.lt.s32.totalorder %s27, 1
        %s574 = scalar_select %p573, %s27, 1
        %p575 = scmp.lt.s32.totalorder %s29, 3
        %s576 = scalar_select %p575, %s29, 3
        %p577 = scmp.lt.s32.totalorder %s572, 15
        %s578 = scalar_select %p577, %s572, 15
        %s579 = smul.addr %s578, 2
        %s580 = smul.addr %s576, 32
        %s581 = sadd.s32 %s579, %s580
        %s582 = smul.addr %s574, 128
        %s583 = sadd.s32 %s581, %s582
        %s584 = smul.addr %s583, 4
        %s585 = scalar_lea.vmem %s2, %s584
        %s586 = sadd.s32 %s28, 1
        %s587 = smul.u32 %s586, 8
        %p588 = scmp.lt.s32.totalorder %s587, 15
        %s589 = scalar_select %p588, %s587, 15
        %p590 = scmp.lt.s32.totalorder %s27, 1
        %s591 = scalar_select %p590, %s27, 1
        %p592 = scmp.lt.s32.totalorder %s29, 3
        %s593 = scalar_select %p592, %s29, 3
        %s594 = smul.addr %s591, 4
        %s595 = sadd.s32 %s593, %s594
        %s596 = scalar_lea.vmem %s3, %s595
        %p597 = scmp.lt.s32.totalorder %s27, 1
        %s598 = scalar_select %p597, %s27, 1
        %p599 = scmp.lt.s32.totalorder %s29, 3
        %s600 = scalar_select %p599, %s29, 3
        %s601 = smul.addr %s598, 4
        %s602 = sadd.s32 %s600, %s601
        %s603 = scalar_lea.vmem %s4, %s602
        %s604 = smul.u32 16, %s28
        %p605 = scmp.lt.s32.totalorder %s27, 1
        %s606 = scalar_select %p605, %s27, 1
        %p607 = scmp.lt.s32.totalorder %s29, 3
        %s608 = scalar_select %p607, %s29, 3
        %p609 = scmp.lt.s32.totalorder %s604, 31
        %s610 = scalar_select %p609, %s604, 31
        %s611 = smul.addr %s608, 32
        %s612 = sadd.s32 %s610, %s611
        %s613 = smul.addr %s606, 128
        %s614 = sadd.s32 %s612, %s613
        %s615 = smul.addr %s614, 8
        %s616 = scalar_lea.vmem %s7, %s615
        %s617 = smul.u32 16, %s28
        %s618 = smul.u32 16, %s28
        %p620 = scmp.eq.s32.totalorder %s29, 0
        // Predicated region
        $region53: #{res_block_forward.7} parent=51 // pred_check
          %p621 = pneg %p620
        $region54: #{res_block_forward.7} parent=51 // pred_check_branch
          %623 = sbr.rel (%p621) target = $region56
        $region55: #{res_block_forward.7} parent=51 // pred_region
          %vm624 = vcmask 257024
          %625 = vst.msk [vmem:[#allocation2] sm:$0xf] %vm624, 0
          %626 = vst.msk [vmem:[#allocation2 + $0x4] sm:$0xf] %vm624, 0
          %627 = vst.msk [vmem:[#allocation2 + $0x8] sm:$0xf] %vm624, 0
          %628 = vst.msk [vmem:[#allocation2 + $0xc] sm:$0xf] %vm624, 0
          %629 = vst.msk [vmem:[#allocation2 + $0x10] sm:$0xf] %vm624, 0
          %630 = vst.msk [vmem:[#allocation2 + $0x14] sm:$0xf] %vm624, 0
          %631 = vst.msk [vmem:[#allocation2 + $0x18] sm:$0xf] %vm624, 0
          %632 = vst.msk [vmem:[#allocation2 + $0x1c] sm:$0xf] %vm624, 0
          %633 = vst.msk [vmem:[#allocation2 + $0x20] sm:$0xf] %vm624, 0
          %634 = vst.msk [vmem:[#allocation2 + $0x24] sm:$0xf] %vm624, 0
          %635 = vst.msk [vmem:[#allocation2 + $0x28] sm:$0xf] %vm624, 0
          %636 = vst.msk [vmem:[#allocation2 + $0x2c] sm:$0xf] %vm624, 0
          %637 = vst.msk [vmem:[#allocation2 + $0x30] sm:$0xf] %vm624, 0
          %638 = vst.msk [vmem:[#allocation2 + $0x34] sm:$0xf] %vm624, 0
          %639 = vst.msk [vmem:[#allocation2 + $0x38] sm:$0xf] %vm624, 0
          %640 = vst.msk [vmem:[#allocation2 + $0x3c] sm:$0xf] %vm624, 0
          %641 = vst.msk [vmem:[#allocation2 + $0x40] sm:$0xf] %vm624, 0
          %642 = vst.msk [vmem:[#allocation2 + $0x44] sm:$0xf] %vm624, 0
          %643 = vst.msk [vmem:[#allocation2 + $0x48] sm:$0xf] %vm624, 0
          %644 = vst.msk [vmem:[#allocation2 + $0x4c] sm:$0xf] %vm624, 0
          %645 = vst.msk [vmem:[#allocation2 + $0x50] sm:$0xf] %vm624, 0
          %646 = vst.msk [vmem:[#allocation2 + $0x54] sm:$0xf] %vm624, 0
          %647 = vst.msk [vmem:[#allocation2 + $0x58] sm:$0xf] %vm624, 0
          %648 = vst.msk [vmem:[#allocation2 + $0x5c] sm:$0xf] %vm624, 0
          %649 = vst.msk [vmem:[#allocation2 + $0x60] sm:$0xf] %vm624, 0
          %650 = vst.msk [vmem:[#allocation2 + $0x64] sm:$0xf] %vm624, 0
          %651 = vst.msk [vmem:[#allocation2 + $0x68] sm:$0xf] %vm624, 0
          %652 = vst.msk [vmem:[#allocation2 + $0x6c] sm:$0xf] %vm624, 0
          %653 = vst.msk [vmem:[#allocation2 + $0x70] sm:$0xf] %vm624, 0
          %654 = vst.msk [vmem:[#allocation2 + $0x74] sm:$0xf] %vm624, 0
          %655 = vst.msk [vmem:[#allocation2 + $0x78] sm:$0xf] %vm624, 0
          %656 = vst.msk [vmem:[#allocation2 + $0x7c] sm:$0xf] %vm624, 0
          %657 = vst.msk [vmem:[#allocation2 + $0x80] sm:$0xf] %vm624, 0
          %658 = vst.msk [vmem:[#allocation2 + $0x84] sm:$0xf] %vm624, 0
          %659 = vst.msk [vmem:[#allocation2 + $0x88] sm:$0xf] %vm624, 0
          %660 = vst.msk [vmem:[#allocation2 + $0x8c] sm:$0xf] %vm624, 0
          %661 = vst.msk [vmem:[#allocation2 + $0x90] sm:$0xf] %vm624, 0
          %662 = vst.msk [vmem:[#allocation2 + $0x94] sm:$0xf] %vm624, 0
          %663 = vst.msk [vmem:[#allocation2 + $0x98] sm:$0xf] %vm624, 0
          %664 = vst.msk [vmem:[#allocation2 + $0x9c] sm:$0xf] %vm624, 0
          %665 = vst.msk [vmem:[#allocation2 + $0xa0] sm:$0xf] %vm624, 0
          %666 = vst.msk [vmem:[#allocation2 + $0xa4] sm:$0xf] %vm624, 0
          %667 = vst.msk [vmem:[#allocation2 + $0xa8] sm:$0xf] %vm624, 0
          %668 = vst.msk [vmem:[#allocation2 + $0xac] sm:$0xf] %vm624, 0
          %669 = vst.msk [vmem:[#allocation2 + $0xb0] sm:$0xf] %vm624, 0
          %670 = vst.msk [vmem:[#allocation2 + $0xb4] sm:$0xf] %vm624, 0
          %671 = vst.msk [vmem:[#allocation2 + $0xb8] sm:$0xf] %vm624, 0
          %672 = vst.msk [vmem:[#allocation2 + $0xbc] sm:$0xf] %vm624, 0
          %673 = vst.msk [vmem:[#allocation2 + $0xc0] sm:$0xf] %vm624, 0
          %674 = vst.msk [vmem:[#allocation2 + $0xc4] sm:$0xf] %vm624, 0
          %675 = vst.msk [vmem:[#allocation2 + $0xc8] sm:$0xf] %vm624, 0
          %676 = vst.msk [vmem:[#allocation2 + $0xcc] sm:$0xf] %vm624, 0
          %677 = vst.msk [vmem:[#allocation2 + $0xd0] sm:$0xf] %vm624, 0
          %678 = vst.msk [vmem:[#allocation2 + $0xd4] sm:$0xf] %vm624, 0
          %679 = vst.msk [vmem:[#allocation2 + $0xd8] sm:$0xf] %vm624, 0
          %680 = vst.msk [vmem:[#allocation2 + $0xdc] sm:$0xf] %vm624, 0
          %681 = vst.msk [vmem:[#allocation2 + $0xe0] sm:$0xf] %vm624, 0
          %682 = vst.msk [vmem:[#allocation2 + $0xe4] sm:$0xf] %vm624, 0
          %683 = vst.msk [vmem:[#allocation2 + $0xe8] sm:$0xf] %vm624, 0
          %684 = vst.msk [vmem:[#allocation2 + $0xec] sm:$0xf] %vm624, 0
          %685 = vst.msk [vmem:[#allocation2 + $0xf0] sm:$0xf] %vm624, 0
          %686 = vst.msk [vmem:[#allocation2 + $0xf4] sm:$0xf] %vm624, 0
          %687 = vst.msk [vmem:[#allocation2 + $0xf8] sm:$0xf] %vm624, 0
          %688 = vst.msk [vmem:[#allocation2 + $0xfc] sm:$0xf] %vm624, 0
          %689 = vst.msk [vmem:[#allocation2 + $0x100] sm:$0xf] %vm624, 0
          %690 = vst.msk [vmem:[#allocation2 + $0x104] sm:$0xf] %vm624, 0
          %691 = vst.msk [vmem:[#allocation2 + $0x108] sm:$0xf] %vm624, 0
          %692 = vst.msk [vmem:[#allocation2 + $0x10c] sm:$0xf] %vm624, 0
          %693 = vst.msk [vmem:[#allocation2 + $0x110] sm:$0xf] %vm624, 0
          %694 = vst.msk [vmem:[#allocation2 + $0x114] sm:$0xf] %vm624, 0
          %695 = vst.msk [vmem:[#allocation2 + $0x118] sm:$0xf] %vm624, 0
          %696 = vst.msk [vmem:[#allocation2 + $0x11c] sm:$0xf] %vm624, 0
          %697 = vst.msk [vmem:[#allocation2 + $0x120] sm:$0xf] %vm624, 0
          %698 = vst.msk [vmem:[#allocation2 + $0x124] sm:$0xf] %vm624, 0
          %699 = vst.msk [vmem:[#allocation2 + $0x128] sm:$0xf] %vm624, 0
          %700 = vst.msk [vmem:[#allocation2 + $0x12c] sm:$0xf] %vm624, 0
          %701 = vst.msk [vmem:[#allocation2 + $0x130] sm:$0xf] %vm624, 0
          %702 = vst.msk [vmem:[#allocation2 + $0x134] sm:$0xf] %vm624, 0
          %703 = vst.msk [vmem:[#allocation2 + $0x138] sm:$0xf] %vm624, 0
          %704 = vst.msk [vmem:[#allocation2 + $0x13c] sm:$0xf] %vm624, 0
          %705 = vst.msk [vmem:[#allocation2 + $0x140] sm:$0xf] %vm624, 0
          %706 = vst.msk [vmem:[#allocation2 + $0x144] sm:$0xf] %vm624, 0
          %707 = vst.msk [vmem:[#allocation2 + $0x148] sm:$0xf] %vm624, 0
          %708 = vst.msk [vmem:[#allocation2 + $0x14c] sm:$0xf] %vm624, 0
          %709 = vst.msk [vmem:[#allocation2 + $0x150] sm:$0xf] %vm624, 0
          %710 = vst.msk [vmem:[#allocation2 + $0x154] sm:$0xf] %vm624, 0
          %711 = vst.msk [vmem:[#allocation2 + $0x158] sm:$0xf] %vm624, 0
          %712 = vst.msk [vmem:[#allocation2 + $0x15c] sm:$0xf] %vm624, 0
          %713 = vst.msk [vmem:[#allocation2 + $0x160] sm:$0xf] %vm624, 0
          %714 = vst.msk [vmem:[#allocation2 + $0x164] sm:$0xf] %vm624, 0
          %715 = vst.msk [vmem:[#allocation2 + $0x168] sm:$0xf] %vm624, 0
          %716 = vst.msk [vmem:[#allocation2 + $0x16c] sm:$0xf] %vm624, 0
          %717 = vst.msk [vmem:[#allocation2 + $0x170] sm:$0xf] %vm624, 0
          %718 = vst.msk [vmem:[#allocation2 + $0x174] sm:$0xf] %vm624, 0
          %719 = vst.msk [vmem:[#allocation2 + $0x178] sm:$0xf] %vm624, 0
          %720 = vst.msk [vmem:[#allocation2 + $0x17c] sm:$0xf] %vm624, 0
          %721 = vst.msk [vmem:[#allocation2 + $0x180] sm:$0xf] %vm624, 0
          %722 = vst.msk [vmem:[#allocation2 + $0x184] sm:$0xf] %vm624, 0
          %723 = vst.msk [vmem:[#allocation2 + $0x188] sm:$0xf] %vm624, 0
          %724 = vst.msk [vmem:[#allocation2 + $0x18c] sm:$0xf] %vm624, 0
          %725 = vst.msk [vmem:[#allocation2 + $0x190] sm:$0xf] %vm624, 0
          %726 = vst.msk [vmem:[#allocation2 + $0x194] sm:$0xf] %vm624, 0
          %727 = vst.msk [vmem:[#allocation2 + $0x198] sm:$0xf] %vm624, 0
          %728 = vst.msk [vmem:[#allocation2 + $0x19c] sm:$0xf] %vm624, 0
          %729 = vst.msk [vmem:[#allocation2 + $0x1a0] sm:$0xf] %vm624, 0
          %730 = vst.msk [vmem:[#allocation2 + $0x1a4] sm:$0xf] %vm624, 0
          %731 = vst.msk [vmem:[#allocation2 + $0x1a8] sm:$0xf] %vm624, 0
          %732 = vst.msk [vmem:[#allocation2 + $0x1ac] sm:$0xf] %vm624, 0
          %733 = vst.msk [vmem:[#allocation2 + $0x1b0] sm:$0xf] %vm624, 0
          %734 = vst.msk [vmem:[#allocation2 + $0x1b4] sm:$0xf] %vm624, 0
          %735 = vst.msk [vmem:[#allocation2 + $0x1b8] sm:$0xf] %vm624, 0
          %736 = vst.msk [vmem:[#allocation2 + $0x1bc] sm:$0xf] %vm624, 0
          %737 = vst.msk [vmem:[#allocation2 + $0x1c0] sm:$0xf] %vm624, 0
          %738 = vst.msk [vmem:[#allocation2 + $0x1c4] sm:$0xf] %vm624, 0
          %739 = vst.msk [vmem:[#allocation2 + $0x1c8] sm:$0xf] %vm624, 0
          %740 = vst.msk [vmem:[#allocation2 + $0x1cc] sm:$0xf] %vm624, 0
          %741 = vst.msk [vmem:[#allocation2 + $0x1d0] sm:$0xf] %vm624, 0
          %742 = vst.msk [vmem:[#allocation2 + $0x1d4] sm:$0xf] %vm624, 0
          %743 = vst.msk [vmem:[#allocation2 + $0x1d8] sm:$0xf] %vm624, 0
          %744 = vst.msk [vmem:[#allocation2 + $0x1dc] sm:$0xf] %vm624, 0
        $region56: #{res_block_forward.7} parent=51 // pred_fallthru
          _
        %v745 = vld [vmem:[%s596] sm:$0x1]
        %v746 = vld [vmem:[%s603] sm:$0x1]
        %p747 = scmp.lt.s32.totalorder %s29, 0
        %s748 = ssub.s32 0, %s29
        %s749 = scalar_select %p747, %s748, %s29
        %s750 = sdiv.u32.pop %s749, 3
        %s751 = srem.u32.pop %s749, 3
        %s752 = ssub.s32 0, %s751
        %s753 = scalar_select %p747, %s752, %s751
        %p754 = scmp.ne.s32.totalorder %s753, 0
        %p755 = scmp.lt.s32.totalorder %s753, 0
        %p756 = pnand %p755, %p754
        %p757 = pneg %p756
        %s758 = sadd.s32 %s753, 3
        %s759 = scalar_select %p757, %s758, %s753
        %v760 = vld [vmem:[%s546] sm:$0xf]
        %v761 = vld [vmem:[%s546 + $0x4] sm:$0xf]
        %v762 = vld [vmem:[%s546 + $0x8] sm:$0xf]
        %v763 = vld [vmem:[%s546 + $0xc] sm:$0xf]
        %v764 = vld [vmem:[%s546 + $0x10] sm:$0xf]
        %v765 = vld [vmem:[%s546 + $0x14] sm:$0xf]
        %v766 = vld [vmem:[%s546 + $0x18] sm:$0xf]
        %v767 = vld [vmem:[%s546 + $0x1c] sm:$0xf]
        %v768 = vld [vmem:[%s546 + $0x20] sm:$0xf]
        %v769 = vld [vmem:[%s546 + $0x24] sm:$0xf]
        %v770 = vld [vmem:[%s546 + $0x28] sm:$0xf]
        %v771 = vld [vmem:[%s546 + $0x2c] sm:$0xf]
        %v772 = vld [vmem:[%s546 + $0x30] sm:$0xf]
        %v773 = vld [vmem:[%s546 + $0x34] sm:$0xf]
        %v774 = vld [vmem:[%s546 + $0x38] sm:$0xf]
        %v775 = vld [vmem:[%s546 + $0x3c] sm:$0xf]
        %v776 = vunpack.c.l.bf16 %v760
        %v777 = vunpack.c.l.bf16 %v761
        %v778 = vunpack.c.l.bf16 %v762
        %v779 = vunpack.c.l.bf16 %v763
        %v780 = vunpack.c.l.bf16 %v764
        %v781 = vunpack.c.l.bf16 %v765
        %v782 = vunpack.c.l.bf16 %v766
        %v783 = vunpack.c.l.bf16 %v767
        %v784 = vunpack.c.l.bf16 %v768
        %v785 = vunpack.c.l.bf16 %v769
        %v786 = vunpack.c.l.bf16 %v770
        %v787 = vunpack.c.l.bf16 %v771
        %v788 = vunpack.c.l.bf16 %v772
        %v789 = vunpack.c.l.bf16 %v773
        %v790 = vunpack.c.l.bf16 %v774
        %v791 = vunpack.c.l.bf16 %v775
        %v793 = vlaneseq
        %v794 = vshrl.u32 %v793, 7
        %v795 = vsub.s32 0, %v794
        %v796 = vrot.slane %v745, %v795
        %v798 = vmul.f32 %v776, %v796
        %v799 = vmul.f32 %v777, %v796
        %v800 = vmul.f32 %v778, %v796
        %v801 = vmul.f32 %v779, %v796
        %v802 = vmul.f32 %v780, %v796
        %v803 = vmul.f32 %v781, %v796
        %v804 = vmul.f32 %v782, %v796
        %v805 = vmul.f32 %v783, %v796
        %v806 = vmul.f32 %v784, %v796
        %v807 = vmul.f32 %v785, %v796
        %v808 = vmul.f32 %v786, %v796
        %v809 = vmul.f32 %v787, %v796
        %v810 = vmul.f32 %v788, %v796
        %v811 = vmul.f32 %v789, %v796
        %v812 = vmul.f32 %v790, %v796
        %v813 = vmul.f32 %v791, %v796
        %v815 = vlaneseq
        %v816 = vshrl.u32 %v815, 7
        %v817 = vsub.s32 0, %v816
        %v818 = vrot.slane %v746, %v817
        %v820 = vadd.f32 %v798, %v818
        %v821 = vadd.f32 %v799, %v818
        %v822 = vadd.f32 %v800, %v818
        %v823 = vadd.f32 %v801, %v818
        %v824 = vadd.f32 %v802, %v818
        %v825 = vadd.f32 %v803, %v818
        %v826 = vadd.f32 %v804, %v818
        %v827 = vadd.f32 %v805, %v818
        %v828 = vadd.f32 %v806, %v818
        %v829 = vadd.f32 %v807, %v818
        %v830 = vadd.f32 %v808, %v818
        %v831 = vadd.f32 %v809, %v818
        %v832 = vadd.f32 %v810, %v818
        %v833 = vadd.f32 %v811, %v818
        %v834 = vadd.f32 %v812, %v818
        %v835 = vadd.f32 %v813, %v818
        %v836 = vxor.u32 %v820, 2147483648
        %v837 = vxor.u32 %v821, 2147483648
        %v838 = vxor.u32 %v822, 2147483648
        %v839 = vxor.u32 %v823, 2147483648
        %v840 = vxor.u32 %v824, 2147483648
        %v841 = vxor.u32 %v825, 2147483648
        %v842 = vxor.u32 %v826, 2147483648
        %v843 = vxor.u32 %v827, 2147483648
        %v844 = vxor.u32 %v828, 2147483648
        %v845 = vxor.u32 %v829, 2147483648
        %v846 = vxor.u32 %v830, 2147483648
        %v847 = vxor.u32 %v831, 2147483648
        %v848 = vxor.u32 %v832, 2147483648
        %v849 = vxor.u32 %v833, 2147483648
        %v850 = vxor.u32 %v834, 2147483648
        %v851 = vxor.u32 %v835, 2147483648
        %v852 = vmul.f32 %v836, 1.442695
        %v853 = vpow.pop %v852
        %v854 = vmul.f32 %v837, 1.442695
        %v855 = vpow.pop %v854
        %v856 = vmul.f32 %v838, 1.442695
        %v857 = vpow.pop %v856
        %v858 = vmul.f32 %v839, 1.442695
        %v859 = vpow.pop %v858
        %v860 = vmul.f32 %v840, 1.442695
        %v861 = vpow.pop %v860
        %v862 = vmul.f32 %v841, 1.442695
        %v863 = vpow.pop %v862
        %v864 = vmul.f32 %v842, 1.442695
        %v865 = vpow.pop %v864
        %v866 = vmul.f32 %v843, 1.442695
        %v867 = vpow.pop %v866
        %v868 = vmul.f32 %v844, 1.442695
        %v869 = vpow.pop %v868
        %v870 = vmul.f32 %v845, 1.442695
        %v871 = vpow.pop %v870
        %v872 = vmul.f32 %v846, 1.442695
        %v873 = vpow.pop %v872
        %v874 = vmul.f32 %v847, 1.442695
        %v875 = vpow.pop %v874
        %v876 = vmul.f32 %v848, 1.442695
        %v877 = vpow.pop %v876
        %v878 = vmul.f32 %v849, 1.442695
        %v879 = vpow.pop %v878
        %v880 = vmul.f32 %v850, 1.442695
        %v881 = vpow.pop %v880
        %v882 = vmul.f32 %v851, 1.442695
        %v883 = vpow.pop %v882
        %v884 = vadd.f32 %v853, 1.0
        %v885 = vadd.f32 %v855, 1.0
        %v886 = vadd.f32 %v857, 1.0
        %v887 = vadd.f32 %v859, 1.0
        %v888 = vadd.f32 %v861, 1.0
        %v889 = vadd.f32 %v863, 1.0
        %v890 = vadd.f32 %v865, 1.0
        %v891 = vadd.f32 %v867, 1.0
        %v892 = vadd.f32 %v869, 1.0
        %v893 = vadd.f32 %v871, 1.0
        %v894 = vadd.f32 %v873, 1.0
        %v895 = vadd.f32 %v875, 1.0
        %v896 = vadd.f32 %v877, 1.0
        %v897 = vadd.f32 %v879, 1.0
        %v898 = vadd.f32 %v881, 1.0
        %v899 = vadd.f32 %v883, 1.0
        %v900 = vrcp.pop %v884
        %v901 = vmul.f32 1.0, %v900
        %v902 = vrcp.pop %v885
        %v903 = vmul.f32 1.0, %v902
        %v904 = vrcp.pop %v886
        %v905 = vmul.f32 1.0, %v904
        %v906 = vrcp.pop %v887
        %v907 = vmul.f32 1.0, %v906
        %v908 = vrcp.pop %v888
        %v909 = vmul.f32 1.0, %v908
        %v910 = vrcp.pop %v889
        %v911 = vmul.f32 1.0, %v910
        %v912 = vrcp.pop %v890
        %v913 = vmul.f32 1.0, %v912
        %v914 = vrcp.pop %v891
        %v915 = vmul.f32 1.0, %v914
        %v916 = vrcp.pop %v892
        %v917 = vmul.f32 1.0, %v916
        %v918 = vrcp.pop %v893
        %v919 = vmul.f32 1.0, %v918
        %v920 = vrcp.pop %v894
        %v921 = vmul.f32 1.0, %v920
        %v922 = vrcp.pop %v895
        %v923 = vmul.f32 1.0, %v922
        %v924 = vrcp.pop %v896
        %v925 = vmul.f32 1.0, %v924
        %v926 = vrcp.pop %v897
        %v927 = vmul.f32 1.0, %v926
        %v928 = vrcp.pop %v898
        %v929 = vmul.f32 1.0, %v928
        %v930 = vrcp.pop %v899
        %v931 = vmul.f32 1.0, %v930
        %v932 = vmul.f32 %v820, %v901
        %v933 = vmul.f32 %v821, %v903
        %v934 = vmul.f32 %v822, %v905
        %v935 = vmul.f32 %v823, %v907
        %v936 = vmul.f32 %v824, %v909
        %v937 = vmul.f32 %v825, %v911
        %v938 = vmul.f32 %v826, %v913
        %v939 = vmul.f32 %v827, %v915
        %v940 = vmul.f32 %v828, %v917
        %v941 = vmul.f32 %v829, %v919
        %v942 = vmul.f32 %v830, %v921
        %v943 = vmul.f32 %v831, %v923
        %v944 = vmul.f32 %v832, %v925
        %v945 = vmul.f32 %v833, %v927
        %v946 = vmul.f32 %v834, %v929
        %v947 = vmul.f32 %v835, %v931
        %v948 = vpack.c.bf16 %v933, %v932
        %v949 = vpack.c.bf16 %v935, %v934
        %v950 = vpack.c.bf16 %v937, %v936
        %v951 = vpack.c.bf16 %v939, %v938
        %v952 = vpack.c.bf16 %v941, %v940
        %v953 = vpack.c.bf16 %v943, %v942
        %v954 = vpack.c.bf16 %v945, %v944
        %v955 = vpack.c.bf16 %v947, %v946
        %v964 = vunpack.c.l.b16 %v948
        %v965 = vunpack.c.h.b16 %v948
        %v966 = vunpack.c.l.b16 %v949
        %v967 = vunpack.c.h.b16 %v949
        %v968 = vunpack.c.l.b16 %v950
        %v969 = vunpack.c.h.b16 %v950
        %v970 = vunpack.c.l.b16 %v951
        %v971 = vunpack.c.h.b16 %v951
        %v972 = vunpack.c.l.b16 %v952
        %v973 = vunpack.c.h.b16 %v952
        %v974 = vunpack.c.l.b16 %v953
        %v975 = vunpack.c.h.b16 %v953
        %v976 = vunpack.c.l.b16 %v954
        %v977 = vunpack.c.h.b16 %v954
        %v978 = vunpack.c.l.b16 %v955
        %v979 = vunpack.c.h.b16 %v955
        %v980 = vpack.c.b16 %v964, %v964
        %v981 = vpack.c.b16 %v965, %v965
        %v982 = vpack.c.b16 %v966, %v966
        %v983 = vpack.c.b16 %v967, %v967
        %v984 = vpack.c.b16 %v968, %v968
        %v985 = vpack.c.b16 %v969, %v969
        %v986 = vpack.c.b16 %v970, %v970
        %v987 = vpack.c.b16 %v971, %v971
        %v988 = vpack.c.b16 %v972, %v972
        %v989 = vpack.c.b16 %v973, %v973
        %v990 = vpack.c.b16 %v974, %v974
        %v991 = vpack.c.b16 %v975, %v975
        %v992 = vpack.c.b16 %v976, %v976
        %v993 = vpack.c.b16 %v977, %v977
        %v994 = vpack.c.b16 %v978, %v978
        %v995 = vpack.c.b16 %v979, %v979
        %s1012 = smul.u32 %s759, 40
        %s1013 = sadd.s32 4, %s1012
        %s1014 = smul.addr %s1013, 4
        %s1015 = scalar_lea.vmem [#allocation2], %s1014
        %vm1016 = vcmask 257024
        %1017 = vst.msk [vmem:[%s1015 + $0x4] sm:$0xf] %vm1016, %v980
        %1018 = vst.msk [vmem:[%s1015 + $0x8] sm:$0xf] %vm1016, %v981
        %1019 = vst.msk [vmem:[%s1015 + $0x14] sm:$0xf] %vm1016, %v982
        %1020 = vst.msk [vmem:[%s1015 + $0x18] sm:$0xf] %vm1016, %v983
        %1021 = vst.msk [vmem:[%s1015 + $0x24] sm:$0xf] %vm1016, %v984
        %1022 = vst.msk [vmem:[%s1015 + $0x28] sm:$0xf] %vm1016, %v985
        %1023 = vst.msk [vmem:[%s1015 + $0x34] sm:$0xf] %vm1016, %v986
        %1024 = vst.msk [vmem:[%s1015 + $0x38] sm:$0xf] %vm1016, %v987
        %1025 = vst.msk [vmem:[%s1015 + $0x44] sm:$0xf] %vm1016, %v988
        %1026 = vst.msk [vmem:[%s1015 + $0x48] sm:$0xf] %vm1016, %v989
        %1027 = vst.msk [vmem:[%s1015 + $0x54] sm:$0xf] %vm1016, %v990
        %1028 = vst.msk [vmem:[%s1015 + $0x58] sm:$0xf] %vm1016, %v991
        %1029 = vst.msk [vmem:[%s1015 + $0x64] sm:$0xf] %vm1016, %v992
        %1030 = vst.msk [vmem:[%s1015 + $0x68] sm:$0xf] %vm1016, %v993
        %1031 = vst.msk [vmem:[%s1015 + $0x74] sm:$0xf] %vm1016, %v994
        %1032 = vst.msk [vmem:[%s1015 + $0x78] sm:$0xf] %vm1016, %v995
        %v1033 = vld [vmem:[%s564] sm:$0xf]
        %v1034 = vld [vmem:[%s564 + $0x4] sm:$0xf]
        %v1035 = vunpack.c.l.bf16 %v1033
        %v1036 = vunpack.c.l.bf16 %v1034
        %v1037 = vmul.f32 %v1035, %v796
        %v1038 = vmul.f32 %v1036, %v796
        %v1039 = vadd.f32 %v1037, %v818
        %v1040 = vadd.f32 %v1038, %v818
        %v1041 = vxor.u32 %v1039, 2147483648
        %v1042 = vxor.u32 %v1040, 2147483648
        %v1043 = vmul.f32 %v1041, 1.442695
        %v1044 = vpow.pop %v1043
        %v1045 = vmul.f32 %v1042, 1.442695
        %v1046 = vpow.pop %v1045
        %v1047 = vadd.f32 %v1044, 1.0
        %v1048 = vadd.f32 %v1046, 1.0
        %v1049 = vrcp.pop %v1047
        %v1050 = vmul.f32 1.0, %v1049
        %v1051 = vrcp.pop %v1048
        %v1052 = vmul.f32 1.0, %v1051
        %v1053 = vmul.f32 %v1039, %v1050
        %v1054 = vmul.f32 %v1040, %v1052
        %v1055 = vpack.c.bf16 %v1054, %v1053
        %p1056 = scmp.gt.s32.totalorder %s28, 0
        %s1057 = scalar_select %p1056, 1, 0
        %v1058 = vstv %s1057
        %vm1059 = vcmp.eq.s32.totalorder %v1058, 1
        %v1060 = vsel %vm1059, %v1055, 0
        %v1061 = vld [vmem:[%s585] sm:$0xf]
        %v1062 = vld [vmem:[%s585 + $0x4] sm:$0xf]
        %v1063 = vunpack.c.l.bf16 %v1061
        %v1064 = vunpack.c.l.bf16 %v1062
        %v1065 = vmul.f32 %v1063, %v796
        %v1066 = vmul.f32 %v1064, %v796
        %v1067 = vadd.f32 %v1065, %v818
        %v1068 = vadd.f32 %v1066, %v818
        %v1069 = vxor.u32 %v1067, 2147483648
        %v1070 = vxor.u32 %v1068, 2147483648
        %v1071 = vmul.f32 %v1069, 1.442695
        %v1072 = vpow.pop %v1071
        %v1073 = vmul.f32 %v1070, 1.442695
        %v1074 = vpow.pop %v1073
        %v1075 = vadd.f32 %v1072, 1.0
        %v1076 = vadd.f32 %v1074, 1.0
        %v1077 = vrcp.pop %v1075
        %v1078 = vmul.f32 1.0, %v1077
        %v1079 = vrcp.pop %v1076
        %v1080 = vmul.f32 1.0, %v1079
        %v1081 = vmul.f32 %v1067, %v1078
        %v1082 = vmul.f32 %v1068, %v1080
        %v1083 = vpack.c.bf16 %v1082, %v1081
        %p1084 = scmp.lt.s32.totalorder %s28, 1
        %s1085 = scalar_select %p1084, 1, 0
        %v1086 = vstv %s1085
        %vm1087 = vcmp.eq.s32.totalorder %v1086, 1
        %v1088 = vsel %vm1087, %v1083, 0
        %v1090 = vunpack.c.l.b16 %v1060
        %v1091 = vunpack.c.h.b16 %v1060
        %v1092 = vpack.c.b16 %v1090, %v1090
        %v1093 = vpack.c.b16 %v1091, %v1091
        %s1096 = smul.addr %s1012, 4
        %s1097 = scalar_lea.vmem [#allocation2], %s1096
        %1098 = vst.msk [vmem:[%s1097 + $0x4] sm:$0xf] %vm1016, %v1092
        %1099 = vst.msk [vmem:[%s1097 + $0x8] sm:$0xf] %vm1016, %v1093
        %v1101 = vunpack.c.l.b16 %v1088
        %v1102 = vunpack.c.h.b16 %v1088
        %v1103 = vpack.c.b16 %v1101, %v1101
        %v1104 = vpack.c.b16 %v1102, %v1102
        %s1107 = sadd.s32 36, %s1012
        %s1108 = smul.addr %s1107, 4
        %s1109 = scalar_lea.vmem [#allocation2], %s1108
        %1110 = vst.msk [vmem:[%s1109 + $0x4] sm:$0xf] %vm1016, %v1103
        %1111 = vst.msk [vmem:[%s1109 + $0x8] sm:$0xf] %vm1016, %v1104
        %s1112 = sadd.s32 %s29, 1
        %p1113 = scmp.lt.s32.totalorder %s1112, 0
        %s1114 = ssub.s32 0, %s1112
        %s1115 = scalar_select %p1113, %s1114, %s1112
        %s1116 = sdiv.u32.pop %s1115, 3
        %s1117 = srem.u32.pop %s1115, 3
        %s1118 = ssub.s32 0, %s1117
        %s1119 = scalar_select %p1113, %s1118, %s1117
        %p1120 = scmp.ne.s32.totalorder %s1119, 0
        %p1121 = scmp.lt.s32.totalorder %s1119, 0
        %p1122 = pnand %p1121, %p1120
        %p1123 = pneg %p1122
        %s1124 = sadd.s32 %s1119, 3
        %s1125 = scalar_select %p1123, %s1124, %s1119
        %s1126 = smul.u32 %s1125, 40
        %s1127 = smul.addr %s1126, 4
        %s1128 = scalar_lea.vmem [#allocation2], %s1127
        %v1129 = vld [vmem:[%s1128] sm:$0x8]
        %v1130 = vld [vmem:[%s1128 + $0x4] sm:$0xf]
        %v1131 = vld [vmem:[%s1128 + $0x8] sm:$0xf]
        %v1132 = vld [vmem:[%s1128 + $0x10] sm:$0x8]
        %v1133 = vld [vmem:[%s1128 + $0x14] sm:$0xf]
        %v1134 = vld [vmem:[%s1128 + $0x18] sm:$0xf]
        %v1135 = vld [vmem:[%s1128 + $0x20] sm:$0x8]
        %v1136 = vld [vmem:[%s1128 + $0x24] sm:$0xf]
        %v1137 = vld [vmem:[%s1128 + $0x28] sm:$0xf]
        %v1138 = vld [vmem:[%s1128 + $0x30] sm:$0x8]
        %v1139 = vld [vmem:[%s1128 + $0x34] sm:$0xf]
        %v1140 = vld [vmem:[%s1128 + $0x38] sm:$0xf]
        %v1141 = vld [vmem:[%s1128 + $0x40] sm:$0x8]
        %v1142 = vld [vmem:[%s1128 + $0x44] sm:$0xf]
        %v1143 = vld [vmem:[%s1128 + $0x48] sm:$0xf]
        %v1144 = vld [vmem:[%s1128 + $0x50] sm:$0x8]
        %v1145 = vld [vmem:[%s1128 + $0x54] sm:$0xf]
        %v1146 = vld [vmem:[%s1128 + $0x58] sm:$0xf]
        %v1147 = vld [vmem:[%s1128 + $0x60] sm:$0x8]
        %v1148 = vld [vmem:[%s1128 + $0x64] sm:$0xf]
        %v1149 = vld [vmem:[%s1128 + $0x68] sm:$0xf]
        %v1150 = vld [vmem:[%s1128 + $0x70] sm:$0x8]
        %v1151 = vld [vmem:[%s1128 + $0x74] sm:$0xf]
        %v1152 = vld [vmem:[%s1128 + $0x78] sm:$0xf]
        %v1153 = vld [vmem:[%s1128 + $0x80] sm:$0x8]
        %v1154 = vld [vmem:[%s1128 + $0x84] sm:$0xf]
        %v1155 = vld [vmem:[%s1128 + $0x88] sm:$0xf]
        %v1156 = vld [vmem:[%s1128 + $0x90] sm:$0x8]
        %v1157 = vld [vmem:[%s1128 + $0x94] sm:$0xf]
        %v1158 = vld [vmem:[%s1128 + $0x98] sm:$0xf]
        %v1183 = vunpack.c.l.b16 %v1129
        %v1184 = vunpack.c.l.b16 %v1130
        %v1185 = vunpack.c.l.b16 %v1131
        %v1186 = vunpack.c.l.b16 %v1132
        %v1187 = vunpack.c.l.b16 %v1133
        %v1188 = vunpack.c.l.b16 %v1134
        %v1189 = vunpack.c.l.b16 %v1135
        %v1190 = vunpack.c.l.b16 %v1136
        %v1191 = vunpack.c.l.b16 %v1137
        %v1192 = vunpack.c.l.b16 %v1138
        %v1193 = vunpack.c.l.b16 %v1139
        %v1194 = vunpack.c.l.b16 %v1140
        %v1195 = vunpack.c.l.b16 %v1141
        %v1196 = vunpack.c.l.b16 %v1142
        %v1197 = vunpack.c.l.b16 %v1143
        %v1198 = vunpack.c.l.b16 %v1144
        %v1199 = vunpack.c.l.b16 %v1145
        %v1200 = vunpack.c.l.b16 %v1146
        %v1201 = vunpack.c.l.b16 %v1147
        %v1202 = vunpack.c.l.b16 %v1148
        %v1203 = vunpack.c.l.b16 %v1149
        %v1204 = vunpack.c.l.b16 %v1150
        %v1205 = vunpack.c.l.b16 %v1151
        %v1206 = vunpack.c.l.b16 %v1152
        %v1207 = vpack.c.b16 %v1184, %v1183
        %v1208 = vpack.c.b16 %v1185, %v1185
        %v1209 = vpack.c.b16 %v1187, %v1186
        %v1210 = vpack.c.b16 %v1188, %v1188
        %v1211 = vpack.c.b16 %v1190, %v1189
        %v1212 = vpack.c.b16 %v1191, %v1191
        %v1213 = vpack.c.b16 %v1193, %v1192
        %v1214 = vpack.c.b16 %v1194, %v1194
        %v1215 = vpack.c.b16 %v1196, %v1195
        %v1216 = vpack.c.b16 %v1197, %v1197
        %v1217 = vpack.c.b16 %v1199, %v1198
        %v1218 = vpack.c.b16 %v1200, %v1200
        %v1219 = vpack.c.b16 %v1202, %v1201
        %v1220 = vpack.c.b16 %v1203, %v1203
        %v1221 = vpack.c.b16 %v1205, %v1204
        %v1222 = vpack.c.b16 %v1206, %v1206
        %v1226 = vunpack.c.l.b16 %v1153
        %v1227 = vunpack.c.l.b16 %v1154
        %v1228 = vunpack.c.l.b16 %v1155
        %v1229 = vpack.c.b16 %v1227, %v1226
        %v1230 = vpack.c.b16 %v1228, %v1228
        %1231 = vrot.lane.b32.xlu0 %v1209, 32
        %v1232 = vpop.permute.xlu0 %1231
        %1233 = vrot.lane.b32.xlu0 %v1210, 32
        %v1234 = vpop.permute.xlu0 %1233
        %1235 = vrot.lane.b32.xlu0 %v1211, 32
        %v1236 = vpop.permute.xlu0 %1235
        %1237 = vrot.lane.b32.xlu0 %v1212, 32
        %v1238 = vpop.permute.xlu0 %1237
        %1239 = vrot.lane.b32.xlu0 %v1213, 32
        %v1240 = vpop.permute.xlu0 %1239
        %1241 = vrot.lane.b32.xlu0 %v1214, 32
        %v1242 = vpop.permute.xlu0 %1241
        %1243 = vrot.lane.b32.xlu0 %v1215, 32
        %v1244 = vpop.permute.xlu0 %1243
        %1245 = vrot.lane.b32.xlu0 %v1216, 32
        %v1246 = vpop.permute.xlu0 %1245
        %1247 = vrot.lane.b32.xlu0 %v1217, 32
        %v1248 = vpop.permute.xlu0 %1247
        %1249 = vrot.lane.b32.xlu0 %v1218, 32
        %v1250 = vpop.permute.xlu0 %1249
        %1251 = vrot.lane.b32.xlu0 %v1219, 32
        %v1252 = vpop.permute.xlu0 %1251
        %1253 = vrot.lane.b32.xlu0 %v1220, 32
        %v1254 = vpop.permute.xlu0 %1253
        %1255 = vrot.lane.b32.xlu0 %v1221, 32
        %v1256 = vpop.permute.xlu0 %1255
        %1257 = vrot.lane.b32.xlu0 %v1222, 32
        %v1258 = vpop.permute.xlu0 %1257
        %1259 = vrot.lane.b32.xlu0 %v1229, 32
        %v1260 = vpop.permute.xlu0 %1259
        %1261 = vrot.lane.b32.xlu0 %v1230, 32
        %v1262 = vpop.permute.xlu0 %1261
        %v1266 = vunpack.c.l.b16 %v1156
        %v1267 = vunpack.c.l.b16 %v1157
        %v1268 = vunpack.c.l.b16 %v1158
        %v1269 = vpack.c.b16 %v1267, %v1266
        %v1270 = vpack.c.b16 %v1268, %v1268
        %1271 = vrot.lane.b32.xlu0 %v1211, 64
        %v1272 = vpop.permute.xlu0 %1271
        %1273 = vrot.lane.b32.xlu0 %v1212, 64
        %v1274 = vpop.permute.xlu0 %1273
        %1275 = vrot.lane.b32.xlu0 %v1213, 64
        %v1276 = vpop.permute.xlu0 %1275
        %1277 = vrot.lane.b32.xlu0 %v1214, 64
        %v1278 = vpop.permute.xlu0 %1277
        %1279 = vrot.lane.b32.xlu0 %v1215, 64
        %v1280 = vpop.permute.xlu0 %1279
        %1281 = vrot.lane.b32.xlu0 %v1216, 64
        %v1282 = vpop.permute.xlu0 %1281
        %1283 = vrot.lane.b32.xlu0 %v1217, 64
        %v1284 = vpop.permute.xlu0 %1283
        %1285 = vrot.lane.b32.xlu0 %v1218, 64
        %v1286 = vpop.permute.xlu0 %1285
        %1287 = vrot.lane.b32.xlu0 %v1219, 64
        %v1288 = vpop.permute.xlu0 %1287
        %1289 = vrot.lane.b32.xlu0 %v1220, 64
        %v1290 = vpop.permute.xlu0 %1289
        %1291 = vrot.lane.b32.xlu0 %v1221, 64
        %v1292 = vpop.permute.xlu0 %1291
        %1293 = vrot.lane.b32.xlu0 %v1222, 64
        %v1294 = vpop.permute.xlu0 %1293
        %1295 = vrot.lane.b32.xlu0 %v1229, 64
        %v1296 = vpop.permute.xlu0 %1295
        %1297 = vrot.lane.b32.xlu0 %v1230, 64
        %v1298 = vpop.permute.xlu0 %1297
        %1299 = vrot.lane.b32.xlu0 %v1269, 64
        %v1300 = vpop.permute.xlu0 %1299
        %1301 = vrot.lane.b32.xlu0 %v1270, 64
        %v1302 = vpop.permute.xlu0 %1301
        %vm1303 = vcmask 261120
        %v1306 = vsel %vm1303, %v1207, %v1232
        %v1309 = vsel %vm1303, %v1208, %v1234
        %v1312 = vsel %vm1303, %v1209, %v1236
        %v1315 = vsel %vm1303, %v1210, %v1238
        %v1318 = vsel %vm1303, %v1211, %v1240
        %v1321 = vsel %vm1303, %v1212, %v1242
        %v1324 = vsel %vm1303, %v1213, %v1244
        %v1327 = vsel %vm1303, %v1214, %v1246
        %v1330 = vsel %vm1303, %v1215, %v1248
        %v1333 = vsel %vm1303, %v1216, %v1250
        %v1336 = vsel %vm1303, %v1217, %v1252
        %v1339 = vsel %vm1303, %v1218, %v1254
        %v1342 = vsel %vm1303, %v1219, %v1256
        %v1345 = vsel %vm1303, %v1220, %v1258
        %v1348 = vsel %vm1303, %v1221, %v1260
        %v1351 = vsel %vm1303, %v1222, %v1262
        %vm1352 = vcmask 523264
        %v1354 = vsel %vm1352, %v1306, %v1272
        %v1356 = vsel %vm1352, %v1309, %v1274
        %v1358 = vsel %vm1352, %v1312, %v1276
        %v1360 = vsel %vm1352, %v1315, %v1278
        %v1362 = vsel %vm1352, %v1318, %v1280
        %v1364 = vsel %vm1352, %v1321, %v1282
        %v1366 = vsel %vm1352, %v1324, %v1284
        %v1368 = vsel %vm1352, %v1327, %v1286
        %v1370 = vsel %vm1352, %v1330, %v1288
        %v1372 = vsel %vm1352, %v1333, %v1290
        %v1374 = vsel %vm1352, %v1336, %v1292
        %v1376 = vsel %vm1352, %v1339, %v1294
        %v1378 = vsel %vm1352, %v1342, %v1296
        %v1380 = vsel %vm1352, %v1345, %v1298
        %v1382 = vsel %vm1352, %v1348, %v1300
        %v1384 = vsel %vm1352, %v1351, %v1302
        %vm1385 = vsmask.f32 4352
        %v1386 = vshrl.u32 %v1354, 16
        %v1388 = vrot.slane %v1386, 3
        %v1389 = vshll.u32 %v1354, 16
        %v1391 = vrot.slane %v1389, 4
        %v1392 = vor.u32 %v1388, %v1391
        %v1393 = vshrl.u32 %v1356, 16
        %v1395 = vrot.slane %v1393, 3
        %v1396 = vshll.u32 %v1356, 16
        %v1398 = vrot.slane %v1396, 4
        %v1399 = vor.u32 %v1395, %v1398
        %v1400 = vsel %vm1385, %v1392, %v1399
        %v1401 = vshrl.u32 %v1358, 16
        %v1403 = vrot.slane %v1401, 3
        %v1404 = vshll.u32 %v1358, 16
        %v1406 = vrot.slane %v1404, 4
        %v1407 = vor.u32 %v1403, %v1406
        %v1408 = vshrl.u32 %v1360, 16
        %v1410 = vrot.slane %v1408, 3
        %v1411 = vshll.u32 %v1360, 16
        %v1413 = vrot.slane %v1411, 4
        %v1414 = vor.u32 %v1410, %v1413
        %v1415 = vsel %vm1385, %v1407, %v1414
        %v1416 = vshrl.u32 %v1362, 16
        %v1418 = vrot.slane %v1416, 3
        %v1419 = vshll.u32 %v1362, 16
        %v1421 = vrot.slane %v1419, 4
        %v1422 = vor.u32 %v1418, %v1421
        %v1423 = vshrl.u32 %v1364, 16
        %v1425 = vrot.slane %v1423, 3
        %v1426 = vshll.u32 %v1364, 16
        %v1428 = vrot.slane %v1426, 4
        %v1429 = vor.u32 %v1425, %v1428
        %v1430 = vsel %vm1385, %v1422, %v1429
        %v1431 = vshrl.u32 %v1366, 16
        %v1433 = vrot.slane %v1431, 3
        %v1434 = vshll.u32 %v1366, 16
        %v1436 = vrot.slane %v1434, 4
        %v1437 = vor.u32 %v1433, %v1436
        %v1438 = vshrl.u32 %v1368, 16
        %v1440 = vrot.slane %v1438, 3
        %v1441 = vshll.u32 %v1368, 16
        %v1443 = vrot.slane %v1441, 4
        %v1444 = vor.u32 %v1440, %v1443
        %v1445 = vsel %vm1385, %v1437, %v1444
        %v1446 = vshrl.u32 %v1370, 16
        %v1448 = vrot.slane %v1446, 3
        %v1449 = vshll.u32 %v1370, 16
        %v1451 = vrot.slane %v1449, 4
        %v1452 = vor.u32 %v1448, %v1451
        %v1453 = vshrl.u32 %v1372, 16
        %v1455 = vrot.slane %v1453, 3
        %v1456 = vshll.u32 %v1372, 16
        %v1458 = vrot.slane %v1456, 4
        %v1459 = vor.u32 %v1455, %v1458
        %v1460 = vsel %vm1385, %v1452, %v1459
        %v1461 = vshrl.u32 %v1374, 16
        %v1463 = vrot.slane %v1461, 3
        %v1464 = vshll.u32 %v1374, 16
        %v1466 = vrot.slane %v1464, 4
        %v1467 = vor.u32 %v1463, %v1466
        %v1468 = vshrl.u32 %v1376, 16
        %v1470 = vrot.slane %v1468, 3
        %v1471 = vshll.u32 %v1376, 16
        %v1473 = vrot.slane %v1471, 4
        %v1474 = vor.u32 %v1470, %v1473
        %v1475 = vsel %vm1385, %v1467, %v1474
        %v1476 = vshrl.u32 %v1378, 16
        %v1478 = vrot.slane %v1476, 3
        %v1479 = vshll.u32 %v1378, 16
        %v1481 = vrot.slane %v1479, 4
        %v1482 = vor.u32 %v1478, %v1481
        %v1483 = vshrl.u32 %v1380, 16
        %v1485 = vrot.slane %v1483, 3
        %v1486 = vshll.u32 %v1380, 16
        %v1488 = vrot.slane %v1486, 4
        %v1489 = vor.u32 %v1485, %v1488
        %v1490 = vsel %vm1385, %v1482, %v1489
        %v1491 = vshrl.u32 %v1382, 16
        %v1493 = vrot.slane %v1491, 3
        %v1494 = vshll.u32 %v1382, 16
        %v1496 = vrot.slane %v1494, 4
        %v1497 = vor.u32 %v1493, %v1496
        %v1498 = vshrl.u32 %v1384, 16
        %v1500 = vrot.slane %v1498, 3
        %v1501 = vshll.u32 %v1384, 16
        %v1503 = vrot.slane %v1501, 4
        %v1504 = vor.u32 %v1500, %v1503
        %v1505 = vsel %vm1385, %v1497, %v1504
        %v1506 = vld [vmem:[%s5] sm:$0xf]
        %v1507 = vld [vmem:[%s5 + $0x4] sm:$0xf]
        %v1508 = vld [vmem:[%s5 + $0x8] sm:$0xf]
        %v1509 = vld [vmem:[%s5 + $0xc] sm:$0xf]
        %v1510 = vld [vmem:[%s5 + $0x10] sm:$0xf]
        %v1511 = vld [vmem:[%s5 + $0x14] sm:$0xf]
        %v1512 = vld [vmem:[%s5 + $0x18] sm:$0xf]
        %v1513 = vld [vmem:[%s5 + $0x1c] sm:$0xf]
        %v1514 = vld [vmem:[%s5 + $0x20] sm:$0xf]
        %v1515 = vld [vmem:[%s5 + $0x24] sm:$0xf]
        %v1516 = vld [vmem:[%s5 + $0x28] sm:$0xf]
        %v1517 = vld [vmem:[%s5 + $0x2c] sm:$0xf]
        %v1518 = vpack.c.b16 %v1185, %v1184
        %v1519 = vpack.c.b16 %v1188, %v1187
        %v1520 = vpack.c.b16 %v1191, %v1190
        %v1521 = vpack.c.b16 %v1194, %v1193
        %v1522 = vpack.c.b16 %v1197, %v1196
        %v1523 = vpack.c.b16 %v1200, %v1199
        %v1524 = vpack.c.b16 %v1203, %v1202
        %v1525 = vpack.c.b16 %v1206, %v1205
        %v1526 = vpack.c.b16 %v1228, %v1227
        %1527 = vrot.lane.b32.xlu0 %v1519, 32
        %v1528 = vpop.permute.xlu0 %1527
        %1529 = vrot.lane.b32.xlu0 %v1520, 32
        %v1530 = vpop.permute.xlu0 %1529
        %1531 = vrot.lane.b32.xlu0 %v1521, 32
        %v1532 = vpop.permute.xlu0 %1531
        %1533 = vrot.lane.b32.xlu0 %v1522, 32
        %v1534 = vpop.permute.xlu0 %1533
        %1535 = vrot.lane.b32.xlu0 %v1523, 32
        %v1536 = vpop.permute.xlu0 %1535
        %1537 = vrot.lane.b32.xlu0 %v1524, 32
        %v1538 = vpop.permute.xlu0 %1537
        %1539 = vrot.lane.b32.xlu0 %v1525, 32
        %v1540 = vpop.permute.xlu0 %1539
        %1541 = vrot.lane.b32.xlu0 %v1526, 32
        %v1542 = vpop.permute.xlu0 %1541
        %v1543 = vpack.c.b16 %v1268, %v1267
        %1544 = vrot.lane.b32.xlu0 %v1520, 64
        %v1545 = vpop.permute.xlu0 %1544
        %1546 = vrot.lane.b32.xlu0 %v1521, 64
        %v1547 = vpop.permute.xlu0 %1546
        %1548 = vrot.lane.b32.xlu0 %v1522, 64
        %v1549 = vpop.permute.xlu0 %1548
        %1550 = vrot.lane.b32.xlu0 %v1523, 64
        %v1551 = vpop.permute.xlu0 %1550
        %1552 = vrot.lane.b32.xlu0 %v1524, 64
        %v1553 = vpop.permute.xlu0 %1552
        %1554 = vrot.lane.b32.xlu0 %v1525, 64
        %v1555 = vpop.permute.xlu0 %1554
        %1556 = vrot.lane.b32.xlu0 %v1526, 64
        %v1557 = vpop.permute.xlu0 %1556
        %1558 = vrot.lane.b32.xlu0 %v1543, 64
        %v1559 = vpop.permute.xlu0 %1558
        %v1562 = vsel %vm1303, %v1518, %v1528
        %v1565 = vsel %vm1303, %v1519, %v1530
        %v1568 = vsel %vm1303, %v1520, %v1532
        %v1571 = vsel %vm1303, %v1521, %v1534
        %v1574 = vsel %vm1303, %v1522, %v1536
        %v1577 = vsel %vm1303, %v1523, %v1538
        %v1580 = vsel %vm1303, %v1524, %v1540
        %v1583 = vsel %vm1303, %v1525, %v1542
        %v1585 = vsel %vm1352, %v1562, %v1545
        %v1587 = vsel %vm1352, %v1565, %v1547
        %v1589 = vsel %vm1352, %v1568, %v1549
        %v1591 = vsel %vm1352, %v1571, %v1551
        %v1593 = vsel %vm1352, %v1574, %v1553
        %v1595 = vsel %vm1352, %v1577, %v1555
        %v1597 = vsel %vm1352, %v1580, %v1557
        %v1599 = vsel %vm1352, %v1583, %v1559
        %s1600 = scalar_lea.vmem %s5, 48
        %v1601 = vld [vmem:[%s1600] sm:$0xf]
        %v1602 = vld [vmem:[%s1600 + $0x4] sm:$0xf]
        %v1603 = vld [vmem:[%s1600 + $0x8] sm:$0xf]
        %v1604 = vld [vmem:[%s1600 + $0xc] sm:$0xf]
        %v1605 = vld [vmem:[%s1600 + $0x10] sm:$0xf]
        %v1606 = vld [vmem:[%s1600 + $0x14] sm:$0xf]
        %v1607 = vld [vmem:[%s1600 + $0x18] sm:$0xf]
        %v1608 = vld [vmem:[%s1600 + $0x1c] sm:$0xf]
        %v1609 = vld [vmem:[%s1600 + $0x20] sm:$0xf]
        %v1610 = vld [vmem:[%s1600 + $0x24] sm:$0xf]
        %v1611 = vld [vmem:[%s1600 + $0x28] sm:$0xf]
        %v1612 = vld [vmem:[%s1600 + $0x2c] sm:$0xf]
        %v1625 = vunpack.c.l.b16 %v1601
        %v1626 = vunpack.c.l.b16 %v1602
        %v1627 = vunpack.c.l.b16 %v1603
        %v1628 = vunpack.c.l.b16 %v1604
        %v1629 = vunpack.c.l.b16 %v1605
        %v1630 = vunpack.c.l.b16 %v1606
        %v1631 = vunpack.c.l.b16 %v1607
        %v1632 = vunpack.c.l.b16 %v1608
        %v1633 = vunpack.c.l.b16 %v1609
        %v1634 = vunpack.c.l.b16 %v1610
        %v1635 = vunpack.c.l.b16 %v1611
        %v1636 = vunpack.c.l.b16 %v1612
        %v1637 = vpack.c.b16 %v1626, %v1625
        %v1638 = vpack.c.b16 %v1628, %v1627
        %v1639 = vpack.c.b16 %v1630, %v1629
        %v1640 = vpack.c.b16 %v1632, %v1631
        %v1641 = vpack.c.b16 %v1634, %v1633
        %v1642 = vpack.c.b16 %v1636, %v1635
        %vm1649 = vcmask 785408
        %v1650 = vsel %vm1649, %v1585, 0
        %v1652 = vsel %vm1649, %v1587, 0
        %v1654 = vsel %vm1649, %v1589, 0
        %v1656 = vsel %vm1649, %v1591, 0
        %v1658 = vsel %vm1649, %v1593, 0
        %v1660 = vsel %vm1649, %v1595, 0
        %v1662 = vsel %vm1649, %v1597, 0
        %v1664 = vsel %vm1649, %v1599, 0
        %1666 = vmatprep.subr.bf16.mxu0 0
        %1667 = vmatpush1.bf16.msra.mxu0 0
        %1668 = vmatprep.subr.bf16.mxu0 0
        %1669 = vmatpush1.bf16.msra.mxu0 0
        %1670 = vmatprep.subr.bf16.mxu0 0
        %1671 = vmatpush1.bf16.msra.mxu0 %v1642
        %1672 = vmatprep.subr.bf16.mxu0 0
        %1673 = vmatpush1.bf16.msra.mxu0 %v1641
        %1674 = vmatprep.subr.bf16.mxu0 0
        %1675 = vmatpush1.bf16.msra.mxu0 %v1640
        %1676 = vmatprep.subr.bf16.mxu0 0
        %1677 = vmatpush1.bf16.msra.mxu0 %v1639
        %1678 = vmatprep.subr.bf16.mxu0 0
        %1679 = vmatpush1.bf16.msra.mxu0 %v1638
        %1680 = vmatprep.subr.bf16.mxu0 0
        %1681 = vmatpush1.bf16.msra.mxu0 %v1637
        %1682 = vmatprep.subr.bf16.mxu0 0
        %1683 = vmatpush2.bf16.msra.mxu0 0
        %1684 = vmatprep.subr.bf16.mxu0 0
        %1685 = vmatpush2.bf16.msra.mxu0 0
        %1686 = vmatprep.subr.bf16.mxu0 0
        %1687 = vmatpush2.bf16.msra.mxu0 0
        %1688 = vmatprep.subr.bf16.mxu0 0
        %1689 = vmatpush2.bf16.msra.mxu0 0
        %1690 = vmatprep.subr.bf16.mxu0 0
        %1691 = vmatpush2.bf16.msra.mxu0 0
        %1692 = vmatprep.subr.bf16.mxu0 0
        %1693 = vmatpush2.bf16.msra.mxu0 0
        %1694 = vmatprep.subr.bf16.mxu0 0
        %1695 = vmatpush2.bf16.msra.mxu0 0
        %1696 = vmatprep.subr.bf16.mxu0 0
        %1697 = vmatpush2.bf16.msra.mxu0 0
        %1698 = vmatprep.mubr.bf16.mxu0 0
        %1699 = vmatmul.mubr.bf16.gmra.mxu0 %v1650
        %v1700 = vpop.f32.mrf.mxu0
        %v1701 = vadd.f32 0.0, %v1700
        %v1702 = vpop.f32.mrf.mxu0
        %v1703 = vpop.f32.mrf.mxu0
        %v1704 = vadd.f32 0.0, %v1703
        %v1705 = vpop.f32.mrf.mxu0
        %1706 = vmatprep.mubr.bf16.mxu0 0
        %1707 = vmatmul.mubr.bf16.gmra.mxu0 %v1652
        %v1708 = vpop.f32.mrf.mxu0
        %v1709 = vadd.f32 0.0, %v1708
        %v1710 = vpop.f32.mrf.mxu0
        %v1711 = vpop.f32.mrf.mxu0
        %v1712 = vadd.f32 0.0, %v1711
        %v1713 = vpop.f32.mrf.mxu0
        %1714 = vmatprep.mubr.bf16.mxu0 0
        %1715 = vmatmul.mubr.bf16.gmra.mxu0 %v1654
        %v1716 = vpop.f32.mrf.mxu0
        %v1717 = vadd.f32 0.0, %v1716
        %v1718 = vpop.f32.mrf.mxu0
        %v1719 = vpop.f32.mrf.mxu0
        %v1720 = vadd.f32 0.0, %v1719
        %v1721 = vpop.f32.mrf.mxu0
        %1722 = vmatprep.mubr.bf16.mxu0 0
        %1723 = vmatmul.mubr.bf16.gmra.mxu0 %v1656
        %v1724 = vpop.f32.mrf.mxu0
        %v1725 = vadd.f32 0.0, %v1724
        %v1726 = vpop.f32.mrf.mxu0
        %v1727 = vpop.f32.mrf.mxu0
        %v1728 = vadd.f32 0.0, %v1727
        %v1729 = vpop.f32.mrf.mxu0
        %1730 = vmatprep.mubr.bf16.mxu0 0
        %1731 = vmatmul.mubr.bf16.gmra.mxu0 %v1658
        %v1732 = vpop.f32.mrf.mxu0
        %v1733 = vadd.f32 0.0, %v1732
        %v1734 = vpop.f32.mrf.mxu0
        %v1735 = vpop.f32.mrf.mxu0
        %v1736 = vadd.f32 0.0, %v1735
        %v1737 = vpop.f32.mrf.mxu0
        %1738 = vmatprep.mubr.bf16.mxu0 0
        %1739 = vmatmul.mubr.bf16.gmra.mxu0 %v1660
        %v1740 = vpop.f32.mrf.mxu0
        %v1741 = vadd.f32 0.0, %v1740
        %v1742 = vpop.f32.mrf.mxu0
        %v1743 = vpop.f32.mrf.mxu0
        %v1744 = vadd.f32 0.0, %v1743
        %v1745 = vpop.f32.mrf.mxu0
        %1746 = vmatprep.mubr.bf16.mxu0 0
        %1747 = vmatmul.mubr.bf16.gmra.mxu0 %v1662
        %v1748 = vpop.f32.mrf.mxu0
        %v1749 = vadd.f32 0.0, %v1748
        %v1750 = vpop.f32.mrf.mxu0
        %v1751 = vpop.f32.mrf.mxu0
        %v1752 = vadd.f32 0.0, %v1751
        %v1753 = vpop.f32.mrf.mxu0
        %1754 = vmatprep.mubr.bf16.mxu0 0
        %1755 = vmatmul.mubr.bf16.gmra.mxu0 %v1664
        %v1756 = vpop.f32.mrf.mxu0
        %v1757 = vadd.f32 0.0, %v1756
        %v1758 = vpop.f32.mrf.mxu0
        %v1759 = vpop.f32.mrf.mxu0
        %v1760 = vadd.f32 0.0, %v1759
        %v1761 = vpop.f32.mrf.mxu0
        %1762 = vdwg.mxu0
        %v1775 = vunpack.c.l.b16 %v1506
        %v1776 = vunpack.c.l.b16 %v1507
        %v1777 = vunpack.c.l.b16 %v1508
        %v1778 = vunpack.c.l.b16 %v1509
        %v1779 = vunpack.c.l.b16 %v1510
        %v1780 = vunpack.c.l.b16 %v1511
        %v1781 = vunpack.c.l.b16 %v1512
        %v1782 = vunpack.c.l.b16 %v1513
        %v1783 = vunpack.c.l.b16 %v1514
        %v1784 = vunpack.c.l.b16 %v1515
        %v1785 = vunpack.c.l.b16 %v1516
        %v1786 = vunpack.c.l.b16 %v1517
        %v1787 = vpack.c.b16 %v1776, %v1775
        %v1788 = vpack.c.b16 %v1778, %v1777
        %v1789 = vpack.c.b16 %v1780, %v1779
        %v1790 = vpack.c.b16 %v1782, %v1781
        %v1791 = vpack.c.b16 %v1784, %v1783
        %v1792 = vpack.c.b16 %v1786, %v1785
        %v1800 = vsel %vm1649, %v1400, 0
        %v1803 = vsel %vm1649, %v1415, 0
        %v1806 = vsel %vm1649, %v1430, 0
        %v1809 = vsel %vm1649, %v1445, 0
        %v1812 = vsel %vm1649, %v1460, 0
        %v1815 = vsel %vm1649, %v1475, 0
        %v1818 = vsel %vm1649, %v1490, 0
        %v1821 = vsel %vm1649, %v1505, 0
        %1823 = vmatprep.subr.bf16.mxu0 0
        %1824 = vmatpush1.bf16.msra.mxu0 0
        %1825 = vmatprep.subr.bf16.mxu0 0
        %1826 = vmatpush1.bf16.msra.mxu0 0
        %1827 = vmatprep.subr.bf16.mxu0 0
        %1828 = vmatpush1.bf16.msra.mxu0 %v1792
        %1829 = vmatprep.subr.bf16.mxu0 0
        %1830 = vmatpush1.bf16.msra.mxu0 %v1791
        %1831 = vmatprep.subr.bf16.mxu0 0
        %1832 = vmatpush1.bf16.msra.mxu0 %v1790
        %1833 = vmatprep.subr.bf16.mxu0 0
        %1834 = vmatpush1.bf16.msra.mxu0 %v1789
        %1835 = vmatprep.subr.bf16.mxu0 0
        %1836 = vmatpush1.bf16.msra.mxu0 %v1788
        %1837 = vmatprep.subr.bf16.mxu0 0
        %1838 = vmatpush1.bf16.msra.mxu0 %v1787
        %1839 = vmatprep.subr.bf16.mxu0 0
        %1840 = vmatpush2.bf16.msra.mxu0 0
        %1841 = vmatprep.subr.bf16.mxu0 0
        %1842 = vmatpush2.bf16.msra.mxu0 0
        %1843 = vmatprep.subr.bf16.mxu0 0
        %1844 = vmatpush2.bf16.msra.mxu0 0
        %1845 = vmatprep.subr.bf16.mxu0 0
        %1846 = vmatpush2.bf16.msra.mxu0 0
        %1847 = vmatprep.subr.bf16.mxu0 0
        %1848 = vmatpush2.bf16.msra.mxu0 0
        %1849 = vmatprep.subr.bf16.mxu0 0
        %1850 = vmatpush2.bf16.msra.mxu0 0
        %1851 = vmatprep.subr.bf16.mxu0 0
        %1852 = vmatpush2.bf16.msra.mxu0 0
        %1853 = vmatprep.subr.bf16.mxu0 0
        %1854 = vmatpush2.bf16.msra.mxu0 0
        %1855 = vmatprep.mubr.bf16.mxu0 0
        %1856 = vmatmul.mubr.bf16.gmra.mxu0 %v1800
        %v1857 = vpop.f32.mrf.mxu0
        %v1858 = vadd.f32 %v1701, %v1857
        %v1859 = vpop.f32.mrf.mxu0
        %v1860 = vpop.f32.mrf.mxu0
        %v1861 = vadd.f32 %v1704, %v1860
        %v1862 = vpop.f32.mrf.mxu0
        %1863 = vmatprep.mubr.bf16.mxu0 0
        %1864 = vmatmul.mubr.bf16.gmra.mxu0 %v1803
        %v1865 = vpop.f32.mrf.mxu0
        %v1866 = vadd.f32 %v1709, %v1865
        %v1867 = vpop.f32.mrf.mxu0
        %v1868 = vpop.f32.mrf.mxu0
        %v1869 = vadd.f32 %v1712, %v1868
        %v1870 = vpop.f32.mrf.mxu0
        %1871 = vmatprep.mubr.bf16.mxu0 0
        %1872 = vmatmul.mubr.bf16.gmra.mxu0 %v1806
        %v1873 = vpop.f32.mrf.mxu0
        %v1874 = vadd.f32 %v1717, %v1873
        %v1875 = vpop.f32.mrf.mxu0
        %v1876 = vpop.f32.mrf.mxu0
        %v1877 = vadd.f32 %v1720, %v1876
        %v1878 = vpop.f32.mrf.mxu0
        %1879 = vmatprep.mubr.bf16.mxu0 0
        %1880 = vmatmul.mubr.bf16.gmra.mxu0 %v1809
        %v1881 = vpop.f32.mrf.mxu0
        %v1882 = vadd.f32 %v1725, %v1881
        %v1883 = vpop.f32.mrf.mxu0
        %v1884 = vpop.f32.mrf.mxu0
        %v1885 = vadd.f32 %v1728, %v1884
        %v1886 = vpop.f32.mrf.mxu0
        %1887 = vmatprep.mubr.bf16.mxu0 0
        %1888 = vmatmul.mubr.bf16.gmra.mxu0 %v1812
        %v1889 = vpop.f32.mrf.mxu0
        %v1890 = vadd.f32 %v1733, %v1889
        %v1891 = vpop.f32.mrf.mxu0
        %v1892 = vpop.f32.mrf.mxu0
        %v1893 = vadd.f32 %v1736, %v1892
        %v1894 = vpop.f32.mrf.mxu0
        %1895 = vmatprep.mubr.bf16.mxu0 0
        %1896 = vmatmul.mubr.bf16.gmra.mxu0 %v1815
        %v1897 = vpop.f32.mrf.mxu0
        %v1898 = vadd.f32 %v1741, %v1897
        %v1899 = vpop.f32.mrf.mxu0
        %v1900 = vpop.f32.mrf.mxu0
        %v1901 = vadd.f32 %v1744, %v1900
        %v1902 = vpop.f32.mrf.mxu0
        %1903 = vmatprep.mubr.bf16.mxu0 0
        %1904 = vmatmul.mubr.bf16.gmra.mxu0 %v1818
        %v1905 = vpop.f32.mrf.mxu0
        %v1906 = vadd.f32 %v1749, %v1905
        %v1907 = vpop.f32.mrf.mxu0
        %v1908 = vpop.f32.mrf.mxu0
        %v1909 = vadd.f32 %v1752, %v1908
        %v1910 = vpop.f32.mrf.mxu0
        %1911 = vmatprep.mubr.bf16.mxu0 0
        %1912 = vmatmul.mubr.bf16.gmra.mxu0 %v1821
        %v1913 = vpop.f32.mrf.mxu0
        %v1914 = vadd.f32 %v1757, %v1913
        %v1915 = vpop.f32.mrf.mxu0
        %v1916 = vpop.f32.mrf.mxu0
        %v1917 = vadd.f32 %v1760, %v1916
        %v1918 = vpop.f32.mrf.mxu0
        %1919 = vdwg.mxu0
        %v1920 = vld [vmem:[%s1128 + $0x4] sm:$0xf]
        %v1921 = vld [vmem:[%s1128 + $0x8] sm:$0xf]
        %v1922 = vld [vmem:[%s1128 + $0xc] sm:$0x1]
        %v1923 = vld [vmem:[%s1128 + $0x14] sm:$0xf]
        %v1924 = vld [vmem:[%s1128 + $0x18] sm:$0xf]
        %v1925 = vld [vmem:[%s1128 + $0x1c] sm:$0x1]
        %v1926 = vld [vmem:[%s1128 + $0x24] sm:$0xf]
        %v1927 = vld [vmem:[%s1128 + $0x28] sm:$0xf]
        %v1928 = vld [vmem:[%s1128 + $0x2c] sm:$0x1]
        %v1929 = vld [vmem:[%s1128 + $0x34] sm:$0xf]
        %v1930 = vld [vmem:[%s1128 + $0x38] sm:$0xf]
        %v1931 = vld [vmem:[%s1128 + $0x3c] sm:$0x1]
        %v1932 = vld [vmem:[%s1128 + $0x44] sm:$0xf]
        %v1933 = vld [vmem:[%s1128 + $0x48] sm:$0xf]
        %v1934 = vld [vmem:[%s1128 + $0x4c] sm:$0x1]
        %v1935 = vld [vmem:[%s1128 + $0x54] sm:$0xf]
        %v1936 = vld [vmem:[%s1128 + $0x58] sm:$0xf]
        %v1937 = vld [vmem:[%s1128 + $0x5c] sm:$0x1]
        %v1938 = vld [vmem:[%s1128 + $0x64] sm:$0xf]
        %v1939 = vld [vmem:[%s1128 + $0x68] sm:$0xf]
        %v1940 = vld [vmem:[%s1128 + $0x6c] sm:$0x1]
        %v1941 = vld [vmem:[%s1128 + $0x74] sm:$0xf]
        %v1942 = vld [vmem:[%s1128 + $0x78] sm:$0xf]
        %v1943 = vld [vmem:[%s1128 + $0x7c] sm:$0x1]
        %v1944 = vld [vmem:[%s1128 + $0x84] sm:$0xf]
        %v1945 = vld [vmem:[%s1128 + $0x88] sm:$0xf]
        %v1946 = vld [vmem:[%s1128 + $0x8c] sm:$0x1]
        %v1947 = vld [vmem:[%s1128 + $0x94] sm:$0xf]
        %v1948 = vld [vmem:[%s1128 + $0x98] sm:$0xf]
        %v1949 = vld [vmem:[%s1128 + $0x9c] sm:$0x1]
        %v1974 = vunpack.c.l.b16 %v1920
        %v1975 = vunpack.c.l.b16 %v1921
        %v1976 = vunpack.c.l.b16 %v1922
        %v1977 = vunpack.c.l.b16 %v1923
        %v1978 = vunpack.c.l.b16 %v1924
        %v1979 = vunpack.c.l.b16 %v1925
        %v1980 = vunpack.c.l.b16 %v1926
        %v1981 = vunpack.c.l.b16 %v1927
        %v1982 = vunpack.c.l.b16 %v1928
        %v1983 = vunpack.c.l.b16 %v1929
        %v1984 = vunpack.c.l.b16 %v1930
        %v1985 = vunpack.c.l.b16 %v1931
        %v1986 = vunpack.c.l.b16 %v1932
        %v1987 = vunpack.c.l.b16 %v1933
        %v1988 = vunpack.c.l.b16 %v1934
        %v1989 = vunpack.c.l.b16 %v1935
        %v1990 = vunpack.c.l.b16 %v1936
        %v1991 = vunpack.c.l.b16 %v1937
        %v1992 = vunpack.c.l.b16 %v1938
        %v1993 = vunpack.c.l.b16 %v1939
        %v1994 = vunpack.c.l.b16 %v1940
        %v1995 = vunpack.c.l.b16 %v1941
        %v1996 = vunpack.c.l.b16 %v1942
        %v1997 = vunpack.c.l.b16 %v1943
        %v1998 = vpack.c.b16 %v1975, %v1974
        %v1999 = vpack.c.b16 %v1976, %v1976
        %v2000 = vpack.c.b16 %v1978, %v1977
        %v2001 = vpack.c.b16 %v1979, %v1979
        %v2002 = vpack.c.b16 %v1981, %v1980
        %v2003 = vpack.c.b16 %v1982, %v1982
        %v2004 = vpack.c.b16 %v1984, %v1983
        %v2005 = vpack.c.b16 %v1985, %v1985
        %v2006 = vpack.c.b16 %v1987, %v1986
        %v2007 = vpack.c.b16 %v1988, %v1988
        %v2008 = vpack.c.b16 %v1990, %v1989
        %v2009 = vpack.c.b16 %v1991, %v1991
        %v2010 = vpack.c.b16 %v1993, %v1992
        %v2011 = vpack.c.b16 %v1994, %v1994
        %v2012 = vpack.c.b16 %v1996, %v1995
        %v2013 = vpack.c.b16 %v1997, %v1997
        %v2017 = vunpack.c.l.b16 %v1944
        %v2018 = vunpack.c.l.b16 %v1945
        %v2019 = vunpack.c.l.b16 %v1946
        %v2020 = vpack.c.b16 %v2018, %v2017
        %v2021 = vpack.c.b16 %v2019, %v2019
        %2022 = vrot.lane.b32.xlu0 %v2000, 32
        %v2023 = vpop.permute.xlu0 %2022
        %2024 = vrot.lane.b32.xlu0 %v2001, 32
        %v2025 = vpop.permute.xlu0 %2024
        %2026 = vrot.lane.b32.xlu0 %v2002, 32
        %v2027 = vpop.permute.xlu0 %2026
        %2028 = vrot.lane.b32.xlu0 %v2003, 32
        %v2029 = vpop.permute.xlu0 %2028
        %2030 = vrot.lane.b32.xlu0 %v2004, 32
        %v2031 = vpop.permute.xlu0 %2030
        %2032 = vrot.lane.b32.xlu0 %v2005, 32
        %v2033 = vpop.permute.xlu0 %2032
        %2034 = vrot.lane.b32.xlu0 %v2006, 32
        %v2035 = vpop.permute.xlu0 %2034
        %2036 = vrot.lane.b32.xlu0 %v2007, 32
        %v2037 = vpop.permute.xlu0 %2036
        %2038 = vrot.lane.b32.xlu0 %v2008, 32
        %v2039 = vpop.permute.xlu0 %2038
        %2040 = vrot.lane.b32.xlu0 %v2009, 32
        %v2041 = vpop.permute.xlu0 %2040
        %2042 = vrot.lane.b32.xlu0 %v2010, 32
        %v2043 = vpop.permute.xlu0 %2042
        %2044 = vrot.lane.b32.xlu0 %v2011, 32
        %v2045 = vpop.permute.xlu0 %2044
        %2046 = vrot.lane.b32.xlu0 %v2012, 32
        %v2047 = vpop.permute.xlu0 %2046
        %2048 = vrot.lane.b32.xlu0 %v2013, 32
        %v2049 = vpop.permute.xlu0 %2048
        %2050 = vrot.lane.b32.xlu0 %v2020, 32
        %v2051 = vpop.permute.xlu0 %2050
        %2052 = vrot.lane.b32.xlu0 %v2021, 32
        %v2053 = vpop.permute.xlu0 %2052
        %v2057 = vunpack.c.l.b16 %v1947
        %v2058 = vunpack.c.l.b16 %v1948
        %v2059 = vunpack.c.l.b16 %v1949
        %v2060 = vpack.c.b16 %v2058, %v2057
        %v2061 = vpack.c.b16 %v2059, %v2059
        %2062 = vrot.lane.b32.xlu0 %v2002, 64
        %v2063 = vpop.permute.xlu0 %2062
        %2064 = vrot.lane.b32.xlu0 %v2003, 64
        %v2065 = vpop.permute.xlu0 %2064
        %2066 = vrot.lane.b32.xlu0 %v2004, 64
        %v2067 = vpop.permute.xlu0 %2066
        %2068 = vrot.lane.b32.xlu0 %v2005, 64
        %v2069 = vpop.permute.xlu0 %2068
        %2070 = vrot.lane.b32.xlu0 %v2006, 64
        %v2071 = vpop.permute.xlu0 %2070
        %2072 = vrot.lane.b32.xlu0 %v2007, 64
        %v2073 = vpop.permute.xlu0 %2072
        %2074 = vrot.lane.b32.xlu0 %v2008, 64
        %v2075 = vpop.permute.xlu0 %2074
        %2076 = vrot.lane.b32.xlu0 %v2009, 64
        %v2077 = vpop.permute.xlu0 %2076
        %2078 = vrot.lane.b32.xlu0 %v2010, 64
        %v2079 = vpop.permute.xlu0 %2078
        %2080 = vrot.lane.b32.xlu0 %v2011, 64
        %v2081 = vpop.permute.xlu0 %2080
        %2082 = vrot.lane.b32.xlu0 %v2012, 64
        %v2083 = vpop.permute.xlu0 %2082
        %2084 = vrot.lane.b32.xlu0 %v2013, 64
        %v2085 = vpop.permute.xlu0 %2084
        %2086 = vrot.lane.b32.xlu0 %v2020, 64
        %v2087 = vpop.permute.xlu0 %2086
        %2088 = vrot.lane.b32.xlu0 %v2021, 64
        %v2089 = vpop.permute.xlu0 %2088
        %2090 = vrot.lane.b32.xlu0 %v2060, 64
        %v2091 = vpop.permute.xlu0 %2090
        %2092 = vrot.lane.b32.xlu0 %v2061, 64
        %v2093 = vpop.permute.xlu0 %2092
        %v2096 = vsel %vm1303, %v1998, %v2023
        %v2099 = vsel %vm1303, %v1999, %v2025
        %v2102 = vsel %vm1303, %v2000, %v2027
        %v2105 = vsel %vm1303, %v2001, %v2029
        %v2108 = vsel %vm1303, %v2002, %v2031
        %v2111 = vsel %vm1303, %v2003, %v2033
        %v2114 = vsel %vm1303, %v2004, %v2035
        %v2117 = vsel %vm1303, %v2005, %v2037
        %v2120 = vsel %vm1303, %v2006, %v2039
        %v2123 = vsel %vm1303, %v2007, %v2041
        %v2126 = vsel %vm1303, %v2008, %v2043
        %v2129 = vsel %vm1303, %v2009, %v2045
        %v2132 = vsel %vm1303, %v2010, %v2047
        %v2135 = vsel %vm1303, %v2011, %v2049
        %v2138 = vsel %vm1303, %v2012, %v2051
        %v2141 = vsel %vm1303, %v2013, %v2053
        %v2143 = vsel %vm1352, %v2096, %v2063
        %v2145 = vsel %vm1352, %v2099, %v2065
        %v2147 = vsel %vm1352, %v2102, %v2067
        %v2149 = vsel %vm1352, %v2105, %v2069
        %v2151 = vsel %vm1352, %v2108, %v2071
        %v2153 = vsel %vm1352, %v2111, %v2073
        %v2155 = vsel %vm1352, %v2114, %v2075
        %v2157 = vsel %vm1352, %v2117, %v2077
        %v2159 = vsel %vm1352, %v2120, %v2079
        %v2161 = vsel %vm1352, %v2123, %v2081
        %v2163 = vsel %vm1352, %v2126, %v2083
        %v2165 = vsel %vm1352, %v2129, %v2085
        %v2167 = vsel %vm1352, %v2132, %v2087
        %v2169 = vsel %vm1352, %v2135, %v2089
        %v2171 = vsel %vm1352, %v2138, %v2091
        %v2173 = vsel %vm1352, %v2141, %v2093
        %vm2174 = vsmask.f32 7424
        %v2175 = vshrl.u32 %v2143, 16
        %v2177 = vshll.u32 %v2143, 16
        %v2179 = vrot.slane %v2177, 1
        %v2180 = vor.u32 %v2175, %v2179
        %v2181 = vshll.u32 %v2145, 16
        %v2183 = vrot.slane %v2181, 1
        %v2184 = vsel %vm2174, %v2180, %v2183
        %v2185 = vshrl.u32 %v2147, 16
        %v2187 = vshll.u32 %v2147, 16
        %v2189 = vrot.slane %v2187, 1
        %v2190 = vor.u32 %v2185, %v2189
        %v2191 = vshll.u32 %v2149, 16
        %v2193 = vrot.slane %v2191, 1
        %v2194 = vsel %vm2174, %v2190, %v2193
        %v2195 = vshrl.u32 %v2151, 16
        %v2197 = vshll.u32 %v2151, 16
        %v2199 = vrot.slane %v2197, 1
        %v2200 = vor.u32 %v2195, %v2199
        %v2201 = vshll.u32 %v2153, 16
        %v2203 = vrot.slane %v2201, 1
        %v2204 = vsel %vm2174, %v2200, %v2203
        %v2205 = vshrl.u32 %v2155, 16
        %v2207 = vshll.u32 %v2155, 16
        %v2209 = vrot.slane %v2207, 1
        %v2210 = vor.u32 %v2205, %v2209
        %v2211 = vshll.u32 %v2157, 16
        %v2213 = vrot.slane %v2211, 1
        %v2214 = vsel %vm2174, %v2210, %v2213
        %v2215 = vshrl.u32 %v2159, 16
        %v2217 = vshll.u32 %v2159, 16
        %v2219 = vrot.slane %v2217, 1
        %v2220 = vor.u32 %v2215, %v2219
        %v2221 = vshll.u32 %v2161, 16
        %v2223 = vrot.slane %v2221, 1
        %v2224 = vsel %vm2174, %v2220, %v2223
        %v2225 = vshrl.u32 %v2163, 16
        %v2227 = vshll.u32 %v2163, 16
        %v2229 = vrot.slane %v2227, 1
        %v2230 = vor.u32 %v2225, %v2229
        %v2231 = vshll.u32 %v2165, 16
        %v2233 = vrot.slane %v2231, 1
        %v2234 = vsel %vm2174, %v2230, %v2233
        %v2235 = vshrl.u32 %v2167, 16
        %v2237 = vshll.u32 %v2167, 16
        %v2239 = vrot.slane %v2237, 1
        %v2240 = vor.u32 %v2235, %v2239
        %v2241 = vshll.u32 %v2169, 16
        %v2243 = vrot.slane %v2241, 1
        %v2244 = vsel %vm2174, %v2240, %v2243
        %v2245 = vshrl.u32 %v2171, 16
        %v2247 = vshll.u32 %v2171, 16
        %v2249 = vrot.slane %v2247, 1
        %v2250 = vor.u32 %v2245, %v2249
        %v2251 = vshll.u32 %v2173, 16
        %v2253 = vrot.slane %v2251, 1
        %v2254 = vsel %vm2174, %v2250, %v2253
        %s2255 = scalar_lea.vmem %s5, 96
        %v2256 = vld [vmem:[%s2255] sm:$0xf]
        %v2257 = vld [vmem:[%s2255 + $0x4] sm:$0xf]
        %v2258 = vld [vmem:[%s2255 + $0x8] sm:$0xf]
        %v2259 = vld [vmem:[%s2255 + $0xc] sm:$0xf]
        %v2260 = vld [vmem:[%s2255 + $0x10] sm:$0xf]
        %v2261 = vld [vmem:[%s2255 + $0x14] sm:$0xf]
        %v2262 = vld [vmem:[%s2255 + $0x18] sm:$0xf]
        %v2263 = vld [vmem:[%s2255 + $0x1c] sm:$0xf]
        %v2264 = vld [vmem:[%s2255 + $0x20] sm:$0xf]
        %v2265 = vld [vmem:[%s2255 + $0x24] sm:$0xf]
        %v2266 = vld [vmem:[%s2255 + $0x28] sm:$0xf]
        %v2267 = vld [vmem:[%s2255 + $0x2c] sm:$0xf]
        %v2280 = vunpack.c.l.b16 %v2256
        %v2281 = vunpack.c.l.b16 %v2257
        %v2282 = vunpack.c.l.b16 %v2258
        %v2283 = vunpack.c.l.b16 %v2259
        %v2284 = vunpack.c.l.b16 %v2260
        %v2285 = vunpack.c.l.b16 %v2261
        %v2286 = vunpack.c.l.b16 %v2262
        %v2287 = vunpack.c.l.b16 %v2263
        %v2288 = vunpack.c.l.b16 %v2264
        %v2289 = vunpack.c.l.b16 %v2265
        %v2290 = vunpack.c.l.b16 %v2266
        %v2291 = vunpack.c.l.b16 %v2267
        %v2292 = vpack.c.b16 %v2281, %v2280
        %v2293 = vpack.c.b16 %v2283, %v2282
        %v2294 = vpack.c.b16 %v2285, %v2284
        %v2295 = vpack.c.b16 %v2287, %v2286
        %v2296 = vpack.c.b16 %v2289, %v2288
        %v2297 = vpack.c.b16 %v2291, %v2290
        %v2305 = vsel %vm1649, %v2184, 0
        %v2308 = vsel %vm1649, %v2194, 0
        %v2311 = vsel %vm1649, %v2204, 0
        %v2314 = vsel %vm1649, %v2214, 0
        %v2317 = vsel %vm1649, %v2224, 0
        %v2320 = vsel %vm1649, %v2234, 0
        %v2323 = vsel %vm1649, %v2244, 0
        %v2326 = vsel %vm1649, %v2254, 0
        %2328 = vmatprep.subr.bf16.mxu0 0
        %2329 = vmatpush1.bf16.msra.mxu0 0
        %2330 = vmatprep.subr.bf16.mxu0 0
        %2331 = vmatpush1.bf16.msra.mxu0 0
        %2332 = vmatprep.subr.bf16.mxu0 0
        %2333 = vmatpush1.bf16.msra.mxu0 %v2297
        %2334 = vmatprep.subr.bf16.mxu0 0
        %2335 = vmatpush1.bf16.msra.mxu0 %v2296
        %2336 = vmatprep.subr.bf16.mxu0 0
        %2337 = vmatpush1.bf16.msra.mxu0 %v2295
        %2338 = vmatprep.subr.bf16.mxu0 0
        %2339 = vmatpush1.bf16.msra.mxu0 %v2294
        %2340 = vmatprep.subr.bf16.mxu0 0
        %2341 = vmatpush1.bf16.msra.mxu0 %v2293
        %2342 = vmatprep.subr.bf16.mxu0 0
        %2343 = vmatpush1.bf16.msra.mxu0 %v2292
        %2344 = vmatprep.subr.bf16.mxu0 0
        %2345 = vmatpush2.bf16.msra.mxu0 0
        %2346 = vmatprep.subr.bf16.mxu0 0
        %2347 = vmatpush2.bf16.msra.mxu0 0
        %2348 = vmatprep.subr.bf16.mxu0 0
        %2349 = vmatpush2.bf16.msra.mxu0 0
        %2350 = vmatprep.subr.bf16.mxu0 0
        %2351 = vmatpush2.bf16.msra.mxu0 0
        %2352 = vmatprep.subr.bf16.mxu0 0
        %2353 = vmatpush2.bf16.msra.mxu0 0
        %2354 = vmatprep.subr.bf16.mxu0 0
        %2355 = vmatpush2.bf16.msra.mxu0 0
        %2356 = vmatprep.subr.bf16.mxu0 0
        %2357 = vmatpush2.bf16.msra.mxu0 0
        %2358 = vmatprep.subr.bf16.mxu0 0
        %2359 = vmatpush2.bf16.msra.mxu0 0
        %2360 = vmatprep.mubr.bf16.mxu0 0
        %2361 = vmatmul.mubr.bf16.gmra.mxu0 %v2305
        %v2362 = vpop.f32.mrf.mxu0
        %v2363 = vadd.f32 0.0, %v2362
        %v2364 = vpop.f32.mrf.mxu0
        %v2365 = vpop.f32.mrf.mxu0
        %v2366 = vadd.f32 0.0, %v2365
        %v2367 = vpop.f32.mrf.mxu0
        %2368 = vmatprep.mubr.bf16.mxu0 0
        %2369 = vmatmul.mubr.bf16.gmra.mxu0 %v2308
        %v2370 = vpop.f32.mrf.mxu0
        %v2371 = vadd.f32 0.0, %v2370
        %v2372 = vpop.f32.mrf.mxu0
        %v2373 = vpop.f32.mrf.mxu0
        %v2374 = vadd.f32 0.0, %v2373
        %v2375 = vpop.f32.mrf.mxu0
        %2376 = vmatprep.mubr.bf16.mxu0 0
        %2377 = vmatmul.mubr.bf16.gmra.mxu0 %v2311
        %v2378 = vpop.f32.mrf.mxu0
        %v2379 = vadd.f32 0.0, %v2378
        %v2380 = vpop.f32.mrf.mxu0
        %v2381 = vpop.f32.mrf.mxu0
        %v2382 = vadd.f32 0.0, %v2381
        %v2383 = vpop.f32.mrf.mxu0
        %2384 = vmatprep.mubr.bf16.mxu0 0
        %2385 = vmatmul.mubr.bf16.gmra.mxu0 %v2314
        %v2386 = vpop.f32.mrf.mxu0
        %v2387 = vadd.f32 0.0, %v2386
        %v2388 = vpop.f32.mrf.mxu0
        %v2389 = vpop.f32.mrf.mxu0
        %v2390 = vadd.f32 0.0, %v2389
        %v2391 = vpop.f32.mrf.mxu0
        %2392 = vmatprep.mubr.bf16.mxu0 0
        %2393 = vmatmul.mubr.bf16.gmra.mxu0 %v2317
        %v2394 = vpop.f32.mrf.mxu0
        %v2395 = vadd.f32 0.0, %v2394
        %v2396 = vpop.f32.mrf.mxu0
        %v2397 = vpop.f32.mrf.mxu0
        %v2398 = vadd.f32 0.0, %v2397
        %v2399 = vpop.f32.mrf.mxu0
        %2400 = vmatprep.mubr.bf16.mxu0 0
        %2401 = vmatmul.mubr.bf16.gmra.mxu0 %v2320
        %v2402 = vpop.f32.mrf.mxu0
        %v2403 = vadd.f32 0.0, %v2402
        %v2404 = vpop.f32.mrf.mxu0
        %v2405 = vpop.f32.mrf.mxu0
        %v2406 = vadd.f32 0.0, %v2405
        %v2407 = vpop.f32.mrf.mxu0
        %2408 = vmatprep.mubr.bf16.mxu0 0
        %2409 = vmatmul.mubr.bf16.gmra.mxu0 %v2323
        %v2410 = vpop.f32.mrf.mxu0
        %v2411 = vadd.f32 0.0, %v2410
        %v2412 = vpop.f32.mrf.mxu0
        %v2413 = vpop.f32.mrf.mxu0
        %v2414 = vadd.f32 0.0, %v2413
        %v2415 = vpop.f32.mrf.mxu0
        %2416 = vmatprep.mubr.bf16.mxu0 0
        %2417 = vmatmul.mubr.bf16.gmra.mxu0 %v2326
        %v2418 = vpop.f32.mrf.mxu0
        %v2419 = vadd.f32 0.0, %v2418
        %v2420 = vpop.f32.mrf.mxu0
        %v2421 = vpop.f32.mrf.mxu0
        %v2422 = vadd.f32 0.0, %v2421
        %v2423 = vpop.f32.mrf.mxu0
        %2424 = vdwg.mxu0
        %v2425 = vadd.f32 %v1858, %v2363
        %v2426 = vadd.f32 %v1861, %v2366
        %v2427 = vadd.f32 %v1866, %v2371
        %v2428 = vadd.f32 %v1869, %v2374
        %v2429 = vadd.f32 %v1874, %v2379
        %v2430 = vadd.f32 %v1877, %v2382
        %v2431 = vadd.f32 %v1882, %v2387
        %v2432 = vadd.f32 %v1885, %v2390
        %v2433 = vadd.f32 %v1890, %v2395
        %v2434 = vadd.f32 %v1893, %v2398
        %v2435 = vadd.f32 %v1898, %v2403
        %v2436 = vadd.f32 %v1901, %v2406
        %v2437 = vadd.f32 %v1906, %v2411
        %v2438 = vadd.f32 %v1909, %v2414
        %v2439 = vadd.f32 %v1914, %v2419
        %v2440 = vadd.f32 %v1917, %v2422
        %s2441 = sadd.s32 %s29, 2
        %p2442 = scmp.lt.s32.totalorder %s2441, 0
        %s2443 = ssub.s32 0, %s2441
        %s2444 = scalar_select %p2442, %s2443, %s2441
        %s2445 = sdiv.u32.pop %s2444, 3
        %s2446 = srem.u32.pop %s2444, 3
        %s2447 = ssub.s32 0, %s2446
        %s2448 = scalar_select %p2442, %s2447, %s2446
        %p2449 = scmp.ne.s32.totalorder %s2448, 0
        %p2450 = scmp.lt.s32.totalorder %s2448, 0
        %p2451 = pnand %p2450, %p2449
        %p2452 = pneg %p2451
        %s2453 = sadd.s32 %s2448, 3
        %s2454 = scalar_select %p2452, %s2453, %s2448
        %s2455 = smul.u32 %s2454, 40
        %s2456 = smul.addr %s2455, 4
        %s2457 = scalar_lea.vmem [#allocation2], %s2456
        %v2458 = vld [vmem:[%s2457] sm:$0x8]
        %v2459 = vld [vmem:[%s2457 + $0x4] sm:$0xf]
        %v2460 = vld [vmem:[%s2457 + $0x8] sm:$0xf]
        %v2461 = vld [vmem:[%s2457 + $0x10] sm:$0x8]
        %v2462 = vld [vmem:[%s2457 + $0x14] sm:$0xf]
        %v2463 = vld [vmem:[%s2457 + $0x18] sm:$0xf]
        %v2464 = vld [vmem:[%s2457 + $0x20] sm:$0x8]
        %v2465 = vld [vmem:[%s2457 + $0x24] sm:$0xf]
        %v2466 = vld [vmem:[%s2457 + $0x28] sm:$0xf]
        %v2467 = vld [vmem:[%s2457 + $0x30] sm:$0x8]
        %v2468 = vld [vmem:[%s2457 + $0x34] sm:$0xf]
        %v2469 = vld [vmem:[%s2457 + $0x38] sm:$0xf]
        %v2470 = vld [vmem:[%s2457 + $0x40] sm:$0x8]
        %v2471 = vld [vmem:[%s2457 + $0x44] sm:$0xf]
        %v2472 = vld [vmem:[%s2457 + $0x48] sm:$0xf]
        %v2473 = vld [vmem:[%s2457 + $0x50] sm:$0x8]
        %v2474 = vld [vmem:[%s2457 + $0x54] sm:$0xf]
        %v2475 = vld [vmem:[%s2457 + $0x58] sm:$0xf]
        %v2476 = vld [vmem:[%s2457 + $0x60] sm:$0x8]
        %v2477 = vld [vmem:[%s2457 + $0x64] sm:$0xf]
        %v2478 = vld [vmem:[%s2457 + $0x68] sm:$0xf]
        %v2479 = vld [vmem:[%s2457 + $0x70] sm:$0x8]
        %v2480 = vld [vmem:[%s2457 + $0x74] sm:$0xf]
        %v2481 = vld [vmem:[%s2457 + $0x78] sm:$0xf]
        %v2482 = vld [vmem:[%s2457 + $0x80] sm:$0x8]
        %v2483 = vld [vmem:[%s2457 + $0x84] sm:$0xf]
        %v2484 = vld [vmem:[%s2457 + $0x88] sm:$0xf]
        %v2485 = vld [vmem:[%s2457 + $0x90] sm:$0x8]
        %v2486 = vld [vmem:[%s2457 + $0x94] sm:$0xf]
        %v2487 = vld [vmem:[%s2457 + $0x98] sm:$0xf]
        %v2512 = vunpack.c.l.b16 %v2458
        %v2513 = vunpack.c.l.b16 %v2459
        %v2514 = vunpack.c.l.b16 %v2460
        %v2515 = vunpack.c.l.b16 %v2461
        %v2516 = vunpack.c.l.b16 %v2462
        %v2517 = vunpack.c.l.b16 %v2463
        %v2518 = vunpack.c.l.b16 %v2464
        %v2519 = vunpack.c.l.b16 %v2465
        %v2520 = vunpack.c.l.b16 %v2466
        %v2521 = vunpack.c.l.b16 %v2467
        %v2522 = vunpack.c.l.b16 %v2468
        %v2523 = vunpack.c.l.b16 %v2469
        %v2524 = vunpack.c.l.b16 %v2470
        %v2525 = vunpack.c.l.b16 %v2471
        %v2526 = vunpack.c.l.b16 %v2472
        %v2527 = vunpack.c.l.b16 %v2473
        %v2528 = vunpack.c.l.b16 %v2474
        %v2529 = vunpack.c.l.b16 %v2475
        %v2530 = vunpack.c.l.b16 %v2476
        %v2531 = vunpack.c.l.b16 %v2477
        %v2532 = vunpack.c.l.b16 %v2478
        %v2533 = vunpack.c.l.b16 %v2479
        %v2534 = vunpack.c.l.b16 %v2480
        %v2535 = vunpack.c.l.b16 %v2481
        %v2536 = vpack.c.b16 %v2513, %v2512
        %v2537 = vpack.c.b16 %v2514, %v2514
        %v2538 = vpack.c.b16 %v2516, %v2515
        %v2539 = vpack.c.b16 %v2517, %v2517
        %v2540 = vpack.c.b16 %v2519, %v2518
        %v2541 = vpack.c.b16 %v2520, %v2520
        %v2542 = vpack.c.b16 %v2522, %v2521
        %v2543 = vpack.c.b16 %v2523, %v2523
        %v2544 = vpack.c.b16 %v2525, %v2524
        %v2545 = vpack.c.b16 %v2526, %v2526
        %v2546 = vpack.c.b16 %v2528, %v2527
        %v2547 = vpack.c.b16 %v2529, %v2529
        %v2548 = vpack.c.b16 %v2531, %v2530
        %v2549 = vpack.c.b16 %v2532, %v2532
        %v2550 = vpack.c.b16 %v2534, %v2533
        %v2551 = vpack.c.b16 %v2535, %v2535
        %v2555 = vunpack.c.l.b16 %v2482
        %v2556 = vunpack.c.l.b16 %v2483
        %v2557 = vunpack.c.l.b16 %v2484
        %v2558 = vpack.c.b16 %v2556, %v2555
        %v2559 = vpack.c.b16 %v2557, %v2557
        %2560 = vrot.lane.b32.xlu0 %v2538, 32
        %v2561 = vpop.permute.xlu0 %2560
        %2562 = vrot.lane.b32.xlu0 %v2539, 32
        %v2563 = vpop.permute.xlu0 %2562
        %2564 = vrot.lane.b32.xlu0 %v2540, 32
        %v2565 = vpop.permute.xlu0 %2564
        %2566 = vrot.lane.b32.xlu0 %v2541, 32
        %v2567 = vpop.permute.xlu0 %2566
        %2568 = vrot.lane.b32.xlu0 %v2542, 32
        %v2569 = vpop.permute.xlu0 %2568
        %2570 = vrot.lane.b32.xlu0 %v2543, 32
        %v2571 = vpop.permute.xlu0 %2570
        %2572 = vrot.lane.b32.xlu0 %v2544, 32
        %v2573 = vpop.permute.xlu0 %2572
        %2574 = vrot.lane.b32.xlu0 %v2545, 32
        %v2575 = vpop.permute.xlu0 %2574
        %2576 = vrot.lane.b32.xlu0 %v2546, 32
        %v2577 = vpop.permute.xlu0 %2576
        %2578 = vrot.lane.b32.xlu0 %v2547, 32
        %v2579 = vpop.permute.xlu0 %2578
        %2580 = vrot.lane.b32.xlu0 %v2548, 32
        %v2581 = vpop.permute.xlu0 %2580
        %2582 = vrot.lane.b32.xlu0 %v2549, 32
        %v2583 = vpop.permute.xlu0 %2582
        %2584 = vrot.lane.b32.xlu0 %v2550, 32
        %v2585 = vpop.permute.xlu0 %2584
        %2586 = vrot.lane.b32.xlu0 %v2551, 32
        %v2587 = vpop.permute.xlu0 %2586
        %2588 = vrot.lane.b32.xlu0 %v2558, 32
        %v2589 = vpop.permute.xlu0 %2588
        %2590 = vrot.lane.b32.xlu0 %v2559, 32
        %v2591 = vpop.permute.xlu0 %2590
        %v2595 = vunpack.c.l.b16 %v2485
        %v2596 = vunpack.c.l.b16 %v2486
        %v2597 = vunpack.c.l.b16 %v2487
        %v2598 = vpack.c.b16 %v2596, %v2595
        %v2599 = vpack.c.b16 %v2597, %v2597
        %2600 = vrot.lane.b32.xlu0 %v2540, 64
        %v2601 = vpop.permute.xlu0 %2600
        %2602 = vrot.lane.b32.xlu0 %v2541, 64
        %v2603 = vpop.permute.xlu0 %2602
        %2604 = vrot.lane.b32.xlu0 %v2542, 64
        %v2605 = vpop.permute.xlu0 %2604
        %2606 = vrot.lane.b32.xlu0 %v2543, 64
        %v2607 = vpop.permute.xlu0 %2606
        %2608 = vrot.lane.b32.xlu0 %v2544, 64
        %v2609 = vpop.permute.xlu0 %2608
        %2610 = vrot.lane.b32.xlu0 %v2545, 64
        %v2611 = vpop.permute.xlu0 %2610
        %2612 = vrot.lane.b32.xlu0 %v2546, 64
        %v2613 = vpop.permute.xlu0 %2612
        %2614 = vrot.lane.b32.xlu0 %v2547, 64
        %v2615 = vpop.permute.xlu0 %2614
        %2616 = vrot.lane.b32.xlu0 %v2548, 64
        %v2617 = vpop.permute.xlu0 %2616
        %2618 = vrot.lane.b32.xlu0 %v2549, 64
        %v2619 = vpop.permute.xlu0 %2618
        %2620 = vrot.lane.b32.xlu0 %v2550, 64
        %v2621 = vpop.permute.xlu0 %2620
        %2622 = vrot.lane.b32.xlu0 %v2551, 64
        %v2623 = vpop.permute.xlu0 %2622
        %2624 = vrot.lane.b32.xlu0 %v2558, 64
        %v2625 = vpop.permute.xlu0 %2624
        %2626 = vrot.lane.b32.xlu0 %v2559, 64
        %v2627 = vpop.permute.xlu0 %2626
        %2628 = vrot.lane.b32.xlu0 %v2598, 64
        %v2629 = vpop.permute.xlu0 %2628
        %2630 = vrot.lane.b32.xlu0 %v2599, 64
        %v2631 = vpop.permute.xlu0 %2630
        %v2634 = vsel %vm1303, %v2536, %v2561
        %v2637 = vsel %vm1303, %v2537, %v2563
        %v2640 = vsel %vm1303, %v2538, %v2565
        %v2643 = vsel %vm1303, %v2539, %v2567
        %v2646 = vsel %vm1303, %v2540, %v2569
        %v2649 = vsel %vm1303, %v2541, %v2571
        %v2652 = vsel %vm1303, %v2542, %v2573
        %v2655 = vsel %vm1303, %v2543, %v2575
        %v2658 = vsel %vm1303, %v2544, %v2577
        %v2661 = vsel %vm1303, %v2545, %v2579
        %v2664 = vsel %vm1303, %v2546, %v2581
        %v2667 = vsel %vm1303, %v2547, %v2583
        %v2670 = vsel %vm1303, %v2548, %v2585
        %v2673 = vsel %vm1303, %v2549, %v2587
        %v2676 = vsel %vm1303, %v2550, %v2589
        %v2679 = vsel %vm1303, %v2551, %v2591
        %v2681 = vsel %vm1352, %v2634, %v2601
        %v2683 = vsel %vm1352, %v2637, %v2603
        %v2685 = vsel %vm1352, %v2640, %v2605
        %v2687 = vsel %vm1352, %v2643, %v2607
        %v2689 = vsel %vm1352, %v2646, %v2609
        %v2691 = vsel %vm1352, %v2649, %v2611
        %v2693 = vsel %vm1352, %v2652, %v2613
        %v2695 = vsel %vm1352, %v2655, %v2615
        %v2697 = vsel %vm1352, %v2658, %v2617
        %v2699 = vsel %vm1352, %v2661, %v2619
        %v2701 = vsel %vm1352, %v2664, %v2621
        %v2703 = vsel %vm1352, %v2667, %v2623
        %v2705 = vsel %vm1352, %v2670, %v2625
        %v2707 = vsel %vm1352, %v2673, %v2627
        %v2709 = vsel %vm1352, %v2676, %v2629
        %v2711 = vsel %vm1352, %v2679, %v2631
        %v2712 = vshrl.u32 %v2681, 16
        %v2714 = vrot.slane %v2712, 3
        %v2715 = vshll.u32 %v2681, 16
        %v2717 = vrot.slane %v2715, 4
        %v2718 = vor.u32 %v2714, %v2717
        %v2719 = vshrl.u32 %v2683, 16
        %v2721 = vrot.slane %v2719, 3
        %v2722 = vshll.u32 %v2683, 16
        %v2724 = vrot.slane %v2722, 4
        %v2725 = vor.u32 %v2721, %v2724
        %v2726 = vsel %vm1385, %v2718, %v2725
        %v2727 = vshrl.u32 %v2685, 16
        %v2729 = vrot.slane %v2727, 3
        %v2730 = vshll.u32 %v2685, 16
        %v2732 = vrot.slane %v2730, 4
        %v2733 = vor.u32 %v2729, %v2732
        %v2734 = vshrl.u32 %v2687, 16
        %v2736 = vrot.slane %v2734, 3
        %v2737 = vshll.u32 %v2687, 16
        %v2739 = vrot.slane %v2737, 4
        %v2740 = vor.u32 %v2736, %v2739
        %v2741 = vsel %vm1385, %v2733, %v2740
        %v2742 = vshrl.u32 %v2689, 16
        %v2744 = vrot.slane %v2742, 3
        %v2745 = vshll.u32 %v2689, 16
        %v2747 = vrot.slane %v2745, 4
        %v2748 = vor.u32 %v2744, %v2747
        %v2749 = vshrl.u32 %v2691, 16
        %v2751 = vrot.slane %v2749, 3
        %v2752 = vshll.u32 %v2691, 16
        %v2754 = vrot.slane %v2752, 4
        %v2755 = vor.u32 %v2751, %v2754
        %v2756 = vsel %vm1385, %v2748, %v2755
        %v2757 = vshrl.u32 %v2693, 16
        %v2759 = vrot.slane %v2757, 3
        %v2760 = vshll.u32 %v2693, 16
        %v2762 = vrot.slane %v2760, 4
        %v2763 = vor.u32 %v2759, %v2762
        %v2764 = vshrl.u32 %v2695, 16
        %v2766 = vrot.slane %v2764, 3
        %v2767 = vshll.u32 %v2695, 16
        %v2769 = vrot.slane %v2767, 4
        %v2770 = vor.u32 %v2766, %v2769
        %v2771 = vsel %vm1385, %v2763, %v2770
        %v2772 = vshrl.u32 %v2697, 16
        %v2774 = vrot.slane %v2772, 3
        %v2775 = vshll.u32 %v2697, 16
        %v2777 = vrot.slane %v2775, 4
        %v2778 = vor.u32 %v2774, %v2777
        %v2779 = vshrl.u32 %v2699, 16
        %v2781 = vrot.slane %v2779, 3
        %v2782 = vshll.u32 %v2699, 16
        %v2784 = vrot.slane %v2782, 4
        %v2785 = vor.u32 %v2781, %v2784
        %v2786 = vsel %vm1385, %v2778, %v2785
        %v2787 = vshrl.u32 %v2701, 16
        %v2789 = vrot.slane %v2787, 3
        %v2790 = vshll.u32 %v2701, 16
        %v2792 = vrot.slane %v2790, 4
        %v2793 = vor.u32 %v2789, %v2792
        %v2794 = vshrl.u32 %v2703, 16
        %v2796 = vrot.slane %v2794, 3
        %v2797 = vshll.u32 %v2703, 16
        %v2799 = vrot.slane %v2797, 4
        %v2800 = vor.u32 %v2796, %v2799
        %v2801 = vsel %vm1385, %v2793, %v2800
        %v2802 = vshrl.u32 %v2705, 16
        %v2804 = vrot.slane %v2802, 3
        %v2805 = vshll.u32 %v2705, 16
        %v2807 = vrot.slane %v2805, 4
        %v2808 = vor.u32 %v2804, %v2807
        %v2809 = vshrl.u32 %v2707, 16
        %v2811 = vrot.slane %v2809, 3
        %v2812 = vshll.u32 %v2707, 16
        %v2814 = vrot.slane %v2812, 4
        %v2815 = vor.u32 %v2811, %v2814
        %v2816 = vsel %vm1385, %v2808, %v2815
        %v2817 = vshrl.u32 %v2709, 16
        %v2819 = vrot.slane %v2817, 3
        %v2820 = vshll.u32 %v2709, 16
        %v2822 = vrot.slane %v2820, 4
        %v2823 = vor.u32 %v2819, %v2822
        %v2824 = vshrl.u32 %v2711, 16
        %v2826 = vrot.slane %v2824, 3
        %v2827 = vshll.u32 %v2711, 16
        %v2829 = vrot.slane %v2827, 4
        %v2830 = vor.u32 %v2826, %v2829
        %v2831 = vsel %vm1385, %v2823, %v2830
        %s2832 = scalar_lea.vmem %s5, 144
        %v2833 = vld [vmem:[%s2832] sm:$0xf]
        %v2834 = vld [vmem:[%s2832 + $0x4] sm:$0xf]
        %v2835 = vld [vmem:[%s2832 + $0x8] sm:$0xf]
        %v2836 = vld [vmem:[%s2832 + $0xc] sm:$0xf]
        %v2837 = vld [vmem:[%s2832 + $0x10] sm:$0xf]
        %v2838 = vld [vmem:[%s2832 + $0x14] sm:$0xf]
        %v2839 = vld [vmem:[%s2832 + $0x18] sm:$0xf]
        %v2840 = vld [vmem:[%s2832 + $0x1c] sm:$0xf]
        %v2841 = vld [vmem:[%s2832 + $0x20] sm:$0xf]
        %v2842 = vld [vmem:[%s2832 + $0x24] sm:$0xf]
        %v2843 = vld [vmem:[%s2832 + $0x28] sm:$0xf]
        %v2844 = vld [vmem:[%s2832 + $0x2c] sm:$0xf]
        %v2857 = vunpack.c.l.b16 %v2833
        %v2858 = vunpack.c.l.b16 %v2834
        %v2859 = vunpack.c.l.b16 %v2835
        %v2860 = vunpack.c.l.b16 %v2836
        %v2861 = vunpack.c.l.b16 %v2837
        %v2862 = vunpack.c.l.b16 %v2838
        %v2863 = vunpack.c.l.b16 %v2839
        %v2864 = vunpack.c.l.b16 %v2840
        %v2865 = vunpack.c.l.b16 %v2841
        %v2866 = vunpack.c.l.b16 %v2842
        %v2867 = vunpack.c.l.b16 %v2843
        %v2868 = vunpack.c.l.b16 %v2844
        %v2869 = vpack.c.b16 %v2858, %v2857
        %v2870 = vpack.c.b16 %v2860, %v2859
        %v2871 = vpack.c.b16 %v2862, %v2861
        %v2872 = vpack.c.b16 %v2864, %v2863
        %v2873 = vpack.c.b16 %v2866, %v2865
        %v2874 = vpack.c.b16 %v2868, %v2867
        %v2882 = vsel %vm1649, %v2726, 0
        %v2885 = vsel %vm1649, %v2741, 0
        %v2888 = vsel %vm1649, %v2756, 0
        %v2891 = vsel %vm1649, %v2771, 0
        %v2894 = vsel %vm1649, %v2786, 0
        %v2897 = vsel %vm1649, %v2801, 0
        %v2900 = vsel %vm1649, %v2816, 0
        %v2903 = vsel %vm1649, %v2831, 0
        %2905 = vmatprep.subr.bf16.mxu0 0
        %2906 = vmatpush1.bf16.msra.mxu0 0
        %2907 = vmatprep.subr.bf16.mxu0 0
        %2908 = vmatpush1.bf16.msra.mxu0 0
        %2909 = vmatprep.subr.bf16.mxu0 0
        %2910 = vmatpush1.bf16.msra.mxu0 %v2874
        %2911 = vmatprep.subr.bf16.mxu0 0
        %2912 = vmatpush1.bf16.msra.mxu0 %v2873
        %2913 = vmatprep.subr.bf16.mxu0 0
        %2914 = vmatpush1.bf16.msra.mxu0 %v2872
        %2915 = vmatprep.subr.bf16.mxu0 0
        %2916 = vmatpush1.bf16.msra.mxu0 %v2871
        %2917 = vmatprep.subr.bf16.mxu0 0
        %2918 = vmatpush1.bf16.msra.mxu0 %v2870
        %2919 = vmatprep.subr.bf16.mxu0 0
        %2920 = vmatpush1.bf16.msra.mxu0 %v2869
        %2921 = vmatprep.subr.bf16.mxu0 0
        %2922 = vmatpush2.bf16.msra.mxu0 0
        %2923 = vmatprep.subr.bf16.mxu0 0
        %2924 = vmatpush2.bf16.msra.mxu0 0
        %2925 = vmatprep.subr.bf16.mxu0 0
        %2926 = vmatpush2.bf16.msra.mxu0 0
        %2927 = vmatprep.subr.bf16.mxu0 0
        %2928 = vmatpush2.bf16.msra.mxu0 0
        %2929 = vmatprep.subr.bf16.mxu0 0
        %2930 = vmatpush2.bf16.msra.mxu0 0
        %2931 = vmatprep.subr.bf16.mxu0 0
        %2932 = vmatpush2.bf16.msra.mxu0 0
        %2933 = vmatprep.subr.bf16.mxu0 0
        %2934 = vmatpush2.bf16.msra.mxu0 0
        %2935 = vmatprep.subr.bf16.mxu0 0
        %2936 = vmatpush2.bf16.msra.mxu0 0
        %2937 = vmatprep.mubr.bf16.mxu0 0
        %2938 = vmatmul.mubr.bf16.gmra.mxu0 %v2882
        %v2939 = vpop.f32.mrf.mxu0
        %v2940 = vadd.f32 0.0, %v2939
        %v2941 = vpop.f32.mrf.mxu0
        %v2942 = vpop.f32.mrf.mxu0
        %v2943 = vadd.f32 0.0, %v2942
        %v2944 = vpop.f32.mrf.mxu0
        %2945 = vmatprep.mubr.bf16.mxu0 0
        %2946 = vmatmul.mubr.bf16.gmra.mxu0 %v2885
        %v2947 = vpop.f32.mrf.mxu0
        %v2948 = vadd.f32 0.0, %v2947
        %v2949 = vpop.f32.mrf.mxu0
        %v2950 = vpop.f32.mrf.mxu0
        %v2951 = vadd.f32 0.0, %v2950
        %v2952 = vpop.f32.mrf.mxu0
        %2953 = vmatprep.mubr.bf16.mxu0 0
        %2954 = vmatmul.mubr.bf16.gmra.mxu0 %v2888
        %v2955 = vpop.f32.mrf.mxu0
        %v2956 = vadd.f32 0.0, %v2955
        %v2957 = vpop.f32.mrf.mxu0
        %v2958 = vpop.f32.mrf.mxu0
        %v2959 = vadd.f32 0.0, %v2958
        %v2960 = vpop.f32.mrf.mxu0
        %2961 = vmatprep.mubr.bf16.mxu0 0
        %2962 = vmatmul.mubr.bf16.gmra.mxu0 %v2891
        %v2963 = vpop.f32.mrf.mxu0
        %v2964 = vadd.f32 0.0, %v2963
        %v2965 = vpop.f32.mrf.mxu0
        %v2966 = vpop.f32.mrf.mxu0
        %v2967 = vadd.f32 0.0, %v2966
        %v2968 = vpop.f32.mrf.mxu0
        %2969 = vmatprep.mubr.bf16.mxu0 0
        %2970 = vmatmul.mubr.bf16.gmra.mxu0 %v2894
        %v2971 = vpop.f32.mrf.mxu0
        %v2972 = vadd.f32 0.0, %v2971
        %v2973 = vpop.f32.mrf.mxu0
        %v2974 = vpop.f32.mrf.mxu0
        %v2975 = vadd.f32 0.0, %v2974
        %v2976 = vpop.f32.mrf.mxu0
        %2977 = vmatprep.mubr.bf16.mxu0 0
        %2978 = vmatmul.mubr.bf16.gmra.mxu0 %v2897
        %v2979 = vpop.f32.mrf.mxu0
        %v2980 = vadd.f32 0.0, %v2979
        %v2981 = vpop.f32.mrf.mxu0
        %v2982 = vpop.f32.mrf.mxu0
        %v2983 = vadd.f32 0.0, %v2982
        %v2984 = vpop.f32.mrf.mxu0
        %2985 = vmatprep.mubr.bf16.mxu0 0
        %2986 = vmatmul.mubr.bf16.gmra.mxu0 %v2900
        %v2987 = vpop.f32.mrf.mxu0
        %v2988 = vadd.f32 0.0, %v2987
        %v2989 = vpop.f32.mrf.mxu0
        %v2990 = vpop.f32.mrf.mxu0
        %v2991 = vadd.f32 0.0, %v2990
        %v2992 = vpop.f32.mrf.mxu0
        %2993 = vmatprep.mubr.bf16.mxu0 0
        %2994 = vmatmul.mubr.bf16.gmra.mxu0 %v2903
        %v2995 = vpop.f32.mrf.mxu0
        %v2996 = vadd.f32 0.0, %v2995
        %v2997 = vpop.f32.mrf.mxu0
        %v2998 = vpop.f32.mrf.mxu0
        %v2999 = vadd.f32 0.0, %v2998
        %v3000 = vpop.f32.mrf.mxu0
        %3001 = vdwg.mxu0
        %v3002 = vadd.f32 %v2425, %v2940
        %v3003 = vadd.f32 %v2426, %v2943
        %v3004 = vadd.f32 %v2427, %v2948
        %v3005 = vadd.f32 %v2428, %v2951
        %v3006 = vadd.f32 %v2429, %v2956
        %v3007 = vadd.f32 %v2430, %v2959
        %v3008 = vadd.f32 %v2431, %v2964
        %v3009 = vadd.f32 %v2432, %v2967
        %v3010 = vadd.f32 %v2433, %v2972
        %v3011 = vadd.f32 %v2434, %v2975
        %v3012 = vadd.f32 %v2435, %v2980
        %v3013 = vadd.f32 %v2436, %v2983
        %v3014 = vadd.f32 %v2437, %v2988
        %v3015 = vadd.f32 %v2438, %v2991
        %v3016 = vadd.f32 %v2439, %v2996
        %v3017 = vadd.f32 %v2440, %v2999
        %v3018 = vpack.c.b16 %v2514, %v2513
        %v3019 = vpack.c.b16 %v2517, %v2516
        %v3020 = vpack.c.b16 %v2520, %v2519
        %v3021 = vpack.c.b16 %v2523, %v2522
        %v3022 = vpack.c.b16 %v2526, %v2525
        %v3023 = vpack.c.b16 %v2529, %v2528
        %v3024 = vpack.c.b16 %v2532, %v2531
        %v3025 = vpack.c.b16 %v2535, %v2534
        %v3026 = vpack.c.b16 %v2557, %v2556
        %3027 = vrot.lane.b32.xlu0 %v3019, 32
        %v3028 = vpop.permute.xlu0 %3027
        %3029 = vrot.lane.b32.xlu0 %v3020, 32
        %v3030 = vpop.permute.xlu0 %3029
        %3031 = vrot.lane.b32.xlu0 %v3021, 32
        %v3032 = vpop.permute.xlu0 %3031
        %3033 = vrot.lane.b32.xlu0 %v3022, 32
        %v3034 = vpop.permute.xlu0 %3033
        %3035 = vrot.lane.b32.xlu0 %v3023, 32
        %v3036 = vpop.permute.xlu0 %3035
        %3037 = vrot.lane.b32.xlu0 %v3024, 32
        %v3038 = vpop.permute.xlu0 %3037
        %3039 = vrot.lane.b32.xlu0 %v3025, 32
        %v3040 = vpop.permute.xlu0 %3039
        %3041 = vrot.lane.b32.xlu0 %v3026, 32
        %v3042 = vpop.permute.xlu0 %3041
        %v3043 = vpack.c.b16 %v2597, %v2596
        %3044 = vrot.lane.b32.xlu0 %v3020, 64
        %v3045 = vpop.permute.xlu0 %3044
        %3046 = vrot.lane.b32.xlu0 %v3021, 64
        %v3047 = vpop.permute.xlu0 %3046
        %3048 = vrot.lane.b32.xlu0 %v3022, 64
        %v3049 = vpop.permute.xlu0 %3048
        %3050 = vrot.lane.b32.xlu0 %v3023, 64
        %v3051 = vpop.permute.xlu0 %3050
        %3052 = vrot.lane.b32.xlu0 %v3024, 64
        %v3053 = vpop.permute.xlu0 %3052
        %3054 = vrot.lane.b32.xlu0 %v3025, 64
        %v3055 = vpop.permute.xlu0 %3054
        %3056 = vrot.lane.b32.xlu0 %v3026, 64
        %v3057 = vpop.permute.xlu0 %3056
        %3058 = vrot.lane.b32.xlu0 %v3043, 64
        %v3059 = vpop.permute.xlu0 %3058
        %v3062 = vsel %vm1303, %v3018, %v3028
        %v3065 = vsel %vm1303, %v3019, %v3030
        %v3068 = vsel %vm1303, %v3020, %v3032
        %v3071 = vsel %vm1303, %v3021, %v3034
        %v3074 = vsel %vm1303, %v3022, %v3036
        %v3077 = vsel %vm1303, %v3023, %v3038
        %v3080 = vsel %vm1303, %v3024, %v3040
        %v3083 = vsel %vm1303, %v3025, %v3042
        %v3085 = vsel %vm1352, %v3062, %v3045
        %v3087 = vsel %vm1352, %v3065, %v3047
        %v3089 = vsel %vm1352, %v3068, %v3049
        %v3091 = vsel %vm1352, %v3071, %v3051
        %v3093 = vsel %vm1352, %v3074, %v3053
        %v3095 = vsel %vm1352, %v3077, %v3055
        %v3097 = vsel %vm1352, %v3080, %v3057
        %v3099 = vsel %vm1352, %v3083, %v3059
        %s3100 = scalar_lea.vmem %s5, 192
        %v3101 = vld [vmem:[%s3100] sm:$0xf]
        %v3102 = vld [vmem:[%s3100 + $0x4] sm:$0xf]
        %v3103 = vld [vmem:[%s3100 + $0x8] sm:$0xf]
        %v3104 = vld [vmem:[%s3100 + $0xc] sm:$0xf]
        %v3105 = vld [vmem:[%s3100 + $0x10] sm:$0xf]
        %v3106 = vld [vmem:[%s3100 + $0x14] sm:$0xf]
        %v3107 = vld [vmem:[%s3100 + $0x18] sm:$0xf]
        %v3108 = vld [vmem:[%s3100 + $0x1c] sm:$0xf]
        %v3109 = vld [vmem:[%s3100 + $0x20] sm:$0xf]
        %v3110 = vld [vmem:[%s3100 + $0x24] sm:$0xf]
        %v3111 = vld [vmem:[%s3100 + $0x28] sm:$0xf]
        %v3112 = vld [vmem:[%s3100 + $0x2c] sm:$0xf]
        %v3125 = vunpack.c.l.b16 %v3101
        %v3126 = vunpack.c.l.b16 %v3102
        %v3127 = vunpack.c.l.b16 %v3103
        %v3128 = vunpack.c.l.b16 %v3104
        %v3129 = vunpack.c.l.b16 %v3105
        %v3130 = vunpack.c.l.b16 %v3106
        %v3131 = vunpack.c.l.b16 %v3107
        %v3132 = vunpack.c.l.b16 %v3108
        %v3133 = vunpack.c.l.b16 %v3109
        %v3134 = vunpack.c.l.b16 %v3110
        %v3135 = vunpack.c.l.b16 %v3111
        %v3136 = vunpack.c.l.b16 %v3112
        %v3137 = vpack.c.b16 %v3126, %v3125
        %v3138 = vpack.c.b16 %v3128, %v3127
        %v3139 = vpack.c.b16 %v3130, %v3129
        %v3140 = vpack.c.b16 %v3132, %v3131
        %v3141 = vpack.c.b16 %v3134, %v3133
        %v3142 = vpack.c.b16 %v3136, %v3135
        %v3149 = vsel %vm1649, %v3085, 0
        %v3151 = vsel %vm1649, %v3087, 0
        %v3153 = vsel %vm1649, %v3089, 0
        %v3155 = vsel %vm1649, %v3091, 0
        %v3157 = vsel %vm1649, %v3093, 0
        %v3159 = vsel %vm1649, %v3095, 0
        %v3161 = vsel %vm1649, %v3097, 0
        %v3163 = vsel %vm1649, %v3099, 0
        %3165 = vmatprep.subr.bf16.mxu0 0
        %3166 = vmatpush1.bf16.msra.mxu0 0
        %3167 = vmatprep.subr.bf16.mxu0 0
        %3168 = vmatpush1.bf16.msra.mxu0 0
        %3169 = vmatprep.subr.bf16.mxu0 0
        %3170 = vmatpush1.bf16.msra.mxu0 %v3142
        %3171 = vmatprep.subr.bf16.mxu0 0
        %3172 = vmatpush1.bf16.msra.mxu0 %v3141
        %3173 = vmatprep.subr.bf16.mxu0 0
        %3174 = vmatpush1.bf16.msra.mxu0 %v3140
        %3175 = vmatprep.subr.bf16.mxu0 0
        %3176 = vmatpush1.bf16.msra.mxu0 %v3139
        %3177 = vmatprep.subr.bf16.mxu0 0
        %3178 = vmatpush1.bf16.msra.mxu0 %v3138
        %3179 = vmatprep.subr.bf16.mxu0 0
        %3180 = vmatpush1.bf16.msra.mxu0 %v3137
        %3181 = vmatprep.subr.bf16.mxu0 0
        %3182 = vmatpush2.bf16.msra.mxu0 0
        %3183 = vmatprep.subr.bf16.mxu0 0
        %3184 = vmatpush2.bf16.msra.mxu0 0
        %3185 = vmatprep.subr.bf16.mxu0 0
        %3186 = vmatpush2.bf16.msra.mxu0 0
        %3187 = vmatprep.subr.bf16.mxu0 0
        %3188 = vmatpush2.bf16.msra.mxu0 0
        %3189 = vmatprep.subr.bf16.mxu0 0
        %3190 = vmatpush2.bf16.msra.mxu0 0
        %3191 = vmatprep.subr.bf16.mxu0 0
        %3192 = vmatpush2.bf16.msra.mxu0 0
        %3193 = vmatprep.subr.bf16.mxu0 0
        %3194 = vmatpush2.bf16.msra.mxu0 0
        %3195 = vmatprep.subr.bf16.mxu0 0
        %3196 = vmatpush2.bf16.msra.mxu0 0
        %3197 = vmatprep.mubr.bf16.mxu0 0
        %3198 = vmatmul.mubr.bf16.gmra.mxu0 %v3149
        %v3199 = vpop.f32.mrf.mxu0
        %v3200 = vadd.f32 0.0, %v3199
        %v3201 = vpop.f32.mrf.mxu0
        %v3202 = vpop.f32.mrf.mxu0
        %v3203 = vadd.f32 0.0, %v3202
        %v3204 = vpop.f32.mrf.mxu0
        %3205 = vmatprep.mubr.bf16.mxu0 0
        %3206 = vmatmul.mubr.bf16.gmra.mxu0 %v3151
        %v3207 = vpop.f32.mrf.mxu0
        %v3208 = vadd.f32 0.0, %v3207
        %v3209 = vpop.f32.mrf.mxu0
        %v3210 = vpop.f32.mrf.mxu0
        %v3211 = vadd.f32 0.0, %v3210
        %v3212 = vpop.f32.mrf.mxu0
        %3213 = vmatprep.mubr.bf16.mxu0 0
        %3214 = vmatmul.mubr.bf16.gmra.mxu0 %v3153
        %v3215 = vpop.f32.mrf.mxu0
        %v3216 = vadd.f32 0.0, %v3215
        %v3217 = vpop.f32.mrf.mxu0
        %v3218 = vpop.f32.mrf.mxu0
        %v3219 = vadd.f32 0.0, %v3218
        %v3220 = vpop.f32.mrf.mxu0
        %3221 = vmatprep.mubr.bf16.mxu0 0
        %3222 = vmatmul.mubr.bf16.gmra.mxu0 %v3155
        %v3223 = vpop.f32.mrf.mxu0
        %v3224 = vadd.f32 0.0, %v3223
        %v3225 = vpop.f32.mrf.mxu0
        %v3226 = vpop.f32.mrf.mxu0
        %v3227 = vadd.f32 0.0, %v3226
        %v3228 = vpop.f32.mrf.mxu0
        %3229 = vmatprep.mubr.bf16.mxu0 0
        %3230 = vmatmul.mubr.bf16.gmra.mxu0 %v3157
        %v3231 = vpop.f32.mrf.mxu0
        %v3232 = vadd.f32 0.0, %v3231
        %v3233 = vpop.f32.mrf.mxu0
        %v3234 = vpop.f32.mrf.mxu0
        %v3235 = vadd.f32 0.0, %v3234
        %v3236 = vpop.f32.mrf.mxu0
        %3237 = vmatprep.mubr.bf16.mxu0 0
        %3238 = vmatmul.mubr.bf16.gmra.mxu0 %v3159
        %v3239 = vpop.f32.mrf.mxu0
        %v3240 = vadd.f32 0.0, %v3239
        %v3241 = vpop.f32.mrf.mxu0
        %v3242 = vpop.f32.mrf.mxu0
        %v3243 = vadd.f32 0.0, %v3242
        %v3244 = vpop.f32.mrf.mxu0
        %3245 = vmatprep.mubr.bf16.mxu0 0
        %3246 = vmatmul.mubr.bf16.gmra.mxu0 %v3161
        %v3247 = vpop.f32.mrf.mxu0
        %v3248 = vadd.f32 0.0, %v3247
        %v3249 = vpop.f32.mrf.mxu0
        %v3250 = vpop.f32.mrf.mxu0
        %v3251 = vadd.f32 0.0, %v3250
        %v3252 = vpop.f32.mrf.mxu0
        %3253 = vmatprep.mubr.bf16.mxu0 0
        %3254 = vmatmul.mubr.bf16.gmra.mxu0 %v3163
        %v3255 = vpop.f32.mrf.mxu0
        %v3256 = vadd.f32 0.0, %v3255
        %v3257 = vpop.f32.mrf.mxu0
        %v3258 = vpop.f32.mrf.mxu0
        %v3259 = vadd.f32 0.0, %v3258
        %v3260 = vpop.f32.mrf.mxu0
        %3261 = vdwg.mxu0
        %v3262 = vadd.f32 %v3002, %v3200
        %v3263 = vadd.f32 %v3003, %v3203
        %v3264 = vadd.f32 %v3004, %v3208
        %v3265 = vadd.f32 %v3005, %v3211
        %v3266 = vadd.f32 %v3006, %v3216
        %v3267 = vadd.f32 %v3007, %v3219
        %v3268 = vadd.f32 %v3008, %v3224
        %v3269 = vadd.f32 %v3009, %v3227
        %v3270 = vadd.f32 %v3010, %v3232
        %v3271 = vadd.f32 %v3011, %v3235
        %v3272 = vadd.f32 %v3012, %v3240
        %v3273 = vadd.f32 %v3013, %v3243
        %v3274 = vadd.f32 %v3014, %v3248
        %v3275 = vadd.f32 %v3015, %v3251
        %v3276 = vadd.f32 %v3016, %v3256
        %v3277 = vadd.f32 %v3017, %v3259
        %v3278 = vld [vmem:[%s2457 + $0x4] sm:$0xf]
        %v3279 = vld [vmem:[%s2457 + $0x8] sm:$0xf]
        %v3280 = vld [vmem:[%s2457 + $0xc] sm:$0x1]
        %v3281 = vld [vmem:[%s2457 + $0x14] sm:$0xf]
        %v3282 = vld [vmem:[%s2457 + $0x18] sm:$0xf]
        %v3283 = vld [vmem:[%s2457 + $0x1c] sm:$0x1]
        %v3284 = vld [vmem:[%s2457 + $0x24] sm:$0xf]
        %v3285 = vld [vmem:[%s2457 + $0x28] sm:$0xf]
        %v3286 = vld [vmem:[%s2457 + $0x2c] sm:$0x1]
        %v3287 = vld [vmem:[%s2457 + $0x34] sm:$0xf]
        %v3288 = vld [vmem:[%s2457 + $0x38] sm:$0xf]
        %v3289 = vld [vmem:[%s2457 + $0x3c] sm:$0x1]
        %v3290 = vld [vmem:[%s2457 + $0x44] sm:$0xf]
        %v3291 = vld [vmem:[%s2457 + $0x48] sm:$0xf]
        %v3292 = vld [vmem:[%s2457 + $0x4c] sm:$0x1]
        %v3293 = vld [vmem:[%s2457 + $0x54] sm:$0xf]
        %v3294 = vld [vmem:[%s2457 + $0x58] sm:$0xf]
        %v3295 = vld [vmem:[%s2457 + $0x5c] sm:$0x1]
        %v3296 = vld [vmem:[%s2457 + $0x64] sm:$0xf]
        %v3297 = vld [vmem:[%s2457 + $0x68] sm:$0xf]
        %v3298 = vld [vmem:[%s2457 + $0x6c] sm:$0x1]
        %v3299 = vld [vmem:[%s2457 + $0x74] sm:$0xf]
        %v3300 = vld [vmem:[%s2457 + $0x78] sm:$0xf]
        %v3301 = vld [vmem:[%s2457 + $0x7c] sm:$0x1]
        %v3302 = vld [vmem:[%s2457 + $0x84] sm:$0xf]
        %v3303 = vld [vmem:[%s2457 + $0x88] sm:$0xf]
        %v3304 = vld [vmem:[%s2457 + $0x8c] sm:$0x1]
        %v3305 = vld [vmem:[%s2457 + $0x94] sm:$0xf]
        %v3306 = vld [vmem:[%s2457 + $0x98] sm:$0xf]
        %v3307 = vld [vmem:[%s2457 + $0x9c] sm:$0x1]
        %v3332 = vunpack.c.l.b16 %v3278
        %v3333 = vunpack.c.l.b16 %v3279
        %v3334 = vunpack.c.l.b16 %v3280
        %v3335 = vunpack.c.l.b16 %v3281
        %v3336 = vunpack.c.l.b16 %v3282
        %v3337 = vunpack.c.l.b16 %v3283
        %v3338 = vunpack.c.l.b16 %v3284
        %v3339 = vunpack.c.l.b16 %v3285
        %v3340 = vunpack.c.l.b16 %v3286
        %v3341 = vunpack.c.l.b16 %v3287
        %v3342 = vunpack.c.l.b16 %v3288
        %v3343 = vunpack.c.l.b16 %v3289
        %v3344 = vunpack.c.l.b16 %v3290
        %v3345 = vunpack.c.l.b16 %v3291
        %v3346 = vunpack.c.l.b16 %v3292
        %v3347 = vunpack.c.l.b16 %v3293
        %v3348 = vunpack.c.l.b16 %v3294
        %v3349 = vunpack.c.l.b16 %v3295
        %v3350 = vunpack.c.l.b16 %v3296
        %v3351 = vunpack.c.l.b16 %v3297
        %v3352 = vunpack.c.l.b16 %v3298
        %v3353 = vunpack.c.l.b16 %v3299
        %v3354 = vunpack.c.l.b16 %v3300
        %v3355 = vunpack.c.l.b16 %v3301
        %v3356 = vpack.c.b16 %v3333, %v3332
        %v3357 = vpack.c.b16 %v3334, %v3334
        %v3358 = vpack.c.b16 %v3336, %v3335
        %v3359 = vpack.c.b16 %v3337, %v3337
        %v3360 = vpack.c.b16 %v3339, %v3338
        %v3361 = vpack.c.b16 %v3340, %v3340
        %v3362 = vpack.c.b16 %v3342, %v3341
        %v3363 = vpack.c.b16 %v3343, %v3343
        %v3364 = vpack.c.b16 %v3345, %v3344
        %v3365 = vpack.c.b16 %v3346, %v3346
        %v3366 = vpack.c.b16 %v3348, %v3347
        %v3367 = vpack.c.b16 %v3349, %v3349
        %v3368 = vpack.c.b16 %v3351, %v3350
        %v3369 = vpack.c.b16 %v3352, %v3352
        %v3370 = vpack.c.b16 %v3354, %v3353
        %v3371 = vpack.c.b16 %v3355, %v3355
        %v3375 = vunpack.c.l.b16 %v3302
        %v3376 = vunpack.c.l.b16 %v3303
        %v3377 = vunpack.c.l.b16 %v3304
        %v3378 = vpack.c.b16 %v3376, %v3375
        %v3379 = vpack.c.b16 %v3377, %v3377
        %3380 = vrot.lane.b32.xlu0 %v3358, 32
        %v3381 = vpop.permute.xlu0 %3380
        %3382 = vrot.lane.b32.xlu0 %v3359, 32
        %v3383 = vpop.permute.xlu0 %3382
        %3384 = vrot.lane.b32.xlu0 %v3360, 32
        %v3385 = vpop.permute.xlu0 %3384
        %3386 = vrot.lane.b32.xlu0 %v3361, 32
        %v3387 = vpop.permute.xlu0 %3386
        %3388 = vrot.lane.b32.xlu0 %v3362, 32
        %v3389 = vpop.permute.xlu0 %3388
        %3390 = vrot.lane.b32.xlu0 %v3363, 32
        %v3391 = vpop.permute.xlu0 %3390
        %3392 = vrot.lane.b32.xlu0 %v3364, 32
        %v3393 = vpop.permute.xlu0 %3392
        %3394 = vrot.lane.b32.xlu0 %v3365, 32
        %v3395 = vpop.permute.xlu0 %3394
        %3396 = vrot.lane.b32.xlu0 %v3366, 32
        %v3397 = vpop.permute.xlu0 %3396
        %3398 = vrot.lane.b32.xlu0 %v3367, 32
        %v3399 = vpop.permute.xlu0 %3398
        %3400 = vrot.lane.b32.xlu0 %v3368, 32
        %v3401 = vpop.permute.xlu0 %3400
        %3402 = vrot.lane.b32.xlu0 %v3369, 32
        %v3403 = vpop.permute.xlu0 %3402
        %3404 = vrot.lane.b32.xlu0 %v3370, 32
        %v3405 = vpop.permute.xlu0 %3404
        %3406 = vrot.lane.b32.xlu0 %v3371, 32
        %v3407 = vpop.permute.xlu0 %3406
        %3408 = vrot.lane.b32.xlu0 %v3378, 32
        %v3409 = vpop.permute.xlu0 %3408
        %3410 = vrot.lane.b32.xlu0 %v3379, 32
        %v3411 = vpop.permute.xlu0 %3410
        %v3415 = vunpack.c.l.b16 %v3305
        %v3416 = vunpack.c.l.b16 %v3306
        %v3417 = vunpack.c.l.b16 %v3307
        %v3418 = vpack.c.b16 %v3416, %v3415
        %v3419 = vpack.c.b16 %v3417, %v3417
        %3420 = vrot.lane.b32.xlu0 %v3360, 64
        %v3421 = vpop.permute.xlu0 %3420
        %3422 = vrot.lane.b32.xlu0 %v3361, 64
        %v3423 = vpop.permute.xlu0 %3422
        %3424 = vrot.lane.b32.xlu0 %v3362, 64
        %v3425 = vpop.permute.xlu0 %3424
        %3426 = vrot.lane.b32.xlu0 %v3363, 64
        %v3427 = vpop.permute.xlu0 %3426
        %3428 = vrot.lane.b32.xlu0 %v3364, 64
        %v3429 = vpop.permute.xlu0 %3428
        %3430 = vrot.lane.b32.xlu0 %v3365, 64
        %v3431 = vpop.permute.xlu0 %3430
        %3432 = vrot.lane.b32.xlu0 %v3366, 64
        %v3433 = vpop.permute.xlu0 %3432
        %3434 = vrot.lane.b32.xlu0 %v3367, 64
        %v3435 = vpop.permute.xlu0 %3434
        %3436 = vrot.lane.b32.xlu0 %v3368, 64
        %v3437 = vpop.permute.xlu0 %3436
        %3438 = vrot.lane.b32.xlu0 %v3369, 64
        %v3439 = vpop.permute.xlu0 %3438
        %3440 = vrot.lane.b32.xlu0 %v3370, 64
        %v3441 = vpop.permute.xlu0 %3440
        %3442 = vrot.lane.b32.xlu0 %v3371, 64
        %v3443 = vpop.permute.xlu0 %3442
        %3444 = vrot.lane.b32.xlu0 %v3378, 64
        %v3445 = vpop.permute.xlu0 %3444
        %3446 = vrot.lane.b32.xlu0 %v3379, 64
        %v3447 = vpop.permute.xlu0 %3446
        %3448 = vrot.lane.b32.xlu0 %v3418, 64
        %v3449 = vpop.permute.xlu0 %3448
        %3450 = vrot.lane.b32.xlu0 %v3419, 64
        %v3451 = vpop.permute.xlu0 %3450
        %v3454 = vsel %vm1303, %v3356, %v3381
        %v3457 = vsel %vm1303, %v3357, %v3383
        %v3460 = vsel %vm1303, %v3358, %v3385
        %v3463 = vsel %vm1303, %v3359, %v3387
        %v3466 = vsel %vm1303, %v3360, %v3389
        %v3469 = vsel %vm1303, %v3361, %v3391
        %v3472 = vsel %vm1303, %v3362, %v3393
        %v3475 = vsel %vm1303, %v3363, %v3395
        %v3478 = vsel %vm1303, %v3364, %v3397
        %v3481 = vsel %vm1303, %v3365, %v3399
        %v3484 = vsel %vm1303, %v3366, %v3401
        %v3487 = vsel %vm1303, %v3367, %v3403
        %v3490 = vsel %vm1303, %v3368, %v3405
        %v3493 = vsel %vm1303, %v3369, %v3407
        %v3496 = vsel %vm1303, %v3370, %v3409
        %v3499 = vsel %vm1303, %v3371, %v3411
        %v3501 = vsel %vm1352, %v3454, %v3421
        %v3503 = vsel %vm1352, %v3457, %v3423
        %v3505 = vsel %vm1352, %v3460, %v3425
        %v3507 = vsel %vm1352, %v3463, %v3427
        %v3509 = vsel %vm1352, %v3466, %v3429
        %v3511 = vsel %vm1352, %v3469, %v3431
        %v3513 = vsel %vm1352, %v3472, %v3433
        %v3515 = vsel %vm1352, %v3475, %v3435
        %v3517 = vsel %vm1352, %v3478, %v3437
        %v3519 = vsel %vm1352, %v3481, %v3439
        %v3521 = vsel %vm1352, %v3484, %v3441
        %v3523 = vsel %vm1352, %v3487, %v3443
        %v3525 = vsel %vm1352, %v3490, %v3445
        %v3527 = vsel %vm1352, %v3493, %v3447
        %v3529 = vsel %vm1352, %v3496, %v3449
        %v3531 = vsel %vm1352, %v3499, %v3451
        %v3532 = vshrl.u32 %v3501, 16
        %v3534 = vshll.u32 %v3501, 16
        %v3536 = vrot.slane %v3534, 1
        %v3537 = vor.u32 %v3532, %v3536
        %v3538 = vshll.u32 %v3503, 16
        %v3540 = vrot.slane %v3538, 1
        %v3541 = vsel %vm2174, %v3537, %v3540
        %v3542 = vshrl.u32 %v3505, 16
        %v3544 = vshll.u32 %v3505, 16
        %v3546 = vrot.slane %v3544, 1
        %v3547 = vor.u32 %v3542, %v3546
        %v3548 = vshll.u32 %v3507, 16
        %v3550 = vrot.slane %v3548, 1
        %v3551 = vsel %vm2174, %v3547, %v3550
        %v3552 = vshrl.u32 %v3509, 16
        %v3554 = vshll.u32 %v3509, 16
        %v3556 = vrot.slane %v3554, 1
        %v3557 = vor.u32 %v3552, %v3556
        %v3558 = vshll.u32 %v3511, 16
        %v3560 = vrot.slane %v3558, 1
        %v3561 = vsel %vm2174, %v3557, %v3560
        %v3562 = vshrl.u32 %v3513, 16
        %v3564 = vshll.u32 %v3513, 16
        %v3566 = vrot.slane %v3564, 1
        %v3567 = vor.u32 %v3562, %v3566
        %v3568 = vshll.u32 %v3515, 16
        %v3570 = vrot.slane %v3568, 1
        %v3571 = vsel %vm2174, %v3567, %v3570
        %v3572 = vshrl.u32 %v3517, 16
        %v3574 = vshll.u32 %v3517, 16
        %v3576 = vrot.slane %v3574, 1
        %v3577 = vor.u32 %v3572, %v3576
        %v3578 = vshll.u32 %v3519, 16
        %v3580 = vrot.slane %v3578, 1
        %v3581 = vsel %vm2174, %v3577, %v3580
        %v3582 = vshrl.u32 %v3521, 16
        %v3584 = vshll.u32 %v3521, 16
        %v3586 = vrot.slane %v3584, 1
        %v3587 = vor.u32 %v3582, %v3586
        %v3588 = vshll.u32 %v3523, 16
        %v3590 = vrot.slane %v3588, 1
        %v3591 = vsel %vm2174, %v3587, %v3590
        %v3592 = vshrl.u32 %v3525, 16
        %v3594 = vshll.u32 %v3525, 16
        %v3596 = vrot.slane %v3594, 1
        %v3597 = vor.u32 %v3592, %v3596
        %v3598 = vshll.u32 %v3527, 16
        %v3600 = vrot.slane %v3598, 1
        %v3601 = vsel %vm2174, %v3597, %v3600
        %v3602 = vshrl.u32 %v3529, 16
        %v3604 = vshll.u32 %v3529, 16
        %v3606 = vrot.slane %v3604, 1
        %v3607 = vor.u32 %v3602, %v3606
        %v3608 = vshll.u32 %v3531, 16
        %v3610 = vrot.slane %v3608, 1
        %v3611 = vsel %vm2174, %v3607, %v3610
        %s3612 = scalar_lea.vmem %s5, 240
        %v3613 = vld [vmem:[%s3612] sm:$0xf]
        %v3614 = vld [vmem:[%s3612 + $0x4] sm:$0xf]
        %v3615 = vld [vmem:[%s3612 + $0x8] sm:$0xf]
        %v3616 = vld [vmem:[%s3612 + $0xc] sm:$0xf]
        %v3617 = vld [vmem:[%s3612 + $0x10] sm:$0xf]
        %v3618 = vld [vmem:[%s3612 + $0x14] sm:$0xf]
        %v3619 = vld [vmem:[%s3612 + $0x18] sm:$0xf]
        %v3620 = vld [vmem:[%s3612 + $0x1c] sm:$0xf]
        %v3621 = vld [vmem:[%s3612 + $0x20] sm:$0xf]
        %v3622 = vld [vmem:[%s3612 + $0x24] sm:$0xf]
        %v3623 = vld [vmem:[%s3612 + $0x28] sm:$0xf]
        %v3624 = vld [vmem:[%s3612 + $0x2c] sm:$0xf]
        %v3637 = vunpack.c.l.b16 %v3613
        %v3638 = vunpack.c.l.b16 %v3614
        %v3639 = vunpack.c.l.b16 %v3615
        %v3640 = vunpack.c.l.b16 %v3616
        %v3641 = vunpack.c.l.b16 %v3617
        %v3642 = vunpack.c.l.b16 %v3618
        %v3643 = vunpack.c.l.b16 %v3619
        %v3644 = vunpack.c.l.b16 %v3620
        %v3645 = vunpack.c.l.b16 %v3621
        %v3646 = vunpack.c.l.b16 %v3622
        %v3647 = vunpack.c.l.b16 %v3623
        %v3648 = vunpack.c.l.b16 %v3624
        %v3649 = vpack.c.b16 %v3638, %v3637
        %v3650 = vpack.c.b16 %v3640, %v3639
        %v3651 = vpack.c.b16 %v3642, %v3641
        %v3652 = vpack.c.b16 %v3644, %v3643
        %v3653 = vpack.c.b16 %v3646, %v3645
        %v3654 = vpack.c.b16 %v3648, %v3647
        %v3662 = vsel %vm1649, %v3541, 0
        %v3665 = vsel %vm1649, %v3551, 0
        %v3668 = vsel %vm1649, %v3561, 0
        %v3671 = vsel %vm1649, %v3571, 0
        %v3674 = vsel %vm1649, %v3581, 0
        %v3677 = vsel %vm1649, %v3591, 0
        %v3680 = vsel %vm1649, %v3601, 0
        %v3683 = vsel %vm1649, %v3611, 0
        %3685 = vmatprep.subr.bf16.mxu0 0
        %3686 = vmatpush1.bf16.msra.mxu0 0
        %3687 = vmatprep.subr.bf16.mxu0 0
        %3688 = vmatpush1.bf16.msra.mxu0 0
        %3689 = vmatprep.subr.bf16.mxu0 0
        %3690 = vmatpush1.bf16.msra.mxu0 %v3654
        %3691 = vmatprep.subr.bf16.mxu0 0
        %3692 = vmatpush1.bf16.msra.mxu0 %v3653
        %3693 = vmatprep.subr.bf16.mxu0 0
        %3694 = vmatpush1.bf16.msra.mxu0 %v3652
        %3695 = vmatprep.subr.bf16.mxu0 0
        %3696 = vmatpush1.bf16.msra.mxu0 %v3651
        %3697 = vmatprep.subr.bf16.mxu0 0
        %3698 = vmatpush1.bf16.msra.mxu0 %v3650
        %3699 = vmatprep.subr.bf16.mxu0 0
        %3700 = vmatpush1.bf16.msra.mxu0 %v3649
        %3701 = vmatprep.subr.bf16.mxu0 0
        %3702 = vmatpush2.bf16.msra.mxu0 0
        %3703 = vmatprep.subr.bf16.mxu0 0
        %3704 = vmatpush2.bf16.msra.mxu0 0
        %3705 = vmatprep.subr.bf16.mxu0 0
        %3706 = vmatpush2.bf16.msra.mxu0 0
        %3707 = vmatprep.subr.bf16.mxu0 0
        %3708 = vmatpush2.bf16.msra.mxu0 0
        %3709 = vmatprep.subr.bf16.mxu0 0
        %3710 = vmatpush2.bf16.msra.mxu0 0
        %3711 = vmatprep.subr.bf16.mxu0 0
        %3712 = vmatpush2.bf16.msra.mxu0 0
        %3713 = vmatprep.subr.bf16.mxu0 0
        %3714 = vmatpush2.bf16.msra.mxu0 0
        %3715 = vmatprep.subr.bf16.mxu0 0
        %3716 = vmatpush2.bf16.msra.mxu0 0
        %3717 = vmatprep.mubr.bf16.mxu0 0
        %3718 = vmatmul.mubr.bf16.gmra.mxu0 %v3662
        %v3719 = vpop.f32.mrf.mxu0
        %v3720 = vadd.f32 0.0, %v3719
        %v3721 = vpop.f32.mrf.mxu0
        %v3722 = vpop.f32.mrf.mxu0
        %v3723 = vadd.f32 0.0, %v3722
        %v3724 = vpop.f32.mrf.mxu0
        %3725 = vmatprep.mubr.bf16.mxu0 0
        %3726 = vmatmul.mubr.bf16.gmra.mxu0 %v3665
        %v3727 = vpop.f32.mrf.mxu0
        %v3728 = vadd.f32 0.0, %v3727
        %v3729 = vpop.f32.mrf.mxu0
        %v3730 = vpop.f32.mrf.mxu0
        %v3731 = vadd.f32 0.0, %v3730
        %v3732 = vpop.f32.mrf.mxu0
        %3733 = vmatprep.mubr.bf16.mxu0 0
        %3734 = vmatmul.mubr.bf16.gmra.mxu0 %v3668
        %v3735 = vpop.f32.mrf.mxu0
        %v3736 = vadd.f32 0.0, %v3735
        %v3737 = vpop.f32.mrf.mxu0
        %v3738 = vpop.f32.mrf.mxu0
        %v3739 = vadd.f32 0.0, %v3738
        %v3740 = vpop.f32.mrf.mxu0
        %3741 = vmatprep.mubr.bf16.mxu0 0
        %3742 = vmatmul.mubr.bf16.gmra.mxu0 %v3671
        %v3743 = vpop.f32.mrf.mxu0
        %v3744 = vadd.f32 0.0, %v3743
        %v3745 = vpop.f32.mrf.mxu0
        %v3746 = vpop.f32.mrf.mxu0
        %v3747 = vadd.f32 0.0, %v3746
        %v3748 = vpop.f32.mrf.mxu0
        %3749 = vmatprep.mubr.bf16.mxu0 0
        %3750 = vmatmul.mubr.bf16.gmra.mxu0 %v3674
        %v3751 = vpop.f32.mrf.mxu0
        %v3752 = vadd.f32 0.0, %v3751
        %v3753 = vpop.f32.mrf.mxu0
        %v3754 = vpop.f32.mrf.mxu0
        %v3755 = vadd.f32 0.0, %v3754
        %v3756 = vpop.f32.mrf.mxu0
        %3757 = vmatprep.mubr.bf16.mxu0 0
        %3758 = vmatmul.mubr.bf16.gmra.mxu0 %v3677
        %v3759 = vpop.f32.mrf.mxu0
        %v3760 = vadd.f32 0.0, %v3759
        %v3761 = vpop.f32.mrf.mxu0
        %v3762 = vpop.f32.mrf.mxu0
        %v3763 = vadd.f32 0.0, %v3762
        %v3764 = vpop.f32.mrf.mxu0
        %3765 = vmatprep.mubr.bf16.mxu0 0
        %3766 = vmatmul.mubr.bf16.gmra.mxu0 %v3680
        %v3767 = vpop.f32.mrf.mxu0
        %v3768 = vadd.f32 0.0, %v3767
        %v3769 = vpop.f32.mrf.mxu0
        %v3770 = vpop.f32.mrf.mxu0
        %v3771 = vadd.f32 0.0, %v3770
        %v3772 = vpop.f32.mrf.mxu0
        %3773 = vmatprep.mubr.bf16.mxu0 0
        %3774 = vmatmul.mubr.bf16.gmra.mxu0 %v3683
        %v3775 = vpop.f32.mrf.mxu0
        %v3776 = vadd.f32 0.0, %v3775
        %v3777 = vpop.f32.mrf.mxu0
        %v3778 = vpop.f32.mrf.mxu0
        %v3779 = vadd.f32 0.0, %v3778
        %v3780 = vpop.f32.mrf.mxu0
        %3781 = vdwg.mxu0
        %v3782 = vadd.f32 %v3262, %v3720
        %v3783 = vadd.f32 %v3263, %v3723
        %v3784 = vadd.f32 %v3264, %v3728
        %v3785 = vadd.f32 %v3265, %v3731
        %v3786 = vadd.f32 %v3266, %v3736
        %v3787 = vadd.f32 %v3267, %v3739
        %v3788 = vadd.f32 %v3268, %v3744
        %v3789 = vadd.f32 %v3269, %v3747
        %v3790 = vadd.f32 %v3270, %v3752
        %v3791 = vadd.f32 %v3271, %v3755
        %v3792 = vadd.f32 %v3272, %v3760
        %v3793 = vadd.f32 %v3273, %v3763
        %v3794 = vadd.f32 %v3274, %v3768
        %v3795 = vadd.f32 %v3275, %v3771
        %v3796 = vadd.f32 %v3276, %v3776
        %v3797 = vadd.f32 %v3277, %v3779
        %s3798 = sadd.s32 %s29, 3
        %p3799 = scmp.lt.s32.totalorder %s3798, 0
        %s3800 = ssub.s32 0, %s3798
        %s3801 = scalar_select %p3799, %s3800, %s3798
        %s3802 = sdiv.u32.pop %s3801, 3
        %s3803 = srem.u32.pop %s3801, 3
        %s3804 = ssub.s32 0, %s3803
        %s3805 = scalar_select %p3799, %s3804, %s3803
        %p3806 = scmp.ne.s32.totalorder %s3805, 0
        %p3807 = scmp.lt.s32.totalorder %s3805, 0
        %p3808 = pnand %p3807, %p3806
        %p3809 = pneg %p3808
        %s3810 = sadd.s32 %s3805, 3
        %s3811 = scalar_select %p3809, %s3810, %s3805
        %s3812 = smul.u32 %s3811, 40
        %s3813 = smul.addr %s3812, 4
        %s3814 = scalar_lea.vmem [#allocation2], %s3813
        %v3815 = vld [vmem:[%s3814] sm:$0x8]
        %v3816 = vld [vmem:[%s3814 + $0x4] sm:$0xf]
        %v3817 = vld [vmem:[%s3814 + $0x8] sm:$0xf]
        %v3818 = vld [vmem:[%s3814 + $0x10] sm:$0x8]
        %v3819 = vld [vmem:[%s3814 + $0x14] sm:$0xf]
        %v3820 = vld [vmem:[%s3814 + $0x18] sm:$0xf]
        %v3821 = vld [vmem:[%s3814 + $0x20] sm:$0x8]
        %v3822 = vld [vmem:[%s3814 + $0x24] sm:$0xf]
        %v3823 = vld [vmem:[%s3814 + $0x28] sm:$0xf]
        %v3824 = vld [vmem:[%s3814 + $0x30] sm:$0x8]
        %v3825 = vld [vmem:[%s3814 + $0x34] sm:$0xf]
        %v3826 = vld [vmem:[%s3814 + $0x38] sm:$0xf]
        %v3827 = vld [vmem:[%s3814 + $0x40] sm:$0x8]
        %v3828 = vld [vmem:[%s3814 + $0x44] sm:$0xf]
        %v3829 = vld [vmem:[%s3814 + $0x48] sm:$0xf]
        %v3830 = vld [vmem:[%s3814 + $0x50] sm:$0x8]
        %v3831 = vld [vmem:[%s3814 + $0x54] sm:$0xf]
        %v3832 = vld [vmem:[%s3814 + $0x58] sm:$0xf]
        %v3833 = vld [vmem:[%s3814 + $0x60] sm:$0x8]
        %v3834 = vld [vmem:[%s3814 + $0x64] sm:$0xf]
        %v3835 = vld [vmem:[%s3814 + $0x68] sm:$0xf]
        %v3836 = vld [vmem:[%s3814 + $0x70] sm:$0x8]
        %v3837 = vld [vmem:[%s3814 + $0x74] sm:$0xf]
        %v3838 = vld [vmem:[%s3814 + $0x78] sm:$0xf]
        %v3839 = vld [vmem:[%s3814 + $0x80] sm:$0x8]
        %v3840 = vld [vmem:[%s3814 + $0x84] sm:$0xf]
        %v3841 = vld [vmem:[%s3814 + $0x88] sm:$0xf]
        %v3842 = vld [vmem:[%s3814 + $0x90] sm:$0x8]
        %v3843 = vld [vmem:[%s3814 + $0x94] sm:$0xf]
        %v3844 = vld [vmem:[%s3814 + $0x98] sm:$0xf]
        %v3869 = vunpack.c.l.b16 %v3815
        %v3870 = vunpack.c.l.b16 %v3816
        %v3871 = vunpack.c.l.b16 %v3817
        %v3872 = vunpack.c.l.b16 %v3818
        %v3873 = vunpack.c.l.b16 %v3819
        %v3874 = vunpack.c.l.b16 %v3820
        %v3875 = vunpack.c.l.b16 %v3821
        %v3876 = vunpack.c.l.b16 %v3822
        %v3877 = vunpack.c.l.b16 %v3823
        %v3878 = vunpack.c.l.b16 %v3824
        %v3879 = vunpack.c.l.b16 %v3825
        %v3880 = vunpack.c.l.b16 %v3826
        %v3881 = vunpack.c.l.b16 %v3827
        %v3882 = vunpack.c.l.b16 %v3828
        %v3883 = vunpack.c.l.b16 %v3829
        %v3884 = vunpack.c.l.b16 %v3830
        %v3885 = vunpack.c.l.b16 %v3831
        %v3886 = vunpack.c.l.b16 %v3832
        %v3887 = vunpack.c.l.b16 %v3833
        %v3888 = vunpack.c.l.b16 %v3834
        %v3889 = vunpack.c.l.b16 %v3835
        %v3890 = vunpack.c.l.b16 %v3836
        %v3891 = vunpack.c.l.b16 %v3837
        %v3892 = vunpack.c.l.b16 %v3838
        %v3893 = vpack.c.b16 %v3870, %v3869
        %v3894 = vpack.c.b16 %v3871, %v3871
        %v3895 = vpack.c.b16 %v3873, %v3872
        %v3896 = vpack.c.b16 %v3874, %v3874
        %v3897 = vpack.c.b16 %v3876, %v3875
        %v3898 = vpack.c.b16 %v3877, %v3877
        %v3899 = vpack.c.b16 %v3879, %v3878
        %v3900 = vpack.c.b16 %v3880, %v3880
        %v3901 = vpack.c.b16 %v3882, %v3881
        %v3902 = vpack.c.b16 %v3883, %v3883
        %v3903 = vpack.c.b16 %v3885, %v3884
        %v3904 = vpack.c.b16 %v3886, %v3886
        %v3905 = vpack.c.b16 %v3888, %v3887
        %v3906 = vpack.c.b16 %v3889, %v3889
        %v3907 = vpack.c.b16 %v3891, %v3890
        %v3908 = vpack.c.b16 %v3892, %v3892
        %v3912 = vunpack.c.l.b16 %v3839
        %v3913 = vunpack.c.l.b16 %v3840
        %v3914 = vunpack.c.l.b16 %v3841
        %v3915 = vpack.c.b16 %v3913, %v3912
        %v3916 = vpack.c.b16 %v3914, %v3914
        %3917 = vrot.lane.b32.xlu0 %v3895, 32
        %v3918 = vpop.permute.xlu0 %3917
        %3919 = vrot.lane.b32.xlu0 %v3896, 32
        %v3920 = vpop.permute.xlu0 %3919
        %3921 = vrot.lane.b32.xlu0 %v3897, 32
        %v3922 = vpop.permute.xlu0 %3921
        %3923 = vrot.lane.b32.xlu0 %v3898, 32
        %v3924 = vpop.permute.xlu0 %3923
        %3925 = vrot.lane.b32.xlu0 %v3899, 32
        %v3926 = vpop.permute.xlu0 %3925
        %3927 = vrot.lane.b32.xlu0 %v3900, 32
        %v3928 = vpop.permute.xlu0 %3927
        %3929 = vrot.lane.b32.xlu0 %v3901, 32
        %v3930 = vpop.permute.xlu0 %3929
        %3931 = vrot.lane.b32.xlu0 %v3902, 32
        %v3932 = vpop.permute.xlu0 %3931
        %3933 = vrot.lane.b32.xlu0 %v3903, 32
        %v3934 = vpop.permute.xlu0 %3933
        %3935 = vrot.lane.b32.xlu0 %v3904, 32
        %v3936 = vpop.permute.xlu0 %3935
        %3937 = vrot.lane.b32.xlu0 %v3905, 32
        %v3938 = vpop.permute.xlu0 %3937
        %3939 = vrot.lane.b32.xlu0 %v3906, 32
        %v3940 = vpop.permute.xlu0 %3939
        %3941 = vrot.lane.b32.xlu0 %v3907, 32
        %v3942 = vpop.permute.xlu0 %3941
        %3943 = vrot.lane.b32.xlu0 %v3908, 32
        %v3944 = vpop.permute.xlu0 %3943
        %3945 = vrot.lane.b32.xlu0 %v3915, 32
        %v3946 = vpop.permute.xlu0 %3945
        %3947 = vrot.lane.b32.xlu0 %v3916, 32
        %v3948 = vpop.permute.xlu0 %3947
        %v3952 = vunpack.c.l.b16 %v3842
        %v3953 = vunpack.c.l.b16 %v3843
        %v3954 = vunpack.c.l.b16 %v3844
        %v3955 = vpack.c.b16 %v3953, %v3952
        %v3956 = vpack.c.b16 %v3954, %v3954
        %3957 = vrot.lane.b32.xlu0 %v3897, 64
        %v3958 = vpop.permute.xlu0 %3957
        %3959 = vrot.lane.b32.xlu0 %v3898, 64
        %v3960 = vpop.permute.xlu0 %3959
        %3961 = vrot.lane.b32.xlu0 %v3899, 64
        %v3962 = vpop.permute.xlu0 %3961
        %3963 = vrot.lane.b32.xlu0 %v3900, 64
        %v3964 = vpop.permute.xlu0 %3963
        %3965 = vrot.lane.b32.xlu0 %v3901, 64
        %v3966 = vpop.permute.xlu0 %3965
        %3967 = vrot.lane.b32.xlu0 %v3902, 64
        %v3968 = vpop.permute.xlu0 %3967
        %3969 = vrot.lane.b32.xlu0 %v3903, 64
        %v3970 = vpop.permute.xlu0 %3969
        %3971 = vrot.lane.b32.xlu0 %v3904, 64
        %v3972 = vpop.permute.xlu0 %3971
        %3973 = vrot.lane.b32.xlu0 %v3905, 64
        %v3974 = vpop.permute.xlu0 %3973
        %3975 = vrot.lane.b32.xlu0 %v3906, 64
        %v3976 = vpop.permute.xlu0 %3975
        %3977 = vrot.lane.b32.xlu0 %v3907, 64
        %v3978 = vpop.permute.xlu0 %3977
        %3979 = vrot.lane.b32.xlu0 %v3908, 64
        %v3980 = vpop.permute.xlu0 %3979
        %3981 = vrot.lane.b32.xlu0 %v3915, 64
        %v3982 = vpop.permute.xlu0 %3981
        %3983 = vrot.lane.b32.xlu0 %v3916, 64
        %v3984 = vpop.permute.xlu0 %3983
        %3985 = vrot.lane.b32.xlu0 %v3955, 64
        %v3986 = vpop.permute.xlu0 %3985
        %3987 = vrot.lane.b32.xlu0 %v3956, 64
        %v3988 = vpop.permute.xlu0 %3987
        %v3991 = vsel %vm1303, %v3893, %v3918
        %v3994 = vsel %vm1303, %v3894, %v3920
        %v3997 = vsel %vm1303, %v3895, %v3922
        %v4000 = vsel %vm1303, %v3896, %v3924
        %v4003 = vsel %vm1303, %v3897, %v3926
        %v4006 = vsel %vm1303, %v3898, %v3928
        %v4009 = vsel %vm1303, %v3899, %v3930
        %v4012 = vsel %vm1303, %v3900, %v3932
        %v4015 = vsel %vm1303, %v3901, %v3934
        %v4018 = vsel %vm1303, %v3902, %v3936
        %v4021 = vsel %vm1303, %v3903, %v3938
        %v4024 = vsel %vm1303, %v3904, %v3940
        %v4027 = vsel %vm1303, %v3905, %v3942
        %v4030 = vsel %vm1303, %v3906, %v3944
        %v4033 = vsel %vm1303, %v3907, %v3946
        %v4036 = vsel %vm1303, %v3908, %v3948
        %v4038 = vsel %vm1352, %v3991, %v3958
        %v4040 = vsel %vm1352, %v3994, %v3960
        %v4042 = vsel %vm1352, %v3997, %v3962
        %v4044 = vsel %vm1352, %v4000, %v3964
        %v4046 = vsel %vm1352, %v4003, %v3966
        %v4048 = vsel %vm1352, %v4006, %v3968
        %v4050 = vsel %vm1352, %v4009, %v3970
        %v4052 = vsel %vm1352, %v4012, %v3972
        %v4054 = vsel %vm1352, %v4015, %v3974
        %v4056 = vsel %vm1352, %v4018, %v3976
        %v4058 = vsel %vm1352, %v4021, %v3978
        %v4060 = vsel %vm1352, %v4024, %v3980
        %v4062 = vsel %vm1352, %v4027, %v3982
        %v4064 = vsel %vm1352, %v4030, %v3984
        %v4066 = vsel %vm1352, %v4033, %v3986
        %v4068 = vsel %vm1352, %v4036, %v3988
        %v4069 = vshrl.u32 %v4038, 16
        %v4071 = vrot.slane %v4069, 3
        %v4072 = vshll.u32 %v4038, 16
        %v4074 = vrot.slane %v4072, 4
        %v4075 = vor.u32 %v4071, %v4074
        %v4076 = vshrl.u32 %v4040, 16
        %v4078 = vrot.slane %v4076, 3
        %v4079 = vshll.u32 %v4040, 16
        %v4081 = vrot.slane %v4079, 4
        %v4082 = vor.u32 %v4078, %v4081
        %v4083 = vsel %vm1385, %v4075, %v4082
        %v4084 = vshrl.u32 %v4042, 16
        %v4086 = vrot.slane %v4084, 3
        %v4087 = vshll.u32 %v4042, 16
        %v4089 = vrot.slane %v4087, 4
        %v4090 = vor.u32 %v4086, %v4089
        %v4091 = vshrl.u32 %v4044, 16
        %v4093 = vrot.slane %v4091, 3
        %v4094 = vshll.u32 %v4044, 16
        %v4096 = vrot.slane %v4094, 4
        %v4097 = vor.u32 %v4093, %v4096
        %v4098 = vsel %vm1385, %v4090, %v4097
        %v4099 = vshrl.u32 %v4046, 16
        %v4101 = vrot.slane %v4099, 3
        %v4102 = vshll.u32 %v4046, 16
        %v4104 = vrot.slane %v4102, 4
        %v4105 = vor.u32 %v4101, %v4104
        %v4106 = vshrl.u32 %v4048, 16
        %v4108 = vrot.slane %v4106, 3
        %v4109 = vshll.u32 %v4048, 16
        %v4111 = vrot.slane %v4109, 4
        %v4112 = vor.u32 %v4108, %v4111
        %v4113 = vsel %vm1385, %v4105, %v4112
        %v4114 = vshrl.u32 %v4050, 16
        %v4116 = vrot.slane %v4114, 3
        %v4117 = vshll.u32 %v4050, 16
        %v4119 = vrot.slane %v4117, 4
        %v4120 = vor.u32 %v4116, %v4119
        %v4121 = vshrl.u32 %v4052, 16
        %v4123 = vrot.slane %v4121, 3
        %v4124 = vshll.u32 %v4052, 16
        %v4126 = vrot.slane %v4124, 4
        %v4127 = vor.u32 %v4123, %v4126
        %v4128 = vsel %vm1385, %v4120, %v4127
        %v4129 = vshrl.u32 %v4054, 16
        %v4131 = vrot.slane %v4129, 3
        %v4132 = vshll.u32 %v4054, 16
        %v4134 = vrot.slane %v4132, 4
        %v4135 = vor.u32 %v4131, %v4134
        %v4136 = vshrl.u32 %v4056, 16
        %v4138 = vrot.slane %v4136, 3
        %v4139 = vshll.u32 %v4056, 16
        %v4141 = vrot.slane %v4139, 4
        %v4142 = vor.u32 %v4138, %v4141
        %v4143 = vsel %vm1385, %v4135, %v4142
        %v4144 = vshrl.u32 %v4058, 16
        %v4146 = vrot.slane %v4144, 3
        %v4147 = vshll.u32 %v4058, 16
        %v4149 = vrot.slane %v4147, 4
        %v4150 = vor.u32 %v4146, %v4149
        %v4151 = vshrl.u32 %v4060, 16
        %v4153 = vrot.slane %v4151, 3
        %v4154 = vshll.u32 %v4060, 16
        %v4156 = vrot.slane %v4154, 4
        %v4157 = vor.u32 %v4153, %v4156
        %v4158 = vsel %vm1385, %v4150, %v4157
        %v4159 = vshrl.u32 %v4062, 16
        %v4161 = vrot.slane %v4159, 3
        %v4162 = vshll.u32 %v4062, 16
        %v4164 = vrot.slane %v4162, 4
        %v4165 = vor.u32 %v4161, %v4164
        %v4166 = vshrl.u32 %v4064, 16
        %v4168 = vrot.slane %v4166, 3
        %v4169 = vshll.u32 %v4064, 16
        %v4171 = vrot.slane %v4169, 4
        %v4172 = vor.u32 %v4168, %v4171
        %v4173 = vsel %vm1385, %v4165, %v4172
        %v4174 = vshrl.u32 %v4066, 16
        %v4176 = vrot.slane %v4174, 3
        %v4177 = vshll.u32 %v4066, 16
        %v4179 = vrot.slane %v4177, 4
        %v4180 = vor.u32 %v4176, %v4179
        %v4181 = vshrl.u32 %v4068, 16
        %v4183 = vrot.slane %v4181, 3
        %v4184 = vshll.u32 %v4068, 16
        %v4186 = vrot.slane %v4184, 4
        %v4187 = vor.u32 %v4183, %v4186
        %v4188 = vsel %vm1385, %v4180, %v4187
        %s4189 = scalar_lea.vmem %s5, 288
        %v4190 = vld [vmem:[%s4189] sm:$0xf]
        %v4191 = vld [vmem:[%s4189 + $0x4] sm:$0xf]
        %v4192 = vld [vmem:[%s4189 + $0x8] sm:$0xf]
        %v4193 = vld [vmem:[%s4189 + $0xc] sm:$0xf]
        %v4194 = vld [vmem:[%s4189 + $0x10] sm:$0xf]
        %v4195 = vld [vmem:[%s4189 + $0x14] sm:$0xf]
        %v4196 = vld [vmem:[%s4189 + $0x18] sm:$0xf]
        %v4197 = vld [vmem:[%s4189 + $0x1c] sm:$0xf]
        %v4198 = vld [vmem:[%s4189 + $0x20] sm:$0xf]
        %v4199 = vld [vmem:[%s4189 + $0x24] sm:$0xf]
        %v4200 = vld [vmem:[%s4189 + $0x28] sm:$0xf]
        %v4201 = vld [vmem:[%s4189 + $0x2c] sm:$0xf]
        %v4214 = vunpack.c.l.b16 %v4190
        %v4215 = vunpack.c.l.b16 %v4191
        %v4216 = vunpack.c.l.b16 %v4192
        %v4217 = vunpack.c.l.b16 %v4193
        %v4218 = vunpack.c.l.b16 %v4194
        %v4219 = vunpack.c.l.b16 %v4195
        %v4220 = vunpack.c.l.b16 %v4196
        %v4221 = vunpack.c.l.b16 %v4197
        %v4222 = vunpack.c.l.b16 %v4198
        %v4223 = vunpack.c.l.b16 %v4199
        %v4224 = vunpack.c.l.b16 %v4200
        %v4225 = vunpack.c.l.b16 %v4201
        %v4226 = vpack.c.b16 %v4215, %v4214
        %v4227 = vpack.c.b16 %v4217, %v4216
        %v4228 = vpack.c.b16 %v4219, %v4218
        %v4229 = vpack.c.b16 %v4221, %v4220
        %v4230 = vpack.c.b16 %v4223, %v4222
        %v4231 = vpack.c.b16 %v4225, %v4224
        %v4239 = vsel %vm1649, %v4083, 0
        %v4242 = vsel %vm1649, %v4098, 0
        %v4245 = vsel %vm1649, %v4113, 0
        %v4248 = vsel %vm1649, %v4128, 0
        %v4251 = vsel %vm1649, %v4143, 0
        %v4254 = vsel %vm1649, %v4158, 0
        %v4257 = vsel %vm1649, %v4173, 0
        %v4260 = vsel %vm1649, %v4188, 0
        %4262 = vmatprep.subr.bf16.mxu0 0
        %4263 = vmatpush1.bf16.msra.mxu0 0
        %4264 = vmatprep.subr.bf16.mxu0 0
        %4265 = vmatpush1.bf16.msra.mxu0 0
        %4266 = vmatprep.subr.bf16.mxu0 0
        %4267 = vmatpush1.bf16.msra.mxu0 %v4231
        %4268 = vmatprep.subr.bf16.mxu0 0
        %4269 = vmatpush1.bf16.msra.mxu0 %v4230
        %4270 = vmatprep.subr.bf16.mxu0 0
        %4271 = vmatpush1.bf16.msra.mxu0 %v4229
        %4272 = vmatprep.subr.bf16.mxu0 0
        %4273 = vmatpush1.bf16.msra.mxu0 %v4228
        %4274 = vmatprep.subr.bf16.mxu0 0
        %4275 = vmatpush1.bf16.msra.mxu0 %v4227
        %4276 = vmatprep.subr.bf16.mxu0 0
        %4277 = vmatpush1.bf16.msra.mxu0 %v4226
        %4278 = vmatprep.subr.bf16.mxu0 0
        %4279 = vmatpush2.bf16.msra.mxu0 0
        %4280 = vmatprep.subr.bf16.mxu0 0
        %4281 = vmatpush2.bf16.msra.mxu0 0
        %4282 = vmatprep.subr.bf16.mxu0 0
        %4283 = vmatpush2.bf16.msra.mxu0 0
        %4284 = vmatprep.subr.bf16.mxu0 0
        %4285 = vmatpush2.bf16.msra.mxu0 0
        %4286 = vmatprep.subr.bf16.mxu0 0
        %4287 = vmatpush2.bf16.msra.mxu0 0
        %4288 = vmatprep.subr.bf16.mxu0 0
        %4289 = vmatpush2.bf16.msra.mxu0 0
        %4290 = vmatprep.subr.bf16.mxu0 0
        %4291 = vmatpush2.bf16.msra.mxu0 0
        %4292 = vmatprep.subr.bf16.mxu0 0
        %4293 = vmatpush2.bf16.msra.mxu0 0
        %4294 = vmatprep.mubr.bf16.mxu0 0
        %4295 = vmatmul.mubr.bf16.gmra.mxu0 %v4239
        %v4296 = vpop.f32.mrf.mxu0
        %v4297 = vadd.f32 0.0, %v4296
        %v4298 = vpop.f32.mrf.mxu0
        %v4299 = vpop.f32.mrf.mxu0
        %v4300 = vadd.f32 0.0, %v4299
        %v4301 = vpop.f32.mrf.mxu0
        %4302 = vmatprep.mubr.bf16.mxu0 0
        %4303 = vmatmul.mubr.bf16.gmra.mxu0 %v4242
        %v4304 = vpop.f32.mrf.mxu0
        %v4305 = vadd.f32 0.0, %v4304
        %v4306 = vpop.f32.mrf.mxu0
        %v4307 = vpop.f32.mrf.mxu0
        %v4308 = vadd.f32 0.0, %v4307
        %v4309 = vpop.f32.mrf.mxu0
        %4310 = vmatprep.mubr.bf16.mxu0 0
        %4311 = vmatmul.mubr.bf16.gmra.mxu0 %v4245
        %v4312 = vpop.f32.mrf.mxu0
        %v4313 = vadd.f32 0.0, %v4312
        %v4314 = vpop.f32.mrf.mxu0
        %v4315 = vpop.f32.mrf.mxu0
        %v4316 = vadd.f32 0.0, %v4315
        %v4317 = vpop.f32.mrf.mxu0
        %4318 = vmatprep.mubr.bf16.mxu0 0
        %4319 = vmatmul.mubr.bf16.gmra.mxu0 %v4248
        %v4320 = vpop.f32.mrf.mxu0
        %v4321 = vadd.f32 0.0, %v4320
        %v4322 = vpop.f32.mrf.mxu0
        %v4323 = vpop.f32.mrf.mxu0
        %v4324 = vadd.f32 0.0, %v4323
        %v4325 = vpop.f32.mrf.mxu0
        %4326 = vmatprep.mubr.bf16.mxu0 0
        %4327 = vmatmul.mubr.bf16.gmra.mxu0 %v4251
        %v4328 = vpop.f32.mrf.mxu0
        %v4329 = vadd.f32 0.0, %v4328
        %v4330 = vpop.f32.mrf.mxu0
        %v4331 = vpop.f32.mrf.mxu0
        %v4332 = vadd.f32 0.0, %v4331
        %v4333 = vpop.f32.mrf.mxu0
        %4334 = vmatprep.mubr.bf16.mxu0 0
        %4335 = vmatmul.mubr.bf16.gmra.mxu0 %v4254
        %v4336 = vpop.f32.mrf.mxu0
        %v4337 = vadd.f32 0.0, %v4336
        %v4338 = vpop.f32.mrf.mxu0
        %v4339 = vpop.f32.mrf.mxu0
        %v4340 = vadd.f32 0.0, %v4339
        %v4341 = vpop.f32.mrf.mxu0
        %4342 = vmatprep.mubr.bf16.mxu0 0
        %4343 = vmatmul.mubr.bf16.gmra.mxu0 %v4257
        %v4344 = vpop.f32.mrf.mxu0
        %v4345 = vadd.f32 0.0, %v4344
        %v4346 = vpop.f32.mrf.mxu0
        %v4347 = vpop.f32.mrf.mxu0
        %v4348 = vadd.f32 0.0, %v4347
        %v4349 = vpop.f32.mrf.mxu0
        %4350 = vmatprep.mubr.bf16.mxu0 0
        %4351 = vmatmul.mubr.bf16.gmra.mxu0 %v4260
        %v4352 = vpop.f32.mrf.mxu0
        %v4353 = vadd.f32 0.0, %v4352
        %v4354 = vpop.f32.mrf.mxu0
        %v4355 = vpop.f32.mrf.mxu0
        %v4356 = vadd.f32 0.0, %v4355
        %v4357 = vpop.f32.mrf.mxu0
        %4358 = vdwg.mxu0
        %v4359 = vadd.f32 %v3782, %v4297
        %v4360 = vadd.f32 %v3783, %v4300
        %v4361 = vadd.f32 %v3784, %v4305
        %v4362 = vadd.f32 %v3785, %v4308
        %v4363 = vadd.f32 %v3786, %v4313
        %v4364 = vadd.f32 %v3787, %v4316
        %v4365 = vadd.f32 %v3788, %v4321
        %v4366 = vadd.f32 %v3789, %v4324
        %v4367 = vadd.f32 %v3790, %v4329
        %v4368 = vadd.f32 %v3791, %v4332
        %v4369 = vadd.f32 %v3792, %v4337
        %v4370 = vadd.f32 %v3793, %v4340
        %v4371 = vadd.f32 %v3794, %v4345
        %v4372 = vadd.f32 %v3795, %v4348
        %v4373 = vadd.f32 %v3796, %v4353
        %v4374 = vadd.f32 %v3797, %v4356
        %v4375 = vpack.c.b16 %v3871, %v3870
        %v4376 = vpack.c.b16 %v3874, %v3873
        %v4377 = vpack.c.b16 %v3877, %v3876
        %v4378 = vpack.c.b16 %v3880, %v3879
        %v4379 = vpack.c.b16 %v3883, %v3882
        %v4380 = vpack.c.b16 %v3886, %v3885
        %v4381 = vpack.c.b16 %v3889, %v3888
        %v4382 = vpack.c.b16 %v3892, %v3891
        %v4383 = vpack.c.b16 %v3914, %v3913
        %4384 = vrot.lane.b32.xlu0 %v4376, 32
        %v4385 = vpop.permute.xlu0 %4384
        %4386 = vrot.lane.b32.xlu0 %v4377, 32
        %v4387 = vpop.permute.xlu0 %4386
        %4388 = vrot.lane.b32.xlu0 %v4378, 32
        %v4389 = vpop.permute.xlu0 %4388
        %4390 = vrot.lane.b32.xlu0 %v4379, 32
        %v4391 = vpop.permute.xlu0 %4390
        %4392 = vrot.lane.b32.xlu0 %v4380, 32
        %v4393 = vpop.permute.xlu0 %4392
        %4394 = vrot.lane.b32.xlu0 %v4381, 32
        %v4395 = vpop.permute.xlu0 %4394
        %4396 = vrot.lane.b32.xlu0 %v4382, 32
        %v4397 = vpop.permute.xlu0 %4396
        %4398 = vrot.lane.b32.xlu0 %v4383, 32
        %v4399 = vpop.permute.xlu0 %4398
        %v4400 = vpack.c.b16 %v3954, %v3953
        %4401 = vrot.lane.b32.xlu0 %v4377, 64
        %v4402 = vpop.permute.xlu0 %4401
        %4403 = vrot.lane.b32.xlu0 %v4378, 64
        %v4404 = vpop.permute.xlu0 %4403
        %4405 = vrot.lane.b32.xlu0 %v4379, 64
        %v4406 = vpop.permute.xlu0 %4405
        %4407 = vrot.lane.b32.xlu0 %v4380, 64
        %v4408 = vpop.permute.xlu0 %4407
        %4409 = vrot.lane.b32.xlu0 %v4381, 64
        %v4410 = vpop.permute.xlu0 %4409
        %4411 = vrot.lane.b32.xlu0 %v4382, 64
        %v4412 = vpop.permute.xlu0 %4411
        %4413 = vrot.lane.b32.xlu0 %v4383, 64
        %v4414 = vpop.permute.xlu0 %4413
        %4415 = vrot.lane.b32.xlu0 %v4400, 64
        %v4416 = vpop.permute.xlu0 %4415
        %v4419 = vsel %vm1303, %v4375, %v4385
        %v4422 = vsel %vm1303, %v4376, %v4387
        %v4425 = vsel %vm1303, %v4377, %v4389
        %v4428 = vsel %vm1303, %v4378, %v4391
        %v4431 = vsel %vm1303, %v4379, %v4393
        %v4434 = vsel %vm1303, %v4380, %v4395
        %v4437 = vsel %vm1303, %v4381, %v4397
        %v4440 = vsel %vm1303, %v4382, %v4399
        %v4442 = vsel %vm1352, %v4419, %v4402
        %v4444 = vsel %vm1352, %v4422, %v4404
        %v4446 = vsel %vm1352, %v4425, %v4406
        %v4448 = vsel %vm1352, %v4428, %v4408
        %v4450 = vsel %vm1352, %v4431, %v4410
        %v4452 = vsel %vm1352, %v4434, %v4412
        %v4454 = vsel %vm1352, %v4437, %v4414
        %v4456 = vsel %vm1352, %v4440, %v4416
        %s4457 = scalar_lea.vmem %s5, 336
        %v4458 = vld [vmem:[%s4457] sm:$0xf]
        %v4459 = vld [vmem:[%s4457 + $0x4] sm:$0xf]
        %v4460 = vld [vmem:[%s4457 + $0x8] sm:$0xf]
        %v4461 = vld [vmem:[%s4457 + $0xc] sm:$0xf]
        %v4462 = vld [vmem:[%s4457 + $0x10] sm:$0xf]
        %v4463 = vld [vmem:[%s4457 + $0x14] sm:$0xf]
        %v4464 = vld [vmem:[%s4457 + $0x18] sm:$0xf]
        %v4465 = vld [vmem:[%s4457 + $0x1c] sm:$0xf]
        %v4466 = vld [vmem:[%s4457 + $0x20] sm:$0xf]
        %v4467 = vld [vmem:[%s4457 + $0x24] sm:$0xf]
        %v4468 = vld [vmem:[%s4457 + $0x28] sm:$0xf]
        %v4469 = vld [vmem:[%s4457 + $0x2c] sm:$0xf]
        %v4482 = vunpack.c.l.b16 %v4458
        %v4483 = vunpack.c.l.b16 %v4459
        %v4484 = vunpack.c.l.b16 %v4460
        %v4485 = vunpack.c.l.b16 %v4461
        %v4486 = vunpack.c.l.b16 %v4462
        %v4487 = vunpack.c.l.b16 %v4463
        %v4488 = vunpack.c.l.b16 %v4464
        %v4489 = vunpack.c.l.b16 %v4465
        %v4490 = vunpack.c.l.b16 %v4466
        %v4491 = vunpack.c.l.b16 %v4467
        %v4492 = vunpack.c.l.b16 %v4468
        %v4493 = vunpack.c.l.b16 %v4469
        %v4494 = vpack.c.b16 %v4483, %v4482
        %v4495 = vpack.c.b16 %v4485, %v4484
        %v4496 = vpack.c.b16 %v4487, %v4486
        %v4497 = vpack.c.b16 %v4489, %v4488
        %v4498 = vpack.c.b16 %v4491, %v4490
        %v4499 = vpack.c.b16 %v4493, %v4492
        %v4506 = vsel %vm1649, %v4442, 0
        %v4508 = vsel %vm1649, %v4444, 0
        %v4510 = vsel %vm1649, %v4446, 0
        %v4512 = vsel %vm1649, %v4448, 0
        %v4514 = vsel %vm1649, %v4450, 0
        %v4516 = vsel %vm1649, %v4452, 0
        %v4518 = vsel %vm1649, %v4454, 0
        %v4520 = vsel %vm1649, %v4456, 0
        %4522 = vmatprep.subr.bf16.mxu0 0
        %4523 = vmatpush1.bf16.msra.mxu0 0
        %4524 = vmatprep.subr.bf16.mxu0 0
        %4525 = vmatpush1.bf16.msra.mxu0 0
        %4526 = vmatprep.subr.bf16.mxu0 0
        %4527 = vmatpush1.bf16.msra.mxu0 %v4499
        %4528 = vmatprep.subr.bf16.mxu0 0
        %4529 = vmatpush1.bf16.msra.mxu0 %v4498
        %4530 = vmatprep.subr.bf16.mxu0 0
        %4531 = vmatpush1.bf16.msra.mxu0 %v4497
        %4532 = vmatprep.subr.bf16.mxu0 0
        %4533 = vmatpush1.bf16.msra.mxu0 %v4496
        %4534 = vmatprep.subr.bf16.mxu0 0
        %4535 = vmatpush1.bf16.msra.mxu0 %v4495
        %4536 = vmatprep.subr.bf16.mxu0 0
        %4537 = vmatpush1.bf16.msra.mxu0 %v4494
        %4538 = vmatprep.subr.bf16.mxu0 0
        %4539 = vmatpush2.bf16.msra.mxu0 0
        %4540 = vmatprep.subr.bf16.mxu0 0
        %4541 = vmatpush2.bf16.msra.mxu0 0
        %4542 = vmatprep.subr.bf16.mxu0 0
        %4543 = vmatpush2.bf16.msra.mxu0 0
        %4544 = vmatprep.subr.bf16.mxu0 0
        %4545 = vmatpush2.bf16.msra.mxu0 0
        %4546 = vmatprep.subr.bf16.mxu0 0
        %4547 = vmatpush2.bf16.msra.mxu0 0
        %4548 = vmatprep.subr.bf16.mxu0 0
        %4549 = vmatpush2.bf16.msra.mxu0 0
        %4550 = vmatprep.subr.bf16.mxu0 0
        %4551 = vmatpush2.bf16.msra.mxu0 0
        %4552 = vmatprep.subr.bf16.mxu0 0
        %4553 = vmatpush2.bf16.msra.mxu0 0
        %4554 = vmatprep.mubr.bf16.mxu0 0
        %4555 = vmatmul.mubr.bf16.gmra.mxu0 %v4506
        %v4556 = vpop.f32.mrf.mxu0
        %v4557 = vadd.f32 0.0, %v4556
        %v4558 = vpop.f32.mrf.mxu0
        %v4559 = vpop.f32.mrf.mxu0
        %v4560 = vadd.f32 0.0, %v4559
        %v4561 = vpop.f32.mrf.mxu0
        %4562 = vmatprep.mubr.bf16.mxu0 0
        %4563 = vmatmul.mubr.bf16.gmra.mxu0 %v4508
        %v4564 = vpop.f32.mrf.mxu0
        %v4565 = vadd.f32 0.0, %v4564
        %v4566 = vpop.f32.mrf.mxu0
        %v4567 = vpop.f32.mrf.mxu0
        %v4568 = vadd.f32 0.0, %v4567
        %v4569 = vpop.f32.mrf.mxu0
        %4570 = vmatprep.mubr.bf16.mxu0 0
        %4571 = vmatmul.mubr.bf16.gmra.mxu0 %v4510
        %v4572 = vpop.f32.mrf.mxu0
        %v4573 = vadd.f32 0.0, %v4572
        %v4574 = vpop.f32.mrf.mxu0
        %v4575 = vpop.f32.mrf.mxu0
        %v4576 = vadd.f32 0.0, %v4575
        %v4577 = vpop.f32.mrf.mxu0
        %4578 = vmatprep.mubr.bf16.mxu0 0
        %4579 = vmatmul.mubr.bf16.gmra.mxu0 %v4512
        %v4580 = vpop.f32.mrf.mxu0
        %v4581 = vadd.f32 0.0, %v4580
        %v4582 = vpop.f32.mrf.mxu0
        %v4583 = vpop.f32.mrf.mxu0
        %v4584 = vadd.f32 0.0, %v4583
        %v4585 = vpop.f32.mrf.mxu0
        %4586 = vmatprep.mubr.bf16.mxu0 0
        %4587 = vmatmul.mubr.bf16.gmra.mxu0 %v4514
        %v4588 = vpop.f32.mrf.mxu0
        %v4589 = vadd.f32 0.0, %v4588
        %v4590 = vpop.f32.mrf.mxu0
        %v4591 = vpop.f32.mrf.mxu0
        %v4592 = vadd.f32 0.0, %v4591
        %v4593 = vpop.f32.mrf.mxu0
        %4594 = vmatprep.mubr.bf16.mxu0 0
        %4595 = vmatmul.mubr.bf16.gmra.mxu0 %v4516
        %v4596 = vpop.f32.mrf.mxu0
        %v4597 = vadd.f32 0.0, %v4596
        %v4598 = vpop.f32.mrf.mxu0
        %v4599 = vpop.f32.mrf.mxu0
        %v4600 = vadd.f32 0.0, %v4599
        %v4601 = vpop.f32.mrf.mxu0
        %4602 = vmatprep.mubr.bf16.mxu0 0
        %4603 = vmatmul.mubr.bf16.gmra.mxu0 %v4518
        %v4604 = vpop.f32.mrf.mxu0
        %v4605 = vadd.f32 0.0, %v4604
        %v4606 = vpop.f32.mrf.mxu0
        %v4607 = vpop.f32.mrf.mxu0
        %v4608 = vadd.f32 0.0, %v4607
        %v4609 = vpop.f32.mrf.mxu0
        %4610 = vmatprep.mubr.bf16.mxu0 0
        %4611 = vmatmul.mubr.bf16.gmra.mxu0 %v4520
        %v4612 = vpop.f32.mrf.mxu0
        %v4613 = vadd.f32 0.0, %v4612
        %v4614 = vpop.f32.mrf.mxu0
        %v4615 = vpop.f32.mrf.mxu0
        %v4616 = vadd.f32 0.0, %v4615
        %v4617 = vpop.f32.mrf.mxu0
        %4618 = vdwg.mxu0
        %v4619 = vadd.f32 %v4359, %v4557
        %v4620 = vadd.f32 %v4360, %v4560
        %v4621 = vadd.f32 %v4361, %v4565
        %v4622 = vadd.f32 %v4362, %v4568
        %v4623 = vadd.f32 %v4363, %v4573
        %v4624 = vadd.f32 %v4364, %v4576
        %v4625 = vadd.f32 %v4365, %v4581
        %v4626 = vadd.f32 %v4366, %v4584
        %v4627 = vadd.f32 %v4367, %v4589
        %v4628 = vadd.f32 %v4368, %v4592
        %v4629 = vadd.f32 %v4369, %v4597
        %v4630 = vadd.f32 %v4370, %v4600
        %v4631 = vadd.f32 %v4371, %v4605
        %v4632 = vadd.f32 %v4372, %v4608
        %v4633 = vadd.f32 %v4373, %v4613
        %v4634 = vadd.f32 %v4374, %v4616
        %v4635 = vld [vmem:[%s3814 + $0x4] sm:$0xf]
        %v4636 = vld [vmem:[%s3814 + $0x8] sm:$0xf]
        %v4637 = vld [vmem:[%s3814 + $0xc] sm:$0x1]
        %v4638 = vld [vmem:[%s3814 + $0x14] sm:$0xf]
        %v4639 = vld [vmem:[%s3814 + $0x18] sm:$0xf]
        %v4640 = vld [vmem:[%s3814 + $0x1c] sm:$0x1]
        %v4641 = vld [vmem:[%s3814 + $0x24] sm:$0xf]
        %v4642 = vld [vmem:[%s3814 + $0x28] sm:$0xf]
        %v4643 = vld [vmem:[%s3814 + $0x2c] sm:$0x1]
        %v4644 = vld [vmem:[%s3814 + $0x34] sm:$0xf]
        %v4645 = vld [vmem:[%s3814 + $0x38] sm:$0xf]
        %v4646 = vld [vmem:[%s3814 + $0x3c] sm:$0x1]
        %v4647 = vld [vmem:[%s3814 + $0x44] sm:$0xf]
        %v4648 = vld [vmem:[%s3814 + $0x48] sm:$0xf]
        %v4649 = vld [vmem:[%s3814 + $0x4c] sm:$0x1]
        %v4650 = vld [vmem:[%s3814 + $0x54] sm:$0xf]
        %v4651 = vld [vmem:[%s3814 + $0x58] sm:$0xf]
        %v4652 = vld [vmem:[%s3814 + $0x5c] sm:$0x1]
        %v4653 = vld [vmem:[%s3814 + $0x64] sm:$0xf]
        %v4654 = vld [vmem:[%s3814 + $0x68] sm:$0xf]
        %v4655 = vld [vmem:[%s3814 + $0x6c] sm:$0x1]
        %v4656 = vld [vmem:[%s3814 + $0x74] sm:$0xf]
        %v4657 = vld [vmem:[%s3814 + $0x78] sm:$0xf]
        %v4658 = vld [vmem:[%s3814 + $0x7c] sm:$0x1]
        %v4659 = vld [vmem:[%s3814 + $0x84] sm:$0xf]
        %v4660 = vld [vmem:[%s3814 + $0x88] sm:$0xf]
        %v4661 = vld [vmem:[%s3814 + $0x8c] sm:$0x1]
        %v4662 = vld [vmem:[%s3814 + $0x94] sm:$0xf]
        %v4663 = vld [vmem:[%s3814 + $0x98] sm:$0xf]
        %v4664 = vld [vmem:[%s3814 + $0x9c] sm:$0x1]
        %v4689 = vunpack.c.l.b16 %v4635
        %v4690 = vunpack.c.l.b16 %v4636
        %v4691 = vunpack.c.l.b16 %v4637
        %v4692 = vunpack.c.l.b16 %v4638
        %v4693 = vunpack.c.l.b16 %v4639
        %v4694 = vunpack.c.l.b16 %v4640
        %v4695 = vunpack.c.l.b16 %v4641
        %v4696 = vunpack.c.l.b16 %v4642
        %v4697 = vunpack.c.l.b16 %v4643
        %v4698 = vunpack.c.l.b16 %v4644
        %v4699 = vunpack.c.l.b16 %v4645
        %v4700 = vunpack.c.l.b16 %v4646
        %v4701 = vunpack.c.l.b16 %v4647
        %v4702 = vunpack.c.l.b16 %v4648
        %v4703 = vunpack.c.l.b16 %v4649
        %v4704 = vunpack.c.l.b16 %v4650
        %v4705 = vunpack.c.l.b16 %v4651
        %v4706 = vunpack.c.l.b16 %v4652
        %v4707 = vunpack.c.l.b16 %v4653
        %v4708 = vunpack.c.l.b16 %v4654
        %v4709 = vunpack.c.l.b16 %v4655
        %v4710 = vunpack.c.l.b16 %v4656
        %v4711 = vunpack.c.l.b16 %v4657
        %v4712 = vunpack.c.l.b16 %v4658
        %v4713 = vpack.c.b16 %v4690, %v4689
        %v4714 = vpack.c.b16 %v4691, %v4691
        %v4715 = vpack.c.b16 %v4693, %v4692
        %v4716 = vpack.c.b16 %v4694, %v4694
        %v4717 = vpack.c.b16 %v4696, %v4695
        %v4718 = vpack.c.b16 %v4697, %v4697
        %v4719 = vpack.c.b16 %v4699, %v4698
        %v4720 = vpack.c.b16 %v4700, %v4700
        %v4721 = vpack.c.b16 %v4702, %v4701
        %v4722 = vpack.c.b16 %v4703, %v4703
        %v4723 = vpack.c.b16 %v4705, %v4704
        %v4724 = vpack.c.b16 %v4706, %v4706
        %v4725 = vpack.c.b16 %v4708, %v4707
        %v4726 = vpack.c.b16 %v4709, %v4709
        %v4727 = vpack.c.b16 %v4711, %v4710
        %v4728 = vpack.c.b16 %v4712, %v4712
        %v4732 = vunpack.c.l.b16 %v4659
        %v4733 = vunpack.c.l.b16 %v4660
        %v4734 = vunpack.c.l.b16 %v4661
        %v4735 = vpack.c.b16 %v4733, %v4732
        %v4736 = vpack.c.b16 %v4734, %v4734
        %4737 = vrot.lane.b32.xlu0 %v4715, 32
        %v4738 = vpop.permute.xlu0 %4737
        %4739 = vrot.lane.b32.xlu0 %v4716, 32
        %v4740 = vpop.permute.xlu0 %4739
        %4741 = vrot.lane.b32.xlu0 %v4717, 32
        %v4742 = vpop.permute.xlu0 %4741
        %4743 = vrot.lane.b32.xlu0 %v4718, 32
        %v4744 = vpop.permute.xlu0 %4743
        %4745 = vrot.lane.b32.xlu0 %v4719, 32
        %v4746 = vpop.permute.xlu0 %4745
        %4747 = vrot.lane.b32.xlu0 %v4720, 32
        %v4748 = vpop.permute.xlu0 %4747
        %4749 = vrot.lane.b32.xlu0 %v4721, 32
        %v4750 = vpop.permute.xlu0 %4749
        %4751 = vrot.lane.b32.xlu0 %v4722, 32
        %v4752 = vpop.permute.xlu0 %4751
        %4753 = vrot.lane.b32.xlu0 %v4723, 32
        %v4754 = vpop.permute.xlu0 %4753
        %4755 = vrot.lane.b32.xlu0 %v4724, 32
        %v4756 = vpop.permute.xlu0 %4755
        %4757 = vrot.lane.b32.xlu0 %v4725, 32
        %v4758 = vpop.permute.xlu0 %4757
        %4759 = vrot.lane.b32.xlu0 %v4726, 32
        %v4760 = vpop.permute.xlu0 %4759
        %4761 = vrot.lane.b32.xlu0 %v4727, 32
        %v4762 = vpop.permute.xlu0 %4761
        %4763 = vrot.lane.b32.xlu0 %v4728, 32
        %v4764 = vpop.permute.xlu0 %4763
        %4765 = vrot.lane.b32.xlu0 %v4735, 32
        %v4766 = vpop.permute.xlu0 %4765
        %4767 = vrot.lane.b32.xlu0 %v4736, 32
        %v4768 = vpop.permute.xlu0 %4767
        %v4772 = vunpack.c.l.b16 %v4662
        %v4773 = vunpack.c.l.b16 %v4663
        %v4774 = vunpack.c.l.b16 %v4664
        %v4775 = vpack.c.b16 %v4773, %v4772
        %v4776 = vpack.c.b16 %v4774, %v4774
        %4777 = vrot.lane.b32.xlu0 %v4717, 64
        %v4778 = vpop.permute.xlu0 %4777
        %4779 = vrot.lane.b32.xlu0 %v4718, 64
        %v4780 = vpop.permute.xlu0 %4779
        %4781 = vrot.lane.b32.xlu0 %v4719, 64
        %v4782 = vpop.permute.xlu0 %4781
        %4783 = vrot.lane.b32.xlu0 %v4720, 64
        %v4784 = vpop.permute.xlu0 %4783
        %4785 = vrot.lane.b32.xlu0 %v4721, 64
        %v4786 = vpop.permute.xlu0 %4785
        %4787 = vrot.lane.b32.xlu0 %v4722, 64
        %v4788 = vpop.permute.xlu0 %4787
        %4789 = vrot.lane.b32.xlu0 %v4723, 64
        %v4790 = vpop.permute.xlu0 %4789
        %4791 = vrot.lane.b32.xlu0 %v4724, 64
        %v4792 = vpop.permute.xlu0 %4791
        %4793 = vrot.lane.b32.xlu0 %v4725, 64
        %v4794 = vpop.permute.xlu0 %4793
        %4795 = vrot.lane.b32.xlu0 %v4726, 64
        %v4796 = vpop.permute.xlu0 %4795
        %4797 = vrot.lane.b32.xlu0 %v4727, 64
        %v4798 = vpop.permute.xlu0 %4797
        %4799 = vrot.lane.b32.xlu0 %v4728, 64
        %v4800 = vpop.permute.xlu0 %4799
        %4801 = vrot.lane.b32.xlu0 %v4735, 64
        %v4802 = vpop.permute.xlu0 %4801
        %4803 = vrot.lane.b32.xlu0 %v4736, 64
        %v4804 = vpop.permute.xlu0 %4803
        %4805 = vrot.lane.b32.xlu0 %v4775, 64
        %v4806 = vpop.permute.xlu0 %4805
        %4807 = vrot.lane.b32.xlu0 %v4776, 64
        %v4808 = vpop.permute.xlu0 %4807
        %v4811 = vsel %vm1303, %v4713, %v4738
        %v4814 = vsel %vm1303, %v4714, %v4740
        %v4817 = vsel %vm1303, %v4715, %v4742
        %v4820 = vsel %vm1303, %v4716, %v4744
        %v4823 = vsel %vm1303, %v4717, %v4746
        %v4826 = vsel %vm1303, %v4718, %v4748
        %v4829 = vsel %vm1303, %v4719, %v4750
        %v4832 = vsel %vm1303, %v4720, %v4752
        %v4835 = vsel %vm1303, %v4721, %v4754
        %v4838 = vsel %vm1303, %v4722, %v4756
        %v4841 = vsel %vm1303, %v4723, %v4758
        %v4844 = vsel %vm1303, %v4724, %v4760
        %v4847 = vsel %vm1303, %v4725, %v4762
        %v4850 = vsel %vm1303, %v4726, %v4764
        %v4853 = vsel %vm1303, %v4727, %v4766
        %v4856 = vsel %vm1303, %v4728, %v4768
        %v4858 = vsel %vm1352, %v4811, %v4778
        %v4860 = vsel %vm1352, %v4814, %v4780
        %v4862 = vsel %vm1352, %v4817, %v4782
        %v4864 = vsel %vm1352, %v4820, %v4784
        %v4866 = vsel %vm1352, %v4823, %v4786
        %v4868 = vsel %vm1352, %v4826, %v4788
        %v4870 = vsel %vm1352, %v4829, %v4790
        %v4872 = vsel %vm1352, %v4832, %v4792
        %v4874 = vsel %vm1352, %v4835, %v4794
        %v4876 = vsel %vm1352, %v4838, %v4796
        %v4878 = vsel %vm1352, %v4841, %v4798
        %v4880 = vsel %vm1352, %v4844, %v4800
        %v4882 = vsel %vm1352, %v4847, %v4802
        %v4884 = vsel %vm1352, %v4850, %v4804
        %v4886 = vsel %vm1352, %v4853, %v4806
        %v4888 = vsel %vm1352, %v4856, %v4808
        %v4889 = vshrl.u32 %v4858, 16
        %v4891 = vshll.u32 %v4858, 16
        %v4893 = vrot.slane %v4891, 1
        %v4894 = vor.u32 %v4889, %v4893
        %v4895 = vshll.u32 %v4860, 16
        %v4897 = vrot.slane %v4895, 1
        %v4898 = vsel %vm2174, %v4894, %v4897
        %v4899 = vshrl.u32 %v4862, 16
        %v4901 = vshll.u32 %v4862, 16
        %v4903 = vrot.slane %v4901, 1
        %v4904 = vor.u32 %v4899, %v4903
        %v4905 = vshll.u32 %v4864, 16
        %v4907 = vrot.slane %v4905, 1
        %v4908 = vsel %vm2174, %v4904, %v4907
        %v4909 = vshrl.u32 %v4866, 16
        %v4911 = vshll.u32 %v4866, 16
        %v4913 = vrot.slane %v4911, 1
        %v4914 = vor.u32 %v4909, %v4913
        %v4915 = vshll.u32 %v4868, 16
        %v4917 = vrot.slane %v4915, 1
        %v4918 = vsel %vm2174, %v4914, %v4917
        %v4919 = vshrl.u32 %v4870, 16
        %v4921 = vshll.u32 %v4870, 16
        %v4923 = vrot.slane %v4921, 1
        %v4924 = vor.u32 %v4919, %v4923
        %v4925 = vshll.u32 %v4872, 16
        %v4927 = vrot.slane %v4925, 1
        %v4928 = vsel %vm2174, %v4924, %v4927
        %v4929 = vshrl.u32 %v4874, 16
        %v4931 = vshll.u32 %v4874, 16
        %v4933 = vrot.slane %v4931, 1
        %v4934 = vor.u32 %v4929, %v4933
        %v4935 = vshll.u32 %v4876, 16
        %v4937 = vrot.slane %v4935, 1
        %v4938 = vsel %vm2174, %v4934, %v4937
        %v4939 = vshrl.u32 %v4878, 16
        %v4941 = vshll.u32 %v4878, 16
        %v4943 = vrot.slane %v4941, 1
        %v4944 = vor.u32 %v4939, %v4943
        %v4945 = vshll.u32 %v4880, 16
        %v4947 = vrot.slane %v4945, 1
        %v4948 = vsel %vm2174, %v4944, %v4947
        %v4949 = vshrl.u32 %v4882, 16
        %v4951 = vshll.u32 %v4882, 16
        %v4953 = vrot.slane %v4951, 1
        %v4954 = vor.u32 %v4949, %v4953
        %v4955 = vshll.u32 %v4884, 16
        %v4957 = vrot.slane %v4955, 1
        %v4958 = vsel %vm2174, %v4954, %v4957
        %v4959 = vshrl.u32 %v4886, 16
        %v4961 = vshll.u32 %v4886, 16
        %v4963 = vrot.slane %v4961, 1
        %v4964 = vor.u32 %v4959, %v4963
        %v4965 = vshll.u32 %v4888, 16
        %v4967 = vrot.slane %v4965, 1
        %v4968 = vsel %vm2174, %v4964, %v4967
        %s4969 = scalar_lea.vmem %s5, 384
        %v4970 = vld [vmem:[%s4969] sm:$0xf]
        %v4971 = vld [vmem:[%s4969 + $0x4] sm:$0xf]
        %v4972 = vld [vmem:[%s4969 + $0x8] sm:$0xf]
        %v4973 = vld [vmem:[%s4969 + $0xc] sm:$0xf]
        %v4974 = vld [vmem:[%s4969 + $0x10] sm:$0xf]
        %v4975 = vld [vmem:[%s4969 + $0x14] sm:$0xf]
        %v4976 = vld [vmem:[%s4969 + $0x18] sm:$0xf]
        %v4977 = vld [vmem:[%s4969 + $0x1c] sm:$0xf]
        %v4978 = vld [vmem:[%s4969 + $0x20] sm:$0xf]
        %v4979 = vld [vmem:[%s4969 + $0x24] sm:$0xf]
        %v4980 = vld [vmem:[%s4969 + $0x28] sm:$0xf]
        %v4981 = vld [vmem:[%s4969 + $0x2c] sm:$0xf]
        %v4994 = vunpack.c.l.b16 %v4970
        %v4995 = vunpack.c.l.b16 %v4971
        %v4996 = vunpack.c.l.b16 %v4972
        %v4997 = vunpack.c.l.b16 %v4973
        %v4998 = vunpack.c.l.b16 %v4974
        %v4999 = vunpack.c.l.b16 %v4975
        %v5000 = vunpack.c.l.b16 %v4976
        %v5001 = vunpack.c.l.b16 %v4977
        %v5002 = vunpack.c.l.b16 %v4978
        %v5003 = vunpack.c.l.b16 %v4979
        %v5004 = vunpack.c.l.b16 %v4980
        %v5005 = vunpack.c.l.b16 %v4981
        %v5006 = vpack.c.b16 %v4995, %v4994
        %v5007 = vpack.c.b16 %v4997, %v4996
        %v5008 = vpack.c.b16 %v4999, %v4998
        %v5009 = vpack.c.b16 %v5001, %v5000
        %v5010 = vpack.c.b16 %v5003, %v5002
        %v5011 = vpack.c.b16 %v5005, %v5004
        %v5019 = vsel %vm1649, %v4898, 0
        %v5022 = vsel %vm1649, %v4908, 0
        %v5025 = vsel %vm1649, %v4918, 0
        %v5028 = vsel %vm1649, %v4928, 0
        %v5031 = vsel %vm1649, %v4938, 0
        %v5034 = vsel %vm1649, %v4948, 0
        %v5037 = vsel %vm1649, %v4958, 0
        %v5040 = vsel %vm1649, %v4968, 0
        %5042 = vmatprep.subr.bf16.mxu0 0
        %5043 = vmatpush1.bf16.msra.mxu0 0
        %5044 = vmatprep.subr.bf16.mxu0 0
        %5045 = vmatpush1.bf16.msra.mxu0 0
        %5046 = vmatprep.subr.bf16.mxu0 0
        %5047 = vmatpush1.bf16.msra.mxu0 %v5011
        %5048 = vmatprep.subr.bf16.mxu0 0
        %5049 = vmatpush1.bf16.msra.mxu0 %v5010
        %5050 = vmatprep.subr.bf16.mxu0 0
        %5051 = vmatpush1.bf16.msra.mxu0 %v5009
        %5052 = vmatprep.subr.bf16.mxu0 0
        %5053 = vmatpush1.bf16.msra.mxu0 %v5008
        %5054 = vmatprep.subr.bf16.mxu0 0
        %5055 = vmatpush1.bf16.msra.mxu0 %v5007
        %5056 = vmatprep.subr.bf16.mxu0 0
        %5057 = vmatpush1.bf16.msra.mxu0 %v5006
        %5058 = vmatprep.subr.bf16.mxu0 0
        %5059 = vmatpush2.bf16.msra.mxu0 0
        %5060 = vmatprep.subr.bf16.mxu0 0
        %5061 = vmatpush2.bf16.msra.mxu0 0
        %5062 = vmatprep.subr.bf16.mxu0 0
        %5063 = vmatpush2.bf16.msra.mxu0 0
        %5064 = vmatprep.subr.bf16.mxu0 0
        %5065 = vmatpush2.bf16.msra.mxu0 0
        %5066 = vmatprep.subr.bf16.mxu0 0
        %5067 = vmatpush2.bf16.msra.mxu0 0
        %5068 = vmatprep.subr.bf16.mxu0 0
        %5069 = vmatpush2.bf16.msra.mxu0 0
        %5070 = vmatprep.subr.bf16.mxu0 0
        %5071 = vmatpush2.bf16.msra.mxu0 0
        %5072 = vmatprep.subr.bf16.mxu0 0
        %5073 = vmatpush2.bf16.msra.mxu0 0
        %5074 = vmatprep.mubr.bf16.mxu0 0
        %5075 = vmatmul.mubr.bf16.gmra.mxu0 %v5019
        %v5076 = vpop.f32.mrf.mxu0
        %v5077 = vadd.f32 0.0, %v5076
        %v5078 = vpop.f32.mrf.mxu0
        %v5079 = vpop.f32.mrf.mxu0
        %v5080 = vadd.f32 0.0, %v5079
        %v5081 = vpop.f32.mrf.mxu0
        %5082 = vmatprep.mubr.bf16.mxu0 0
        %5083 = vmatmul.mubr.bf16.gmra.mxu0 %v5022
        %v5084 = vpop.f32.mrf.mxu0
        %v5085 = vadd.f32 0.0, %v5084
        %v5086 = vpop.f32.mrf.mxu0
        %v5087 = vpop.f32.mrf.mxu0
        %v5088 = vadd.f32 0.0, %v5087
        %v5089 = vpop.f32.mrf.mxu0
        %5090 = vmatprep.mubr.bf16.mxu0 0
        %5091 = vmatmul.mubr.bf16.gmra.mxu0 %v5025
        %v5092 = vpop.f32.mrf.mxu0
        %v5093 = vadd.f32 0.0, %v5092
        %v5094 = vpop.f32.mrf.mxu0
        %v5095 = vpop.f32.mrf.mxu0
        %v5096 = vadd.f32 0.0, %v5095
        %v5097 = vpop.f32.mrf.mxu0
        %5098 = vmatprep.mubr.bf16.mxu0 0
        %5099 = vmatmul.mubr.bf16.gmra.mxu0 %v5028
        %v5100 = vpop.f32.mrf.mxu0
        %v5101 = vadd.f32 0.0, %v5100
        %v5102 = vpop.f32.mrf.mxu0
        %v5103 = vpop.f32.mrf.mxu0
        %v5104 = vadd.f32 0.0, %v5103
        %v5105 = vpop.f32.mrf.mxu0
        %5106 = vmatprep.mubr.bf16.mxu0 0
        %5107 = vmatmul.mubr.bf16.gmra.mxu0 %v5031
        %v5108 = vpop.f32.mrf.mxu0
        %v5109 = vadd.f32 0.0, %v5108
        %v5110 = vpop.f32.mrf.mxu0
        %v5111 = vpop.f32.mrf.mxu0
        %v5112 = vadd.f32 0.0, %v5111
        %v5113 = vpop.f32.mrf.mxu0
        %5114 = vmatprep.mubr.bf16.mxu0 0
        %5115 = vmatmul.mubr.bf16.gmra.mxu0 %v5034
        %v5116 = vpop.f32.mrf.mxu0
        %v5117 = vadd.f32 0.0, %v5116
        %v5118 = vpop.f32.mrf.mxu0
        %v5119 = vpop.f32.mrf.mxu0
        %v5120 = vadd.f32 0.0, %v5119
        %v5121 = vpop.f32.mrf.mxu0
        %5122 = vmatprep.mubr.bf16.mxu0 0
        %5123 = vmatmul.mubr.bf16.gmra.mxu0 %v5037
        %v5124 = vpop.f32.mrf.mxu0
        %v5125 = vadd.f32 0.0, %v5124
        %v5126 = vpop.f32.mrf.mxu0
        %v5127 = vpop.f32.mrf.mxu0
        %v5128 = vadd.f32 0.0, %v5127
        %v5129 = vpop.f32.mrf.mxu0
        %5130 = vmatprep.mubr.bf16.mxu0 0
        %5131 = vmatmul.mubr.bf16.gmra.mxu0 %v5040
        %v5132 = vpop.f32.mrf.mxu0
        %v5133 = vadd.f32 0.0, %v5132
        %v5134 = vpop.f32.mrf.mxu0
        %v5135 = vpop.f32.mrf.mxu0
        %v5136 = vadd.f32 0.0, %v5135
        %v5137 = vpop.f32.mrf.mxu0
        %5138 = vdwg.mxu0
        %v5139 = vadd.f32 %v4619, %v5077
        %v5140 = vadd.f32 %v4620, %v5080
        %v5141 = vadd.f32 %v4621, %v5085
        %v5142 = vadd.f32 %v4622, %v5088
        %v5143 = vadd.f32 %v4623, %v5093
        %v5144 = vadd.f32 %v4624, %v5096
        %v5145 = vadd.f32 %v4625, %v5101
        %v5146 = vadd.f32 %v4626, %v5104
        %v5147 = vadd.f32 %v4627, %v5109
        %v5148 = vadd.f32 %v4628, %v5112
        %v5149 = vadd.f32 %v4629, %v5117
        %v5150 = vadd.f32 %v4630, %v5120
        %v5151 = vadd.f32 %v4631, %v5125
        %v5152 = vadd.f32 %v4632, %v5128
        %v5153 = vadd.f32 %v4633, %v5133
        %v5154 = vadd.f32 %v4634, %v5136
        %v5155 = vld [vmem:[%s6] sm:$0x1]
        %v5157 = vlaneseq
        %v5158 = vshrl.u32 %v5157, 7
        %v5159 = vsub.s32 0, %v5158
        %v5160 = vrot.slane %v5155, %v5159
        %v5162 = vadd.f32 %v5139, %v5160
        %v5163 = vadd.f32 %v5140, %v5160
        %v5164 = vadd.f32 %v5141, %v5160
        %v5165 = vadd.f32 %v5142, %v5160
        %v5166 = vadd.f32 %v5143, %v5160
        %v5167 = vadd.f32 %v5144, %v5160
        %v5168 = vadd.f32 %v5145, %v5160
        %v5169 = vadd.f32 %v5146, %v5160
        %v5170 = vadd.f32 %v5147, %v5160
        %v5171 = vadd.f32 %v5148, %v5160
        %v5172 = vadd.f32 %v5149, %v5160
        %v5173 = vadd.f32 %v5150, %v5160
        %v5174 = vadd.f32 %v5151, %v5160
        %v5175 = vadd.f32 %v5152, %v5160
        %v5176 = vadd.f32 %v5153, %v5160
        %v5177 = vadd.f32 %v5154, %v5160
        %v5178 = vld [vmem:[%s616] sm:$0xff]
        %v5179 = vld [vmem:[%s616 + $0x8] sm:$0xff]
        %v5180 = vld [vmem:[%s616 + $0x10] sm:$0xff]
        %v5181 = vld [vmem:[%s616 + $0x18] sm:$0xff]
        %v5182 = vld [vmem:[%s616 + $0x20] sm:$0xff]
        %v5183 = vld [vmem:[%s616 + $0x28] sm:$0xff]
        %v5184 = vld [vmem:[%s616 + $0x30] sm:$0xff]
        %v5185 = vld [vmem:[%s616 + $0x38] sm:$0xff]
        %v5186 = vld [vmem:[%s616 + $0x40] sm:$0xff]
        %v5187 = vld [vmem:[%s616 + $0x48] sm:$0xff]
        %v5188 = vld [vmem:[%s616 + $0x50] sm:$0xff]
        %v5189 = vld [vmem:[%s616 + $0x58] sm:$0xff]
        %v5190 = vld [vmem:[%s616 + $0x60] sm:$0xff]
        %v5191 = vld [vmem:[%s616 + $0x68] sm:$0xff]
        %v5192 = vld [vmem:[%s616 + $0x70] sm:$0xff]
        %v5193 = vld [vmem:[%s616 + $0x78] sm:$0xff]
        %v5194 = vadd.f32 %v5162, %v5178
        %v5195 = vadd.f32 %v5163, %v5179
        %v5196 = vadd.f32 %v5164, %v5180
        %v5197 = vadd.f32 %v5165, %v5181
        %v5198 = vadd.f32 %v5166, %v5182
        %v5199 = vadd.f32 %v5167, %v5183
        %v5200 = vadd.f32 %v5168, %v5184
        %v5201 = vadd.f32 %v5169, %v5185
        %v5202 = vadd.f32 %v5170, %v5186
        %v5203 = vadd.f32 %v5171, %v5187
        %v5204 = vadd.f32 %v5172, %v5188
        %v5205 = vadd.f32 %v5173, %v5189
        %v5206 = vadd.f32 %v5174, %v5190
        %v5207 = vadd.f32 %v5175, %v5191
        %v5208 = vadd.f32 %v5176, %v5192
        %v5209 = vadd.f32 %v5177, %v5193
        %5210 = vst.msk [vmem:[%s532] sm:$0xff] %vm1303, %v5194
        %5211 = vst.msk [vmem:[%s532 + $0x8] sm:$0xff] %vm1303, %v5195
        %5212 = vst.msk [vmem:[%s532 + $0x10] sm:$0xff] %vm1303, %v5196
        %5213 = vst.msk [vmem:[%s532 + $0x18] sm:$0xff] %vm1303, %v5197
        %5214 = vst.msk [vmem:[%s532 + $0x20] sm:$0xff] %vm1303, %v5198
        %5215 = vst.msk [vmem:[%s532 + $0x28] sm:$0xff] %vm1303, %v5199
        %5216 = vst.msk [vmem:[%s532 + $0x30] sm:$0xff] %vm1303, %v5200
        %5217 = vst.msk [vmem:[%s532 + $0x38] sm:$0xff] %vm1303, %v5201
        %5218 = vst.msk [vmem:[%s532 + $0x40] sm:$0xff] %vm1303, %v5202
        %5219 = vst.msk [vmem:[%s532 + $0x48] sm:$0xff] %vm1303, %v5203
        %5220 = vst.msk [vmem:[%s532 + $0x50] sm:$0xff] %vm1303, %v5204
        %5221 = vst.msk [vmem:[%s532 + $0x58] sm:$0xff] %vm1303, %v5205
        %5222 = vst.msk [vmem:[%s532 + $0x60] sm:$0xff] %vm1303, %v5206
        %5223 = vst.msk [vmem:[%s532 + $0x68] sm:$0xff] %vm1303, %v5207
        %5224 = vst.msk [vmem:[%s532 + $0x70] sm:$0xff] %vm1303, %v5208
        %5225 = vst.msk [vmem:[%s532 + $0x78] sm:$0xff] %vm1303, %v5209
        %s5226 = sand.u32 %s287, 1
        %s5227 = scalar_lea.sflag [#allocation4], %s5226
        %s5228 = sand.u32 %s287, 1
        %s5229 = smul.addr %s5228, 128
        %s5230 = scalar_lea.vmem [#allocation3], %s5229
        // Predicated region
        $region57: #{res_block_forward.7} parent=51 // pred_check
          %p5231 = pneg %p297
        $region58: #{res_block_forward.7} parent=51 // pred_check_branch
          %5233 = sbr.rel (%p5231) target = $region60
        $region59: #{res_block_forward.7} parent=51 // pred_region
          %s5234 = smul.u32 16, %s28
          %s5236 = ssub.s32 2048, 2048
          %5237 = vsyncadd %s5227, %s5236
          %s5238 = smul.addr %s29, 32
          %s5239 = sadd.s32 %s5234, %s5238
          %s5240 = smul.addr %s27, 128
          %s5241 = sadd.s32 %s5239, %s5240
          %s5242 = smul.addr %s5241, 128
          %s5243 = scalar_lea.hbm %s8, %s5242
          %s5244 = sshll.u32 %s5230, 4
          %s5245 = int_to_ptr.vmem [resolvable:$true] %s5244
          %5250 = dma.vmem_to_hbm [thread:$0]  %s5245, 2048, %s5243, %s5227, 128, 128, 8
        $region60: #{res_block_forward.7} parent=51 // pred_fallthru
          _
      $region52: #{res_block_forward.7} parent=5 // pred_fallthru
        _
      %p5251 = scmp.le.s32.totalorder 2, %s17
      // Predicated region
      $region61: #{res_block_forward.7} parent=5 // pred_check
        %p5252 = pneg %p5251
      $region62: #{res_block_forward.7} parent=5 // pred_check_branch
        %5254 = sbr.rel (%p5252) target = $region64
      $region63: #{res_block_forward.7} parent=5 // pred_region
        %s5255 = ssub.s32 %s17, 2
        // Predicated region
        $region65: #{res_block_forward.7} parent=63 // pred_check
          %p5256 = pneg %p303
        $region66: #{res_block_forward.7} parent=63 // pred_check_branch
          %5258 = sbr.rel (%p5256) target = $region68
        $region67: #{res_block_forward.7} parent=63 // pred_region
          %s5259 = sand.u32 %s288, 1
          %s5260 = scalar_lea.sflag [#allocation4], %s5259
          %s5261 = sand.u32 %s288, 1
          %s5262 = smul.addr %s5261, 128
          %s5263 = scalar_lea.vmem [#allocation3], %s5262
          %5264 = dma.done %s5260, 2048
        $region68: #{res_block_forward.7} parent=63 // pred_fallthru
          _
      $region64: #{res_block_forward.7} parent=5 // pred_fallthru
        _
    $region6: #{res_block_forward.7} parent=1 // loop_footer
      %s21 = sadd.s32 1, %s17
    $region7: #{res_block_forward.7} parent=1 // loop_footer_branch
      %16 = sbr.rel target = $region3
    $region8: #{res_block_forward.7} parent=1 // loop_exit
      _
    %5265 = vsyncpa [#allocation4], 1
    %s5266 = scalar_lea.sflag [#allocation4], 1
    %5267 = vsyncpa %s5266, 1

</llo_original>
